<compile_context>
chip_gen: v6e
topology: v6e:2x2x1
jax: 0.10.0
libtpu: 0.0.40
codegen_flags: <defaults>
</compile_context>

<pallas_src>
import functools
import math

import jax
import jax.numpy as jnp
from jax.experimental import pallas as pl
from jax.experimental.pallas import tpu as pltpu


# ----------------------------- Pallas kernel -------------------------------

def _fused_kernel(bias_ref, x_ref, wa_ref, ba_ref, wub_ref, bu_ref,
                  wr00_ref, wr01_ref, br_ref, out_ref, b0_ref, b1_ref,
                  *, td, H):
    """Fused gate + ConvTranspose3d(k=2,s=2) + Conv3d(3x3x3)+BN+ReLU.

    bias_ref: (1, 1)                   softplus(attention_bias)
    x_ref:    (1, (D+2)*H, W*Cin)      depth-padded input, resident per batch
    wa_ref:   (W*Cin, W*Cin)   bf16    banded attention 1x1x1 conv (BN folded)
    ba_ref:   (1, W*Cin)
    wub_ref:  (W*Cin, 4*L)     bf16    banded ConvTranspose, 4 (kd, kh) blocks
    bu_ref:   (1, L)
    wr00_ref: (3, L, 2*L)      bf16    refinement RHS [Wr[kd,1] | Wr[kd,0]]
    wr01_ref: (3, L, 2*L)      bf16    refinement RHS [Wr[kd,2] | Wr[kd,1]]
    br_ref:   (1, L)
    out_ref:  (1, 2, 2*td*(H+1), L)    two row-phase output slabs (pad row kept)
    b0/b1:    ((2*td+2)*(H+1)+2, L)    bf16 upsampled-plane buffers per phase
    """
    f32 = jnp.float32
    bf16 = jnp.bfloat16
    t = pl.program_id(1)
    nt = pl.num_programs(1)
    L = br_ref.shape[-1]
    hp1 = H + 1
    n_up = 2 * td + 2                       # upsampled depth planes this step
    m_acc = 2 * td * hp1

    # ---- stage A: attention gate (1x1x1 conv + BN + sigmoid); one fused dot
    #      over the td input slices plus one halo slice on each side ----
    row0 = pl.multiple_of(t * (td * H), td * H)
    xs = x_ref[0, pl.ds(row0, (td + 2) * H), :]                  # ((td+2)*H, Kc) f32
    att = jax.nn.sigmoid(
        jnp.dot(xs.astype(bf16), wa_ref[...], preferred_element_type=f32)
        + ba_ref[...])
    xa = xs * (bias_ref[...] + att)                              # f32

    # ---- stage B: ConvTranspose3d(k=2,s=2); all four (depth-phase, row-phase)
    #      outputs concatenated along N -> a single (M, 4*L) dot ----
    y = jnp.dot(xa.astype(bf16), wub_ref[...], preferred_element_type=f32)

    # Re-zero the shared H-pad rows of the plane buffers (tiny; keeps every
    # grid step independent so both grid axes stay "parallel" / megacore-safe).
    zrow = jnp.zeros((1, L), bf16)
    b0_ref[pl.ds(0, 1), :] = zrow
    b1_ref[pl.ds(0, 1), :] = zrow
    for k in range(n_up + 1):
        b0_ref[pl.ds(k * hp1 + 1, 1), :] = zrow
        b1_ref[pl.ds(k * hp1 + 1, 1), :] = zrow

    # Scatter upsampled planes (+ bias, masked only at the volume boundary)
    # into the two row-phase plane buffers; plane u_local lives at rows
    # [u_local*(H+1)+2, u_local*(H+1)+2+H), sharing one zero pad row above it.
    bu = bu_ref[...]
    for ul in range(n_up):
        d_local = (ul + 1) // 2              # index into the td+2 gated slices
        kd = (ul + 1) % 2                    # ConvTranspose depth phase
        if ul == 0:                          # upsampled depth 2*d0 - 1
            b = bu * (t > 0).astype(f32)
        elif ul == n_up - 1:                 # upsampled depth 2*(d0 + td)
            b = bu * (t < nt - 1).astype(f32)
        else:
            b = bu
        for p, bref in ((0, b0_ref), (1, b1_ref)):
            g = 2 * kd + p
            plane = y[d_local * H:(d_local + 1) * H, g * L:(g + 1) * L] + b
            bref[pl.ds(ul * hp1 + 2, H), :] = plane.astype(bf16)

    # ---- stage C: 3x3x3 refinement conv (+folded BN) + ReLU, polyphase in h.
    #      acc0 = output rows 2h, acc1 = output rows 2h+1; shared source slabs
    #      use a phase-merged N=256 RHS, shifted kh taps are plain row offsets.
    br = br_ref[...]
    acc0 = jnp.zeros((m_acc, L), f32) + br
    acc1 = jnp.zeros((m_acc, L), f32) + br
    for kd in range(3):
        base = kd * hp1 + 1
        w00 = wr00_ref[kd]                   # [ Wr[kd,1] | Wr[kd,0] ]
        w01 = wr01_ref[kd]                   # [ Wr[kd,2] | Wr[kd,1] ]
        t00 = jnp.dot(b0_ref[pl.ds(base, m_acc), :], w00,
                      preferred_element_type=f32)
        acc0 += t00[:, :L]
        acc1 += t00[:, L:]
        t01 = jnp.dot(b1_ref[pl.ds(base, m_acc), :], w01,
                      preferred_element_type=f32)
        acc0 += t01[:, :L]
        acc1 += t01[:, L:]
        acc0 += jnp.dot(b1_ref[pl.ds(base - 1, m_acc), :], w00[:, L:],
                        preferred_element_type=f32)          # kh=0, rows h-1
        acc1 += jnp.dot(b0_ref[pl.ds(base + 1, m_acc), :], w01[:, :L],
                        preferred_element_type=f32)          # kh=2, rows h+1

    out_ref[0, 0] = jnp.maximum(acc0, 0.0)
    out_ref[0, 1] = jnp.maximum(acc1, 0.0)


# ------------------------------ host wrapper -------------------------------

def attention_upsample_forward(x, params, *, eps=1e-5, td=8):
    """x: (N, Cin, D, H, W) float32 NCDHW.  Returns (N, Cout, 2D, 2H, 2W)."""
    N, Cin, D, H, W = map(int, x.shape)
    Cout = int(params["up_b"].shape[0])
    D2, H2, W2 = 2 * D, 2 * H, 2 * W
    Kc = W * Cin
    L = W2 * Cout                 # lane width; best perf when L % 128 == 0
    f32, bf16 = jnp.float32, jnp.bfloat16

    td = max(1, min(td, D))
    while D % td:                 # fall back to a divisor of D
        td -= 1
    nt = D // td
    hp1 = H + 1
    n_up = 2 * td + 2
    b_rows = n_up * hp1 + 2
    m_gate = (td + 2) * H
    m_acc = 2 * td * hp1

    # ---- fold BatchNorm (inference) into the adjacent convs ----
    g1 = params["bn1_gamma"] / jnp.sqrt(params["bn1_var"] + eps)
    wa_f = (params["attn_w"].reshape(Cin, Cin) * g1[:, None]).T             # (ci, k)
    ba_f = params["attn_b"] * g1 + params["bn1_beta"] - params["bn1_mean"] * g1

    g2 = params["bn2_gamma"] / jnp.sqrt(params["bn2_var"] + eps)
    wr_f = params["ref_w"] * g2[:, None, None, None, None]                  # (co, cm, kd, kh, kw)
    br_f = params["ref_b"] * g2 + params["bn2_beta"] - params["bn2_mean"] * g2

    # ---- block-banded weights (the W axis folded into the lane dimension) ----
    wa_band = jnp.kron(jnp.eye(W, dtype=f32), wa_f.astype(f32)).astype(bf16)
    ba_band = jnp.tile(ba_f, W)[None, :].astype(f32)

    # ConvTranspose3d(k=2,s=2): (W*Cin) -> (W2*Cout) for each (kd, kh); the
    # four (kd, kh) blocks are concatenated along N so the upsample is ONE dot.
    eye_w = jnp.eye(W, dtype=f32)
    wub_groups = []
    for kd in range(2):
        for kh in range(2):
            wsel = jnp.transpose(params["up_w"][:, :, kd, kh, :], (0, 2, 1))   # (Cin, kw, Cout)
            tm = eye_w[:, None, :, None, None] * wsel[None, :, None, :, :]     # (W,Cin,W,2,Cout)
            wub_groups.append(tm.reshape(Kc, L))
    wub_all = jnp.concatenate(wub_groups, axis=1).astype(bf16)                 # (Kc, 4L)
    bu_band = jnp.tile(params["up_b"], W2)[None, :].astype(f32)                # (1, L)

    # 3x3x3 refinement conv: K = W2*Cout exactly (out-of-range kw taps dropped,
    # so the kernel needs no W zero-padding).  The two output row-phases that
    # share a source slab get their RHS concatenated along N (N = 2L).
    wr_band = [[None] * 3 for _ in range(3)]
    for kd in range(3):
        for kh in range(3):
            tm = jnp.zeros((W2, Cout, W2, Cout), f32)
            for kw in range(3):
                sel = jnp.eye(W2, W2, k=1 - kw, dtype=f32)      # [jw, ow] = (jw == ow + kw - 1)
                blk = wr_f[:, :, kd, kh, kw].T                  # (cm, co)
                tm = tm + sel[:, None, :, None] * blk[None, :, None, :]
            wr_band[kd][kh] = tm.reshape(L, L)
    wr00 = jnp.stack([jnp.concatenate([wr_band[kd][1], wr_band[kd][0]], axis=1)
                      for kd in range(3)]).astype(bf16)         # (3, L, 2L)
    wr01 = jnp.stack([jnp.concatenate([wr_band[kd][2], wr_band[kd][1]], axis=1)
                      for kd in range(3)]).astype(bf16)         # (3, L, 2L)
    br_band = jnp.tile(br_f, W2)[None, :].astype(f32)           # (1, L)

    bias_sp = jnp.asarray(params["attention_bias_softplus"], f32).reshape(1, 1)

    # input: NCDHW -> (N, (D+2)*H, W*Cin) with one zero halo depth slice per side
    x_cl = jnp.transpose(x, (0, 2, 3, 4, 1)).reshape(N, D, H, Kc)
    xp = jnp.pad(x_cl, ((0, 0), (1, 1), (0, 0), (0, 0))).reshape(N, (D + 2) * H, Kc)

    flops = 2 * N * nt * (m_gate * Kc * Kc + m_gate * Kc * 4 * L
                          + 3 * (2 * m_acc * L * 2 * L + 2 * m_acc * L * L))
    bytes_accessed = (4 * xp.size + 4 * N * 2 * D2 * hp1 * L
                      + 2 * (wa_band.size + wub_all.size + wr00.size + wr01.size))

    out = pl.pallas_call(
        functools.partial(_fused_kernel, td=td, H=H),
        out_shape=jax.ShapeDtypeStruct((N, 2, D2 * hp1, L), f32),
        grid=(N, nt),
        in_specs=[
            pl.BlockSpec((1, 1), lambda n, t: (0, 0)),                   # softplus bias
            # whole padded per-batch input; block index ignores t so it is only
            # re-fetched when the batch index changes
            pl.BlockSpec((1, (D + 2) * H, Kc), lambda n, t: (n, 0, 0)),
            pl.BlockSpec((Kc, Kc), lambda n, t: (0, 0)),
            pl.BlockSpec((1, Kc), lambda n, t: (0, 0)),
            pl.BlockSpec((Kc, 4 * L), lambda n, t: (0, 0)),
            pl.BlockSpec((1, L), lambda n, t: (0, 0)),
            pl.BlockSpec((3, L, 2 * L), lambda n, t: (0, 0, 0)),
            pl.BlockSpec((3, L, 2 * L), lambda n, t: (0, 0, 0)),
            pl.BlockSpec((1, L), lambda n, t: (0, 0)),
        ],
        out_specs=pl.BlockSpec((1, 2, 2 * td * hp1, L), lambda n, t: (n, 0, t, 0)),
        scratch_shapes=[pltpu.VMEM((b_rows, L), bf16),
                        pltpu.VMEM((b_rows, L), bf16)],
        compiler_params=pltpu.CompilerParams(
            dimension_semantics=("parallel", "parallel")),
        cost_estimate=pl.CostEstimate(
            flops=int(flops),
            transcendentals=int(N * nt * m_gate * Kc),
            bytes_accessed=int(bytes_accessed)),
    )(bias_sp, xp, wa_band, ba_band, wub_all, bu_band, wr00, wr01, br_band)

    # (N, 2 row-phases, D2*(H+1), W2*Cout) -> NCDHW.  Dropping the per-depth
    # pad row and interleaving the row-phases fuse into this single transpose.
    out = out.reshape(N, 2, D2, hp1, W2, Cout)[:, :, :, 1:, :, :]
    out = jnp.transpose(out, (0, 5, 2, 3, 1, 4)).reshape(N, Cout, D2, H2, W2)
    return out


# --------------------------- pure-JAX reference ----------------------------

def _reference(x, params, eps=1e-5):
    N, Cin, D, H, W = x.shape
    Cout = int(params["up_b"].shape[0])
    hp = jax.lax.Precision.HIGHEST

    g1 = params["bn1_gamma"] / jnp.sqrt(params["bn1_var"] + eps)
    y = jnp.einsum("ncdhw,kc->nkdhw", x, params["attn_w"].reshape(Cin, Cin), precision=hp)
    y = y + params["attn_b"][None, :, None, None, None]
    y = y * g1[None, :, None, None, None] + (params["bn1_beta"] - params["bn1_mean"] * g1)[None, :, None, None, None]
    attn = jax.nn.sigmoid(y)
    xa = x * (params["attention_bias_softplus"] + attn)

    up = jnp.einsum("ncdhw,copqr->nodphqwr", xa, params["up_w"], precision=hp)
    up = up.reshape(N, Cout, 2 * D, 2 * H, 2 * W) + params["up_b"][None, :, None, None, None]

    D2, H2, W2 = 2 * D, 2 * H, 2 * W
    upp = jnp.pad(up, ((0, 0), (0, 0), (1, 1), (1, 1), (1, 1)))
    z = jnp.zeros((N, Cout, D2, H2, W2), jnp.float32)
    for kd in range(3):
        for kh in range(3):
            for kw in range(3):
                z = z + jnp.einsum("ncdhw,oc->nodhw",
                                   upp[:, :, kd:kd + D2, kh:kh + H2, kw:kw + W2],
                                   params["ref_w"][:, :, kd, kh, kw], precision=hp)
    z = z + params["ref_b"][None, :, None, None, None]
    g2 = params["bn2_gamma"] / jnp.sqrt(params["bn2_var"] + eps)
    z = z * g2[None, :, None, None, None] + (params["bn2_beta"] - params["bn2_mean"] * g2)[None, :, None, None, None]
    return jnp.maximum(z, 0.0)


# ---------------------------------- main -----------------------------------

if __name__ == "__main__":
    key = jax.random.PRNGKey(0)
    N, Cin, Cout, D, H, W = 2, 4, 4, 16, 16, 16
    ks = jax.random.split(key, 16)

    x = jax.random.normal(ks[0], (N, Cin, D, H, W), jnp.float32)

    params = dict(
        # attention: Conv3d(Cin, Cin, 1) + BatchNorm3d(Cin)
        attn_w=0.2 * jax.random.normal(ks[1], (Cin, Cin, 1, 1, 1), jnp.float32),
        attn_b=0.1 * jax.random.normal(ks[2], (Cin,), jnp.float32),
        bn1_gamma=1.0 + 0.1 * jax.random.normal(ks[3], (Cin,), jnp.float32),
        bn1_beta=0.1 * jax.random.normal(ks[4], (Cin,), jnp.float32),
        bn1_mean=0.1 * jax.random.normal(ks[5], (Cin,), jnp.float32),
        bn1_var=1.0 + 0.1 * jax.random.uniform(ks[6], (Cin,), jnp.float32),
        # up_conv: ConvTranspose3d(Cin, Cout, kernel_size=2, stride=2)
        up_w=0.2 * jax.random.normal(ks[7], (Cin, Cout, 2, 2, 2), jnp.float32),
        up_b=0.1 * jax.random.normal(ks[8], (Cout,), jnp.float32),
        # refinement: Conv3d(Cout, Cout, 3, padding=1) + BatchNorm3d(Cout)
        ref_w=0.2 * jax.random.normal(ks[9], (Cout, Cout, 3, 3, 3), jnp.float32),
        ref_b=0.1 * jax.random.normal(ks[10], (Cout,), jnp.float32),
        bn2_gamma=1.0 + 0.1 * jax.random.normal(ks[11], (Cout,), jnp.float32),
        bn2_beta=0.1 * jax.random.normal(ks[12], (Cout,), jnp.float32),
        bn2_mean=0.1 * jax.random.normal(ks[13], (Cout,), jnp.float32),
        bn2_var=1.0 + 0.1 * jax.random.uniform(ks[14], (Cout,), jnp.float32),
        # nn.Parameter(torch.tensor(0.3)) -> softplus applied in forward
        attention_bias_softplus=math.log1p(math.exp(0.3)),
    )

    out = jax.block_until_ready(attention_upsample_forward(x, params))

    assert out.shape == (N, Cout, 2 * D, 2 * H, 2 * W), out.shape
    assert bool(jnp.all(jnp.isfinite(out)))

    ref = jax.block_until_ready(_reference(x, params))
    # Matmuls intentionally run as single bf16 MXU passes (DEFAULT precision /
    # explicit bf16 operands), so compare at bf16-class tolerance against the
    # f32 HIGHEST-precision reference.
    assert bool(jnp.allclose(out, ref, rtol=2.5e-2, atol=2.5e-2)), \
        float(jnp.max(jnp.abs(out - ref)))

    print("KERNEL_OK")
</pallas_src>

<mosaic_0001>
module attributes {stable_mosaic.version = 11 : i64} {
  func.func @_fused_kernel(%arg0: i32, %arg1: i32, %arg2: memref<1x1xf32, #tpu.memory_space<vmem>>, %arg3: memref<1x288x64xf32, #tpu.memory_space<vmem>>, %arg4: memref<64x64xbf16, #tpu.memory_space<vmem>>, %arg5: memref<1x64xf32, #tpu.memory_space<vmem>>, %arg6: memref<64x512xbf16, #tpu.memory_space<vmem>>, %arg7: memref<1x128xf32, #tpu.memory_space<vmem>>, %arg8: memref<3x128x256xbf16, #tpu.memory_space<vmem>>, %arg9: memref<3x128x256xbf16, #tpu.memory_space<vmem>>, %arg10: memref<1x128xf32, #tpu.memory_space<vmem>>, %arg11: memref<1x2x272x128xf32, #tpu.memory_space<vmem>>, %arg12: memref<308x128xbf16, #tpu.memory_space<vmem>>, %arg13: memref<308x128xbf16, #tpu.memory_space<vmem>>) attributes {dimension_semantics = [#tpu.dimension_semantics<parallel>, #tpu.dimension_semantics<parallel>], iteration_bounds = array<i64: 2, 2>, scalar_prefetch = 0 : i64, scratch_operands = 2 : i64, tpu.core_type = #tpu.core_type<tc>, window_params = [{pipeline_mode = #tpu.pipeline_mode<synchronous>, transform_indices = @transform_0, window_bounds = array<i64: 1, 1>}, {transform_indices = @transform_1, window_bounds = array<i64: 1, 288, 64>}, {pipeline_mode = #tpu.pipeline_mode<synchronous>, transform_indices = @transform_2, window_bounds = array<i64: 64, 64>}, {pipeline_mode = #tpu.pipeline_mode<synchronous>, transform_indices = @transform_3, window_bounds = array<i64: 1, 64>}, {pipeline_mode = #tpu.pipeline_mode<synchronous>, transform_indices = @transform_4, window_bounds = array<i64: 64, 512>}, {pipeline_mode = #tpu.pipeline_mode<synchronous>, transform_indices = @transform_5, window_bounds = array<i64: 1, 128>}, {pipeline_mode = #tpu.pipeline_mode<synchronous>, transform_indices = @transform_6, window_bounds = array<i64: 3, 128, 256>}, {pipeline_mode = #tpu.pipeline_mode<synchronous>, transform_indices = @transform_7, window_bounds = array<i64: 3, 128, 256>}, {pipeline_mode = #tpu.pipeline_mode<synchronous>, transform_indices = @transform_8, window_bounds = array<i64: 1, 128>}, {transform_indices = @transform_9, window_bounds = array<i64: 1, 2, 272, 128>}]} {
    %c128_i32 = arith.constant 128 : i32
    %0 = arith.muli %arg1, %c128_i32 : i32
    %1 = tpu.assume_multiple %0, 128 : i32
    %c0 = arith.constant 0 : index
    %2 = arith.index_cast %1 : i32 to index
    %c0_0 = arith.constant 0 : index
    %3 = vector.load %arg3[%c0, %2, %c0_0] : memref<1x288x64xf32, #tpu.memory_space<vmem>>, vector<1x160x64xf32>
    %4 = vector.shape_cast %3 : vector<1x160x64xf32> to vector<160x64xf32>
    %5 = arith.truncf %4 : vector<160x64xf32> to vector<160x64xbf16>
    %c0_1 = arith.constant 0 : index
    %c0_2 = arith.constant 0 : index
    %6 = vector.load %arg4[%c0_1, %c0_2] : memref<64x64xbf16, #tpu.memory_space<vmem>>, vector<64x64xbf16>
    %cst = arith.constant dense<0.000000e+00> : vector<160x64xf32>
    %7 = tpu.matmul %5, %6, %cst {dimension_numbers = #tpu.dot_dimension_numbers<[1], [0], [0], [1], [0, 0, 1, 1], [], []>} : vector<160x64xbf16>, vector<64x64xbf16>, vector<160x64xf32> -> vector<160x64xf32>
    %c0_3 = arith.constant 0 : index
    %c0_4 = arith.constant 0 : index
    %8 = vector.load %arg5[%c0_3, %c0_4] : memref<1x64xf32, #tpu.memory_space<vmem>>, vector<1x64xf32>
    %9 = vector.broadcast %8 : vector<1x64xf32> to vector<160x64xf32>
    %10 = arith.addf %7, %9 : vector<160x64xf32>
    %11 = arith.negf %10 : vector<160x64xf32>
    %12 = math.exp %11 : vector<160x64xf32>
    %cst_5 = arith.constant 1.000000e+00 : f32
    %13 = vector.broadcast %cst_5 : f32 to vector<160x64xf32>
    %14 = arith.addf %13, %12 : vector<160x64xf32>
    %15 = arith.divf %13, %14 : vector<160x64xf32>
    %c0_6 = arith.constant 0 : index
    %c0_7 = arith.constant 0 : index
    %16 = vector.load %arg2[%c0_6, %c0_7] : memref<1x1xf32, #tpu.memory_space<vmem>>, vector<1x1xf32>
    %17 = vector.broadcast %16 : vector<1x1xf32> to vector<160x64xf32>
    %18 = arith.addf %17, %15 : vector<160x64xf32>
    %19 = arith.mulf %4, %18 : vector<160x64xf32>
    %20 = arith.truncf %19 : vector<160x64xf32> to vector<160x64xbf16>
    %c0_8 = arith.constant 0 : index
    %c0_9 = arith.constant 0 : index
    %21 = vector.load %arg6[%c0_8, %c0_9] : memref<64x512xbf16, #tpu.memory_space<vmem>>, vector<64x512xbf16>
    %cst_10 = arith.constant dense<0.000000e+00> : vector<160x512xf32>
    %22 = tpu.matmul %20, %21, %cst_10 {dimension_numbers = #tpu.dot_dimension_numbers<[1], [0], [0], [1], [0, 0, 1, 1], [], []>} : vector<160x64xbf16>, vector<64x512xbf16>, vector<160x512xf32> -> vector<160x512xf32>
    %cst_11 = arith.constant 0.000000e+00 : bf16
    %23 = vector.broadcast %cst_11 : bf16 to vector<1x128xbf16>
    %c0_12 = arith.constant 0 : index
    %c0_13 = arith.constant 0 : index
    %24 = vector.load %arg12[%c0_12, %c0_13] : memref<308x128xbf16, #tpu.memory_space<vmem>>, vector<1x128xbf16>
    tpu.vector_store %arg12[%c0_12, %c0_13], %23 {strides = array<i32>} : memref<308x128xbf16, #tpu.memory_space<vmem>>, vector<1x128xbf16>,
    %c0_14 = arith.constant 0 : index
    %c0_15 = arith.constant 0 : index
    %25 = vector.load %arg13[%c0_14, %c0_15] : memref<308x128xbf16, #tpu.memory_space<vmem>>, vector<1x128xbf16>
    tpu.vector_store %arg13[%c0_14, %c0_15], %23 {strides = array<i32>} : memref<308x128xbf16, #tpu.memory_space<vmem>>, vector<1x128xbf16>,
    %c1 = arith.constant 1 : index
    %c0_16 = arith.constant 0 : index
    %26 = vector.load %arg12[%c1, %c0_16] : memref<308x128xbf16, #tpu.memory_space<vmem>>, vector<1x128xbf16>
    tpu.vector_store %arg12[%c1, %c0_16], %23 {strides = array<i32>} : memref<308x128xbf16, #tpu.memory_space<vmem>>, vector<1x128xbf16>,
    %c1_17 = arith.constant 1 : index
    %c0_18 = arith.constant 0 : index
    %27 = vector.load %arg13[%c1_17, %c0_18] : memref<308x128xbf16, #tpu.memory_space<vmem>>, vector<1x128xbf16>
    tpu.vector_store %arg13[%c1_17, %c0_18], %23 {strides = array<i32>} : memref<308x128xbf16, #tpu.memory_space<vmem>>, vector<1x128xbf16>,
    %c18 = arith.constant 18 : index
    %c0_19 = arith.constant 0 : index
    %28 = vector.load %arg12[%c18, %c0_19] : memref<308x128xbf16, #tpu.memory_space<vmem>>, vector<1x128xbf16>
    tpu.vector_store %arg12[%c18, %c0_19], %23 {strides = array<i32>} : memref<308x128xbf16, #tpu.memory_space<vmem>>, vector<1x128xbf16>,
    %c18_20 = arith.constant 18 : index
    %c0_21 = arith.constant 0 : index
    %29 = vector.load %arg13[%c18_20, %c0_21] : memref<308x128xbf16, #tpu.memory_space<vmem>>, vector<1x128xbf16>
    tpu.vector_store %arg13[%c18_20, %c0_21], %23 {strides = array<i32>} : memref<308x128xbf16, #tpu.memory_space<vmem>>, vector<1x128xbf16>,
    %c35 = arith.constant 35 : index
    %c0_22 = arith.constant 0 : index
    %30 = vector.load %arg12[%c35, %c0_22] : memref<308x128xbf16, #tpu.memory_space<vmem>>, vector<1x128xbf16>
    tpu.vector_store %arg12[%c35, %c0_22], %23 {strides = array<i32>} : memref<308x128xbf16, #tpu.memory_space<vmem>>, vector<1x128xbf16>,
    %c35_23 = arith.constant 35 : index
    %c0_24 = arith.constant 0 : index
    %31 = vector.load %arg13[%c35_23, %c0_24] : memref<308x128xbf16, #tpu.memory_space<vmem>>, vector<1x128xbf16>
    tpu.vector_store %arg13[%c35_23, %c0_24], %23 {strides = array<i32>} : memref<308x128xbf16, #tpu.memory_space<vmem>>, vector<1x128xbf16>,
    %c52 = arith.constant 52 : index
    %c0_25 = arith.constant 0 : index
    %32 = vector.load %arg12[%c52, %c0_25] : memref<308x128xbf16, #tpu.memory_space<vmem>>, vector<1x128xbf16>
    tpu.vector_store %arg12[%c52, %c0_25], %23 {strides = array<i32>} : memref<308x128xbf16, #tpu.memory_space<vmem>>, vector<1x128xbf16>,
    %c52_26 = arith.constant 52 : index
    %c0_27 = arith.constant 0 : index
    %33 = vector.load %arg13[%c52_26, %c0_27] : memref<308x128xbf16, #tpu.memory_space<vmem>>, vector<1x128xbf16>
    tpu.vector_store %arg13[%c52_26, %c0_27], %23 {strides = array<i32>} : memref<308x128xbf16, #tpu.memory_space<vmem>>, vector<1x128xbf16>,
    %c69 = arith.constant 69 : index
    %c0_28 = arith.constant 0 : index
    %34 = vector.load %arg12[%c69, %c0_28] : memref<308x128xbf16, #tpu.memory_space<vmem>>, vector<1x128xbf16>
    tpu.vector_store %arg12[%c69, %c0_28], %23 {strides = array<i32>} : memref<308x128xbf16, #tpu.memory_space<vmem>>, vector<1x128xbf16>,
    %c69_29 = arith.constant 69 : index
    %c0_30 = arith.constant 0 : index
    %35 = vector.load %arg13[%c69_29, %c0_30] : memref<308x128xbf16, #tpu.memory_space<vmem>>, vector<1x128xbf16>
    tpu.vector_store %arg13[%c69_29, %c0_30], %23 {strides = array<i32>} : memref<308x128xbf16, #tpu.memory_space<vmem>>, vector<1x128xbf16>,
    %c86 = arith.constant 86 : index
    %c0_31 = arith.constant 0 : index
    %36 = vector.load %arg12[%c86, %c0_31] : memref<308x128xbf16, #tpu.memory_space<vmem>>, vector<1x128xbf16>
    tpu.vector_store %arg12[%c86, %c0_31], %23 {strides = array<i32>} : memref<308x128xbf16, #tpu.memory_space<vmem>>, vector<1x128xbf16>,
    %c86_32 = arith.constant 86 : index
    %c0_33 = arith.constant 0 : index
    %37 = vector.load %arg13[%c86_32, %c0_33] : memref<308x128xbf16, #tpu.memory_space<vmem>>, vector<1x128xbf16>
    tpu.vector_store %arg13[%c86_32, %c0_33], %23 {strides = array<i32>} : memref<308x128xbf16, #tpu.memory_space<vmem>>, vector<1x128xbf16>,
    %c103 = arith.constant 103 : index
    %c0_34 = arith.constant 0 : index
    %38 = vector.load %arg12[%c103, %c0_34] : memref<308x128xbf16, #tpu.memory_space<vmem>>, vector<1x128xbf16>
    tpu.vector_store %arg12[%c103, %c0_34], %23 {strides = array<i32>} : memref<308x128xbf16, #tpu.memory_space<vmem>>, vector<1x128xbf16>,
    %c103_35 = arith.constant 103 : index
    %c0_36 = arith.constant 0 : index
    %39 = vector.load %arg13[%c103_35, %c0_36] : memref<308x128xbf16, #tpu.memory_space<vmem>>, vector<1x128xbf16>
    tpu.vector_store %arg13[%c103_35, %c0_36], %23 {strides = array<i32>} : memref<308x128xbf16, #tpu.memory_space<vmem>>, vector<1x128xbf16>,
    %c120 = arith.constant 120 : index
    %c0_37 = arith.constant 0 : index
    %40 = vector.load %arg12[%c120, %c0_37] : memref<308x128xbf16, #tpu.memory_space<vmem>>, vector<1x128xbf16>
    tpu.vector_store %arg12[%c120, %c0_37], %23 {strides = array<i32>} : memref<308x128xbf16, #tpu.memory_space<vmem>>, vector<1x128xbf16>,
    %c120_38 = arith.constant 120 : index
    %c0_39 = arith.constant 0 : index
    %41 = vector.load %arg13[%c120_38, %c0_39] : memref<308x128xbf16, #tpu.memory_space<vmem>>, vector<1x128xbf16>
    tpu.vector_store %arg13[%c120_38, %c0_39], %23 {strides = array<i32>} : memref<308x128xbf16, #tpu.memory_space<vmem>>, vector<1x128xbf16>,
    %c137 = arith.constant 137 : index
    %c0_40 = arith.constant 0 : index
    %42 = vector.load %arg12[%c137, %c0_40] : memref<308x128xbf16, #tpu.memory_space<vmem>>, vector<1x128xbf16>
    tpu.vector_store %arg12[%c137, %c0_40], %23 {strides = array<i32>} : memref<308x128xbf16, #tpu.memory_space<vmem>>, vector<1x128xbf16>,
    %c137_41 = arith.constant 137 : index
    %c0_42 = arith.constant 0 : index
    %43 = vector.load %arg13[%c137_41, %c0_42] : memref<308x128xbf16, #tpu.memory_space<vmem>>, vector<1x128xbf16>
    tpu.vector_store %arg13[%c137_41, %c0_42], %23 {strides = array<i32>} : memref<308x128xbf16, #tpu.memory_space<vmem>>, vector<1x128xbf16>,
    %c154 = arith.constant 154 : index
    %c0_43 = arith.constant 0 : index
    %44 = vector.load %arg12[%c154, %c0_43] : memref<308x128xbf16, #tpu.memory_space<vmem>>, vector<1x128xbf16>
    tpu.vector_store %arg12[%c154, %c0_43], %23 {strides = array<i32>} : memref<308x128xbf16, #tpu.memory_space<vmem>>, vector<1x128xbf16>,
    %c154_44 = arith.constant 154 : index
    %c0_45 = arith.constant 0 : index
    %45 = vector.load %arg13[%c154_44, %c0_45] : memref<308x128xbf16, #tpu.memory_space<vmem>>, vector<1x128xbf16>
    tpu.vector_store %arg13[%c154_44, %c0_45], %23 {strides = array<i32>} : memref<308x128xbf16, #tpu.memory_space<vmem>>, vector<1x128xbf16>,
    %c171 = arith.constant 171 : index
    %c0_46 = arith.constant 0 : index
    %46 = vector.load %arg12[%c171, %c0_46] : memref<308x128xbf16, #tpu.memory_space<vmem>>, vector<1x128xbf16>
    tpu.vector_store %arg12[%c171, %c0_46], %23 {strides = array<i32>} : memref<308x128xbf16, #tpu.memory_space<vmem>>, vector<1x128xbf16>,
    %c171_47 = arith.constant 171 : index
    %c0_48 = arith.constant 0 : index
    %47 = vector.load %arg13[%c171_47, %c0_48] : memref<308x128xbf16, #tpu.memory_space<vmem>>, vector<1x128xbf16>
    tpu.vector_store %arg13[%c171_47, %c0_48], %23 {strides = array<i32>} : memref<308x128xbf16, #tpu.memory_space<vmem>>, vector<1x128xbf16>,
    %c188 = arith.constant 188 : index
    %c0_49 = arith.constant 0 : index
    %48 = vector.load %arg12[%c188, %c0_49] : memref<308x128xbf16, #tpu.memory_space<vmem>>, vector<1x128xbf16>
    tpu.vector_store %arg12[%c188, %c0_49], %23 {strides = array<i32>} : memref<308x128xbf16, #tpu.memory_space<vmem>>, vector<1x128xbf16>,
    %c188_50 = arith.constant 188 : index
    %c0_51 = arith.constant 0 : index
    %49 = vector.load %arg13[%c188_50, %c0_51] : memref<308x128xbf16, #tpu.memory_space<vmem>>, vector<1x128xbf16>
    tpu.vector_store %arg13[%c188_50, %c0_51], %23 {strides = array<i32>} : memref<308x128xbf16, #tpu.memory_space<vmem>>, vector<1x128xbf16>,
    %c205 = arith.constant 205 : index
    %c0_52 = arith.constant 0 : index
    %50 = vector.load %arg12[%c205, %c0_52] : memref<308x128xbf16, #tpu.memory_space<vmem>>, vector<1x128xbf16>
    tpu.vector_store %arg12[%c205, %c0_52], %23 {strides = array<i32>} : memref<308x128xbf16, #tpu.memory_space<vmem>>, vector<1x128xbf16>,
    %c205_53 = arith.constant 205 : index
    %c0_54 = arith.constant 0 : index
    %51 = vector.load %arg13[%c205_53, %c0_54] : memref<308x128xbf16, #tpu.memory_space<vmem>>, vector<1x128xbf16>
    tpu.vector_store %arg13[%c205_53, %c0_54], %23 {strides = array<i32>} : memref<308x128xbf16, #tpu.memory_space<vmem>>, vector<1x128xbf16>,
    %c222 = arith.constant 222 : index
    %c0_55 = arith.constant 0 : index
    %52 = vector.load %arg12[%c222, %c0_55] : memref<308x128xbf16, #tpu.memory_space<vmem>>, vector<1x128xbf16>
    tpu.vector_store %arg12[%c222, %c0_55], %23 {strides = array<i32>} : memref<308x128xbf16, #tpu.memory_space<vmem>>, vector<1x128xbf16>,
    %c222_56 = arith.constant 222 : index
    %c0_57 = arith.constant 0 : index
    %53 = vector.load %arg13[%c222_56, %c0_57] : memref<308x128xbf16, #tpu.memory_space<vmem>>, vector<1x128xbf16>
    tpu.vector_store %arg13[%c222_56, %c0_57], %23 {strides = array<i32>} : memref<308x128xbf16, #tpu.memory_space<vmem>>, vector<1x128xbf16>,
    %c239 = arith.constant 239 : index
    %c0_58 = arith.constant 0 : index
    %54 = vector.load %arg12[%c239, %c0_58] : memref<308x128xbf16, #tpu.memory_space<vmem>>, vector<1x128xbf16>
    tpu.vector_store %arg12[%c239, %c0_58], %23 {strides = array<i32>} : memref<308x128xbf16, #tpu.memory_space<vmem>>, vector<1x128xbf16>,
    %c239_59 = arith.constant 239 : index
    %c0_60 = arith.constant 0 : index
    %55 = vector.load %arg13[%c239_59, %c0_60] : memref<308x128xbf16, #tpu.memory_space<vmem>>, vector<1x128xbf16>
    tpu.vector_store %arg13[%c239_59, %c0_60], %23 {strides = array<i32>} : memref<308x128xbf16, #tpu.memory_space<vmem>>, vector<1x128xbf16>,
    %c256 = arith.constant 256 : index
    %c0_61 = arith.constant 0 : index
    %56 = vector.load %arg12[%c256, %c0_61] : memref<308x128xbf16, #tpu.memory_space<vmem>>, vector<1x128xbf16>
    tpu.vector_store %arg12[%c256, %c0_61], %23 {strides = array<i32>} : memref<308x128xbf16, #tpu.memory_space<vmem>>, vector<1x128xbf16>,
    %c256_62 = arith.constant 256 : index
    %c0_63 = arith.constant 0 : index
    %57 = vector.load %arg13[%c256_62, %c0_63] : memref<308x128xbf16, #tpu.memory_space<vmem>>, vector<1x128xbf16>
    tpu.vector_store %arg13[%c256_62, %c0_63], %23 {strides = array<i32>} : memref<308x128xbf16, #tpu.memory_space<vmem>>, vector<1x128xbf16>,
    %c273 = arith.constant 273 : index
    %c0_64 = arith.constant 0 : index
    %58 = vector.load %arg12[%c273, %c0_64] : memref<308x128xbf16, #tpu.memory_space<vmem>>, vector<1x128xbf16>
    tpu.vector_store %arg12[%c273, %c0_64], %23 {strides = array<i32>} : memref<308x128xbf16, #tpu.memory_space<vmem>>, vector<1x128xbf16>,
    %c273_65 = arith.constant 273 : index
    %c0_66 = arith.constant 0 : index
    %59 = vector.load %arg13[%c273_65, %c0_66] : memref<308x128xbf16, #tpu.memory_space<vmem>>, vector<1x128xbf16>
    tpu.vector_store %arg13[%c273_65, %c0_66], %23 {strides = array<i32>} : memref<308x128xbf16, #tpu.memory_space<vmem>>, vector<1x128xbf16>,
    %c290 = arith.constant 290 : index
    %c0_67 = arith.constant 0 : index
    %60 = vector.load %arg12[%c290, %c0_67] : memref<308x128xbf16, #tpu.memory_space<vmem>>, vector<1x128xbf16>
    tpu.vector_store %arg12[%c290, %c0_67], %23 {strides = array<i32>} : memref<308x128xbf16, #tpu.memory_space<vmem>>, vector<1x128xbf16>,
    %c290_68 = arith.constant 290 : index
    %c0_69 = arith.constant 0 : index
    %61 = vector.load %arg13[%c290_68, %c0_69] : memref<308x128xbf16, #tpu.memory_space<vmem>>, vector<1x128xbf16>
    tpu.vector_store %arg13[%c290_68, %c0_69], %23 {strides = array<i32>} : memref<308x128xbf16, #tpu.memory_space<vmem>>, vector<1x128xbf16>,
    %c307 = arith.constant 307 : index
    %c0_70 = arith.constant 0 : index
    %62 = vector.load %arg12[%c307, %c0_70] : memref<308x128xbf16, #tpu.memory_space<vmem>>, vector<1x128xbf16>
    tpu.vector_store %arg12[%c307, %c0_70], %23 {strides = array<i32>} : memref<308x128xbf16, #tpu.memory_space<vmem>>, vector<1x128xbf16>,
    %c307_71 = arith.constant 307 : index
    %c0_72 = arith.constant 0 : index
    %63 = vector.load %arg13[%c307_71, %c0_72] : memref<308x128xbf16, #tpu.memory_space<vmem>>, vector<1x128xbf16>
    tpu.vector_store %arg13[%c307_71, %c0_72], %23 {strides = array<i32>} : memref<308x128xbf16, #tpu.memory_space<vmem>>, vector<1x128xbf16>,
    %c0_73 = arith.constant 0 : index
    %c0_74 = arith.constant 0 : index
    %64 = vector.load %arg7[%c0_73, %c0_74] : memref<1x128xf32, #tpu.memory_space<vmem>>, vector<1x128xf32>
    %c0_i32 = arith.constant 0 : i32
    %65 = arith.cmpi sgt, %arg1, %c0_i32 : i32
    %66 = arith.extui %65 : i1 to i32
    %67 = arith.sitofp %66 : i32 to f32
    %68 = vector.broadcast %67 : f32 to vector<1x128xf32>
    %69 = arith.mulf %64, %68 : vector<1x128xf32>
    %70 = vector.extract_strided_slice %22 {offsets = [0, 256], sizes = [16, 128], strides = [1, 1]} : vector<160x512xf32> to vector<16x128xf32>
    %71 = vector.broadcast %69 : vector<1x128xf32> to vector<16x128xf32>
    %72 = arith.addf %70, %71 : vector<16x128xf32>
    %73 = arith.truncf %72 : vector<16x128xf32> to vector<16x128xbf16>
    %c2 = arith.constant 2 : index
    %c0_75 = arith.constant 0 : index
    %74 = vector.load %arg12[%c2, %c0_75] : memref<308x128xbf16, #tpu.memory_space<vmem>>, vector<16x128xbf16>
    tpu.vector_store %arg12[%c2, %c0_75], %73 {strides = array<i32>} : memref<308x128xbf16, #tpu.memory_space<vmem>>, vector<16x128xbf16>,
    %75 = vector.extract_strided_slice %22 {offsets = [0, 384], sizes = [16, 128], strides = [1, 1]} : vector<160x512xf32> to vector<16x128xf32>
    %76 = vector.broadcast %69 : vector<1x128xf32> to vector<16x128xf32>
    %77 = arith.addf %75, %76 : vector<16x128xf32>
    %78 = arith.truncf %77 : vector<16x128xf32> to vector<16x128xbf16>
    %c2_76 = arith.constant 2 : index
    %c0_77 = arith.constant 0 : index
    %79 = vector.load %arg13[%c2_76, %c0_77] : memref<308x128xbf16, #tpu.memory_space<vmem>>, vector<16x128xbf16>
    tpu.vector_store %arg13[%c2_76, %c0_77], %78 {strides = array<i32>} : memref<308x128xbf16, #tpu.memory_space<vmem>>, vector<16x128xbf16>,
    %80 = vector.extract_strided_slice %22 {offsets = [16, 0], sizes = [16, 128], strides = [1, 1]} : vector<160x512xf32> to vector<16x128xf32>
    %81 = vector.broadcast %64 : vector<1x128xf32> to vector<16x128xf32>
    %82 = arith.addf %80, %81 : vector<16x128xf32>
    %83 = arith.truncf %82 : vector<16x128xf32> to vector<16x128xbf16>
    %c19 = arith.constant 19 : index
    %c0_78 = arith.constant 0 : index
    %84 = vector.load %arg12[%c19, %c0_78] : memref<308x128xbf16, #tpu.memory_space<vmem>>, vector<16x128xbf16>
    tpu.vector_store %arg12[%c19, %c0_78], %83 {strides = array<i32>} : memref<308x128xbf16, #tpu.memory_space<vmem>>, vector<16x128xbf16>,
    %85 = vector.extract_strided_slice %22 {offsets = [16, 128], sizes = [16, 128], strides = [1, 1]} : vector<160x512xf32> to vector<16x128xf32>
    %86 = vector.broadcast %64 : vector<1x128xf32> to vector<16x128xf32>
    %87 = arith.addf %85, %86 : vector<16x128xf32>
    %88 = arith.truncf %87 : vector<16x128xf32> to vector<16x128xbf16>
    %c19_79 = arith.constant 19 : index
    %c0_80 = arith.constant 0 : index
    %89 = vector.load %arg13[%c19_79, %c0_80] : memref<308x128xbf16, #tpu.memory_space<vmem>>, vector<16x128xbf16>
    tpu.vector_store %arg13[%c19_79, %c0_80], %88 {strides = array<i32>} : memref<308x128xbf16, #tpu.memory_space<vmem>>, vector<16x128xbf16>,
    %90 = vector.extract_strided_slice %22 {offsets = [16, 256], sizes = [16, 128], strides = [1, 1]} : vector<160x512xf32> to vector<16x128xf32>
    %91 = vector.broadcast %64 : vector<1x128xf32> to vector<16x128xf32>
    %92 = arith.addf %90, %91 : vector<16x128xf32>
    %93 = arith.truncf %92 : vector<16x128xf32> to vector<16x128xbf16>
    %c36 = arith.constant 36 : index
    %c0_81 = arith.constant 0 : index
    %94 = vector.load %arg12[%c36, %c0_81] : memref<308x128xbf16, #tpu.memory_space<vmem>>, vector<16x128xbf16>
    tpu.vector_store %arg12[%c36, %c0_81], %93 {strides = array<i32>} : memref<308x128xbf16, #tpu.memory_space<vmem>>, vector<16x128xbf16>,
    %95 = vector.extract_strided_slice %22 {offsets = [16, 384], sizes = [16, 128], strides = [1, 1]} : vector<160x512xf32> to vector<16x128xf32>
    %96 = vector.broadcast %64 : vector<1x128xf32> to vector<16x128xf32>
    %97 = arith.addf %95, %96 : vector<16x128xf32>
    %98 = arith.truncf %97 : vector<16x128xf32> to vector<16x128xbf16>
    %c36_82 = arith.constant 36 : index
    %c0_83 = arith.constant 0 : index
    %99 = vector.load %arg13[%c36_82, %c0_83] : memref<308x128xbf16, #tpu.memory_space<vmem>>, vector<16x128xbf16>
    tpu.vector_store %arg13[%c36_82, %c0_83], %98 {strides = array<i32>} : memref<308x128xbf16, #tpu.memory_space<vmem>>, vector<16x128xbf16>,
    %100 = vector.extract_strided_slice %22 {offsets = [32, 0], sizes = [16, 128], strides = [1, 1]} : vector<160x512xf32> to vector<16x128xf32>
    %101 = vector.broadcast %64 : vector<1x128xf32> to vector<16x128xf32>
    %102 = arith.addf %100, %101 : vector<16x128xf32>
    %103 = arith.truncf %102 : vector<16x128xf32> to vector<16x128xbf16>
    %c53 = arith.constant 53 : index
    %c0_84 = arith.constant 0 : index
    %104 = vector.load %arg12[%c53, %c0_84] : memref<308x128xbf16, #tpu.memory_space<vmem>>, vector<16x128xbf16>
    tpu.vector_store %arg12[%c53, %c0_84], %103 {strides = array<i32>} : memref<308x128xbf16, #tpu.memory_space<vmem>>, vector<16x128xbf16>,
    %105 = vector.extract_strided_slice %22 {offsets = [32, 128], sizes = [16, 128], strides = [1, 1]} : vector<160x512xf32> to vector<16x128xf32>
    %106 = vector.broadcast %64 : vector<1x128xf32> to vector<16x128xf32>
    %107 = arith.addf %105, %106 : vector<16x128xf32>
    %108 = arith.truncf %107 : vector<16x128xf32> to vector<16x128xbf16>
    %c53_85 = arith.constant 53 : index
    %c0_86 = arith.constant 0 : index
    %109 = vector.load %arg13[%c53_85, %c0_86] : memref<308x128xbf16, #tpu.memory_space<vmem>>, vector<16x128xbf16>
    tpu.vector_store %arg13[%c53_85, %c0_86], %108 {strides = array<i32>} : memref<308x128xbf16, #tpu.memory_space<vmem>>, vector<16x128xbf16>,
    %110 = vector.extract_strided_slice %22 {offsets = [32, 256], sizes = [16, 128], strides = [1, 1]} : vector<160x512xf32> to vector<16x128xf32>
    %111 = vector.broadcast %64 : vector<1x128xf32> to vector<16x128xf32>
    %112 = arith.addf %110, %111 : vector<16x128xf32>
    %113 = arith.truncf %112 : vector<16x128xf32> to vector<16x128xbf16>
    %c70 = arith.constant 70 : index
    %c0_87 = arith.constant 0 : index
    %114 = vector.load %arg12[%c70, %c0_87] : memref<308x128xbf16, #tpu.memory_space<vmem>>, vector<16x128xbf16>
    tpu.vector_store %arg12[%c70, %c0_87], %113 {strides = array<i32>} : memref<308x128xbf16, #tpu.memory_space<vmem>>, vector<16x128xbf16>,
    %115 = vector.extract_strided_slice %22 {offsets = [32, 384], sizes = [16, 128], strides = [1, 1]} : vector<160x512xf32> to vector<16x128xf32>
    %116 = vector.broadcast %64 : vector<1x128xf32> to vector<16x128xf32>
    %117 = arith.addf %115, %116 : vector<16x128xf32>
    %118 = arith.truncf %117 : vector<16x128xf32> to vector<16x128xbf16>
    %c70_88 = arith.constant 70 : index
    %c0_89 = arith.constant 0 : index
    %119 = vector.load %arg13[%c70_88, %c0_89] : memref<308x128xbf16, #tpu.memory_space<vmem>>, vector<16x128xbf16>
    tpu.vector_store %arg13[%c70_88, %c0_89], %118 {strides = array<i32>} : memref<308x128xbf16, #tpu.memory_space<vmem>>, vector<16x128xbf16>,
    %120 = vector.extract_strided_slice %22 {offsets = [48, 0], sizes = [16, 128], strides = [1, 1]} : vector<160x512xf32> to vector<16x128xf32>
    %121 = vector.broadcast %64 : vector<1x128xf32> to vector<16x128xf32>
    %122 = arith.addf %120, %121 : vector<16x128xf32>
    %123 = arith.truncf %122 : vector<16x128xf32> to vector<16x128xbf16>
    %c87 = arith.constant 87 : index
    %c0_90 = arith.constant 0 : index
    %124 = vector.load %arg12[%c87, %c0_90] : memref<308x128xbf16, #tpu.memory_space<vmem>>, vector<16x128xbf16>
    tpu.vector_store %arg12[%c87, %c0_90], %123 {strides = array<i32>} : memref<308x128xbf16, #tpu.memory_space<vmem>>, vector<16x128xbf16>,
    %125 = vector.extract_strided_slice %22 {offsets = [48, 128], sizes = [16, 128], strides = [1, 1]} : vector<160x512xf32> to vector<16x128xf32>
    %126 = vector.broadcast %64 : vector<1x128xf32> to vector<16x128xf32>
    %127 = arith.addf %125, %126 : vector<16x128xf32>
    %128 = arith.truncf %127 : vector<16x128xf32> to vector<16x128xbf16>
    %c87_91 = arith.constant 87 : index
    %c0_92 = arith.constant 0 : index
    %129 = vector.load %arg13[%c87_91, %c0_92] : memref<308x128xbf16, #tpu.memory_space<vmem>>, vector<16x128xbf16>
    tpu.vector_store %arg13[%c87_91, %c0_92], %128 {strides = array<i32>} : memref<308x128xbf16, #tpu.memory_space<vmem>>, vector<16x128xbf16>,
    %130 = vector.extract_strided_slice %22 {offsets = [48, 256], sizes = [16, 128], strides = [1, 1]} : vector<160x512xf32> to vector<16x128xf32>
    %131 = vector.broadcast %64 : vector<1x128xf32> to vector<16x128xf32>
    %132 = arith.addf %130, %131 : vector<16x128xf32>
    %133 = arith.truncf %132 : vector<16x128xf32> to vector<16x128xbf16>
    %c104 = arith.constant 104 : index
    %c0_93 = arith.constant 0 : index
    %134 = vector.load %arg12[%c104, %c0_93] : memref<308x128xbf16, #tpu.memory_space<vmem>>, vector<16x128xbf16>
    tpu.vector_store %arg12[%c104, %c0_93], %133 {strides = array<i32>} : memref<308x128xbf16, #tpu.memory_space<vmem>>, vector<16x128xbf16>,
    %135 = vector.extract_strided_slice %22 {offsets = [48, 384], sizes = [16, 128], strides = [1, 1]} : vector<160x512xf32> to vector<16x128xf32>
    %136 = vector.broadcast %64 : vector<1x128xf32> to vector<16x128xf32>
    %137 = arith.addf %135, %136 : vector<16x128xf32>
    %138 = arith.truncf %137 : vector<16x128xf32> to vector<16x128xbf16>
    %c104_94 = arith.constant 104 : index
    %c0_95 = arith.constant 0 : index
    %139 = vector.load %arg13[%c104_94, %c0_95] : memref<308x128xbf16, #tpu.memory_space<vmem>>, vector<16x128xbf16>
    tpu.vector_store %arg13[%c104_94, %c0_95], %138 {strides = array<i32>} : memref<308x128xbf16, #tpu.memory_space<vmem>>, vector<16x128xbf16>,
    %140 = vector.extract_strided_slice %22 {offsets = [64, 0], sizes = [16, 128], strides = [1, 1]} : vector<160x512xf32> to vector<16x128xf32>
    %141 = vector.broadcast %64 : vector<1x128xf32> to vector<16x128xf32>
    %142 = arith.addf %140, %141 : vector<16x128xf32>
    %143 = arith.truncf %142 : vector<16x128xf32> to vector<16x128xbf16>
    %c121 = arith.constant 121 : index
    %c0_96 = arith.constant 0 : index
    %144 = vector.load %arg12[%c121, %c0_96] : memref<308x128xbf16, #tpu.memory_space<vmem>>, vector<16x128xbf16>
    tpu.vector_store %arg12[%c121, %c0_96], %143 {strides = array<i32>} : memref<308x128xbf16, #tpu.memory_space<vmem>>, vector<16x128xbf16>,
    %145 = vector.extract_strided_slice %22 {offsets = [64, 128], sizes = [16, 128], strides = [1, 1]} : vector<160x512xf32> to vector<16x128xf32>
    %146 = vector.broadcast %64 : vector<1x128xf32> to vector<16x128xf32>
    %147 = arith.addf %145, %146 : vector<16x128xf32>
    %148 = arith.truncf %147 : vector<16x128xf32> to vector<16x128xbf16>
    %c121_97 = arith.constant 121 : index
    %c0_98 = arith.constant 0 : index
    %149 = vector.load %arg13[%c121_97, %c0_98] : memref<308x128xbf16, #tpu.memory_space<vmem>>, vector<16x128xbf16>
    tpu.vector_store %arg13[%c121_97, %c0_98], %148 {strides = array<i32>} : memref<308x128xbf16, #tpu.memory_space<vmem>>, vector<16x128xbf16>,
    %150 = vector.extract_strided_slice %22 {offsets = [64, 256], sizes = [16, 128], strides = [1, 1]} : vector<160x512xf32> to vector<16x128xf32>
    %151 = vector.broadcast %64 : vector<1x128xf32> to vector<16x128xf32>
    %152 = arith.addf %150, %151 : vector<16x128xf32>
    %153 = arith.truncf %152 : vector<16x128xf32> to vector<16x128xbf16>
    %c138 = arith.constant 138 : index
    %c0_99 = arith.constant 0 : index
    %154 = vector.load %arg12[%c138, %c0_99] : memref<308x128xbf16, #tpu.memory_space<vmem>>, vector<16x128xbf16>
    tpu.vector_store %arg12[%c138, %c0_99], %153 {strides = array<i32>} : memref<308x128xbf16, #tpu.memory_space<vmem>>, vector<16x128xbf16>,
    %155 = vector.extract_strided_slice %22 {offsets = [64, 384], sizes = [16, 128], strides = [1, 1]} : vector<160x512xf32> to vector<16x128xf32>
    %156 = vector.broadcast %64 : vector<1x128xf32> to vector<16x128xf32>
    %157 = arith.addf %155, %156 : vector<16x128xf32>
    %158 = arith.truncf %157 : vector<16x128xf32> to vector<16x128xbf16>
    %c138_100 = arith.constant 138 : index
    %c0_101 = arith.constant 0 : index
    %159 = vector.load %arg13[%c138_100, %c0_101] : memref<308x128xbf16, #tpu.memory_space<vmem>>, vector<16x128xbf16>
    tpu.vector_store %arg13[%c138_100, %c0_101], %158 {strides = array<i32>} : memref<308x128xbf16, #tpu.memory_space<vmem>>, vector<16x128xbf16>,
    %160 = vector.extract_strided_slice %22 {offsets = [80, 0], sizes = [16, 128], strides = [1, 1]} : vector<160x512xf32> to vector<16x128xf32>
    %161 = vector.broadcast %64 : vector<1x128xf32> to vector<16x128xf32>
    %162 = arith.addf %160, %161 : vector<16x128xf32>
    %163 = arith.truncf %162 : vector<16x128xf32> to vector<16x128xbf16>
    %c155 = arith.constant 155 : index
    %c0_102 = arith.constant 0 : index
    %164 = vector.load %arg12[%c155, %c0_102] : memref<308x128xbf16, #tpu.memory_space<vmem>>, vector<16x128xbf16>
    tpu.vector_store %arg12[%c155, %c0_102], %163 {strides = array<i32>} : memref<308x128xbf16, #tpu.memory_space<vmem>>, vector<16x128xbf16>,
    %165 = vector.extract_strided_slice %22 {offsets = [80, 128], sizes = [16, 128], strides = [1, 1]} : vector<160x512xf32> to vector<16x128xf32>
    %166 = vector.broadcast %64 : vector<1x128xf32> to vector<16x128xf32>
    %167 = arith.addf %165, %166 : vector<16x128xf32>
    %168 = arith.truncf %167 : vector<16x128xf32> to vector<16x128xbf16>
    %c155_103 = arith.constant 155 : index
    %c0_104 = arith.constant 0 : index
    %169 = vector.load %arg13[%c155_103, %c0_104] : memref<308x128xbf16, #tpu.memory_space<vmem>>, vector<16x128xbf16>
    tpu.vector_store %arg13[%c155_103, %c0_104], %168 {strides = array<i32>} : memref<308x128xbf16, #tpu.memory_space<vmem>>, vector<16x128xbf16>,
    %170 = vector.extract_strided_slice %22 {offsets = [80, 256], sizes = [16, 128], strides = [1, 1]} : vector<160x512xf32> to vector<16x128xf32>
    %171 = vector.broadcast %64 : vector<1x128xf32> to vector<16x128xf32>
    %172 = arith.addf %170, %171 : vector<16x128xf32>
    %173 = arith.truncf %172 : vector<16x128xf32> to vector<16x128xbf16>
    %c172 = arith.constant 172 : index
    %c0_105 = arith.constant 0 : index
    %174 = vector.load %arg12[%c172, %c0_105] : memref<308x128xbf16, #tpu.memory_space<vmem>>, vector<16x128xbf16>
    tpu.vector_store %arg12[%c172, %c0_105], %173 {strides = array<i32>} : memref<308x128xbf16, #tpu.memory_space<vmem>>, vector<16x128xbf16>,
    %175 = vector.extract_strided_slice %22 {offsets = [80, 384], sizes = [16, 128], strides = [1, 1]} : vector<160x512xf32> to vector<16x128xf32>
    %176 = vector.broadcast %64 : vector<1x128xf32> to vector<16x128xf32>
    %177 = arith.addf %175, %176 : vector<16x128xf32>
    %178 = arith.truncf %177 : vector<16x128xf32> to vector<16x128xbf16>
    %c172_106 = arith.constant 172 : index
    %c0_107 = arith.constant 0 : index
    %179 = vector.load %arg13[%c172_106, %c0_107] : memref<308x128xbf16, #tpu.memory_space<vmem>>, vector<16x128xbf16>
    tpu.vector_store %arg13[%c172_106, %c0_107], %178 {strides = array<i32>} : memref<308x128xbf16, #tpu.memory_space<vmem>>, vector<16x128xbf16>,
    %180 = vector.extract_strided_slice %22 {offsets = [96, 0], sizes = [16, 128], strides = [1, 1]} : vector<160x512xf32> to vector<16x128xf32>
    %181 = vector.broadcast %64 : vector<1x128xf32> to vector<16x128xf32>
    %182 = arith.addf %180, %181 : vector<16x128xf32>
    %183 = arith.truncf %182 : vector<16x128xf32> to vector<16x128xbf16>
    %c189 = arith.constant 189 : index
    %c0_108 = arith.constant 0 : index
    %184 = vector.load %arg12[%c189, %c0_108] : memref<308x128xbf16, #tpu.memory_space<vmem>>, vector<16x128xbf16>
    tpu.vector_store %arg12[%c189, %c0_108], %183 {strides = array<i32>} : memref<308x128xbf16, #tpu.memory_space<vmem>>, vector<16x128xbf16>,
    %185 = vector.extract_strided_slice %22 {offsets = [96, 128], sizes = [16, 128], strides = [1, 1]} : vector<160x512xf32> to vector<16x128xf32>
    %186 = vector.broadcast %64 : vector<1x128xf32> to vector<16x128xf32>
    %187 = arith.addf %185, %186 : vector<16x128xf32>
    %188 = arith.truncf %187 : vector<16x128xf32> to vector<16x128xbf16>
    %c189_109 = arith.constant 189 : index
    %c0_110 = arith.constant 0 : index
    %189 = vector.load %arg13[%c189_109, %c0_110] : memref<308x128xbf16, #tpu.memory_space<vmem>>, vector<16x128xbf16>
    tpu.vector_store %arg13[%c189_109, %c0_110], %188 {strides = array<i32>} : memref<308x128xbf16, #tpu.memory_space<vmem>>, vector<16x128xbf16>,
    %190 = vector.extract_strided_slice %22 {offsets = [96, 256], sizes = [16, 128], strides = [1, 1]} : vector<160x512xf32> to vector<16x128xf32>
    %191 = vector.broadcast %64 : vector<1x128xf32> to vector<16x128xf32>
    %192 = arith.addf %190, %191 : vector<16x128xf32>
    %193 = arith.truncf %192 : vector<16x128xf32> to vector<16x128xbf16>
    %c206 = arith.constant 206 : index
    %c0_111 = arith.constant 0 : index
    %194 = vector.load %arg12[%c206, %c0_111] : memref<308x128xbf16, #tpu.memory_space<vmem>>, vector<16x128xbf16>
    tpu.vector_store %arg12[%c206, %c0_111], %193 {strides = array<i32>} : memref<308x128xbf16, #tpu.memory_space<vmem>>, vector<16x128xbf16>,
    %195 = vector.extract_strided_slice %22 {offsets = [96, 384], sizes = [16, 128], strides = [1, 1]} : vector<160x512xf32> to vector<16x128xf32>
    %196 = vector.broadcast %64 : vector<1x128xf32> to vector<16x128xf32>
    %197 = arith.addf %195, %196 : vector<16x128xf32>
    %198 = arith.truncf %197 : vector<16x128xf32> to vector<16x128xbf16>
    %c206_112 = arith.constant 206 : index
    %c0_113 = arith.constant 0 : index
    %199 = vector.load %arg13[%c206_112, %c0_113] : memref<308x128xbf16, #tpu.memory_space<vmem>>, vector<16x128xbf16>
    tpu.vector_store %arg13[%c206_112, %c0_113], %198 {strides = array<i32>} : memref<308x128xbf16, #tpu.memory_space<vmem>>, vector<16x128xbf16>,
    %200 = vector.extract_strided_slice %22 {offsets = [112, 0], sizes = [16, 128], strides = [1, 1]} : vector<160x512xf32> to vector<16x128xf32>
    %201 = vector.broadcast %64 : vector<1x128xf32> to vector<16x128xf32>
    %202 = arith.addf %200, %201 : vector<16x128xf32>
    %203 = arith.truncf %202 : vector<16x128xf32> to vector<16x128xbf16>
    %c223 = arith.constant 223 : index
    %c0_114 = arith.constant 0 : index
    %204 = vector.load %arg12[%c223, %c0_114] : memref<308x128xbf16, #tpu.memory_space<vmem>>, vector<16x128xbf16>
    tpu.vector_store %arg12[%c223, %c0_114], %203 {strides = array<i32>} : memref<308x128xbf16, #tpu.memory_space<vmem>>, vector<16x128xbf16>,
    %205 = vector.extract_strided_slice %22 {offsets = [112, 128], sizes = [16, 128], strides = [1, 1]} : vector<160x512xf32> to vector<16x128xf32>
    %206 = vector.broadcast %64 : vector<1x128xf32> to vector<16x128xf32>
    %207 = arith.addf %205, %206 : vector<16x128xf32>
    %208 = arith.truncf %207 : vector<16x128xf32> to vector<16x128xbf16>
    %c223_115 = arith.constant 223 : index
    %c0_116 = arith.constant 0 : index
    %209 = vector.load %arg13[%c223_115, %c0_116] : memref<308x128xbf16, #tpu.memory_space<vmem>>, vector<16x128xbf16>
    tpu.vector_store %arg13[%c223_115, %c0_116], %208 {strides = array<i32>} : memref<308x128xbf16, #tpu.memory_space<vmem>>, vector<16x128xbf16>,
    %210 = vector.extract_strided_slice %22 {offsets = [112, 256], sizes = [16, 128], strides = [1, 1]} : vector<160x512xf32> to vector<16x128xf32>
    %211 = vector.broadcast %64 : vector<1x128xf32> to vector<16x128xf32>
    %212 = arith.addf %210, %211 : vector<16x128xf32>
    %213 = arith.truncf %212 : vector<16x128xf32> to vector<16x128xbf16>
    %c240 = arith.constant 240 : index
    %c0_117 = arith.constant 0 : index
    %214 = vector.load %arg12[%c240, %c0_117] : memref<308x128xbf16, #tpu.memory_space<vmem>>, vector<16x128xbf16>
    tpu.vector_store %arg12[%c240, %c0_117], %213 {strides = array<i32>} : memref<308x128xbf16, #tpu.memory_space<vmem>>, vector<16x128xbf16>,
    %215 = vector.extract_strided_slice %22 {offsets = [112, 384], sizes = [16, 128], strides = [1, 1]} : vector<160x512xf32> to vector<16x128xf32>
    %216 = vector.broadcast %64 : vector<1x128xf32> to vector<16x128xf32>
    %217 = arith.addf %215, %216 : vector<16x128xf32>
    %218 = arith.truncf %217 : vector<16x128xf32> to vector<16x128xbf16>
    %c240_118 = arith.constant 240 : index
    %c0_119 = arith.constant 0 : index
    %219 = vector.load %arg13[%c240_118, %c0_119] : memref<308x128xbf16, #tpu.memory_space<vmem>>, vector<16x128xbf16>
    tpu.vector_store %arg13[%c240_118, %c0_119], %218 {strides = array<i32>} : memref<308x128xbf16, #tpu.memory_space<vmem>>, vector<16x128xbf16>,
    %220 = vector.extract_strided_slice %22 {offsets = [128, 0], sizes = [16, 128], strides = [1, 1]} : vector<160x512xf32> to vector<16x128xf32>
    %221 = vector.broadcast %64 : vector<1x128xf32> to vector<16x128xf32>
    %222 = arith.addf %220, %221 : vector<16x128xf32>
    %223 = arith.truncf %222 : vector<16x128xf32> to vector<16x128xbf16>
    %c257 = arith.constant 257 : index
    %c0_120 = arith.constant 0 : index
    %224 = vector.load %arg12[%c257, %c0_120] : memref<308x128xbf16, #tpu.memory_space<vmem>>, vector<16x128xbf16>
    tpu.vector_store %arg12[%c257, %c0_120], %223 {strides = array<i32>} : memref<308x128xbf16, #tpu.memory_space<vmem>>, vector<16x128xbf16>,
    %225 = vector.extract_strided_slice %22 {offsets = [128, 128], sizes = [16, 128], strides = [1, 1]} : vector<160x512xf32> to vector<16x128xf32>
    %226 = vector.broadcast %64 : vector<1x128xf32> to vector<16x128xf32>
    %227 = arith.addf %225, %226 : vector<16x128xf32>
    %228 = arith.truncf %227 : vector<16x128xf32> to vector<16x128xbf16>
    %c257_121 = arith.constant 257 : index
    %c0_122 = arith.constant 0 : index
    %229 = vector.load %arg13[%c257_121, %c0_122] : memref<308x128xbf16, #tpu.memory_space<vmem>>, vector<16x128xbf16>
    tpu.vector_store %arg13[%c257_121, %c0_122], %228 {strides = array<i32>} : memref<308x128xbf16, #tpu.memory_space<vmem>>, vector<16x128xbf16>,
    %230 = vector.extract_strided_slice %22 {offsets = [128, 256], sizes = [16, 128], strides = [1, 1]} : vector<160x512xf32> to vector<16x128xf32>
    %231 = vector.broadcast %64 : vector<1x128xf32> to vector<16x128xf32>
    %232 = arith.addf %230, %231 : vector<16x128xf32>
    %233 = arith.truncf %232 : vector<16x128xf32> to vector<16x128xbf16>
    %c274 = arith.constant 274 : index
    %c0_123 = arith.constant 0 : index
    %234 = vector.load %arg12[%c274, %c0_123] : memref<308x128xbf16, #tpu.memory_space<vmem>>, vector<16x128xbf16>
    tpu.vector_store %arg12[%c274, %c0_123], %233 {strides = array<i32>} : memref<308x128xbf16, #tpu.memory_space<vmem>>, vector<16x128xbf16>,
    %235 = vector.extract_strided_slice %22 {offsets = [128, 384], sizes = [16, 128], strides = [1, 1]} : vector<160x512xf32> to vector<16x128xf32>
    %236 = vector.broadcast %64 : vector<1x128xf32> to vector<16x128xf32>
    %237 = arith.addf %235, %236 : vector<16x128xf32>
    %238 = arith.truncf %237 : vector<16x128xf32> to vector<16x128xbf16>
    %c274_124 = arith.constant 274 : index
    %c0_125 = arith.constant 0 : index
    %239 = vector.load %arg13[%c274_124, %c0_125] : memref<308x128xbf16, #tpu.memory_space<vmem>>, vector<16x128xbf16>
    tpu.vector_store %arg13[%c274_124, %c0_125], %238 {strides = array<i32>} : memref<308x128xbf16, #tpu.memory_space<vmem>>, vector<16x128xbf16>,
    %c1_i32 = arith.constant 1 : i32
    %240 = arith.cmpi slt, %arg1, %c1_i32 : i32
    %241 = arith.extui %240 : i1 to i32
    %242 = arith.sitofp %241 : i32 to f32
    %243 = vector.broadcast %242 : f32 to vector<1x128xf32>
    %244 = arith.mulf %64, %243 : vector<1x128xf32>
    %245 = vector.extract_strided_slice %22 {offsets = [144, 0], sizes = [16, 128], strides = [1, 1]} : vector<160x512xf32> to vector<16x128xf32>
    %246 = vector.broadcast %244 : vector<1x128xf32> to vector<16x128xf32>
    %247 = arith.addf %245, %246 : vector<16x128xf32>
    %248 = arith.truncf %247 : vector<16x128xf32> to vector<16x128xbf16>
    %c291 = arith.constant 291 : index
    %c0_126 = arith.constant 0 : index
    %249 = vector.load %arg12[%c291, %c0_126] : memref<308x128xbf16, #tpu.memory_space<vmem>>, vector<16x128xbf16>
    tpu.vector_store %arg12[%c291, %c0_126], %248 {strides = array<i32>} : memref<308x128xbf16, #tpu.memory_space<vmem>>, vector<16x128xbf16>,
    %250 = vector.extract_strided_slice %22 {offsets = [144, 128], sizes = [16, 128], strides = [1, 1]} : vector<160x512xf32> to vector<16x128xf32>
    %251 = vector.broadcast %244 : vector<1x128xf32> to vector<16x128xf32>
    %252 = arith.addf %250, %251 : vector<16x128xf32>
    %253 = arith.truncf %252 : vector<16x128xf32> to vector<16x128xbf16>
    %c291_127 = arith.constant 291 : index
    %c0_128 = arith.constant 0 : index
    %254 = vector.load %arg13[%c291_127, %c0_128] : memref<308x128xbf16, #tpu.memory_space<vmem>>, vector<16x128xbf16>
    tpu.vector_store %arg13[%c291_127, %c0_128], %253 {strides = array<i32>} : memref<308x128xbf16, #tpu.memory_space<vmem>>, vector<16x128xbf16>,
    %c0_129 = arith.constant 0 : index
    %c0_130 = arith.constant 0 : index
    %255 = vector.load %arg10[%c0_129, %c0_130] : memref<1x128xf32, #tpu.memory_space<vmem>>, vector<1x128xf32>
    %cst_131 = arith.constant 0.000000e+00 : f32
    %256 = vector.broadcast %cst_131 : f32 to vector<272x128xf32>
    %257 = vector.broadcast %255 : vector<1x128xf32> to vector<272x128xf32>
    %258 = arith.addf %256, %257 : vector<272x128xf32>
    %cst_132 = arith.constant 0.000000e+00 : f32
    %259 = vector.broadcast %cst_132 : f32 to vector<272x128xf32>
    %260 = vector.broadcast %255 : vector<1x128xf32> to vector<272x128xf32>
    %261 = arith.addf %259, %260 : vector<272x128xf32>
    %c0_133 = arith.constant 0 : index
    %c0_134 = arith.constant 0 : index
    %c0_135 = arith.constant 0 : index
    %262 = vector.load %arg8[%c0_133, %c0_134, %c0_135] : memref<3x128x256xbf16, #tpu.memory_space<vmem>>, vector<1x128x256xbf16>
    %263 = vector.shape_cast %262 : vector<1x128x256xbf16> to vector<128x256xbf16>
    %c0_136 = arith.constant 0 : index
    %c0_137 = arith.constant 0 : index
    %c0_138 = arith.constant 0 : index
    %264 = vector.load %arg9[%c0_136, %c0_137, %c0_138] : memref<3x128x256xbf16, #tpu.memory_space<vmem>>, vector<1x128x256xbf16>
    %265 = vector.shape_cast %264 : vector<1x128x256xbf16> to vector<128x256xbf16>
    %c1_139 = arith.constant 1 : index
    %c0_140 = arith.constant 0 : index
    %266 = vector.load %arg12[%c1_139, %c0_140] : memref<308x128xbf16, #tpu.memory_space<vmem>>, vector<272x128xbf16>
    %cst_141 = arith.constant dense<0.000000e+00> : vector<272x256xf32>
    %267 = tpu.matmul %266, %263, %cst_141 {dimension_numbers = #tpu.dot_dimension_numbers<[1], [0], [0], [1], [0, 0, 1, 1], [], []>} : vector<272x128xbf16>, vector<128x256xbf16>, vector<272x256xf32> -> vector<272x256xf32>
    %268 = vector.extract_strided_slice %267 {offsets = [0, 0], sizes = [272, 128], strides = [1, 1]} : vector<272x256xf32> to vector<272x128xf32>
    %269 = arith.addf %258, %268 : vector<272x128xf32>
    %270 = vector.extract_strided_slice %267 {offsets = [0, 128], sizes = [272, 128], strides = [1, 1]} : vector<272x256xf32> to vector<272x128xf32>
    %271 = arith.addf %261, %270 : vector<272x128xf32>
    %c1_142 = arith.constant 1 : index
    %c0_143 = arith.constant 0 : index
    %272 = vector.load %arg13[%c1_142, %c0_143] : memref<308x128xbf16, #tpu.memory_space<vmem>>, vector<272x128xbf16>
    %cst_144 = arith.constant dense<0.000000e+00> : vector<272x256xf32>
    %273 = tpu.matmul %272, %265, %cst_144 {dimension_numbers = #tpu.dot_dimension_numbers<[1], [0], [0], [1], [0, 0, 1, 1], [], []>} : vector<272x128xbf16>, vector<128x256xbf16>, vector<272x256xf32> -> vector<272x256xf32>
    %274 = vector.extract_strided_slice %273 {offsets = [0, 0], sizes = [272, 128], strides = [1, 1]} : vector<272x256xf32> to vector<272x128xf32>
    %275 = arith.addf %269, %274 : vector<272x128xf32>
    %276 = vector.extract_strided_slice %273 {offsets = [0, 128], sizes = [272, 128], strides = [1, 1]} : vector<272x256xf32> to vector<272x128xf32>
    %277 = arith.addf %271, %276 : vector<272x128xf32>
    %c0_145 = arith.constant 0 : index
    %c0_146 = arith.constant 0 : index
    %278 = vector.load %arg13[%c0_145, %c0_146] : memref<308x128xbf16, #tpu.memory_space<vmem>>, vector<272x128xbf16>
    %279 = vector.extract_strided_slice %263 {offsets = [0, 128], sizes = [128, 128], strides = [1, 1]} : vector<128x256xbf16> to vector<128x128xbf16>
    %cst_147 = arith.constant dense<0.000000e+00> : vector<272x128xf32>
    %280 = tpu.matmul %278, %279, %cst_147 {dimension_numbers = #tpu.dot_dimension_numbers<[1], [0], [0], [1], [0, 0, 1, 1], [], []>} : vector<272x128xbf16>, vector<128x128xbf16>, vector<272x128xf32> -> vector<272x128xf32>
    %281 = arith.addf %275, %280 : vector<272x128xf32>
    %c2_148 = arith.constant 2 : index
    %c0_149 = arith.constant 0 : index
    %282 = vector.load %arg12[%c2_148, %c0_149] : memref<308x128xbf16, #tpu.memory_space<vmem>>, vector<272x128xbf16>
    %283 = vector.extract_strided_slice %265 {offsets = [0, 0], sizes = [128, 128], strides = [1, 1]} : vector<128x256xbf16> to vector<128x128xbf16>
    %cst_150 = arith.constant dense<0.000000e+00> : vector<272x128xf32>
    %284 = tpu.matmul %282, %283, %cst_150 {dimension_numbers = #tpu.dot_dimension_numbers<[1], [0], [0], [1], [0, 0, 1, 1], [], []>} : vector<272x128xbf16>, vector<128x128xbf16>, vector<272x128xf32> -> vector<272x128xf32>
    %285 = arith.addf %277, %284 : vector<272x128xf32>
    %c1_151 = arith.constant 1 : index
    %c0_152 = arith.constant 0 : index
    %c0_153 = arith.constant 0 : index
    %286 = vector.load %arg8[%c1_151, %c0_152, %c0_153] : memref<3x128x256xbf16, #tpu.memory_space<vmem>>, vector<1x128x256xbf16>
    %287 = vector.shape_cast %286 : vector<1x128x256xbf16> to vector<128x256xbf16>
    %c1_154 = arith.constant 1 : index
    %c0_155 = arith.constant 0 : index
    %c0_156 = arith.constant 0 : index
    %288 = vector.load %arg9[%c1_154, %c0_155, %c0_156] : memref<3x128x256xbf16, #tpu.memory_space<vmem>>, vector<1x128x256xbf16>
    %289 = vector.shape_cast %288 : vector<1x128x256xbf16> to vector<128x256xbf16>
    %c18_157 = arith.constant 18 : index
    %c0_158 = arith.constant 0 : index
    %290 = vector.load %arg12[%c18_157, %c0_158] : memref<308x128xbf16, #tpu.memory_space<vmem>>, vector<272x128xbf16>
    %cst_159 = arith.constant dense<0.000000e+00> : vector<272x256xf32>
    %291 = tpu.matmul %290, %287, %cst_159 {dimension_numbers = #tpu.dot_dimension_numbers<[1], [0], [0], [1], [0, 0, 1, 1], [], []>} : vector<272x128xbf16>, vector<128x256xbf16>, vector<272x256xf32> -> vector<272x256xf32>
    %292 = vector.extract_strided_slice %291 {offsets = [0, 0], sizes = [272, 128], strides = [1, 1]} : vector<272x256xf32> to vector<272x128xf32>
    %293 = arith.addf %281, %292 : vector<272x128xf32>
    %294 = vector.extract_strided_slice %291 {offsets = [0, 128], sizes = [272, 128], strides = [1, 1]} : vector<272x256xf32> to vector<272x128xf32>
    %295 = arith.addf %285, %294 : vector<272x128xf32>
    %c18_160 = arith.constant 18 : index
    %c0_161 = arith.constant 0 : index
    %296 = vector.load %arg13[%c18_160, %c0_161] : memref<308x128xbf16, #tpu.memory_space<vmem>>, vector<272x128xbf16>
    %cst_162 = arith.constant dense<0.000000e+00> : vector<272x256xf32>
    %297 = tpu.matmul %296, %289, %cst_162 {dimension_numbers = #tpu.dot_dimension_numbers<[1], [0], [0], [1], [0, 0, 1, 1], [], []>} : vector<272x128xbf16>, vector<128x256xbf16>, vector<272x256xf32> -> vector<272x256xf32>
    %298 = vector.extract_strided_slice %297 {offsets = [0, 0], sizes = [272, 128], strides = [1, 1]} : vector<272x256xf32> to vector<272x128xf32>
    %299 = arith.addf %293, %298 : vector<272x128xf32>
    %300 = vector.extract_strided_slice %297 {offsets = [0, 128], sizes = [272, 128], strides = [1, 1]} : vector<272x256xf32> to vector<272x128xf32>
    %301 = arith.addf %295, %300 : vector<272x128xf32>
    %c17 = arith.constant 17 : index
    %c0_163 = arith.constant 0 : index
    %302 = vector.load %arg13[%c17, %c0_163] : memref<308x128xbf16, #tpu.memory_space<vmem>>, vector<272x128xbf16>
    %303 = vector.extract_strided_slice %287 {offsets = [0, 128], sizes = [128, 128], strides = [1, 1]} : vector<128x256xbf16> to vector<128x128xbf16>
    %cst_164 = arith.constant dense<0.000000e+00> : vector<272x128xf32>
    %304 = tpu.matmul %302, %303, %cst_164 {dimension_numbers = #tpu.dot_dimension_numbers<[1], [0], [0], [1], [0, 0, 1, 1], [], []>} : vector<272x128xbf16>, vector<128x128xbf16>, vector<272x128xf32> -> vector<272x128xf32>
    %305 = arith.addf %299, %304 : vector<272x128xf32>
    %c19_165 = arith.constant 19 : index
    %c0_166 = arith.constant 0 : index
    %306 = vector.load %arg12[%c19_165, %c0_166] : memref<308x128xbf16, #tpu.memory_space<vmem>>, vector<272x128xbf16>
    %307 = vector.extract_strided_slice %289 {offsets = [0, 0], sizes = [128, 128], strides = [1, 1]} : vector<128x256xbf16> to vector<128x128xbf16>
    %cst_167 = arith.constant dense<0.000000e+00> : vector<272x128xf32>
    %308 = tpu.matmul %306, %307, %cst_167 {dimension_numbers = #tpu.dot_dimension_numbers<[1], [0], [0], [1], [0, 0, 1, 1], [], []>} : vector<272x128xbf16>, vector<128x128xbf16>, vector<272x128xf32> -> vector<272x128xf32>
    %309 = arith.addf %301, %308 : vector<272x128xf32>
    %c2_168 = arith.constant 2 : index
    %c0_169 = arith.constant 0 : index
    %c0_170 = arith.constant 0 : index
    %310 = vector.load %arg8[%c2_168, %c0_169, %c0_170] : memref<3x128x256xbf16, #tpu.memory_space<vmem>>, vector<1x128x256xbf16>
    %311 = vector.shape_cast %310 : vector<1x128x256xbf16> to vector<128x256xbf16>
    %c2_171 = arith.constant 2 : index
    %c0_172 = arith.constant 0 : index
    %c0_173 = arith.constant 0 : index
    %312 = vector.load %arg9[%c2_171, %c0_172, %c0_173] : memref<3x128x256xbf16, #tpu.memory_space<vmem>>, vector<1x128x256xbf16>
    %313 = vector.shape_cast %312 : vector<1x128x256xbf16> to vector<128x256xbf16>
    %c35_174 = arith.constant 35 : index
    %c0_175 = arith.constant 0 : index
    %314 = vector.load %arg12[%c35_174, %c0_175] : memref<308x128xbf16, #tpu.memory_space<vmem>>, vector<272x128xbf16>
    %cst_176 = arith.constant dense<0.000000e+00> : vector<272x256xf32>
    %315 = tpu.matmul %314, %311, %cst_176 {dimension_numbers = #tpu.dot_dimension_numbers<[1], [0], [0], [1], [0, 0, 1, 1], [], []>} : vector<272x128xbf16>, vector<128x256xbf16>, vector<272x256xf32> -> vector<272x256xf32>
    %316 = vector.extract_strided_slice %315 {offsets = [0, 0], sizes = [272, 128], strides = [1, 1]} : vector<272x256xf32> to vector<272x128xf32>
    %317 = arith.addf %305, %316 : vector<272x128xf32>
    %318 = vector.extract_strided_slice %315 {offsets = [0, 128], sizes = [272, 128], strides = [1, 1]} : vector<272x256xf32> to vector<272x128xf32>
    %319 = arith.addf %309, %318 : vector<272x128xf32>
    %c35_177 = arith.constant 35 : index
    %c0_178 = arith.constant 0 : index
    %320 = vector.load %arg13[%c35_177, %c0_178] : memref<308x128xbf16, #tpu.memory_space<vmem>>, vector<272x128xbf16>
    %cst_179 = arith.constant dense<0.000000e+00> : vector<272x256xf32>
    %321 = tpu.matmul %320, %313, %cst_179 {dimension_numbers = #tpu.dot_dimension_numbers<[1], [0], [0], [1], [0, 0, 1, 1], [], []>} : vector<272x128xbf16>, vector<128x256xbf16>, vector<272x256xf32> -> vector<272x256xf32>
    %322 = vector.extract_strided_slice %321 {offsets = [0, 0], sizes = [272, 128], strides = [1, 1]} : vector<272x256xf32> to vector<272x128xf32>
    %323 = arith.addf %317, %322 : vector<272x128xf32>
    %324 = vector.extract_strided_slice %321 {offsets = [0, 128], sizes = [272, 128], strides = [1, 1]} : vector<272x256xf32> to vector<272x128xf32>
    %325 = arith.addf %319, %324 : vector<272x128xf32>
    %c34 = arith.constant 34 : index
    %c0_180 = arith.constant 0 : index
    %326 = vector.load %arg13[%c34, %c0_180] : memref<308x128xbf16, #tpu.memory_space<vmem>>, vector<272x128xbf16>
    %327 = vector.extract_strided_slice %311 {offsets = [0, 128], sizes = [128, 128], strides = [1, 1]} : vector<128x256xbf16> to vector<128x128xbf16>
    %cst_181 = arith.constant dense<0.000000e+00> : vector<272x128xf32>
    %328 = tpu.matmul %326, %327, %cst_181 {dimension_numbers = #tpu.dot_dimension_numbers<[1], [0], [0], [1], [0, 0, 1, 1], [], []>} : vector<272x128xbf16>, vector<128x128xbf16>, vector<272x128xf32> -> vector<272x128xf32>
    %329 = arith.addf %323, %328 : vector<272x128xf32>
    %c36_182 = arith.constant 36 : index
    %c0_183 = arith.constant 0 : index
    %330 = vector.load %arg12[%c36_182, %c0_183] : memref<308x128xbf16, #tpu.memory_space<vmem>>, vector<272x128xbf16>
    %331 = vector.extract_strided_slice %313 {offsets = [0, 0], sizes = [128, 128], strides = [1, 1]} : vector<128x256xbf16> to vector<128x128xbf16>
    %cst_184 = arith.constant dense<0.000000e+00> : vector<272x128xf32>
    %332 = tpu.matmul %330, %331, %cst_184 {dimension_numbers = #tpu.dot_dimension_numbers<[1], [0], [0], [1], [0, 0, 1, 1], [], []>} : vector<272x128xbf16>, vector<128x128xbf16>, vector<272x128xf32> -> vector<272x128xf32>
    %333 = arith.addf %325, %332 : vector<272x128xf32>
    %cst_185 = arith.constant 0.000000e+00 : f32
    %334 = vector.broadcast %cst_185 : f32 to vector<272x128xf32>
    %335 = arith.maximumf %329, %334 : vector<272x128xf32>
    %c0_186 = arith.constant 0 : index
    %c0_187 = arith.constant 0 : index
    %c0_188 = arith.constant 0 : index
    %c0_189 = arith.constant 0 : index
    %336 = vector.load %arg11[%c0_186, %c0_187, %c0_188, %c0_189] : memref<1x2x272x128xf32, #tpu.memory_space<vmem>>, vector<1x1x272x128xf32>
    %337 = vector.shape_cast %336 : vector<1x1x272x128xf32> to vector<272x128xf32>
    %338 = vector.shape_cast %335 : vector<272x128xf32> to vector<1x1x272x128xf32>
    tpu.vector_store %arg11[%c0_186, %c0_187, %c0_188, %c0_189], %338 {strides = array<i32>} : memref<1x2x272x128xf32, #tpu.memory_space<vmem>>, vector<1x1x272x128xf32>,
    %cst_190 = arith.constant 0.000000e+00 : f32
    %339 = vector.broadcast %cst_190 : f32 to vector<272x128xf32>
    %340 = arith.maximumf %333, %339 : vector<272x128xf32>
    %c0_191 = arith.constant 0 : index
    %c1_192 = arith.constant 1 : index
    %c0_193 = arith.constant 0 : index
    %c0_194 = arith.constant 0 : index
    %341 = vector.load %arg11[%c0_191, %c1_192, %c0_193, %c0_194] : memref<1x2x272x128xf32, #tpu.memory_space<vmem>>, vector<1x1x272x128xf32>
    %342 = vector.shape_cast %341 : vector<1x1x272x128xf32> to vector<272x128xf32>
    %343 = vector.shape_cast %340 : vector<272x128xf32> to vector<1x1x272x128xf32>
    tpu.vector_store %arg11[%c0_191, %c1_192, %c0_193, %c0_194], %343 {strides = array<i32>} : memref<1x2x272x128xf32, #tpu.memory_space<vmem>>, vector<1x1x272x128xf32>,
    return
  }
  func.func @transform_0(%arg0: i32, %arg1: i32) -> (i32, i32) {
    %c0_i32 = arith.constant 0 : i32
    %c0_i32_0 = arith.constant 0 : i32
    %c0_i32_1 = arith.constant 0 : i32
    return %c0_i32, %c0_i32_0 : i32, i32
  }
  func.func @transform_1(%arg0: i32, %arg1: i32) -> (i32, i32, i32) {
    %c0_i32 = arith.constant 0 : i32
    %c0_i32_0 = arith.constant 0 : i32
    %c0_i32_1 = arith.constant 0 : i32
    return %arg0, %c0_i32, %c0_i32_0 : i32, i32, i32
  }
  func.func @transform_2(%arg0: i32, %arg1: i32) -> (i32, i32) {
    %c0_i32 = arith.constant 0 : i32
    %c0_i32_0 = arith.constant 0 : i32
    %c0_i32_1 = arith.constant 0 : i32
    return %c0_i32, %c0_i32_0 : i32, i32
  }
  func.func @transform_3(%arg0: i32, %arg1: i32) -> (i32, i32) {
    %c0_i32 = arith.constant 0 : i32
    %c0_i32_0 = arith.constant 0 : i32
    %c0_i32_1 = arith.constant 0 : i32
    return %c0_i32, %c0_i32_0 : i32, i32
  }
  func.func @transform_4(%arg0: i32, %arg1: i32) -> (i32, i32) {
    %c0_i32 = arith.constant 0 : i32
    %c0_i32_0 = arith.constant 0 : i32
    %c0_i32_1 = arith.constant 0 : i32
    return %c0_i32, %c0_i32_0 : i32, i32
  }
  func.func @transform_5(%arg0: i32, %arg1: i32) -> (i32, i32) {
    %c0_i32 = arith.constant 0 : i32
    %c0_i32_0 = arith.constant 0 : i32
    %c0_i32_1 = arith.constant 0 : i32
    return %c0_i32, %c0_i32_0 : i32, i32
  }
  func.func @transform_6(%arg0: i32, %arg1: i32) -> (i32, i32, i32) {
    %c0_i32 = arith.constant 0 : i32
    %c0_i32_0 = arith.constant 0 : i32
    %c0_i32_1 = arith.constant 0 : i32
    %c0_i32_2 = arith.constant 0 : i32
    return %c0_i32, %c0_i32_0, %c0_i32_1 : i32, i32, i32
  }
  func.func @transform_7(%arg0: i32, %arg1: i32) -> (i32, i32, i32) {
    %c0_i32 = arith.constant 0 : i32
    %c0_i32_0 = arith.constant 0 : i32
    %c0_i32_1 = arith.constant 0 : i32
    %c0_i32_2 = arith.constant 0 : i32
    return %c0_i32, %c0_i32_0, %c0_i32_1 : i32, i32, i32
  }
  func.func @transform_8(%arg0: i32, %arg1: i32) -> (i32, i32) {
    %c0_i32 = arith.constant 0 : i32
    %c0_i32_0 = arith.constant 0 : i32
    %c0_i32_1 = arith.constant 0 : i32
    return %c0_i32, %c0_i32_0 : i32, i32
  }
  func.func @transform_9(%arg0: i32, %arg1: i32) -> (i32, i32, i32, i32) {
    %c0_i32 = arith.constant 0 : i32
    %c0_i32_0 = arith.constant 0 : i32
    %c0_i32_1 = arith.constant 0 : i32
    return %arg0, %c0_i32, %arg1, %c0_i32_0 : i32, i32, i32, i32
  }
}

</mosaic_0001>

<llo_original>
// kernel: tpu_custom_call.1
$region0: #{tpu_custom_call.1}
  #allocation0 [shape = 'u32[]', space=smem, size = 0x4, offset = 0x4, fixed_abs, tag = 'smem constant byte address 0x4 - core index']
  #allocation1 [shape = 'u32[144,128]{1,0:T(1,128)}', space=vmem, size = 0x12000, scoped, tag = 'internal scratch']
  #allocation2 [shape = 'bf16[308,128]{1,0:T(8,128)(2,1)}', space=vmem, size = 0x13800, scoped, tag = 'scratch operand']
  #allocation3 [shape = 'bf16[308,128]{1,0:T(8,128)(2,1)}', space=vmem, size = 0x13800, scoped, tag = 'scratch operand']
  #allocation4 [shape = 'f32[1,1]{1,0:T(1,128)S(1)}', space=vmem, size = 0x200, scoped, tag = 'scoped memory for tpu_custom_call.1']
  #allocation18 [shape = 's32[]', space=sflag, size = 0x4, offset = 0, fixed_abs, tag = 'sflag constant byte address 0x0 - dummy sync flag']
  %s0 = inlined_call_operand.<no memory space> [shape: f32[1,1], index: 0, kind: input, shape index: {}]
  %s1 = inlined_call_operand.vmem [shape: f32[2,288,64], index: 1, kind: input, shape index: {}]
  %s2 = inlined_call_operand.hbm [shape: bf16[64,64], index: 2, kind: input, shape index: {}]
  %s3 = inlined_call_operand.hbm [shape: f32[1,64], index: 3, kind: input, shape index: {}]
  %s4 = inlined_call_operand.hbm [shape: bf16[64,512], index: 4, kind: input, shape index: {}]
  %s5 = inlined_call_operand.hbm [shape: f32[1,128], index: 5, kind: input, shape index: {}]
  %s6 = inlined_call_operand.hbm [shape: bf16[3,128,256], index: 6, kind: input, shape index: {}]
  %s7 = inlined_call_operand.hbm [shape: bf16[3,128,256], index: 7, kind: input, shape index: {}]
  %s8 = inlined_call_operand.hbm [shape: f32[1,128], index: 8, kind: input, shape index: {}]
  %s9 = inlined_call_operand.hbm [shape: f32[2,2,544,128], index: 9, kind: output, shape index: {}]
  %s10 = sld [smem:[#allocation0]]
  $region97: #{tpu_custom_call.1} parent=0
    _
  %s12 = ssub.s32 1, %s10
  %s13 = scalar_select 0, %s12, %s10
  %v14 = vstv %s0
  %15 = vst [vmem:[#allocation4] sm:$0x1] %v14
  $region1: #{tpu_custom_call.1} parent=0
    #allocation5 [shape = 'u8[16384]{0}', space=vmem, size = 0x4000, scoped, tag = 'input window, operand 2, single buffered']
    #allocation6 [shape = 's32[2]{0}', space=sflag, size = 0x8, scoped, tag = 'scoped memory for tpu_custom_call.1']
    #allocation7 [shape = 's32[2]{0}', space=sflag, size = 0x8, scoped, tag = 'scoped memory for tpu_custom_call.1']
    #allocation8 [shape = 'u8[512]{0}', space=vmem, size = 0x400, scoped, tag = 'input window, operand 3, single buffered']
    #allocation9 [shape = 's32[1]{0}', space=sflag, size = 0x4, scoped, tag = 'scoped memory for tpu_custom_call.1']
    #allocation10 [shape = 'u8[65536]{0}', space=vmem, size = 0x10000, scoped, tag = 'input window, operand 4, single buffered']
    #allocation11 [shape = 'u8[512]{0}', space=vmem, size = 0x400, scoped, tag = 'input window, operand 5, single buffered']
    #allocation12 [shape = 's32[1]{0}', space=sflag, size = 0x4, scoped, tag = 'scoped memory for tpu_custom_call.1']
    #allocation13 [shape = 'u8[196608]{0}', space=vmem, size = 0x30000, scoped, tag = 'input window, operand 6, single buffered']
    #allocation14 [shape = 'u8[196608]{0}', space=vmem, size = 0x30000, scoped, tag = 'input window, operand 7, single buffered']
    #allocation15 [shape = 's32[1]{0}', space=sflag, size = 0x4, scoped, tag = 'scoped memory for tpu_custom_call.1']
    #allocation16 [shape = 'u8[512]{0}', space=vmem, size = 0x400, scoped, tag = 'input window, operand 8, single buffered']
    #allocation17 [shape = 'u8[557056]{0}', space=vmem, size = 0x88000, scoped, tag = 'output window, operand 0']
    %16 = vsyncpa [#allocation6], 0
    %17 = vsyncpa [#allocation9], 0
    %18 = vsyncpa [#allocation12], 0
    %19 = vsyncpa [#allocation15], 0
    %20 = vsyncpa [#allocation7], 0
    %s21 = scalar_lea.sflag [#allocation7], 1
    %22 = vsyncpa %s21, 0
    loop: start=0, step=1, limit=6
    $region2: #{tpu_custom_call.1} parent=1 // loop_pre_header
      _
    $region3: #{tpu_custom_call.1} parent=1 // loop_header
      %s24 = sphi 0, %s28
      %p25 = scmp.ge.s32.totalorder %s24, 6
      %s31 = sphi 0, %s43
      %s32 = sphi 0, %s39
      %s33 = sphi 0, %s31
      %s34 = sphi 0, %s32
      %s35 = sphi 0, %s33
      %s36 = sphi 0, %s34
      %s44 = sphi 0, %s44
      %s46 = sphi 0, %s44
      %s47 = sphi 0, %s46
      %s61 = sphi 0, %s47
      %s67 = sphi 0, %s69
      %s70 = sphi 0, %s67
      %s71 = sphi 0, %s70
      %s87 = sphi 0, %s71
      %s91 = sphi 0, %s91
      %s93 = sphi 0, %s91
      %s94 = sphi 0, %s93
      %s108 = sphi 0, %s94
      %s112 = sphi 0, %s112
      %s114 = sphi 0, %s112
      %s115 = sphi 0, %s114
      %s129 = sphi 0, %s115
      %s133 = sphi 0, %s133
      %s135 = sphi 0, %s133
      %s136 = sphi 0, %s135
      %s150 = sphi 0, %s136
      %s154 = sphi 0, %s154
      %s156 = sphi 0, %s154
      %s157 = sphi 0, %s156
      %s171 = sphi 0, %s157
      %s175 = sphi 0, %s175
      %s177 = sphi 0, %s175
      %s178 = sphi 0, %s177
      %s192 = sphi 0, %s178
      %s196 = sphi 0, %s196
      %s198 = sphi 0, %s196
      %s199 = sphi 0, %s198
      %s213 = sphi 0, %s199
      %s217 = sphi 0, %s217
      %s219 = sphi 0, %s217
      %s220 = sphi 0, %s219
      %s234 = sphi 0, %s220
      %s242 = sphi 0, %s244
      %s245 = sphi 0, %s242
      %s246 = sphi 0, %s245
      %s262 = sphi 0, %s246
    $region4: #{tpu_custom_call.1} parent=1 // loop_header_branch
      %27 = sbr.rel (%p25) target = $region8
    $region5: #{tpu_custom_call.1} parent=1 // loop_body
      %s29 = ssub.s32 %s24, 1
      %s30 = ssub.s32 %s24, 2
      %s37 = sadd.s32 1, %s32
      %p38 = scmp.ge.s32.totalorder %s37, 2
      %s39 = scalar_select %p38, 0, %s37
      %s40 = sadd.s32 1, %s31
      %s41 = scalar_select %p38, %s40, %s31
      %p42 = scmp.ge.s32.totalorder %s41, 2
      %s43 = scalar_select %p42, 0, %s41
      %s45 = sadd.s32 %s44, 1
      %p48 = scmp.eq.s32.totalorder %s24, 3
      %p49 = scmp.ne.s32.totalorder %s44, %s46
      %p50 = scmp.eq.s32.totalorder %s24, 0
      %p51 = por %p49, %p50
      %p52 = scmp.ne.s32.totalorder %s44, %s46
      %p53 = scmp.eq.s32.totalorder %s29, 3
      %p54 = por %p52, %p53
      %p55 = scmp.ne.s32.totalorder %s46, %s47
      %p56 = scmp.eq.s32.totalorder %s29, 0
      %p57 = por %p55, %p56
      %p58 = scmp.ne.s32.totalorder %s46, %s47
      %p59 = scmp.eq.s32.totalorder %s30, 3
      %p60 = por %p58, %p59
      %p62 = scmp.ne.s32.totalorder %s47, %s61
      %p63 = scmp.eq.s32.totalorder %s30, 0
      %p64 = por %p62, %p63
      %s65 = ssub.s32 %s31, %s43
      %p66 = scmp.eq.s32.totalorder %s65, 0
      %s68 = sadd.s32 %s67, 1
      %s69 = scalar_select %p66, %s67, %s68
      %p72 = pneg %p66
      %p73 = scmp.eq.s32.totalorder %s24, 3
      %p74 = por %p72, %p73
      %p75 = scmp.ne.s32.totalorder %s67, %s70
      %p76 = scmp.eq.s32.totalorder %s24, 0
      %p77 = por %p75, %p76
      %p78 = scmp.ne.s32.totalorder %s67, %s70
      %p79 = scmp.eq.s32.totalorder %s29, 3
      %p80 = por %p78, %p79
      %p81 = scmp.ne.s32.totalorder %s70, %s71
      %p82 = scmp.eq.s32.totalorder %s29, 0
      %p83 = por %p81, %p82
      %p84 = scmp.ne.s32.totalorder %s70, %s71
      %p85 = scmp.eq.s32.totalorder %s30, 3
      %p86 = por %p84, %p85
      %p88 = scmp.ne.s32.totalorder %s71, %s87
      %p89 = scmp.eq.s32.totalorder %s30, 0
      %p90 = por %p88, %p89
      %s92 = sadd.s32 %s91, 1
      %p95 = scmp.eq.s32.totalorder %s24, 3
      %p96 = scmp.ne.s32.totalorder %s91, %s93
      %p97 = scmp.eq.s32.totalorder %s24, 0
      %p98 = por %p96, %p97
      %p99 = scmp.ne.s32.totalorder %s91, %s93
      %p100 = scmp.eq.s32.totalorder %s29, 3
      %p101 = por %p99, %p100
      %p102 = scmp.ne.s32.totalorder %s93, %s94
      %p103 = scmp.eq.s32.totalorder %s29, 0
      %p104 = por %p102, %p103
      %p105 = scmp.ne.s32.totalorder %s93, %s94
      %p106 = scmp.eq.s32.totalorder %s30, 3
      %p107 = por %p105, %p106
      %p109 = scmp.ne.s32.totalorder %s94, %s108
      %p110 = scmp.eq.s32.totalorder %s30, 0
      %p111 = por %p109, %p110
      %s113 = sadd.s32 %s112, 1
      %p116 = scmp.eq.s32.totalorder %s24, 3
      %p117 = scmp.ne.s32.totalorder %s112, %s114
      %p118 = scmp.eq.s32.totalorder %s24, 0
      %p119 = por %p117, %p118
      %p120 = scmp.ne.s32.totalorder %s112, %s114
      %p121 = scmp.eq.s32.totalorder %s29, 3
      %p122 = por %p120, %p121
      %p123 = scmp.ne.s32.totalorder %s114, %s115
      %p124 = scmp.eq.s32.totalorder %s29, 0
      %p125 = por %p123, %p124
      %p126 = scmp.ne.s32.totalorder %s114, %s115
      %p127 = scmp.eq.s32.totalorder %s30, 3
      %p128 = por %p126, %p127
      %p130 = scmp.ne.s32.totalorder %s115, %s129
      %p131 = scmp.eq.s32.totalorder %s30, 0
      %p132 = por %p130, %p131
      %s134 = sadd.s32 %s133, 1
      %p137 = scmp.eq.s32.totalorder %s24, 3
      %p138 = scmp.ne.s32.totalorder %s133, %s135
      %p139 = scmp.eq.s32.totalorder %s24, 0
      %p140 = por %p138, %p139
      %p141 = scmp.ne.s32.totalorder %s133, %s135
      %p142 = scmp.eq.s32.totalorder %s29, 3
      %p143 = por %p141, %p142
      %p144 = scmp.ne.s32.totalorder %s135, %s136
      %p145 = scmp.eq.s32.totalorder %s29, 0
      %p146 = por %p144, %p145
      %p147 = scmp.ne.s32.totalorder %s135, %s136
      %p148 = scmp.eq.s32.totalorder %s30, 3
      %p149 = por %p147, %p148
      %p151 = scmp.ne.s32.totalorder %s136, %s150
      %p152 = scmp.eq.s32.totalorder %s30, 0
      %p153 = por %p151, %p152
      %s155 = sadd.s32 %s154, 1
      %p158 = scmp.eq.s32.totalorder %s24, 3
      %p159 = scmp.ne.s32.totalorder %s154, %s156
      %p160 = scmp.eq.s32.totalorder %s24, 0
      %p161 = por %p159, %p160
      %p162 = scmp.ne.s32.totalorder %s154, %s156
      %p163 = scmp.eq.s32.totalorder %s29, 3
      %p164 = por %p162, %p163
      %p165 = scmp.ne.s32.totalorder %s156, %s157
      %p166 = scmp.eq.s32.totalorder %s29, 0
      %p167 = por %p165, %p166
      %p168 = scmp.ne.s32.totalorder %s156, %s157
      %p169 = scmp.eq.s32.totalorder %s30, 3
      %p170 = por %p168, %p169
      %p172 = scmp.ne.s32.totalorder %s157, %s171
      %p173 = scmp.eq.s32.totalorder %s30, 0
      %p174 = por %p172, %p173
      %s176 = sadd.s32 %s175, 1
      %p179 = scmp.eq.s32.totalorder %s24, 3
      %p180 = scmp.ne.s32.totalorder %s175, %s177
      %p181 = scmp.eq.s32.totalorder %s24, 0
      %p182 = por %p180, %p181
      %p183 = scmp.ne.s32.totalorder %s175, %s177
      %p184 = scmp.eq.s32.totalorder %s29, 3
      %p185 = por %p183, %p184
      %p186 = scmp.ne.s32.totalorder %s177, %s178
      %p187 = scmp.eq.s32.totalorder %s29, 0
      %p188 = por %p186, %p187
      %p189 = scmp.ne.s32.totalorder %s177, %s178
      %p190 = scmp.eq.s32.totalorder %s30, 3
      %p191 = por %p189, %p190
      %p193 = scmp.ne.s32.totalorder %s178, %s192
      %p194 = scmp.eq.s32.totalorder %s30, 0
      %p195 = por %p193, %p194
      %s197 = sadd.s32 %s196, 1
      %p200 = scmp.eq.s32.totalorder %s24, 3
      %p201 = scmp.ne.s32.totalorder %s196, %s198
      %p202 = scmp.eq.s32.totalorder %s24, 0
      %p203 = por %p201, %p202
      %p204 = scmp.ne.s32.totalorder %s196, %s198
      %p205 = scmp.eq.s32.totalorder %s29, 3
      %p206 = por %p204, %p205
      %p207 = scmp.ne.s32.totalorder %s198, %s199
      %p208 = scmp.eq.s32.totalorder %s29, 0
      %p209 = por %p207, %p208
      %p210 = scmp.ne.s32.totalorder %s198, %s199
      %p211 = scmp.eq.s32.totalorder %s30, 3
      %p212 = por %p210, %p211
      %p214 = scmp.ne.s32.totalorder %s199, %s213
      %p215 = scmp.eq.s32.totalorder %s30, 0
      %p216 = por %p214, %p215
      %s218 = sadd.s32 %s217, 1
      %p221 = scmp.eq.s32.totalorder %s24, 3
      %p222 = scmp.ne.s32.totalorder %s217, %s219
      %p223 = scmp.eq.s32.totalorder %s24, 0
      %p224 = por %p222, %p223
      %p225 = scmp.ne.s32.totalorder %s217, %s219
      %p226 = scmp.eq.s32.totalorder %s29, 3
      %p227 = por %p225, %p226
      %p228 = scmp.ne.s32.totalorder %s219, %s220
      %p229 = scmp.eq.s32.totalorder %s29, 0
      %p230 = por %p228, %p229
      %p231 = scmp.ne.s32.totalorder %s219, %s220
      %p232 = scmp.eq.s32.totalorder %s30, 3
      %p233 = por %p231, %p232
      %p235 = scmp.ne.s32.totalorder %s220, %s234
      %p236 = scmp.eq.s32.totalorder %s30, 0
      %p237 = por %p235, %p236
      %s238 = ssub.s32 %s31, %s43
      %s239 = ssub.s32 %s32, %s39
      %s240 = sor.u32 %s238, %s239
      %p241 = scmp.eq.s32.totalorder %s240, 0
      %s243 = sadd.s32 %s242, 1
      %s244 = scalar_select %p241, %s242, %s243
      %p247 = pneg %p241
      %p248 = scmp.eq.s32.totalorder %s24, 3
      %p249 = por %p247, %p248
      %p250 = scmp.ne.s32.totalorder %s242, %s245
      %p251 = scmp.eq.s32.totalorder %s24, 0
      %p252 = por %p250, %p251
      %p253 = scmp.ne.s32.totalorder %s242, %s245
      %p254 = scmp.eq.s32.totalorder %s29, 3
      %p255 = por %p253, %p254
      %p256 = scmp.ne.s32.totalorder %s245, %s246
      %p257 = scmp.eq.s32.totalorder %s29, 0
      %p258 = por %p256, %p257
      %p259 = scmp.ne.s32.totalorder %s245, %s246
      %p260 = scmp.eq.s32.totalorder %s30, 3
      %p261 = por %p259, %p260
      %p263 = scmp.ne.s32.totalorder %s246, %s262
      %p264 = scmp.eq.s32.totalorder %s30, 0
      %p265 = por %p263, %p264
      %p266 = scmp.le.s32.totalorder 1, %s24
      %p267 = scmp.lt.s32.totalorder %s24, 5
      %p268 = pnand %p266, %p267
      %p269 = pneg %p268
      // Predicated region
      $region9: #{tpu_custom_call.1} parent=5 // pred_check
        _
      $region10: #{tpu_custom_call.1} parent=5 // pred_check_branch
        %271 = sbr.rel (%p268) target = $region12
      $region11: #{tpu_custom_call.1} parent=5 // pred_region
        %s272 = ssub.s32 %s24, 1
        // Predicated region
        $region13: #{tpu_custom_call.1} parent=11 // pred_check
          %p273 = pneg %p57
        $region14: #{tpu_custom_call.1} parent=11 // pred_check_branch
          %275 = sbr.rel (%p273) target = $region16
        $region15: #{tpu_custom_call.1} parent=11 // pred_region
          _
        $region16: #{tpu_custom_call.1} parent=11 // pred_fallthru
          _
        // Predicated region
        $region17: #{tpu_custom_call.1} parent=11 // pred_check
          %p276 = pneg %p104
        $region18: #{tpu_custom_call.1} parent=11 // pred_check_branch
          %278 = sbr.rel (%p276) target = $region20
        $region19: #{tpu_custom_call.1} parent=11 // pred_region
          %s280 = ssub.s32 512, 512
          %281 = vsyncadd [#allocation6], %s280
          %s282 = sshll.u32 [#allocation5], 4
          %s283 = int_to_ptr.vmem [resolvable:$true] %s282
          %288 = dma.hbm_to_vmem [thread:$0]  %s2, 512, %s283, [#allocation6], 64, 64, 4
        $region20: #{tpu_custom_call.1} parent=11 // pred_fallthru
          _
        // Predicated region
        $region21: #{tpu_custom_call.1} parent=11 // pred_check
          %p289 = pneg %p125
        $region22: #{tpu_custom_call.1} parent=11 // pred_check_branch
          %291 = sbr.rel (%p289) target = $region24
        $region23: #{tpu_custom_call.1} parent=11 // pred_region
          %s293 = ssub.s32 16, 16
          %294 = vsyncadd [#allocation9], %s293
          %s296 = sshll.u32 [#allocation8], 4
          %s297 = int_to_ptr.vmem [resolvable:$true] %s296
          %299 = dma.hbm_to_vmem [thread:$0]  %s3, 16, %s297, [#allocation9]
        $region24: #{tpu_custom_call.1} parent=11 // pred_fallthru
          _
        // Predicated region
        $region25: #{tpu_custom_call.1} parent=11 // pred_check
          %p300 = pneg %p146
        $region26: #{tpu_custom_call.1} parent=11 // pred_check_branch
          %302 = sbr.rel (%p300) target = $region28
        $region27: #{tpu_custom_call.1} parent=11 // pred_region
          %s304 = ssub.s32 2048, 2048
          %305 = vsyncadd [#allocation9], %s304
          %s306 = sshll.u32 [#allocation10], 4
          %s307 = int_to_ptr.vmem [resolvable:$true] %s306
          %312 = dma.hbm_to_vmem [thread:$0]  %s4, 2048, %s307, [#allocation9], 256, 256, 16
        $region28: #{tpu_custom_call.1} parent=11 // pred_fallthru
          _
        // Predicated region
        $region29: #{tpu_custom_call.1} parent=11 // pred_check
          %p313 = pneg %p167
        $region30: #{tpu_custom_call.1} parent=11 // pred_check_branch
          %315 = sbr.rel (%p313) target = $region32
        $region31: #{tpu_custom_call.1} parent=11 // pred_region
          %s317 = ssub.s32 16, 16
          %318 = vsyncadd [#allocation12], %s317
          %s320 = sshll.u32 [#allocation11], 4
          %s321 = int_to_ptr.vmem [resolvable:$true] %s320
          %323 = dma.hbm_to_vmem [thread:$0]  %s5, 16, %s321, [#allocation12]
        $region32: #{tpu_custom_call.1} parent=11 // pred_fallthru
          _
        // Predicated region
        $region33: #{tpu_custom_call.1} parent=11 // pred_check
          %p324 = pneg %p188
        $region34: #{tpu_custom_call.1} parent=11 // pred_check_branch
          %326 = sbr.rel (%p324) target = $region36
        $region35: #{tpu_custom_call.1} parent=11 // pred_region
          %s328 = ssub.s32 6144, 6144
          %329 = vsyncadd [#allocation12], %s328
          %s330 = sshll.u32 [#allocation13], 4
          %s331 = int_to_ptr.vmem [resolvable:$true] %s330
          %336 = dma.hbm_to_vmem [thread:$0]  %s6, 6144, %s331, [#allocation12], 128, 128, 8
        $region36: #{tpu_custom_call.1} parent=11 // pred_fallthru
          _
        // Predicated region
        $region37: #{tpu_custom_call.1} parent=11 // pred_check
          %p337 = pneg %p209
        $region38: #{tpu_custom_call.1} parent=11 // pred_check_branch
          %339 = sbr.rel (%p337) target = $region40
        $region39: #{tpu_custom_call.1} parent=11 // pred_region
          %s341 = ssub.s32 6144, 6144
          %342 = vsyncadd [#allocation15], %s341
          %s343 = sshll.u32 [#allocation14], 4
          %s344 = int_to_ptr.vmem [resolvable:$true] %s343
          %349 = dma.hbm_to_vmem [thread:$0]  %s7, 6144, %s344, [#allocation15], 128, 128, 8
        $region40: #{tpu_custom_call.1} parent=11 // pred_fallthru
          _
        // Predicated region
        $region41: #{tpu_custom_call.1} parent=11 // pred_check
          %p350 = pneg %p230
        $region42: #{tpu_custom_call.1} parent=11 // pred_check_branch
          %352 = sbr.rel (%p350) target = $region44
        $region43: #{tpu_custom_call.1} parent=11 // pred_region
          %s354 = ssub.s32 16, 16
          %355 = vsyncadd [#allocation15], %s354
          %s357 = sshll.u32 [#allocation16], 4
          %s358 = int_to_ptr.vmem [resolvable:$true] %s357
          %360 = dma.hbm_to_vmem [thread:$0]  %s8, 16, %s358, [#allocation15]
        $region44: #{tpu_custom_call.1} parent=11 // pred_fallthru
          _
      $region12: #{tpu_custom_call.1} parent=5 // pred_fallthru
        _
      %p361 = scmp.lt.s32.totalorder %s24, 4
      // Predicated region
      $region45: #{tpu_custom_call.1} parent=5 // pred_check
        %p362 = pneg %p361
      $region46: #{tpu_custom_call.1} parent=5 // pred_check_branch
        %364 = sbr.rel (%p362) target = $region48
      $region47: #{tpu_custom_call.1} parent=5 // pred_region
        // Predicated region
        $region49: #{tpu_custom_call.1} parent=47 // pred_check
          %p365 = pneg %p77
        $region50: #{tpu_custom_call.1} parent=47 // pred_check_branch
          %367 = sbr.rel (%p365) target = $region52
        $region51: #{tpu_custom_call.1} parent=47 // pred_region
          %p368 = scmp.lt.s32.totalorder %s31, 1
          %s369 = scalar_select %p368, %s31, 1
          %s370 = smul.addr %s369, 36
          %s371 = smul.addr %s370, 8
          %s372 = scalar_lea.vmem %s1, %s371
        $region52: #{tpu_custom_call.1} parent=47 // pred_fallthru
          _
      $region48: #{tpu_custom_call.1} parent=5 // pred_fallthru
        _
      %p373 = scmp.le.s32.totalorder 1, %s24
      %p374 = scmp.lt.s32.totalorder %s24, 5
      %p375 = pnand %p373, %p374
      %p376 = pneg %p375
      // Predicated region
      $region53: #{tpu_custom_call.1} parent=5 // pred_check
        _
      $region54: #{tpu_custom_call.1} parent=5 // pred_check_branch
        %378 = sbr.rel (%p375) target = $region56
      $region55: #{tpu_custom_call.1} parent=5 // pred_region
        %s379 = ssub.s32 %s24, 1
        // Predicated region
        $region57: #{tpu_custom_call.1} parent=55 // pred_check
          %p380 = pneg %p104
        $region58: #{tpu_custom_call.1} parent=55 // pred_check_branch
          %382 = sbr.rel (%p380) target = $region60
        $region59: #{tpu_custom_call.1} parent=55 // pred_region
          %383 = dma.done [#allocation6], 512
        $region60: #{tpu_custom_call.1} parent=55 // pred_fallthru
          _
        // Predicated region
        $region61: #{tpu_custom_call.1} parent=55 // pred_check
          %p384 = pneg %p125
        $region62: #{tpu_custom_call.1} parent=55 // pred_check_branch
          %386 = sbr.rel (%p384) target = $region64
        $region63: #{tpu_custom_call.1} parent=55 // pred_region
          %387 = dma.done [#allocation9], 16
        $region64: #{tpu_custom_call.1} parent=55 // pred_fallthru
          _
        // Predicated region
        $region65: #{tpu_custom_call.1} parent=55 // pred_check
          %p388 = pneg %p146
        $region66: #{tpu_custom_call.1} parent=55 // pred_check_branch
          %390 = sbr.rel (%p388) target = $region68
        $region67: #{tpu_custom_call.1} parent=55 // pred_region
          %391 = dma.done [#allocation9], 2048
        $region68: #{tpu_custom_call.1} parent=55 // pred_fallthru
          _
        // Predicated region
        $region69: #{tpu_custom_call.1} parent=55 // pred_check
          %p392 = pneg %p167
        $region70: #{tpu_custom_call.1} parent=55 // pred_check_branch
          %394 = sbr.rel (%p392) target = $region72
        $region71: #{tpu_custom_call.1} parent=55 // pred_region
          %395 = dma.done [#allocation12], 16
        $region72: #{tpu_custom_call.1} parent=55 // pred_fallthru
          _
        // Predicated region
        $region73: #{tpu_custom_call.1} parent=55 // pred_check
          %p396 = pneg %p188
        $region74: #{tpu_custom_call.1} parent=55 // pred_check_branch
          %398 = sbr.rel (%p396) target = $region76
        $region75: #{tpu_custom_call.1} parent=55 // pred_region
          %399 = dma.done [#allocation12], 6144
        $region76: #{tpu_custom_call.1} parent=55 // pred_fallthru
          _
        // Predicated region
        $region77: #{tpu_custom_call.1} parent=55 // pred_check
          %p400 = pneg %p209
        $region78: #{tpu_custom_call.1} parent=55 // pred_check_branch
          %402 = sbr.rel (%p400) target = $region80
        $region79: #{tpu_custom_call.1} parent=55 // pred_region
          %403 = dma.done [#allocation15], 6144
        $region80: #{tpu_custom_call.1} parent=55 // pred_fallthru
          _
        // Predicated region
        $region81: #{tpu_custom_call.1} parent=55 // pred_check
          %p404 = pneg %p230
        $region82: #{tpu_custom_call.1} parent=55 // pred_check_branch
          %406 = sbr.rel (%p404) target = $region84
        $region83: #{tpu_custom_call.1} parent=55 // pred_region
          %407 = dma.done [#allocation15], 16
        $region84: #{tpu_custom_call.1} parent=55 // pred_fallthru
          _
        %p408 = pneg %p57
        %p409 = pneg %p54
        %p410 = scmp.lt.s32.totalorder %s33, 1
        %s411 = scalar_select %p410, %s33, 1
        %s412 = smul.addr %s411, 36
        %s413 = smul.addr %s412, 8
        %s414 = scalar_lea.vmem %s1, %s413
        %p415 = pneg %p83
        %p416 = pneg %p80
        %p417 = pneg %p104
        %p418 = pneg %p101
        %p419 = pneg %p125
        %p420 = pneg %p122
        %p421 = pneg %p146
        %p422 = pneg %p143
        %p423 = pneg %p167
        %p424 = pneg %p164
        %p425 = pneg %p188
        %p426 = pneg %p185
        %p427 = pneg %p209
        %p428 = pneg %p206
        %p429 = pneg %p230
        %p430 = pneg %p227
        %p431 = pneg %p258
        %p432 = pneg %p255
        %s433 = sand.u32 %s245, 1
        %s434 = scalar_lea.sflag [#allocation7], %s433
        %s435 = sand.u32 %s245, 1
        %s436 = smul.addr %s435, 544
        %s437 = scalar_lea.vmem [#allocation17], %s436
        %p438 = scmp.lt.s32.totalorder %s33, 1
        %s439 = scalar_select %p438, %s33, 1
        %s440 = smul.addr %s439, 36
        %s441 = smul.addr %s440, 8
        %s442 = scalar_lea.vmem %s1, %s441
        %s443 = smul.u32 34, %s34
        %s445 = smul.u32 %s34, 128
        %s446 = scalar_lea.vmem %s442, %s445
        %v447 = vld [vmem:[%s446] sm:$0xff]
        %v448 = vld [vmem:[%s446 + $0x8] sm:$0xff]
        %v449 = vld [vmem:[%s446 + $0x10] sm:$0xff]
        %v450 = vld [vmem:[%s446 + $0x18] sm:$0xff]
        %v451 = vld [vmem:[%s446 + $0x20] sm:$0xff]
        %v452 = vld [vmem:[%s446 + $0x28] sm:$0xff]
        %v453 = vld [vmem:[%s446 + $0x30] sm:$0xff]
        %v454 = vld [vmem:[%s446 + $0x38] sm:$0xff]
        %v455 = vld [vmem:[%s446 + $0x40] sm:$0xff]
        %v456 = vld [vmem:[%s446 + $0x48] sm:$0xff]
        %v457 = vld [vmem:[%s446 + $0x50] sm:$0xff]
        %v458 = vld [vmem:[%s446 + $0x58] sm:$0xff]
        %v459 = vld [vmem:[%s446 + $0x60] sm:$0xff]
        %v460 = vld [vmem:[%s446 + $0x68] sm:$0xff]
        %v461 = vld [vmem:[%s446 + $0x70] sm:$0xff]
        %v462 = vld [vmem:[%s446 + $0x78] sm:$0xff]
        %v463 = vld [vmem:[%s446 + $0x80] sm:$0xff]
        %v464 = vld [vmem:[%s446 + $0x88] sm:$0xff]
        %v465 = vld [vmem:[%s446 + $0x90] sm:$0xff]
        %v466 = vld [vmem:[%s446 + $0x98] sm:$0xff]
        %v467 = vpack.c.bf16 %v448, %v447
        %v468 = vpack.c.bf16 %v450, %v449
        %v469 = vpack.c.bf16 %v452, %v451
        %v470 = vpack.c.bf16 %v454, %v453
        %v471 = vpack.c.bf16 %v456, %v455
        %v472 = vpack.c.bf16 %v458, %v457
        %v473 = vpack.c.bf16 %v460, %v459
        %v474 = vpack.c.bf16 %v462, %v461
        %v475 = vpack.c.bf16 %v464, %v463
        %v476 = vpack.c.bf16 %v466, %v465
        %v477 = vld [vmem:[#allocation5] sm:$0xf]
        %v478 = vld [vmem:[#allocation5 + $0x4] sm:$0xf]
        %v479 = vld [vmem:[#allocation5 + $0x8] sm:$0xf]
        %v480 = vld [vmem:[#allocation5 + $0xc] sm:$0xf]
        %v481 = vld [vmem:[#allocation5 + $0x10] sm:$0xf]
        %v482 = vld [vmem:[#allocation5 + $0x14] sm:$0xf]
        %v483 = vld [vmem:[#allocation5 + $0x18] sm:$0xf]
        %v484 = vld [vmem:[#allocation5 + $0x1c] sm:$0xf]
        %v485 = vld [vmem:[#allocation8] sm:$0x1]
        %v487 = vlaneseq
        %v488 = vshrl.u32 %v487, 7
        %v489 = vsub.s32 0, %v488
        %v490 = vrot.slane %v485, %v489
        %v500 = vunpack.c.l.b16 %v477
        %v501 = vunpack.c.l.b16 %v478
        %v502 = vunpack.c.l.b16 %v479
        %v503 = vunpack.c.l.b16 %v480
        %v504 = vunpack.c.l.b16 %v481
        %v505 = vunpack.c.l.b16 %v482
        %v506 = vunpack.c.l.b16 %v483
        %v507 = vunpack.c.l.b16 %v484
        %v508 = vpack.c.b16 %v501, %v500
        %v509 = vpack.c.b16 %v503, %v502
        %v510 = vpack.c.b16 %v505, %v504
        %v511 = vpack.c.b16 %v507, %v506
        %vm516 = vcmask 523264
        %v518 = vsel %vm516, %v467, 0
        %v521 = vsel %vm516, %v468, 0
        %v524 = vsel %vm516, %v469, 0
        %v527 = vsel %vm516, %v470, 0
        %v530 = vsel %vm516, %v471, 0
        %v533 = vsel %vm516, %v472, 0
        %v536 = vsel %vm516, %v473, 0
        %v539 = vsel %vm516, %v474, 0
        %v542 = vsel %vm516, %v475, 0
        %v545 = vsel %vm516, %v476, 0
        %547 = vmatprep.subr.bf16.mxu0 0
        %548 = vmatpush1.bf16.msra.mxu0 0
        %549 = vmatprep.subr.bf16.mxu0 0
        %550 = vmatpush1.bf16.msra.mxu0 0
        %551 = vmatprep.subr.bf16.mxu0 0
        %552 = vmatpush1.bf16.msra.mxu0 0
        %553 = vmatprep.subr.bf16.mxu0 0
        %554 = vmatpush1.bf16.msra.mxu0 0
        %555 = vmatprep.subr.bf16.mxu0 0
        %556 = vmatpush1.bf16.msra.mxu0 %v511
        %557 = vmatprep.subr.bf16.mxu0 0
        %558 = vmatpush1.bf16.msra.mxu0 %v510
        %559 = vmatprep.subr.bf16.mxu0 0
        %560 = vmatpush1.bf16.msra.mxu0 %v509
        %561 = vmatprep.subr.bf16.mxu0 0
        %562 = vmatpush1.bf16.msra.mxu0 %v508
        %563 = vmatprep.subr.bf16.mxu0 0
        %564 = vmatpush2.bf16.msra.mxu0 0
        %565 = vmatprep.subr.bf16.mxu0 0
        %566 = vmatpush2.bf16.msra.mxu0 0
        %567 = vmatprep.subr.bf16.mxu0 0
        %568 = vmatpush2.bf16.msra.mxu0 0
        %569 = vmatprep.subr.bf16.mxu0 0
        %570 = vmatpush2.bf16.msra.mxu0 0
        %571 = vmatprep.subr.bf16.mxu0 0
        %572 = vmatpush2.bf16.msra.mxu0 0
        %573 = vmatprep.subr.bf16.mxu0 0
        %574 = vmatpush2.bf16.msra.mxu0 0
        %575 = vmatprep.subr.bf16.mxu0 0
        %576 = vmatpush2.bf16.msra.mxu0 0
        %577 = vmatprep.subr.bf16.mxu0 0
        %578 = vmatpush2.bf16.msra.mxu0 0
        %579 = vmatprep.mubr.bf16.mxu0 0
        %580 = vmatmul.mubr.bf16.gmra.mxu0 %v518
        %v581 = vpop.f32.mrf.mxu0
        %v582 = vadd.f32 %v490, %v581
        %v583 = vpop.f32.mrf.mxu0
        %v584 = vpop.f32.mrf.mxu0
        %v585 = vadd.f32 %v490, %v584
        %v586 = vpop.f32.mrf.mxu0
        %587 = vmatprep.mubr.bf16.mxu0 0
        %588 = vmatmul.mubr.bf16.gmra.mxu0 %v521
        %v589 = vpop.f32.mrf.mxu0
        %v590 = vadd.f32 %v490, %v589
        %v591 = vpop.f32.mrf.mxu0
        %v592 = vpop.f32.mrf.mxu0
        %v593 = vadd.f32 %v490, %v592
        %v594 = vpop.f32.mrf.mxu0
        %595 = vmatprep.mubr.bf16.mxu0 0
        %596 = vmatmul.mubr.bf16.gmra.mxu0 %v524
        %v597 = vpop.f32.mrf.mxu0
        %v598 = vadd.f32 %v490, %v597
        %v599 = vpop.f32.mrf.mxu0
        %v600 = vpop.f32.mrf.mxu0
        %v601 = vadd.f32 %v490, %v600
        %v602 = vpop.f32.mrf.mxu0
        %603 = vmatprep.mubr.bf16.mxu0 0
        %604 = vmatmul.mubr.bf16.gmra.mxu0 %v527
        %v605 = vpop.f32.mrf.mxu0
        %v606 = vadd.f32 %v490, %v605
        %v607 = vpop.f32.mrf.mxu0
        %v608 = vpop.f32.mrf.mxu0
        %v609 = vadd.f32 %v490, %v608
        %v610 = vpop.f32.mrf.mxu0
        %611 = vmatprep.mubr.bf16.mxu0 0
        %612 = vmatmul.mubr.bf16.gmra.mxu0 %v530
        %v613 = vpop.f32.mrf.mxu0
        %v614 = vadd.f32 %v490, %v613
        %v615 = vpop.f32.mrf.mxu0
        %v616 = vpop.f32.mrf.mxu0
        %v617 = vadd.f32 %v490, %v616
        %v618 = vpop.f32.mrf.mxu0
        %619 = vmatprep.mubr.bf16.mxu0 0
        %620 = vmatmul.mubr.bf16.gmra.mxu0 %v533
        %v621 = vpop.f32.mrf.mxu0
        %v622 = vadd.f32 %v490, %v621
        %v623 = vpop.f32.mrf.mxu0
        %v624 = vpop.f32.mrf.mxu0
        %v625 = vadd.f32 %v490, %v624
        %v626 = vpop.f32.mrf.mxu0
        %627 = vmatprep.mubr.bf16.mxu0 0
        %628 = vmatmul.mubr.bf16.gmra.mxu0 %v536
        %v629 = vpop.f32.mrf.mxu0
        %v630 = vadd.f32 %v490, %v629
        %v631 = vpop.f32.mrf.mxu0
        %v632 = vpop.f32.mrf.mxu0
        %v633 = vadd.f32 %v490, %v632
        %v634 = vpop.f32.mrf.mxu0
        %635 = vmatprep.mubr.bf16.mxu0 0
        %636 = vmatmul.mubr.bf16.gmra.mxu0 %v539
        %v637 = vpop.f32.mrf.mxu0
        %v638 = vadd.f32 %v490, %v637
        %v639 = vpop.f32.mrf.mxu0
        %v640 = vpop.f32.mrf.mxu0
        %v641 = vadd.f32 %v490, %v640
        %v642 = vpop.f32.mrf.mxu0
        %643 = vmatprep.mubr.bf16.mxu0 0
        %644 = vmatmul.mubr.bf16.gmra.mxu0 %v542
        %v645 = vpop.f32.mrf.mxu0
        %v646 = vadd.f32 %v490, %v645
        %v647 = vpop.f32.mrf.mxu0
        %v648 = vpop.f32.mrf.mxu0
        %v649 = vadd.f32 %v490, %v648
        %v650 = vpop.f32.mrf.mxu0
        %651 = vmatprep.mubr.bf16.mxu0 0
        %652 = vmatmul.mubr.bf16.gmra.mxu0 %v545
        %v653 = vpop.f32.mrf.mxu0
        %v654 = vadd.f32 %v490, %v653
        %v655 = vpop.f32.mrf.mxu0
        %v656 = vpop.f32.mrf.mxu0
        %v657 = vadd.f32 %v490, %v656
        %v658 = vpop.f32.mrf.mxu0
        %659 = vdwg.mxu0
        %v660 = vxor.u32 %v582, 2147483648
        %v661 = vxor.u32 %v585, 2147483648
        %v662 = vxor.u32 %v590, 2147483648
        %v663 = vxor.u32 %v593, 2147483648
        %v664 = vxor.u32 %v598, 2147483648
        %v665 = vxor.u32 %v601, 2147483648
        %v666 = vxor.u32 %v606, 2147483648
        %v667 = vxor.u32 %v609, 2147483648
        %v668 = vxor.u32 %v614, 2147483648
        %v669 = vxor.u32 %v617, 2147483648
        %v670 = vxor.u32 %v622, 2147483648
        %v671 = vxor.u32 %v625, 2147483648
        %v672 = vxor.u32 %v630, 2147483648
        %v673 = vxor.u32 %v633, 2147483648
        %v674 = vxor.u32 %v638, 2147483648
        %v675 = vxor.u32 %v641, 2147483648
        %v676 = vxor.u32 %v646, 2147483648
        %v677 = vxor.u32 %v649, 2147483648
        %v678 = vxor.u32 %v654, 2147483648
        %v679 = vxor.u32 %v657, 2147483648
        %v680 = vmul.f32 %v660, 1.442695
        %v681 = vpow.pop %v680
        %v682 = vmul.f32 %v661, 1.442695
        %v683 = vpow.pop %v682
        %v684 = vmul.f32 %v662, 1.442695
        %v685 = vpow.pop %v684
        %v686 = vmul.f32 %v663, 1.442695
        %v687 = vpow.pop %v686
        %v688 = vmul.f32 %v664, 1.442695
        %v689 = vpow.pop %v688
        %v690 = vmul.f32 %v665, 1.442695
        %v691 = vpow.pop %v690
        %v692 = vmul.f32 %v666, 1.442695
        %v693 = vpow.pop %v692
        %v694 = vmul.f32 %v667, 1.442695
        %v695 = vpow.pop %v694
        %v696 = vmul.f32 %v668, 1.442695
        %v697 = vpow.pop %v696
        %v698 = vmul.f32 %v669, 1.442695
        %v699 = vpow.pop %v698
        %v700 = vmul.f32 %v670, 1.442695
        %v701 = vpow.pop %v700
        %v702 = vmul.f32 %v671, 1.442695
        %v703 = vpow.pop %v702
        %v704 = vmul.f32 %v672, 1.442695
        %v705 = vpow.pop %v704
        %v706 = vmul.f32 %v673, 1.442695
        %v707 = vpow.pop %v706
        %v708 = vmul.f32 %v674, 1.442695
        %v709 = vpow.pop %v708
        %v710 = vmul.f32 %v675, 1.442695
        %v711 = vpow.pop %v710
        %v712 = vmul.f32 %v676, 1.442695
        %v713 = vpow.pop %v712
        %v714 = vmul.f32 %v677, 1.442695
        %v715 = vpow.pop %v714
        %v716 = vmul.f32 %v678, 1.442695
        %v717 = vpow.pop %v716
        %v718 = vmul.f32 %v679, 1.442695
        %v719 = vpow.pop %v718
        %v720 = vadd.f32 %v681, 1.0
        %v721 = vadd.f32 %v683, 1.0
        %v722 = vadd.f32 %v685, 1.0
        %v723 = vadd.f32 %v687, 1.0
        %v724 = vadd.f32 %v689, 1.0
        %v725 = vadd.f32 %v691, 1.0
        %v726 = vadd.f32 %v693, 1.0
        %v727 = vadd.f32 %v695, 1.0
        %v728 = vadd.f32 %v697, 1.0
        %v729 = vadd.f32 %v699, 1.0
        %v730 = vadd.f32 %v701, 1.0
        %v731 = vadd.f32 %v703, 1.0
        %v732 = vadd.f32 %v705, 1.0
        %v733 = vadd.f32 %v707, 1.0
        %v734 = vadd.f32 %v709, 1.0
        %v735 = vadd.f32 %v711, 1.0
        %v736 = vadd.f32 %v713, 1.0
        %v737 = vadd.f32 %v715, 1.0
        %v738 = vadd.f32 %v717, 1.0
        %v739 = vadd.f32 %v719, 1.0
        %v740 = vrcp.pop %v720
        %v741 = vmul.f32 1.0, %v740
        %v742 = vrcp.pop %v721
        %v743 = vmul.f32 1.0, %v742
        %v744 = vrcp.pop %v722
        %v745 = vmul.f32 1.0, %v744
        %v746 = vrcp.pop %v723
        %v747 = vmul.f32 1.0, %v746
        %v748 = vrcp.pop %v724
        %v749 = vmul.f32 1.0, %v748
        %v750 = vrcp.pop %v725
        %v751 = vmul.f32 1.0, %v750
        %v752 = vrcp.pop %v726
        %v753 = vmul.f32 1.0, %v752
        %v754 = vrcp.pop %v727
        %v755 = vmul.f32 1.0, %v754
        %v756 = vrcp.pop %v728
        %v757 = vmul.f32 1.0, %v756
        %v758 = vrcp.pop %v729
        %v759 = vmul.f32 1.0, %v758
        %v760 = vrcp.pop %v730
        %v761 = vmul.f32 1.0, %v760
        %v762 = vrcp.pop %v731
        %v763 = vmul.f32 1.0, %v762
        %v764 = vrcp.pop %v732
        %v765 = vmul.f32 1.0, %v764
        %v766 = vrcp.pop %v733
        %v767 = vmul.f32 1.0, %v766
        %v768 = vrcp.pop %v734
        %v769 = vmul.f32 1.0, %v768
        %v770 = vrcp.pop %v735
        %v771 = vmul.f32 1.0, %v770
        %v772 = vrcp.pop %v736
        %v773 = vmul.f32 1.0, %v772
        %v774 = vrcp.pop %v737
        %v775 = vmul.f32 1.0, %v774
        %v776 = vrcp.pop %v738
        %v777 = vmul.f32 1.0, %v776
        %v778 = vrcp.pop %v739
        %v779 = vmul.f32 1.0, %v778
        %v780 = vld [vmem:[#allocation4] sm:$0x1]
        %v782 = vlaneseq
        %v783 = vshrl.u32 %v782, 7
        %v784 = vsub.s32 0, %v783
        %v785 = vrot.slane %v780, %v784
        %786 = vset.pattern.permute.xlu0 0
        %787 = vperm.xlu0 %786, %v785
        %v788 = vpop.permute.xlu0 %787
        %v790 = vadd.f32 %v788, %v741
        %v791 = vadd.f32 %v788, %v743
        %v792 = vadd.f32 %v788, %v745
        %v793 = vadd.f32 %v788, %v747
        %v794 = vadd.f32 %v788, %v749
        %v795 = vadd.f32 %v788, %v751
        %v796 = vadd.f32 %v788, %v753
        %v797 = vadd.f32 %v788, %v755
        %v798 = vadd.f32 %v788, %v757
        %v799 = vadd.f32 %v788, %v759
        %v800 = vadd.f32 %v788, %v761
        %v801 = vadd.f32 %v788, %v763
        %v802 = vadd.f32 %v788, %v765
        %v803 = vadd.f32 %v788, %v767
        %v804 = vadd.f32 %v788, %v769
        %v805 = vadd.f32 %v788, %v771
        %v806 = vadd.f32 %v788, %v773
        %v807 = vadd.f32 %v788, %v775
        %v808 = vadd.f32 %v788, %v777
        %v809 = vadd.f32 %v788, %v779
        %v810 = vmul.f32 %v447, %v790
        %v811 = vmul.f32 %v448, %v791
        %v812 = vmul.f32 %v449, %v792
        %v813 = vmul.f32 %v450, %v793
        %v814 = vmul.f32 %v451, %v794
        %v815 = vmul.f32 %v452, %v795
        %v816 = vmul.f32 %v453, %v796
        %v817 = vmul.f32 %v454, %v797
        %v818 = vmul.f32 %v455, %v798
        %v819 = vmul.f32 %v456, %v799
        %v820 = vmul.f32 %v457, %v800
        %v821 = vmul.f32 %v458, %v801
        %v822 = vmul.f32 %v459, %v802
        %v823 = vmul.f32 %v460, %v803
        %v824 = vmul.f32 %v461, %v804
        %v825 = vmul.f32 %v462, %v805
        %v826 = vmul.f32 %v463, %v806
        %v827 = vmul.f32 %v464, %v807
        %v828 = vmul.f32 %v465, %v808
        %v829 = vmul.f32 %v466, %v809
        %v830 = vpack.c.bf16 %v811, %v810
        %v831 = vpack.c.bf16 %v813, %v812
        %v832 = vpack.c.bf16 %v815, %v814
        %v833 = vpack.c.bf16 %v817, %v816
        %v834 = vpack.c.bf16 %v819, %v818
        %v835 = vpack.c.bf16 %v821, %v820
        %v836 = vpack.c.bf16 %v823, %v822
        %v837 = vpack.c.bf16 %v825, %v824
        %v838 = vpack.c.bf16 %v827, %v826
        %v839 = vpack.c.bf16 %v829, %v828
        %v840 = vld [vmem:[#allocation10] sm:$0xff]
        %v841 = vld [vmem:[#allocation10 + $0x8] sm:$0xff]
        %v842 = vld [vmem:[#allocation10 + $0x10] sm:$0xff]
        %v843 = vld [vmem:[#allocation10 + $0x18] sm:$0xff]
        %v844 = vld [vmem:[#allocation10 + $0x20] sm:$0xff]
        %v845 = vld [vmem:[#allocation10 + $0x28] sm:$0xff]
        %v846 = vld [vmem:[#allocation10 + $0x30] sm:$0xff]
        %v847 = vld [vmem:[#allocation10 + $0x38] sm:$0xff]
        %v848 = vld [vmem:[#allocation10 + $0x40] sm:$0xff]
        %v849 = vld [vmem:[#allocation10 + $0x48] sm:$0xff]
        %v850 = vld [vmem:[#allocation10 + $0x50] sm:$0xff]
        %v851 = vld [vmem:[#allocation10 + $0x58] sm:$0xff]
        %v852 = vld [vmem:[#allocation10 + $0x60] sm:$0xff]
        %v853 = vld [vmem:[#allocation10 + $0x68] sm:$0xff]
        %v854 = vld [vmem:[#allocation10 + $0x70] sm:$0xff]
        %v855 = vld [vmem:[#allocation10 + $0x78] sm:$0xff]
        %v872 = vunpack.c.l.b16 %v840
        %v873 = vunpack.c.h.b16 %v840
        %v874 = vunpack.c.l.b16 %v841
        %v875 = vunpack.c.h.b16 %v841
        %v876 = vunpack.c.l.b16 %v842
        %v877 = vunpack.c.h.b16 %v842
        %v878 = vunpack.c.l.b16 %v843
        %v879 = vunpack.c.h.b16 %v843
        %v880 = vunpack.c.l.b16 %v844
        %v881 = vunpack.c.h.b16 %v844
        %v882 = vunpack.c.l.b16 %v845
        %v883 = vunpack.c.h.b16 %v845
        %v884 = vunpack.c.l.b16 %v846
        %v885 = vunpack.c.h.b16 %v846
        %v886 = vunpack.c.l.b16 %v847
        %v887 = vunpack.c.h.b16 %v847
        %v888 = vunpack.c.l.b16 %v848
        %v889 = vunpack.c.h.b16 %v848
        %v890 = vunpack.c.l.b16 %v849
        %v891 = vunpack.c.h.b16 %v849
        %v892 = vunpack.c.l.b16 %v850
        %v893 = vunpack.c.h.b16 %v850
        %v894 = vunpack.c.l.b16 %v851
        %v895 = vunpack.c.h.b16 %v851
        %v896 = vunpack.c.l.b16 %v852
        %v897 = vunpack.c.h.b16 %v852
        %v898 = vunpack.c.l.b16 %v853
        %v899 = vunpack.c.h.b16 %v853
        %v900 = vunpack.c.l.b16 %v854
        %v901 = vunpack.c.h.b16 %v854
        %v902 = vunpack.c.l.b16 %v855
        %v903 = vunpack.c.h.b16 %v855
        %v904 = vpack.c.b16 %v876, %v872
        %v905 = vpack.c.b16 %v877, %v873
        %v906 = vpack.c.b16 %v878, %v874
        %v907 = vpack.c.b16 %v879, %v875
        %v908 = vpack.c.b16 %v884, %v880
        %v909 = vpack.c.b16 %v885, %v881
        %v910 = vpack.c.b16 %v886, %v882
        %v911 = vpack.c.b16 %v887, %v883
        %v912 = vpack.c.b16 %v892, %v888
        %v913 = vpack.c.b16 %v893, %v889
        %v914 = vpack.c.b16 %v894, %v890
        %v915 = vpack.c.b16 %v895, %v891
        %v916 = vpack.c.b16 %v900, %v896
        %v917 = vpack.c.b16 %v901, %v897
        %v918 = vpack.c.b16 %v902, %v898
        %v919 = vpack.c.b16 %v903, %v899
        %v937 = vsel %vm516, %v830, 0
        %v940 = vsel %vm516, %v831, 0
        %v943 = vsel %vm516, %v832, 0
        %v946 = vsel %vm516, %v833, 0
        %v949 = vsel %vm516, %v834, 0
        %v952 = vsel %vm516, %v835, 0
        %v955 = vsel %vm516, %v836, 0
        %v958 = vsel %vm516, %v837, 0
        %v961 = vsel %vm516, %v838, 0
        %v964 = vsel %vm516, %v839, 0
        %966 = vmatprep.subr.bf16.mxu0 0
        %967 = vmatpush1.bf16.msra.mxu0 0
        %968 = vmatprep.subr.bf16.mxu0 0
        %969 = vmatpush1.bf16.msra.mxu0 0
        %970 = vmatprep.subr.bf16.mxu0 0
        %971 = vmatpush1.bf16.msra.mxu0 0
        %972 = vmatprep.subr.bf16.mxu0 0
        %973 = vmatpush1.bf16.msra.mxu0 0
        %974 = vmatprep.subr.bf16.mxu0 %v917
        %975 = vmatpush1.bf16.msra.mxu0 %v916
        %976 = vmatprep.subr.bf16.mxu0 %v913
        %977 = vmatpush1.bf16.msra.mxu0 %v912
        %978 = vmatprep.subr.bf16.mxu0 %v909
        %979 = vmatpush1.bf16.msra.mxu0 %v908
        %980 = vmatprep.subr.bf16.mxu0 %v905
        %981 = vmatpush1.bf16.msra.mxu0 %v904
        %982 = vmatprep.subr.bf16.mxu0 0
        %983 = vmatpush2.bf16.msra.mxu0 0
        %984 = vmatprep.subr.bf16.mxu0 0
        %985 = vmatpush2.bf16.msra.mxu0 0
        %986 = vmatprep.subr.bf16.mxu0 0
        %987 = vmatpush2.bf16.msra.mxu0 0
        %988 = vmatprep.subr.bf16.mxu0 0
        %989 = vmatpush2.bf16.msra.mxu0 0
        %990 = vmatprep.subr.bf16.mxu0 0
        %991 = vmatpush2.bf16.msra.mxu0 0
        %992 = vmatprep.subr.bf16.mxu0 0
        %993 = vmatpush2.bf16.msra.mxu0 0
        %994 = vmatprep.subr.bf16.mxu0 0
        %995 = vmatpush2.bf16.msra.mxu0 0
        %996 = vmatprep.subr.bf16.mxu0 0
        %997 = vmatpush2.bf16.msra.mxu0 0
        %998 = vmatprep.mubr.bf16.mxu0 0
        %999 = vmatmul.mubr.bf16.gmra.mxu0 %v937
        %v1000 = vpop.f32.mrf.mxu0
        %v1001 = vpop.f32.mrf.mxu0
        %v1002 = vpop.f32.mrf.mxu0
        %v1003 = vpop.f32.mrf.mxu0
        %1004 = vmatprep.mubr.bf16.mxu0 0
        %1005 = vmatmul.mubr.bf16.gmra.mxu0 %v940
        %v1006 = vpop.f32.mrf.mxu0
        %v1007 = vadd.f32 0.0, %v1006
        %v1008 = vpop.f32.mrf.mxu0
        %v1009 = vadd.f32 0.0, %v1008
        %v1010 = vpop.f32.mrf.mxu0
        %v1011 = vadd.f32 0.0, %v1010
        %v1012 = vpop.f32.mrf.mxu0
        %v1013 = vadd.f32 0.0, %v1012
        %1014 = vmatprep.mubr.bf16.mxu0 0
        %1015 = vmatmul.mubr.bf16.gmra.mxu0 %v943
        %v1016 = vpop.f32.mrf.mxu0
        %v1017 = vadd.f32 0.0, %v1016
        %v1018 = vpop.f32.mrf.mxu0
        %v1019 = vadd.f32 0.0, %v1018
        %v1020 = vpop.f32.mrf.mxu0
        %v1021 = vadd.f32 0.0, %v1020
        %v1022 = vpop.f32.mrf.mxu0
        %v1023 = vadd.f32 0.0, %v1022
        %1024 = vmatprep.mubr.bf16.mxu0 0
        %1025 = vmatmul.mubr.bf16.gmra.mxu0 %v946
        %v1026 = vpop.f32.mrf.mxu0
        %v1027 = vadd.f32 0.0, %v1026
        %v1028 = vpop.f32.mrf.mxu0
        %v1029 = vadd.f32 0.0, %v1028
        %v1030 = vpop.f32.mrf.mxu0
        %v1031 = vadd.f32 0.0, %v1030
        %v1032 = vpop.f32.mrf.mxu0
        %v1033 = vadd.f32 0.0, %v1032
        %1034 = vmatprep.mubr.bf16.mxu0 0
        %1035 = vmatmul.mubr.bf16.gmra.mxu0 %v949
        %v1036 = vpop.f32.mrf.mxu0
        %v1037 = vadd.f32 0.0, %v1036
        %v1038 = vpop.f32.mrf.mxu0
        %v1039 = vadd.f32 0.0, %v1038
        %v1040 = vpop.f32.mrf.mxu0
        %v1041 = vadd.f32 0.0, %v1040
        %v1042 = vpop.f32.mrf.mxu0
        %v1043 = vadd.f32 0.0, %v1042
        %1044 = vmatprep.mubr.bf16.mxu0 0
        %1045 = vmatmul.mubr.bf16.gmra.mxu0 %v952
        %v1046 = vpop.f32.mrf.mxu0
        %v1047 = vadd.f32 0.0, %v1046
        %v1048 = vpop.f32.mrf.mxu0
        %v1049 = vadd.f32 0.0, %v1048
        %v1050 = vpop.f32.mrf.mxu0
        %v1051 = vadd.f32 0.0, %v1050
        %v1052 = vpop.f32.mrf.mxu0
        %v1053 = vadd.f32 0.0, %v1052
        %1054 = vmatprep.mubr.bf16.mxu0 0
        %1055 = vmatmul.mubr.bf16.gmra.mxu0 %v955
        %v1056 = vpop.f32.mrf.mxu0
        %v1057 = vadd.f32 0.0, %v1056
        %v1058 = vpop.f32.mrf.mxu0
        %v1059 = vadd.f32 0.0, %v1058
        %v1060 = vpop.f32.mrf.mxu0
        %v1061 = vadd.f32 0.0, %v1060
        %v1062 = vpop.f32.mrf.mxu0
        %v1063 = vadd.f32 0.0, %v1062
        %1064 = vmatprep.mubr.bf16.mxu0 0
        %1065 = vmatmul.mubr.bf16.gmra.mxu0 %v958
        %v1066 = vpop.f32.mrf.mxu0
        %v1067 = vadd.f32 0.0, %v1066
        %v1068 = vpop.f32.mrf.mxu0
        %v1069 = vadd.f32 0.0, %v1068
        %v1070 = vpop.f32.mrf.mxu0
        %v1071 = vadd.f32 0.0, %v1070
        %v1072 = vpop.f32.mrf.mxu0
        %v1073 = vadd.f32 0.0, %v1072
        %1074 = vmatprep.mubr.bf16.mxu0 0
        %1075 = vmatmul.mubr.bf16.gmra.mxu0 %v961
        %v1076 = vpop.f32.mrf.mxu0
        %v1077 = vadd.f32 0.0, %v1076
        %v1078 = vpop.f32.mrf.mxu0
        %v1079 = vadd.f32 0.0, %v1078
        %v1080 = vpop.f32.mrf.mxu0
        %v1081 = vadd.f32 0.0, %v1080
        %v1082 = vpop.f32.mrf.mxu0
        %v1083 = vadd.f32 0.0, %v1082
        %1084 = vmatprep.mubr.bf16.mxu0 0
        %1085 = vmatmul.mubr.bf16.gmra.mxu0 %v964
        %v1086 = vpop.f32.mrf.mxu0
        %v1087 = vadd.f32 0.0, %v1086
        %v1088 = vpop.f32.mrf.mxu0
        %v1089 = vadd.f32 0.0, %v1088
        %v1090 = vpop.f32.mrf.mxu0
        %v1091 = vadd.f32 0.0, %v1090
        %v1092 = vpop.f32.mrf.mxu0
        %v1093 = vadd.f32 0.0, %v1092
        %1094 = vdwg.mxu0
        %1095 = vmatprep.subr.bf16.mxu0 0
        %1096 = vmatpush1.bf16.msra.mxu0 0
        %1097 = vmatprep.subr.bf16.mxu0 0
        %1098 = vmatpush1.bf16.msra.mxu0 0
        %1099 = vmatprep.subr.bf16.mxu0 0
        %1100 = vmatpush1.bf16.msra.mxu0 0
        %1101 = vmatprep.subr.bf16.mxu0 0
        %1102 = vmatpush1.bf16.msra.mxu0 0
        %1103 = vmatprep.subr.bf16.mxu0 %v919
        %1104 = vmatpush1.bf16.msra.mxu0 %v918
        %1105 = vmatprep.subr.bf16.mxu0 %v915
        %1106 = vmatpush1.bf16.msra.mxu0 %v914
        %1107 = vmatprep.subr.bf16.mxu0 %v911
        %1108 = vmatpush1.bf16.msra.mxu0 %v910
        %1109 = vmatprep.subr.bf16.mxu0 %v907
        %1110 = vmatpush1.bf16.msra.mxu0 %v906
        %1111 = vmatprep.subr.bf16.mxu0 0
        %1112 = vmatpush2.bf16.msra.mxu0 0
        %1113 = vmatprep.subr.bf16.mxu0 0
        %1114 = vmatpush2.bf16.msra.mxu0 0
        %1115 = vmatprep.subr.bf16.mxu0 0
        %1116 = vmatpush2.bf16.msra.mxu0 0
        %1117 = vmatprep.subr.bf16.mxu0 0
        %1118 = vmatpush2.bf16.msra.mxu0 0
        %1119 = vmatprep.subr.bf16.mxu0 0
        %1120 = vmatpush2.bf16.msra.mxu0 0
        %1121 = vmatprep.subr.bf16.mxu0 0
        %1122 = vmatpush2.bf16.msra.mxu0 0
        %1123 = vmatprep.subr.bf16.mxu0 0
        %1124 = vmatpush2.bf16.msra.mxu0 0
        %1125 = vmatprep.subr.bf16.mxu0 0
        %1126 = vmatpush2.bf16.msra.mxu0 0
        %1127 = vmatprep.mubr.bf16.mxu0 0
        %1128 = vmatmul.mubr.bf16.gmra.mxu0 %v937
        %v1129 = vpop.f32.mrf.mxu0
        %v1130 = vadd.f32 0.0, %v1129
        %v1131 = vpop.f32.mrf.mxu0
        %v1132 = vadd.f32 0.0, %v1131
        %v1133 = vpop.f32.mrf.mxu0
        %v1134 = vadd.f32 0.0, %v1133
        %v1135 = vpop.f32.mrf.mxu0
        %v1136 = vadd.f32 0.0, %v1135
        %1137 = vmatprep.mubr.bf16.mxu0 0
        %1138 = vmatmul.mubr.bf16.gmra.mxu0 %v940
        %v1139 = vpop.f32.mrf.mxu0
        %v1140 = vadd.f32 0.0, %v1139
        %v1141 = vpop.f32.mrf.mxu0
        %v1142 = vadd.f32 0.0, %v1141
        %v1143 = vpop.f32.mrf.mxu0
        %v1144 = vadd.f32 0.0, %v1143
        %v1145 = vpop.f32.mrf.mxu0
        %v1146 = vadd.f32 0.0, %v1145
        %1147 = vmatprep.mubr.bf16.mxu0 0
        %1148 = vmatmul.mubr.bf16.gmra.mxu0 %v943
        %v1149 = vpop.f32.mrf.mxu0
        %v1150 = vadd.f32 0.0, %v1149
        %v1151 = vpop.f32.mrf.mxu0
        %v1152 = vadd.f32 0.0, %v1151
        %v1153 = vpop.f32.mrf.mxu0
        %v1154 = vadd.f32 0.0, %v1153
        %v1155 = vpop.f32.mrf.mxu0
        %v1156 = vadd.f32 0.0, %v1155
        %1157 = vmatprep.mubr.bf16.mxu0 0
        %1158 = vmatmul.mubr.bf16.gmra.mxu0 %v946
        %v1159 = vpop.f32.mrf.mxu0
        %v1160 = vadd.f32 0.0, %v1159
        %v1161 = vpop.f32.mrf.mxu0
        %v1162 = vadd.f32 0.0, %v1161
        %v1163 = vpop.f32.mrf.mxu0
        %v1164 = vadd.f32 0.0, %v1163
        %v1165 = vpop.f32.mrf.mxu0
        %v1166 = vadd.f32 0.0, %v1165
        %1167 = vmatprep.mubr.bf16.mxu0 0
        %1168 = vmatmul.mubr.bf16.gmra.mxu0 %v949
        %v1169 = vpop.f32.mrf.mxu0
        %v1170 = vadd.f32 0.0, %v1169
        %v1171 = vpop.f32.mrf.mxu0
        %v1172 = vadd.f32 0.0, %v1171
        %v1173 = vpop.f32.mrf.mxu0
        %v1174 = vadd.f32 0.0, %v1173
        %v1175 = vpop.f32.mrf.mxu0
        %v1176 = vadd.f32 0.0, %v1175
        %1177 = vmatprep.mubr.bf16.mxu0 0
        %1178 = vmatmul.mubr.bf16.gmra.mxu0 %v952
        %v1179 = vpop.f32.mrf.mxu0
        %v1180 = vadd.f32 0.0, %v1179
        %v1181 = vpop.f32.mrf.mxu0
        %v1182 = vadd.f32 0.0, %v1181
        %v1183 = vpop.f32.mrf.mxu0
        %v1184 = vadd.f32 0.0, %v1183
        %v1185 = vpop.f32.mrf.mxu0
        %v1186 = vadd.f32 0.0, %v1185
        %1187 = vmatprep.mubr.bf16.mxu0 0
        %1188 = vmatmul.mubr.bf16.gmra.mxu0 %v955
        %v1189 = vpop.f32.mrf.mxu0
        %v1190 = vadd.f32 0.0, %v1189
        %v1191 = vpop.f32.mrf.mxu0
        %v1192 = vadd.f32 0.0, %v1191
        %v1193 = vpop.f32.mrf.mxu0
        %v1194 = vadd.f32 0.0, %v1193
        %v1195 = vpop.f32.mrf.mxu0
        %v1196 = vadd.f32 0.0, %v1195
        %1197 = vmatprep.mubr.bf16.mxu0 0
        %1198 = vmatmul.mubr.bf16.gmra.mxu0 %v958
        %v1199 = vpop.f32.mrf.mxu0
        %v1200 = vadd.f32 0.0, %v1199
        %v1201 = vpop.f32.mrf.mxu0
        %v1202 = vadd.f32 0.0, %v1201
        %v1203 = vpop.f32.mrf.mxu0
        %v1204 = vadd.f32 0.0, %v1203
        %v1205 = vpop.f32.mrf.mxu0
        %v1206 = vadd.f32 0.0, %v1205
        %1207 = vmatprep.mubr.bf16.mxu0 0
        %1208 = vmatmul.mubr.bf16.gmra.mxu0 %v961
        %v1209 = vpop.f32.mrf.mxu0
        %v1210 = vadd.f32 0.0, %v1209
        %v1211 = vpop.f32.mrf.mxu0
        %v1212 = vadd.f32 0.0, %v1211
        %v1213 = vpop.f32.mrf.mxu0
        %v1214 = vadd.f32 0.0, %v1213
        %v1215 = vpop.f32.mrf.mxu0
        %v1216 = vadd.f32 0.0, %v1215
        %1217 = vmatprep.mubr.bf16.mxu0 0
        %1218 = vmatmul.mubr.bf16.gmra.mxu0 %v964
        %v1219 = vpop.f32.mrf.mxu0
        %v1220 = vpop.f32.mrf.mxu0
        %v1221 = vpop.f32.mrf.mxu0
        %v1222 = vpop.f32.mrf.mxu0
        %1223 = vdwg.mxu0
        %vm1224 = vcmask 1040384
        %vm1225 = vsmask.f32 256
        %vm1226 = vmand %vm1224, %vm1225
        %v1227 = vld [vmem:[#allocation2] sm:$0x1]
        %v1228 = vsel %vm1226, 0, %v1227
        %1229 = vst [vmem:[#allocation2] sm:$0x1] %v1228
        %v1230 = vld [vmem:[#allocation3] sm:$0x1]
        %v1231 = vsel %vm1226, 0, %v1230
        %1232 = vst [vmem:[#allocation3] sm:$0x1] %v1231
        %vm1233 = vsmask.f32 7938
        %vm1234 = vmand %vm1224, %vm1233
        %v1235 = vld [vmem:[#allocation2] sm:$0x1]
        %v1236 = vsel %vm1234, 0, %v1235
        %1237 = vst [vmem:[#allocation2] sm:$0x1] %v1236
        %v1238 = vld [vmem:[#allocation3] sm:$0x1]
        %v1239 = vsel %vm1234, 0, %v1238
        %1240 = vst [vmem:[#allocation3] sm:$0x1] %v1239
        %vm1241 = vcmask 1041409
        %vm1242 = vsmask.f32 1280
        %vm1243 = vmand %vm1241, %vm1242
        %v1244 = vld [vmem:[#allocation2 + $0x8] sm:$0x2]
        %v1245 = vsel %vm1243, 0, %v1244
        %1246 = vst [vmem:[#allocation2 + $0x8] sm:$0x2] %v1245
        %v1247 = vld [vmem:[#allocation3 + $0x8] sm:$0x2]
        %v1248 = vsel %vm1243, 0, %v1247
        %1249 = vst [vmem:[#allocation3 + $0x8] sm:$0x2] %v1248
        %vm1250 = vsmask.f32 7942
        %vm1251 = vmand %vm1241, %vm1250
        %v1252 = vld [vmem:[#allocation2 + $0x10] sm:$0x2]
        %v1253 = vsel %vm1251, 0, %v1252
        %1254 = vst [vmem:[#allocation2 + $0x10] sm:$0x2] %v1253
        %v1255 = vld [vmem:[#allocation3 + $0x10] sm:$0x2]
        %v1256 = vsel %vm1251, 0, %v1255
        %1257 = vst [vmem:[#allocation3 + $0x10] sm:$0x2] %v1256
        %vm1258 = vcmask 1042434
        %vm1259 = vsmask.f32 2304
        %vm1260 = vmand %vm1258, %vm1259
        %v1261 = vld [vmem:[#allocation2 + $0x18] sm:$0x4]
        %v1262 = vsel %vm1260, 0, %v1261
        %1263 = vst [vmem:[#allocation2 + $0x18] sm:$0x4] %v1262
        %v1264 = vld [vmem:[#allocation3 + $0x18] sm:$0x4]
        %v1265 = vsel %vm1260, 0, %v1264
        %1266 = vst [vmem:[#allocation3 + $0x18] sm:$0x4] %v1265
        %vm1267 = vsmask.f32 7946
        %vm1268 = vmand %vm1258, %vm1267
        %v1269 = vld [vmem:[#allocation2 + $0x20] sm:$0x4]
        %v1270 = vsel %vm1268, 0, %v1269
        %1271 = vst [vmem:[#allocation2 + $0x20] sm:$0x4] %v1270
        %v1272 = vld [vmem:[#allocation3 + $0x20] sm:$0x4]
        %v1273 = vsel %vm1268, 0, %v1272
        %1274 = vst [vmem:[#allocation3 + $0x20] sm:$0x4] %v1273
        %vm1275 = vcmask 1043459
        %vm1276 = vsmask.f32 3328
        %vm1277 = vmand %vm1275, %vm1276
        %v1278 = vld [vmem:[#allocation2 + $0x28] sm:$0x8]
        %v1279 = vsel %vm1277, 0, %v1278
        %1280 = vst [vmem:[#allocation2 + $0x28] sm:$0x8] %v1279
        %v1281 = vld [vmem:[#allocation3 + $0x28] sm:$0x8]
        %v1282 = vsel %vm1277, 0, %v1281
        %1283 = vst [vmem:[#allocation3 + $0x28] sm:$0x8] %v1282
        %vm1284 = vsmask.f32 7950
        %vm1285 = vmand %vm1275, %vm1284
        %v1286 = vld [vmem:[#allocation2 + $0x30] sm:$0x8]
        %v1287 = vsel %vm1285, 0, %v1286
        %1288 = vst [vmem:[#allocation2 + $0x30] sm:$0x8] %v1287
        %v1289 = vld [vmem:[#allocation3 + $0x30] sm:$0x8]
        %v1290 = vsel %vm1285, 0, %v1289
        %1291 = vst [vmem:[#allocation3 + $0x30] sm:$0x8] %v1290
        %v1292 = vld [vmem:[#allocation2 + $0x3c] sm:$0x1]
        %v1293 = vsel %vm1226, 0, %v1292
        %1294 = vst [vmem:[#allocation2 + $0x3c] sm:$0x1] %v1293
        %v1295 = vld [vmem:[#allocation3 + $0x3c] sm:$0x1]
        %v1296 = vsel %vm1226, 0, %v1295
        %1297 = vst [vmem:[#allocation3 + $0x3c] sm:$0x1] %v1296
        %v1298 = vld [vmem:[#allocation2 + $0x44] sm:$0x1]
        %v1299 = vsel %vm1234, 0, %v1298
        %1300 = vst [vmem:[#allocation2 + $0x44] sm:$0x1] %v1299
        %v1301 = vld [vmem:[#allocation3 + $0x44] sm:$0x1]
        %v1302 = vsel %vm1234, 0, %v1301
        %1303 = vst [vmem:[#allocation3 + $0x44] sm:$0x1] %v1302
        %v1304 = vld [vmem:[#allocation2 + $0x4c] sm:$0x2]
        %v1305 = vsel %vm1243, 0, %v1304
        %1306 = vst [vmem:[#allocation2 + $0x4c] sm:$0x2] %v1305
        %v1307 = vld [vmem:[#allocation3 + $0x4c] sm:$0x2]
        %v1308 = vsel %vm1243, 0, %v1307
        %1309 = vst [vmem:[#allocation3 + $0x4c] sm:$0x2] %v1308
        %v1310 = vld [vmem:[#allocation2 + $0x54] sm:$0x2]
        %v1311 = vsel %vm1251, 0, %v1310
        %1312 = vst [vmem:[#allocation2 + $0x54] sm:$0x2] %v1311
        %v1313 = vld [vmem:[#allocation3 + $0x54] sm:$0x2]
        %v1314 = vsel %vm1251, 0, %v1313
        %1315 = vst [vmem:[#allocation3 + $0x54] sm:$0x2] %v1314
        %v1316 = vld [vmem:[#allocation2 + $0x5c] sm:$0x4]
        %v1317 = vsel %vm1260, 0, %v1316
        %1318 = vst [vmem:[#allocation2 + $0x5c] sm:$0x4] %v1317
        %v1319 = vld [vmem:[#allocation3 + $0x5c] sm:$0x4]
        %v1320 = vsel %vm1260, 0, %v1319
        %1321 = vst [vmem:[#allocation3 + $0x5c] sm:$0x4] %v1320
        %v1322 = vld [vmem:[#allocation2 + $0x64] sm:$0x4]
        %v1323 = vsel %vm1268, 0, %v1322
        %1324 = vst [vmem:[#allocation2 + $0x64] sm:$0x4] %v1323
        %v1325 = vld [vmem:[#allocation3 + $0x64] sm:$0x4]
        %v1326 = vsel %vm1268, 0, %v1325
        %1327 = vst [vmem:[#allocation3 + $0x64] sm:$0x4] %v1326
        %v1328 = vld [vmem:[#allocation2 + $0x6c] sm:$0x8]
        %v1329 = vsel %vm1277, 0, %v1328
        %1330 = vst [vmem:[#allocation2 + $0x6c] sm:$0x8] %v1329
        %v1331 = vld [vmem:[#allocation3 + $0x6c] sm:$0x8]
        %v1332 = vsel %vm1277, 0, %v1331
        %1333 = vst [vmem:[#allocation3 + $0x6c] sm:$0x8] %v1332
        %v1334 = vld [vmem:[#allocation2 + $0x74] sm:$0x8]
        %v1335 = vsel %vm1285, 0, %v1334
        %1336 = vst [vmem:[#allocation2 + $0x74] sm:$0x8] %v1335
        %v1337 = vld [vmem:[#allocation3 + $0x74] sm:$0x8]
        %v1338 = vsel %vm1285, 0, %v1337
        %1339 = vst [vmem:[#allocation3 + $0x74] sm:$0x8] %v1338
        %v1340 = vld [vmem:[#allocation2 + $0x80] sm:$0x1]
        %v1341 = vsel %vm1226, 0, %v1340
        %1342 = vst [vmem:[#allocation2 + $0x80] sm:$0x1] %v1341
        %v1343 = vld [vmem:[#allocation3 + $0x80] sm:$0x1]
        %v1344 = vsel %vm1226, 0, %v1343
        %1345 = vst [vmem:[#allocation3 + $0x80] sm:$0x1] %v1344
        %v1346 = vld [vmem:[#allocation2 + $0x88] sm:$0x1]
        %v1347 = vsel %vm1234, 0, %v1346
        %1348 = vst [vmem:[#allocation2 + $0x88] sm:$0x1] %v1347
        %v1349 = vld [vmem:[#allocation3 + $0x88] sm:$0x1]
        %v1350 = vsel %vm1234, 0, %v1349
        %1351 = vst [vmem:[#allocation3 + $0x88] sm:$0x1] %v1350
        %v1352 = vld [vmem:[#allocation2 + $0x90] sm:$0x2]
        %v1353 = vsel %vm1243, 0, %v1352
        %1354 = vst [vmem:[#allocation2 + $0x90] sm:$0x2] %v1353
        %v1355 = vld [vmem:[#allocation3 + $0x90] sm:$0x2]
        %v1356 = vsel %vm1243, 0, %v1355
        %1357 = vst [vmem:[#allocation3 + $0x90] sm:$0x2] %v1356
        %v1358 = vld [vmem:[#allocation2 + $0x98] sm:$0x2]
        %v1359 = vsel %vm1251, 0, %v1358
        %1360 = vst [vmem:[#allocation2 + $0x98] sm:$0x2] %v1359
        %v1361 = vld [vmem:[#allocation3 + $0x98] sm:$0x2]
        %v1362 = vsel %vm1251, 0, %v1361
        %1363 = vst [vmem:[#allocation3 + $0x98] sm:$0x2] %v1362
        %v1364 = vld [vmem:[#allocation11] sm:$0x1]
        %p1365 = scmp.gt.s32.totalorder %s34, 0
        %s1366 = scalar_select %p1365, 1, 0
        %s1367 = scvt.s32.f32 %s1366
        %v1368 = vstv %s1367
        %v1369 = vmul.f32 %v1364, %v1368
        %v1371 = vlaneseq
        %v1372 = vshrl.u32 %v1371, 7
        %v1373 = vsub.s32 0, %v1372
        %v1374 = vrot.slane %v1369, %v1373
        %v1376 = vadd.f32 %v1130, %v1374
        %v1377 = vadd.f32 %v1134, %v1374
        %v1378 = vpack.c.bf16 %v1377, %v1376
        %v1380 = vunpack.c.l.b16 %v1378
        %v1381 = vunpack.c.h.b16 %v1378
        %v1382 = vpack.c.b16 %v1380, %v1380
        %v1383 = vpack.c.b16 %v1381, %v1381
        %vm1384 = vcmask 1044484
        %vm1385 = vmor %vm1224, %vm1384
        %v1386 = vrot.slane %v1382, 7
        %v1387 = vrot.slane %v1386, 4
        %v1388 = vrot.slane %v1383, 7
        %v1389 = vsel %vm1385, %v1387, %v1388
        %v1390 = vrot.slane %v1388, 4
        %1394 = vst [vmem:[#allocation2] sm:$0xe] %v1386
        %1395 = vst [vmem:[#allocation2 + $0x4] sm:$0xf] %v1389
        %1396 = vst [vmem:[#allocation2 + $0x8] sm:$0x1] %v1390
        %v1397 = vadd.f32 %v1132, %v1374
        %v1398 = vadd.f32 %v1136, %v1374
        %v1399 = vpack.c.bf16 %v1398, %v1397
        %v1401 = vunpack.c.l.b16 %v1399
        %v1402 = vunpack.c.h.b16 %v1399
        %v1403 = vpack.c.b16 %v1401, %v1401
        %v1404 = vpack.c.b16 %v1402, %v1402
        %v1405 = vrot.slane %v1403, 7
        %v1406 = vrot.slane %v1405, 4
        %v1407 = vrot.slane %v1404, 7
        %v1408 = vsel %vm1385, %v1406, %v1407
        %v1409 = vrot.slane %v1407, 4
        %1413 = vst [vmem:[#allocation3] sm:$0xe] %v1405
        %1414 = vst [vmem:[#allocation3 + $0x4] sm:$0xf] %v1408
        %1415 = vst [vmem:[#allocation3 + $0x8] sm:$0x1] %v1409
        %v1417 = vlaneseq
        %v1418 = vshrl.u32 %v1417, 7
        %v1419 = vsub.s32 0, %v1418
        %v1420 = vrot.slane %v1364, %v1419
        %v1422 = vadd.f32 %v1007, %v1420
        %v1423 = vadd.f32 %v1011, %v1420
        %v1424 = vpack.c.bf16 %v1423, %v1422
        %v1426 = vunpack.c.l.b16 %v1424
        %v1427 = vunpack.c.h.b16 %v1424
        %v1428 = vpack.c.b16 %v1426, %v1426
        %v1429 = vpack.c.b16 %v1427, %v1427
        %vm1430 = vsmask.f32 5392
        %vm1431 = vmor %vm1242, %vm1430
        %v1433 = vshrl.u32 %v1428, 16
        %v1435 = vrot.slane %v1433, 6
        %v1436 = vshll.u32 %v1428, 16
        %v1438 = vrot.slane %v1436, 7
        %v1439 = vor.u32 %v1435, %v1438
        %v1440 = vrot.slane %v1439, 4
        %v1442 = vshrl.u32 %v1429, 16
        %v1444 = vrot.slane %v1442, 6
        %v1445 = vshll.u32 %v1429, 16
        %v1447 = vrot.slane %v1445, 7
        %v1448 = vor.u32 %v1444, %v1447
        %v1449 = vsel %vm1431, %v1440, %v1448
        %v1450 = vrot.slane %v1448, 4
        %vm1454 = vcmask 1043457
        %vm1455 = vmand %vm1454, %vm1250
        %v1456 = vld [vmem:[#allocation2 + $0x8] sm:$0xe]
        %v1457 = vsel %vm1455, %v1439, %v1456
        %1458 = vst [vmem:[#allocation2 + $0x8] sm:$0xe] %v1457
        %1459 = vst [vmem:[#allocation2 + $0xc] sm:$0xf] %v1449
        %vm1460 = vcmask 1041408
        %vm1461 = vmand %vm1460, %vm1242
        %v1462 = vld [vmem:[#allocation2 + $0x10] sm:$0x3]
        %v1463 = vsel %vm1461, %v1450, %v1462
        %1464 = vst [vmem:[#allocation2 + $0x10] sm:$0x3] %v1463
        %v1465 = vadd.f32 %v1009, %v1420
        %v1466 = vadd.f32 %v1013, %v1420
        %v1467 = vpack.c.bf16 %v1466, %v1465
        %v1469 = vunpack.c.l.b16 %v1467
        %v1470 = vunpack.c.h.b16 %v1467
        %v1471 = vpack.c.b16 %v1469, %v1469
        %v1472 = vpack.c.b16 %v1470, %v1470
        %v1474 = vshrl.u32 %v1471, 16
        %v1476 = vrot.slane %v1474, 6
        %v1477 = vshll.u32 %v1471, 16
        %v1479 = vrot.slane %v1477, 7
        %v1480 = vor.u32 %v1476, %v1479
        %v1481 = vrot.slane %v1480, 4
        %v1483 = vshrl.u32 %v1472, 16
        %v1485 = vrot.slane %v1483, 6
        %v1486 = vshll.u32 %v1472, 16
        %v1488 = vrot.slane %v1486, 7
        %v1489 = vor.u32 %v1485, %v1488
        %v1490 = vsel %vm1431, %v1481, %v1489
        %v1491 = vrot.slane %v1489, 4
        %v1495 = vld [vmem:[#allocation3 + $0x8] sm:$0xe]
        %v1496 = vsel %vm1455, %v1480, %v1495
        %1497 = vst [vmem:[#allocation3 + $0x8] sm:$0xe] %v1496
        %1498 = vst [vmem:[#allocation3 + $0xc] sm:$0xf] %v1490
        %v1499 = vld [vmem:[#allocation3 + $0x10] sm:$0x3]
        %v1500 = vsel %vm1461, %v1491, %v1499
        %1501 = vst [vmem:[#allocation3 + $0x10] sm:$0x3] %v1500
        %v1502 = vadd.f32 %v1140, %v1420
        %v1503 = vadd.f32 %v1144, %v1420
        %v1504 = vpack.c.bf16 %v1503, %v1502
        %v1506 = vunpack.c.l.b16 %v1504
        %v1507 = vunpack.c.h.b16 %v1504
        %v1508 = vpack.c.b16 %v1506, %v1506
        %v1509 = vpack.c.b16 %v1507, %v1507
        %vm1510 = vcmask 1045508
        %vm1511 = vmor %vm1460, %vm1510
        %v1512 = vrot.slane %v1508, 6
        %v1513 = vrot.slane %v1512, 4
        %v1514 = vrot.slane %v1509, 6
        %v1515 = vsel %vm1511, %v1513, %v1514
        %v1516 = vrot.slane %v1514, 4
        %1520 = vst [vmem:[#allocation2 + $0x10] sm:$0xc] %v1512
        %1521 = vst [vmem:[#allocation2 + $0x14] sm:$0xf] %v1515
        %1522 = vst [vmem:[#allocation2 + $0x18] sm:$0x3] %v1516
        %v1523 = vadd.f32 %v1142, %v1420
        %v1524 = vadd.f32 %v1146, %v1420
        %v1525 = vpack.c.bf16 %v1524, %v1523
        %v1527 = vunpack.c.l.b16 %v1525
        %v1528 = vunpack.c.h.b16 %v1525
        %v1529 = vpack.c.b16 %v1527, %v1527
        %v1530 = vpack.c.b16 %v1528, %v1528
        %v1531 = vrot.slane %v1529, 6
        %v1532 = vrot.slane %v1531, 4
        %v1533 = vrot.slane %v1530, 6
        %v1534 = vsel %vm1511, %v1532, %v1533
        %v1535 = vrot.slane %v1533, 4
        %1539 = vst [vmem:[#allocation3 + $0x10] sm:$0xc] %v1531
        %1540 = vst [vmem:[#allocation3 + $0x14] sm:$0xf] %v1534
        %1541 = vst [vmem:[#allocation3 + $0x18] sm:$0x3] %v1535
        %v1542 = vadd.f32 %v1017, %v1420
        %v1543 = vadd.f32 %v1021, %v1420
        %v1544 = vpack.c.bf16 %v1543, %v1542
        %v1546 = vunpack.c.l.b16 %v1544
        %v1547 = vunpack.c.h.b16 %v1544
        %v1548 = vpack.c.b16 %v1546, %v1546
        %v1549 = vpack.c.b16 %v1547, %v1547
        %vm1550 = vsmask.f32 6416
        %vm1551 = vmor %vm1259, %vm1550
        %v1553 = vshrl.u32 %v1548, 16
        %v1555 = vrot.slane %v1553, 5
        %v1556 = vshll.u32 %v1548, 16
        %v1558 = vrot.slane %v1556, 6
        %v1559 = vor.u32 %v1555, %v1558
        %v1560 = vrot.slane %v1559, 4
        %v1562 = vshrl.u32 %v1549, 16
        %v1564 = vrot.slane %v1562, 5
        %v1565 = vshll.u32 %v1549, 16
        %v1567 = vrot.slane %v1565, 6
        %v1568 = vor.u32 %v1564, %v1567
        %v1569 = vsel %vm1551, %v1560, %v1568
        %v1570 = vrot.slane %v1568, 4
        %vm1574 = vcmask 1043458
        %vm1575 = vmand %vm1574, %vm1267
        %v1576 = vld [vmem:[#allocation2 + $0x18] sm:$0xc]
        %v1577 = vsel %vm1575, %v1559, %v1576
        %1578 = vst [vmem:[#allocation2 + $0x18] sm:$0xc] %v1577
        %1579 = vst [vmem:[#allocation2 + $0x1c] sm:$0xf] %v1569
        %vm1580 = vcmask 1042432
        %vm1581 = vmand %vm1580, %vm1259
        %v1582 = vld [vmem:[#allocation2 + $0x20] sm:$0x7]
        %v1583 = vsel %vm1581, %v1570, %v1582
        %1584 = vst [vmem:[#allocation2 + $0x20] sm:$0x7] %v1583
        %v1585 = vadd.f32 %v1019, %v1420
        %v1586 = vadd.f32 %v1023, %v1420
        %v1587 = vpack.c.bf16 %v1586, %v1585
        %v1589 = vunpack.c.l.b16 %v1587
        %v1590 = vunpack.c.h.b16 %v1587
        %v1591 = vpack.c.b16 %v1589, %v1589
        %v1592 = vpack.c.b16 %v1590, %v1590
        %v1594 = vshrl.u32 %v1591, 16
        %v1596 = vrot.slane %v1594, 5
        %v1597 = vshll.u32 %v1591, 16
        %v1599 = vrot.slane %v1597, 6
        %v1600 = vor.u32 %v1596, %v1599
        %v1601 = vrot.slane %v1600, 4
        %v1603 = vshrl.u32 %v1592, 16
        %v1605 = vrot.slane %v1603, 5
        %v1606 = vshll.u32 %v1592, 16
        %v1608 = vrot.slane %v1606, 6
        %v1609 = vor.u32 %v1605, %v1608
        %v1610 = vsel %vm1551, %v1601, %v1609
        %v1611 = vrot.slane %v1609, 4
        %v1615 = vld [vmem:[#allocation3 + $0x18] sm:$0xc]
        %v1616 = vsel %vm1575, %v1600, %v1615
        %1617 = vst [vmem:[#allocation3 + $0x18] sm:$0xc] %v1616
        %1618 = vst [vmem:[#allocation3 + $0x1c] sm:$0xf] %v1610
        %v1619 = vld [vmem:[#allocation3 + $0x20] sm:$0x7]
        %v1620 = vsel %vm1581, %v1611, %v1619
        %1621 = vst [vmem:[#allocation3 + $0x20] sm:$0x7] %v1620
        %v1622 = vadd.f32 %v1150, %v1420
        %v1623 = vadd.f32 %v1154, %v1420
        %v1624 = vpack.c.bf16 %v1623, %v1622
        %v1626 = vunpack.c.l.b16 %v1624
        %v1627 = vunpack.c.h.b16 %v1624
        %v1628 = vpack.c.b16 %v1626, %v1626
        %v1629 = vpack.c.b16 %v1627, %v1627
        %vm1630 = vcmask 1046532
        %vm1631 = vmor %vm1580, %vm1630
        %v1632 = vrot.slane %v1628, 5
        %v1633 = vrot.slane %v1632, 4
        %v1634 = vrot.slane %v1629, 5
        %v1635 = vsel %vm1631, %v1633, %v1634
        %v1636 = vrot.slane %v1634, 4
        %1640 = vst [vmem:[#allocation2 + $0x20] sm:$0x8] %v1632
        %1641 = vst [vmem:[#allocation2 + $0x24] sm:$0xf] %v1635
        %1642 = vst [vmem:[#allocation2 + $0x28] sm:$0x7] %v1636
        %v1643 = vadd.f32 %v1152, %v1420
        %v1644 = vadd.f32 %v1156, %v1420
        %v1645 = vpack.c.bf16 %v1644, %v1643
        %v1647 = vunpack.c.l.b16 %v1645
        %v1648 = vunpack.c.h.b16 %v1645
        %v1649 = vpack.c.b16 %v1647, %v1647
        %v1650 = vpack.c.b16 %v1648, %v1648
        %v1651 = vrot.slane %v1649, 5
        %v1652 = vrot.slane %v1651, 4
        %v1653 = vrot.slane %v1650, 5
        %v1654 = vsel %vm1631, %v1652, %v1653
        %v1655 = vrot.slane %v1653, 4
        %1659 = vst [vmem:[#allocation3 + $0x20] sm:$0x8] %v1651
        %1660 = vst [vmem:[#allocation3 + $0x24] sm:$0xf] %v1654
        %1661 = vst [vmem:[#allocation3 + $0x28] sm:$0x7] %v1655
        %v1662 = vadd.f32 %v1027, %v1420
        %v1663 = vadd.f32 %v1031, %v1420
        %v1664 = vpack.c.bf16 %v1663, %v1662
        %v1666 = vunpack.c.l.b16 %v1664
        %v1667 = vunpack.c.h.b16 %v1664
        %v1668 = vpack.c.b16 %v1666, %v1666
        %v1669 = vpack.c.b16 %v1667, %v1667
        %vm1670 = vsmask.f32 7440
        %vm1671 = vmor %vm1276, %vm1670
        %v1673 = vshll.u32 %v1668, 16
        %v1675 = vrot.slane %v1673, 5
        %v1676 = vshrl.u32 %v1668, 16
        %v1678 = vrot.slane %v1676, 4
        %v1679 = vor.u32 %v1678, %v1675
        %v1680 = vrot.slane %v1679, 4
        %v1682 = vshll.u32 %v1669, 16
        %v1684 = vrot.slane %v1682, 5
        %v1685 = vsel %vm1671, %v1680, %v1684
        %v1686 = vshrl.u32 %v1669, 16
        %v1688 = vrot.slane %v1686, 4
        %v1689 = vor.u32 %v1688, %v1684
        %v1690 = vrot.slane %v1689, 4
        %v1694 = vld [vmem:[#allocation2 + $0x28] sm:$0x8]
        %v1695 = vsel %vm1285, %v1675, %v1694
        %1696 = vst [vmem:[#allocation2 + $0x28] sm:$0x8] %v1695
        %1697 = vst [vmem:[#allocation2 + $0x2c] sm:$0xf] %v1685
        %vm1698 = vcmask 1043456
        %vm1699 = vmand %vm1698, %vm1276
        %v1700 = vld [vmem:[#allocation2 + $0x30] sm:$0xf]
        %v1701 = vsel %vm1699, %v1690, %v1700
        %1702 = vst [vmem:[#allocation2 + $0x30] sm:$0xf] %v1701
        %v1703 = vadd.f32 %v1029, %v1420
        %v1704 = vadd.f32 %v1033, %v1420
        %v1705 = vpack.c.bf16 %v1704, %v1703
        %v1707 = vunpack.c.l.b16 %v1705
        %v1708 = vunpack.c.h.b16 %v1705
        %v1709 = vpack.c.b16 %v1707, %v1707
        %v1710 = vpack.c.b16 %v1708, %v1708
        %v1712 = vshll.u32 %v1709, 16
        %v1714 = vrot.slane %v1712, 5
        %v1715 = vshrl.u32 %v1709, 16
        %v1717 = vrot.slane %v1715, 4
        %v1718 = vor.u32 %v1717, %v1714
        %v1719 = vrot.slane %v1718, 4
        %v1721 = vshll.u32 %v1710, 16
        %v1723 = vrot.slane %v1721, 5
        %v1724 = vsel %vm1671, %v1719, %v1723
        %v1725 = vshrl.u32 %v1710, 16
        %v1727 = vrot.slane %v1725, 4
        %v1728 = vor.u32 %v1727, %v1723
        %v1729 = vrot.slane %v1728, 4
        %v1733 = vld [vmem:[#allocation3 + $0x28] sm:$0x8]
        %v1734 = vsel %vm1285, %v1714, %v1733
        %1735 = vst [vmem:[#allocation3 + $0x28] sm:$0x8] %v1734
        %1736 = vst [vmem:[#allocation3 + $0x2c] sm:$0xf] %v1724
        %v1737 = vld [vmem:[#allocation3 + $0x30] sm:$0xf]
        %v1738 = vsel %vm1699, %v1729, %v1737
        %1739 = vst [vmem:[#allocation3 + $0x30] sm:$0xf] %v1738
        %v1740 = vadd.f32 %v1160, %v1420
        %v1741 = vadd.f32 %v1164, %v1420
        %v1742 = vpack.c.bf16 %v1741, %v1740
        %v1744 = vunpack.c.l.b16 %v1742
        %v1745 = vunpack.c.h.b16 %v1742
        %v1746 = vpack.c.b16 %v1744, %v1744
        %v1747 = vpack.c.b16 %v1745, %v1745
        %1750 = vst [vmem:[#allocation2 + $0x34] sm:$0xf] %v1746
        %1751 = vst [vmem:[#allocation2 + $0x38] sm:$0xf] %v1747
        %v1752 = vadd.f32 %v1162, %v1420
        %v1753 = vadd.f32 %v1166, %v1420
        %v1754 = vpack.c.bf16 %v1753, %v1752
        %v1756 = vunpack.c.l.b16 %v1754
        %v1757 = vunpack.c.h.b16 %v1754
        %v1758 = vpack.c.b16 %v1756, %v1756
        %v1759 = vpack.c.b16 %v1757, %v1757
        %1762 = vst [vmem:[#allocation3 + $0x34] sm:$0xf] %v1758
        %1763 = vst [vmem:[#allocation3 + $0x38] sm:$0xf] %v1759
        %v1764 = vadd.f32 %v1037, %v1420
        %v1765 = vadd.f32 %v1041, %v1420
        %v1766 = vpack.c.bf16 %v1765, %v1764
        %v1768 = vunpack.c.l.b16 %v1766
        %v1769 = vunpack.c.h.b16 %v1766
        %v1770 = vpack.c.b16 %v1768, %v1768
        %v1771 = vpack.c.b16 %v1769, %v1769
        %vm1772 = vsmask.f32 4368
        %vm1773 = vmor %vm1225, %vm1772
        %v1775 = vshrl.u32 %v1770, 16
        %v1777 = vrot.slane %v1775, 7
        %v1778 = vshll.u32 %v1770, 16
        %v1780 = vor.u32 %v1777, %v1778
        %v1781 = vrot.slane %v1777, 4
        %v1783 = vshrl.u32 %v1771, 16
        %v1785 = vrot.slane %v1783, 7
        %v1786 = vshll.u32 %v1771, 16
        %v1788 = vor.u32 %v1785, %v1786
        %v1789 = vsel %vm1773, %v1781, %v1788
        %v1790 = vrot.slane %v1785, 4
        %vm1794 = vmand %vm1698, %vm1233
        %v1795 = vld [vmem:[#allocation2 + $0x3c] sm:$0xf]
        %v1796 = vsel %vm1794, %v1780, %v1795
        %1797 = vst [vmem:[#allocation2 + $0x3c] sm:$0xf] %v1796
        %1798 = vst [vmem:[#allocation2 + $0x40] sm:$0xf] %v1789
        %v1799 = vld [vmem:[#allocation2 + $0x44] sm:$0x1]
        %v1800 = vsel %vm1226, %v1790, %v1799
        %1801 = vst [vmem:[#allocation2 + $0x44] sm:$0x1] %v1800
        %v1802 = vadd.f32 %v1039, %v1420
        %v1803 = vadd.f32 %v1043, %v1420
        %v1804 = vpack.c.bf16 %v1803, %v1802
        %v1806 = vunpack.c.l.b16 %v1804
        %v1807 = vunpack.c.h.b16 %v1804
        %v1808 = vpack.c.b16 %v1806, %v1806
        %v1809 = vpack.c.b16 %v1807, %v1807
        %v1811 = vshrl.u32 %v1808, 16
        %v1813 = vrot.slane %v1811, 7
        %v1814 = vshll.u32 %v1808, 16
        %v1816 = vor.u32 %v1813, %v1814
        %v1817 = vrot.slane %v1813, 4
        %v1819 = vshrl.u32 %v1809, 16
        %v1821 = vrot.slane %v1819, 7
        %v1822 = vshll.u32 %v1809, 16
        %v1824 = vor.u32 %v1821, %v1822
        %v1825 = vsel %vm1773, %v1817, %v1824
        %v1826 = vrot.slane %v1821, 4
        %v1830 = vld [vmem:[#allocation3 + $0x3c] sm:$0xf]
        %v1831 = vsel %vm1794, %v1816, %v1830
        %1832 = vst [vmem:[#allocation3 + $0x3c] sm:$0xf] %v1831
        %1833 = vst [vmem:[#allocation3 + $0x40] sm:$0xf] %v1825
        %v1834 = vld [vmem:[#allocation3 + $0x44] sm:$0x1]
        %v1835 = vsel %vm1226, %v1826, %v1834
        %1836 = vst [vmem:[#allocation3 + $0x44] sm:$0x1] %v1835
        %v1837 = vadd.f32 %v1170, %v1420
        %v1838 = vadd.f32 %v1174, %v1420
        %v1839 = vpack.c.bf16 %v1838, %v1837
        %v1841 = vunpack.c.l.b16 %v1839
        %v1842 = vunpack.c.h.b16 %v1839
        %v1843 = vpack.c.b16 %v1841, %v1841
        %v1844 = vpack.c.b16 %v1842, %v1842
        %v1845 = vrot.slane %v1843, 7
        %v1846 = vrot.slane %v1845, 4
        %v1847 = vrot.slane %v1844, 7
        %v1848 = vsel %vm1385, %v1846, %v1847
        %v1849 = vrot.slane %v1847, 4
        %1853 = vst [vmem:[#allocation2 + $0x44] sm:$0xe] %v1845
        %1854 = vst [vmem:[#allocation2 + $0x48] sm:$0xf] %v1848
        %1855 = vst [vmem:[#allocation2 + $0x4c] sm:$0x1] %v1849
        %v1856 = vadd.f32 %v1172, %v1420
        %v1857 = vadd.f32 %v1176, %v1420
        %v1858 = vpack.c.bf16 %v1857, %v1856
        %v1860 = vunpack.c.l.b16 %v1858
        %v1861 = vunpack.c.h.b16 %v1858
        %v1862 = vpack.c.b16 %v1860, %v1860
        %v1863 = vpack.c.b16 %v1861, %v1861
        %v1864 = vrot.slane %v1862, 7
        %v1865 = vrot.slane %v1864, 4
        %v1866 = vrot.slane %v1863, 7
        %v1867 = vsel %vm1385, %v1865, %v1866
        %v1868 = vrot.slane %v1866, 4
        %1872 = vst [vmem:[#allocation3 + $0x44] sm:$0xe] %v1864
        %1873 = vst [vmem:[#allocation3 + $0x48] sm:$0xf] %v1867
        %1874 = vst [vmem:[#allocation3 + $0x4c] sm:$0x1] %v1868
        %v1875 = vadd.f32 %v1047, %v1420
        %v1876 = vadd.f32 %v1051, %v1420
        %v1877 = vpack.c.bf16 %v1876, %v1875
        %v1879 = vunpack.c.l.b16 %v1877
        %v1880 = vunpack.c.h.b16 %v1877
        %v1881 = vpack.c.b16 %v1879, %v1879
        %v1882 = vpack.c.b16 %v1880, %v1880
        %v1884 = vshrl.u32 %v1881, 16
        %v1886 = vrot.slane %v1884, 6
        %v1887 = vshll.u32 %v1881, 16
        %v1889 = vrot.slane %v1887, 7
        %v1890 = vor.u32 %v1886, %v1889
        %v1891 = vrot.slane %v1890, 4
        %v1893 = vshrl.u32 %v1882, 16
        %v1895 = vrot.slane %v1893, 6
        %v1896 = vshll.u32 %v1882, 16
        %v1898 = vrot.slane %v1896, 7
        %v1899 = vor.u32 %v1895, %v1898
        %v1900 = vsel %vm1431, %v1891, %v1899
        %v1901 = vrot.slane %v1899, 4
        %v1905 = vld [vmem:[#allocation2 + $0x4c] sm:$0xe]
        %v1906 = vsel %vm1455, %v1890, %v1905
        %1907 = vst [vmem:[#allocation2 + $0x4c] sm:$0xe] %v1906
        %1908 = vst [vmem:[#allocation2 + $0x50] sm:$0xf] %v1900
        %v1909 = vld [vmem:[#allocation2 + $0x54] sm:$0x3]
        %v1910 = vsel %vm1461, %v1901, %v1909
        %1911 = vst [vmem:[#allocation2 + $0x54] sm:$0x3] %v1910
        %v1912 = vadd.f32 %v1049, %v1420
        %v1913 = vadd.f32 %v1053, %v1420
        %v1914 = vpack.c.bf16 %v1913, %v1912
        %v1916 = vunpack.c.l.b16 %v1914
        %v1917 = vunpack.c.h.b16 %v1914
        %v1918 = vpack.c.b16 %v1916, %v1916
        %v1919 = vpack.c.b16 %v1917, %v1917
        %v1921 = vshrl.u32 %v1918, 16
        %v1923 = vrot.slane %v1921, 6
        %v1924 = vshll.u32 %v1918, 16
        %v1926 = vrot.slane %v1924, 7
        %v1927 = vor.u32 %v1923, %v1926
        %v1928 = vrot.slane %v1927, 4
        %v1930 = vshrl.u32 %v1919, 16
        %v1932 = vrot.slane %v1930, 6
        %v1933 = vshll.u32 %v1919, 16
        %v1935 = vrot.slane %v1933, 7
        %v1936 = vor.u32 %v1932, %v1935
        %v1937 = vsel %vm1431, %v1928, %v1936
        %v1938 = vrot.slane %v1936, 4
        %v1942 = vld [vmem:[#allocation3 + $0x4c] sm:$0xe]
        %v1943 = vsel %vm1455, %v1927, %v1942
        %1944 = vst [vmem:[#allocation3 + $0x4c] sm:$0xe] %v1943
        %1945 = vst [vmem:[#allocation3 + $0x50] sm:$0xf] %v1937
        %v1946 = vld [vmem:[#allocation3 + $0x54] sm:$0x3]
        %v1947 = vsel %vm1461, %v1938, %v1946
        %1948 = vst [vmem:[#allocation3 + $0x54] sm:$0x3] %v1947
        %v1949 = vadd.f32 %v1180, %v1420
        %v1950 = vadd.f32 %v1184, %v1420
        %v1951 = vpack.c.bf16 %v1950, %v1949
        %v1953 = vunpack.c.l.b16 %v1951
        %v1954 = vunpack.c.h.b16 %v1951
        %v1955 = vpack.c.b16 %v1953, %v1953
        %v1956 = vpack.c.b16 %v1954, %v1954
        %v1957 = vrot.slane %v1955, 6
        %v1958 = vrot.slane %v1957, 4
        %v1959 = vrot.slane %v1956, 6
        %v1960 = vsel %vm1511, %v1958, %v1959
        %v1961 = vrot.slane %v1959, 4
        %1965 = vst [vmem:[#allocation2 + $0x54] sm:$0xc] %v1957
        %1966 = vst [vmem:[#allocation2 + $0x58] sm:$0xf] %v1960
        %1967 = vst [vmem:[#allocation2 + $0x5c] sm:$0x3] %v1961
        %v1968 = vadd.f32 %v1182, %v1420
        %v1969 = vadd.f32 %v1186, %v1420
        %v1970 = vpack.c.bf16 %v1969, %v1968
        %v1972 = vunpack.c.l.b16 %v1970
        %v1973 = vunpack.c.h.b16 %v1970
        %v1974 = vpack.c.b16 %v1972, %v1972
        %v1975 = vpack.c.b16 %v1973, %v1973
        %v1976 = vrot.slane %v1974, 6
        %v1977 = vrot.slane %v1976, 4
        %v1978 = vrot.slane %v1975, 6
        %v1979 = vsel %vm1511, %v1977, %v1978
        %v1980 = vrot.slane %v1978, 4
        %1984 = vst [vmem:[#allocation3 + $0x54] sm:$0xc] %v1976
        %1985 = vst [vmem:[#allocation3 + $0x58] sm:$0xf] %v1979
        %1986 = vst [vmem:[#allocation3 + $0x5c] sm:$0x3] %v1980
        %v1987 = vadd.f32 %v1057, %v1420
        %v1988 = vadd.f32 %v1061, %v1420
        %v1989 = vpack.c.bf16 %v1988, %v1987
        %v1991 = vunpack.c.l.b16 %v1989
        %v1992 = vunpack.c.h.b16 %v1989
        %v1993 = vpack.c.b16 %v1991, %v1991
        %v1994 = vpack.c.b16 %v1992, %v1992
        %v1996 = vshrl.u32 %v1993, 16
        %v1998 = vrot.slane %v1996, 5
        %v1999 = vshll.u32 %v1993, 16
        %v2001 = vrot.slane %v1999, 6
        %v2002 = vor.u32 %v1998, %v2001
        %v2003 = vrot.slane %v2002, 4
        %v2005 = vshrl.u32 %v1994, 16
        %v2007 = vrot.slane %v2005, 5
        %v2008 = vshll.u32 %v1994, 16
        %v2010 = vrot.slane %v2008, 6
        %v2011 = vor.u32 %v2007, %v2010
        %v2012 = vsel %vm1551, %v2003, %v2011
        %v2013 = vrot.slane %v2011, 4
        %v2017 = vld [vmem:[#allocation2 + $0x5c] sm:$0xc]
        %v2018 = vsel %vm1575, %v2002, %v2017
        %2019 = vst [vmem:[#allocation2 + $0x5c] sm:$0xc] %v2018
        %2020 = vst [vmem:[#allocation2 + $0x60] sm:$0xf] %v2012
        %v2021 = vld [vmem:[#allocation2 + $0x64] sm:$0x7]
        %v2022 = vsel %vm1581, %v2013, %v2021
        %2023 = vst [vmem:[#allocation2 + $0x64] sm:$0x7] %v2022
        %v2024 = vadd.f32 %v1059, %v1420
        %v2025 = vadd.f32 %v1063, %v1420
        %v2026 = vpack.c.bf16 %v2025, %v2024
        %v2028 = vunpack.c.l.b16 %v2026
        %v2029 = vunpack.c.h.b16 %v2026
        %v2030 = vpack.c.b16 %v2028, %v2028
        %v2031 = vpack.c.b16 %v2029, %v2029
        %v2033 = vshrl.u32 %v2030, 16
        %v2035 = vrot.slane %v2033, 5
        %v2036 = vshll.u32 %v2030, 16
        %v2038 = vrot.slane %v2036, 6
        %v2039 = vor.u32 %v2035, %v2038
        %v2040 = vrot.slane %v2039, 4
        %v2042 = vshrl.u32 %v2031, 16
        %v2044 = vrot.slane %v2042, 5
        %v2045 = vshll.u32 %v2031, 16
        %v2047 = vrot.slane %v2045, 6
        %v2048 = vor.u32 %v2044, %v2047
        %v2049 = vsel %vm1551, %v2040, %v2048
        %v2050 = vrot.slane %v2048, 4
        %v2054 = vld [vmem:[#allocation3 + $0x5c] sm:$0xc]
        %v2055 = vsel %vm1575, %v2039, %v2054
        %2056 = vst [vmem:[#allocation3 + $0x5c] sm:$0xc] %v2055
        %2057 = vst [vmem:[#allocation3 + $0x60] sm:$0xf] %v2049
        %v2058 = vld [vmem:[#allocation3 + $0x64] sm:$0x7]
        %v2059 = vsel %vm1581, %v2050, %v2058
        %2060 = vst [vmem:[#allocation3 + $0x64] sm:$0x7] %v2059
        %v2061 = vadd.f32 %v1190, %v1420
        %v2062 = vadd.f32 %v1194, %v1420
        %v2063 = vpack.c.bf16 %v2062, %v2061
        %v2065 = vunpack.c.l.b16 %v2063
        %v2066 = vunpack.c.h.b16 %v2063
        %v2067 = vpack.c.b16 %v2065, %v2065
        %v2068 = vpack.c.b16 %v2066, %v2066
        %v2069 = vrot.slane %v2067, 5
        %v2070 = vrot.slane %v2069, 4
        %v2071 = vrot.slane %v2068, 5
        %v2072 = vsel %vm1631, %v2070, %v2071
        %v2073 = vrot.slane %v2071, 4
        %2077 = vst [vmem:[#allocation2 + $0x64] sm:$0x8] %v2069
        %2078 = vst [vmem:[#allocation2 + $0x68] sm:$0xf] %v2072
        %2079 = vst [vmem:[#allocation2 + $0x6c] sm:$0x7] %v2073
        %v2080 = vadd.f32 %v1192, %v1420
        %v2081 = vadd.f32 %v1196, %v1420
        %v2082 = vpack.c.bf16 %v2081, %v2080
        %v2084 = vunpack.c.l.b16 %v2082
        %v2085 = vunpack.c.h.b16 %v2082
        %v2086 = vpack.c.b16 %v2084, %v2084
        %v2087 = vpack.c.b16 %v2085, %v2085
        %v2088 = vrot.slane %v2086, 5
        %v2089 = vrot.slane %v2088, 4
        %v2090 = vrot.slane %v2087, 5
        %v2091 = vsel %vm1631, %v2089, %v2090
        %v2092 = vrot.slane %v2090, 4
        %2096 = vst [vmem:[#allocation3 + $0x64] sm:$0x8] %v2088
        %2097 = vst [vmem:[#allocation3 + $0x68] sm:$0xf] %v2091
        %2098 = vst [vmem:[#allocation3 + $0x6c] sm:$0x7] %v2092
        %v2099 = vadd.f32 %v1067, %v1420
        %v2100 = vadd.f32 %v1071, %v1420
        %v2101 = vpack.c.bf16 %v2100, %v2099
        %v2103 = vunpack.c.l.b16 %v2101
        %v2104 = vunpack.c.h.b16 %v2101
        %v2105 = vpack.c.b16 %v2103, %v2103
        %v2106 = vpack.c.b16 %v2104, %v2104
        %v2108 = vshll.u32 %v2105, 16
        %v2110 = vrot.slane %v2108, 5
        %v2111 = vshrl.u32 %v2105, 16
        %v2113 = vrot.slane %v2111, 4
        %v2114 = vor.u32 %v2113, %v2110
        %v2115 = vrot.slane %v2114, 4
        %v2117 = vshll.u32 %v2106, 16
        %v2119 = vrot.slane %v2117, 5
        %v2120 = vsel %vm1671, %v2115, %v2119
        %v2121 = vshrl.u32 %v2106, 16
        %v2123 = vrot.slane %v2121, 4
        %v2124 = vor.u32 %v2123, %v2119
        %v2125 = vrot.slane %v2124, 4
        %v2129 = vld [vmem:[#allocation2 + $0x6c] sm:$0x8]
        %v2130 = vsel %vm1285, %v2110, %v2129
        %2131 = vst [vmem:[#allocation2 + $0x6c] sm:$0x8] %v2130
        %2132 = vst [vmem:[#allocation2 + $0x70] sm:$0xf] %v2120
        %v2133 = vld [vmem:[#allocation2 + $0x74] sm:$0xf]
        %v2134 = vsel %vm1699, %v2125, %v2133
        %2135 = vst [vmem:[#allocation2 + $0x74] sm:$0xf] %v2134
        %v2136 = vadd.f32 %v1069, %v1420
        %v2137 = vadd.f32 %v1073, %v1420
        %v2138 = vpack.c.bf16 %v2137, %v2136
        %v2140 = vunpack.c.l.b16 %v2138
        %v2141 = vunpack.c.h.b16 %v2138
        %v2142 = vpack.c.b16 %v2140, %v2140
        %v2143 = vpack.c.b16 %v2141, %v2141
        %v2145 = vshll.u32 %v2142, 16
        %v2147 = vrot.slane %v2145, 5
        %v2148 = vshrl.u32 %v2142, 16
        %v2150 = vrot.slane %v2148, 4
        %v2151 = vor.u32 %v2150, %v2147
        %v2152 = vrot.slane %v2151, 4
        %v2154 = vshll.u32 %v2143, 16
        %v2156 = vrot.slane %v2154, 5
        %v2157 = vsel %vm1671, %v2152, %v2156
        %v2158 = vshrl.u32 %v2143, 16
        %v2160 = vrot.slane %v2158, 4
        %v2161 = vor.u32 %v2160, %v2156
        %v2162 = vrot.slane %v2161, 4
        %v2166 = vld [vmem:[#allocation3 + $0x6c] sm:$0x8]
        %v2167 = vsel %vm1285, %v2147, %v2166
        %2168 = vst [vmem:[#allocation3 + $0x6c] sm:$0x8] %v2167
        %2169 = vst [vmem:[#allocation3 + $0x70] sm:$0xf] %v2157
        %v2170 = vld [vmem:[#allocation3 + $0x74] sm:$0xf]
        %v2171 = vsel %vm1699, %v2162, %v2170
        %2172 = vst [vmem:[#allocation3 + $0x74] sm:$0xf] %v2171
        %v2173 = vadd.f32 %v1200, %v1420
        %v2174 = vadd.f32 %v1204, %v1420
        %v2175 = vpack.c.bf16 %v2174, %v2173
        %v2177 = vunpack.c.l.b16 %v2175
        %v2178 = vunpack.c.h.b16 %v2175
        %v2179 = vpack.c.b16 %v2177, %v2177
        %v2180 = vpack.c.b16 %v2178, %v2178
        %2183 = vst [vmem:[#allocation2 + $0x78] sm:$0xf] %v2179
        %2184 = vst [vmem:[#allocation2 + $0x7c] sm:$0xf] %v2180
        %v2185 = vadd.f32 %v1202, %v1420
        %v2186 = vadd.f32 %v1206, %v1420
        %v2187 = vpack.c.bf16 %v2186, %v2185
        %v2189 = vunpack.c.l.b16 %v2187
        %v2190 = vunpack.c.h.b16 %v2187
        %v2191 = vpack.c.b16 %v2189, %v2189
        %v2192 = vpack.c.b16 %v2190, %v2190
        %2195 = vst [vmem:[#allocation3 + $0x78] sm:$0xf] %v2191
        %2196 = vst [vmem:[#allocation3 + $0x7c] sm:$0xf] %v2192
        %v2197 = vadd.f32 %v1077, %v1420
        %v2198 = vadd.f32 %v1081, %v1420
        %v2199 = vpack.c.bf16 %v2198, %v2197
        %v2201 = vunpack.c.l.b16 %v2199
        %v2202 = vunpack.c.h.b16 %v2199
        %v2203 = vpack.c.b16 %v2201, %v2201
        %v2204 = vpack.c.b16 %v2202, %v2202
        %v2206 = vshrl.u32 %v2203, 16
        %v2208 = vrot.slane %v2206, 7
        %v2209 = vshll.u32 %v2203, 16
        %v2211 = vor.u32 %v2208, %v2209
        %v2212 = vrot.slane %v2208, 4
        %v2214 = vshrl.u32 %v2204, 16
        %v2216 = vrot.slane %v2214, 7
        %v2217 = vshll.u32 %v2204, 16
        %v2219 = vor.u32 %v2216, %v2217
        %v2220 = vsel %vm1773, %v2212, %v2219
        %v2221 = vrot.slane %v2216, 4
        %v2225 = vld [vmem:[#allocation2 + $0x80] sm:$0xf]
        %v2226 = vsel %vm1794, %v2211, %v2225
        %2227 = vst [vmem:[#allocation2 + $0x80] sm:$0xf] %v2226
        %2228 = vst [vmem:[#allocation2 + $0x84] sm:$0xf] %v2220
        %v2229 = vld [vmem:[#allocation2 + $0x88] sm:$0x1]
        %v2230 = vsel %vm1226, %v2221, %v2229
        %2231 = vst [vmem:[#allocation2 + $0x88] sm:$0x1] %v2230
        %v2232 = vadd.f32 %v1079, %v1420
        %v2233 = vadd.f32 %v1083, %v1420
        %v2234 = vpack.c.bf16 %v2233, %v2232
        %v2236 = vunpack.c.l.b16 %v2234
        %v2237 = vunpack.c.h.b16 %v2234
        %v2238 = vpack.c.b16 %v2236, %v2236
        %v2239 = vpack.c.b16 %v2237, %v2237
        %v2241 = vshrl.u32 %v2238, 16
        %v2243 = vrot.slane %v2241, 7
        %v2244 = vshll.u32 %v2238, 16
        %v2246 = vor.u32 %v2243, %v2244
        %v2247 = vrot.slane %v2243, 4
        %v2249 = vshrl.u32 %v2239, 16
        %v2251 = vrot.slane %v2249, 7
        %v2252 = vshll.u32 %v2239, 16
        %v2254 = vor.u32 %v2251, %v2252
        %v2255 = vsel %vm1773, %v2247, %v2254
        %v2256 = vrot.slane %v2251, 4
        %v2260 = vld [vmem:[#allocation3 + $0x80] sm:$0xf]
        %v2261 = vsel %vm1794, %v2246, %v2260
        %2262 = vst [vmem:[#allocation3 + $0x80] sm:$0xf] %v2261
        %2263 = vst [vmem:[#allocation3 + $0x84] sm:$0xf] %v2255
        %v2264 = vld [vmem:[#allocation3 + $0x88] sm:$0x1]
        %v2265 = vsel %vm1226, %v2256, %v2264
        %2266 = vst [vmem:[#allocation3 + $0x88] sm:$0x1] %v2265
        %v2267 = vadd.f32 %v1210, %v1420
        %v2268 = vadd.f32 %v1214, %v1420
        %v2269 = vpack.c.bf16 %v2268, %v2267
        %v2271 = vunpack.c.l.b16 %v2269
        %v2272 = vunpack.c.h.b16 %v2269
        %v2273 = vpack.c.b16 %v2271, %v2271
        %v2274 = vpack.c.b16 %v2272, %v2272
        %v2275 = vrot.slane %v2273, 7
        %v2276 = vrot.slane %v2275, 4
        %v2277 = vrot.slane %v2274, 7
        %v2278 = vsel %vm1385, %v2276, %v2277
        %v2279 = vrot.slane %v2277, 4
        %2283 = vst [vmem:[#allocation2 + $0x88] sm:$0xe] %v2275
        %2284 = vst [vmem:[#allocation2 + $0x8c] sm:$0xf] %v2278
        %2285 = vst [vmem:[#allocation2 + $0x90] sm:$0x1] %v2279
        %v2286 = vadd.f32 %v1212, %v1420
        %v2287 = vadd.f32 %v1216, %v1420
        %v2288 = vpack.c.bf16 %v2287, %v2286
        %v2290 = vunpack.c.l.b16 %v2288
        %v2291 = vunpack.c.h.b16 %v2288
        %v2292 = vpack.c.b16 %v2290, %v2290
        %v2293 = vpack.c.b16 %v2291, %v2291
        %v2294 = vrot.slane %v2292, 7
        %v2295 = vrot.slane %v2294, 4
        %v2296 = vrot.slane %v2293, 7
        %v2297 = vsel %vm1385, %v2295, %v2296
        %v2298 = vrot.slane %v2296, 4
        %2302 = vst [vmem:[#allocation3 + $0x88] sm:$0xe] %v2294
        %2303 = vst [vmem:[#allocation3 + $0x8c] sm:$0xf] %v2297
        %2304 = vst [vmem:[#allocation3 + $0x90] sm:$0x1] %v2298
        %p2305 = scmp.lt.s32.totalorder %s34, 1
        %s2306 = scalar_select %p2305, 1, 0
        %s2307 = scvt.s32.f32 %s2306
        %v2308 = vstv %s2307
        %v2309 = vmul.f32 %v1364, %v2308
        %v2311 = vlaneseq
        %v2312 = vshrl.u32 %v2311, 7
        %v2313 = vsub.s32 0, %v2312
        %v2314 = vrot.slane %v2309, %v2313
        %v2316 = vadd.f32 %v1087, %v2314
        %v2317 = vadd.f32 %v1091, %v2314
        %v2318 = vpack.c.bf16 %v2317, %v2316
        %v2320 = vunpack.c.l.b16 %v2318
        %v2321 = vunpack.c.h.b16 %v2318
        %v2322 = vpack.c.b16 %v2320, %v2320
        %v2323 = vpack.c.b16 %v2321, %v2321
        %v2325 = vshrl.u32 %v2322, 16
        %v2327 = vrot.slane %v2325, 6
        %v2328 = vshll.u32 %v2322, 16
        %v2330 = vrot.slane %v2328, 7
        %v2331 = vor.u32 %v2327, %v2330
        %v2332 = vrot.slane %v2331, 4
        %v2334 = vshrl.u32 %v2323, 16
        %v2336 = vrot.slane %v2334, 6
        %v2337 = vshll.u32 %v2323, 16
        %v2339 = vrot.slane %v2337, 7
        %v2340 = vor.u32 %v2336, %v2339
        %v2341 = vsel %vm1431, %v2332, %v2340
        %v2342 = vrot.slane %v2340, 4
        %v2346 = vld [vmem:[#allocation2 + $0x90] sm:$0xe]
        %v2347 = vsel %vm1455, %v2331, %v2346
        %2348 = vst [vmem:[#allocation2 + $0x90] sm:$0xe] %v2347
        %2349 = vst [vmem:[#allocation2 + $0x94] sm:$0xf] %v2341
        %v2350 = vld [vmem:[#allocation2 + $0x98] sm:$0x3]
        %v2351 = vsel %vm1461, %v2342, %v2350
        %2352 = vst [vmem:[#allocation2 + $0x98] sm:$0x3] %v2351
        %v2353 = vadd.f32 %v1089, %v2314
        %v2354 = vadd.f32 %v1093, %v2314
        %v2355 = vpack.c.bf16 %v2354, %v2353
        %v2357 = vunpack.c.l.b16 %v2355
        %v2358 = vunpack.c.h.b16 %v2355
        %v2359 = vpack.c.b16 %v2357, %v2357
        %v2360 = vpack.c.b16 %v2358, %v2358
        %v2362 = vshrl.u32 %v2359, 16
        %v2364 = vrot.slane %v2362, 6
        %v2365 = vshll.u32 %v2359, 16
        %v2367 = vrot.slane %v2365, 7
        %v2368 = vor.u32 %v2364, %v2367
        %v2369 = vrot.slane %v2368, 4
        %v2371 = vshrl.u32 %v2360, 16
        %v2373 = vrot.slane %v2371, 6
        %v2374 = vshll.u32 %v2360, 16
        %v2376 = vrot.slane %v2374, 7
        %v2377 = vor.u32 %v2373, %v2376
        %v2378 = vsel %vm1431, %v2369, %v2377
        %v2379 = vrot.slane %v2377, 4
        %v2383 = vld [vmem:[#allocation3 + $0x90] sm:$0xe]
        %v2384 = vsel %vm1455, %v2368, %v2383
        %2385 = vst [vmem:[#allocation3 + $0x90] sm:$0xe] %v2384
        %2386 = vst [vmem:[#allocation3 + $0x94] sm:$0xf] %v2378
        %v2387 = vld [vmem:[#allocation3 + $0x98] sm:$0x3]
        %v2388 = vsel %vm1461, %v2379, %v2387
        %2389 = vst [vmem:[#allocation3 + $0x98] sm:$0x3] %v2388
        %v2390 = vld [vmem:[#allocation16] sm:$0x1]
        %v2392 = vlaneseq
        %v2393 = vshrl.u32 %v2392, 7
        %v2394 = vsub.s32 0, %v2393
        %v2395 = vrot.slane %v2390, %v2394
        %v2397 = vadd.f32 %v2395, 0.0
        %v2398 = vld [vmem:[#allocation13] sm:$0xff]
        %v2399 = vld [vmem:[#allocation13 + $0x8] sm:$0xff]
        %v2400 = vld [vmem:[#allocation13 + $0x10] sm:$0xff]
        %v2401 = vld [vmem:[#allocation13 + $0x18] sm:$0xff]
        %v2402 = vld [vmem:[#allocation13 + $0x20] sm:$0xff]
        %v2403 = vld [vmem:[#allocation13 + $0x28] sm:$0xff]
        %v2404 = vld [vmem:[#allocation13 + $0x30] sm:$0xff]
        %v2405 = vld [vmem:[#allocation13 + $0x38] sm:$0xff]
        %v2406 = vld [vmem:[#allocation13 + $0x40] sm:$0xff]
        %v2407 = vld [vmem:[#allocation13 + $0x48] sm:$0xff]
        %v2408 = vld [vmem:[#allocation13 + $0x50] sm:$0xff]
        %v2409 = vld [vmem:[#allocation13 + $0x58] sm:$0xff]
        %v2410 = vld [vmem:[#allocation13 + $0x60] sm:$0xff]
        %v2411 = vld [vmem:[#allocation13 + $0x68] sm:$0xff]
        %v2412 = vld [vmem:[#allocation13 + $0x70] sm:$0xff]
        %v2413 = vld [vmem:[#allocation13 + $0x78] sm:$0xff]
        %v2414 = vld [vmem:[#allocation14] sm:$0xff]
        %v2415 = vld [vmem:[#allocation14 + $0x8] sm:$0xff]
        %v2416 = vld [vmem:[#allocation14 + $0x10] sm:$0xff]
        %v2417 = vld [vmem:[#allocation14 + $0x18] sm:$0xff]
        %v2418 = vld [vmem:[#allocation14 + $0x20] sm:$0xff]
        %v2419 = vld [vmem:[#allocation14 + $0x28] sm:$0xff]
        %v2420 = vld [vmem:[#allocation14 + $0x30] sm:$0xff]
        %v2421 = vld [vmem:[#allocation14 + $0x38] sm:$0xff]
        %v2422 = vld [vmem:[#allocation14 + $0x40] sm:$0xff]
        %v2423 = vld [vmem:[#allocation14 + $0x48] sm:$0xff]
        %v2424 = vld [vmem:[#allocation14 + $0x50] sm:$0xff]
        %v2425 = vld [vmem:[#allocation14 + $0x58] sm:$0xff]
        %v2426 = vld [vmem:[#allocation14 + $0x60] sm:$0xff]
        %v2427 = vld [vmem:[#allocation14 + $0x68] sm:$0xff]
        %v2428 = vld [vmem:[#allocation14 + $0x70] sm:$0xff]
        %v2429 = vld [vmem:[#allocation14 + $0x78] sm:$0xff]
        %v2430 = vld [vmem:[#allocation2] sm:$0xf]
        %v2431 = vld [vmem:[#allocation2 + $0x4] sm:$0xf]
        %v2432 = vld [vmem:[#allocation2 + $0x8] sm:$0xf]
        %v2433 = vld [vmem:[#allocation2 + $0xc] sm:$0xf]
        %v2434 = vld [vmem:[#allocation2 + $0x10] sm:$0xf]
        %v2435 = vld [vmem:[#allocation2 + $0x14] sm:$0xf]
        %v2436 = vld [vmem:[#allocation2 + $0x18] sm:$0xf]
        %v2437 = vld [vmem:[#allocation2 + $0x1c] sm:$0xf]
        %v2438 = vld [vmem:[#allocation2 + $0x20] sm:$0xf]
        %v2439 = vld [vmem:[#allocation2 + $0x24] sm:$0xf]
        %v2440 = vld [vmem:[#allocation2 + $0x28] sm:$0xf]
        %v2441 = vld [vmem:[#allocation2 + $0x2c] sm:$0xf]
        %v2442 = vld [vmem:[#allocation2 + $0x30] sm:$0xf]
        %v2443 = vld [vmem:[#allocation2 + $0x34] sm:$0xf]
        %v2444 = vld [vmem:[#allocation2 + $0x38] sm:$0xf]
        %v2445 = vld [vmem:[#allocation2 + $0x3c] sm:$0xf]
        %v2446 = vld [vmem:[#allocation2 + $0x40] sm:$0xf]
        %v2447 = vld [vmem:[#allocation2 + $0x44] sm:$0xf]
        %v2448 = vld [vmem:[#allocation2 + $0x48] sm:$0xf]
        %v2449 = vld [vmem:[#allocation2 + $0x4c] sm:$0xf]
        %v2450 = vld [vmem:[#allocation2 + $0x50] sm:$0xf]
        %v2451 = vld [vmem:[#allocation2 + $0x54] sm:$0xf]
        %v2452 = vld [vmem:[#allocation2 + $0x58] sm:$0xf]
        %v2453 = vld [vmem:[#allocation2 + $0x5c] sm:$0xf]
        %v2454 = vld [vmem:[#allocation2 + $0x60] sm:$0xf]
        %v2455 = vld [vmem:[#allocation2 + $0x64] sm:$0xf]
        %v2456 = vld [vmem:[#allocation2 + $0x68] sm:$0xf]
        %v2457 = vld [vmem:[#allocation2 + $0x6c] sm:$0xf]
        %v2458 = vld [vmem:[#allocation2 + $0x70] sm:$0xf]
        %v2459 = vld [vmem:[#allocation2 + $0x74] sm:$0xf]
        %v2460 = vld [vmem:[#allocation2 + $0x78] sm:$0xf]
        %v2461 = vld [vmem:[#allocation2 + $0x7c] sm:$0xf]
        %v2462 = vld [vmem:[#allocation2 + $0x80] sm:$0xf]
        %v2463 = vld [vmem:[#allocation2 + $0x84] sm:$0xf]
        %v2464 = vld [vmem:[#allocation2 + $0x88] sm:$0x1]
        %v2500 = vunpack.c.l.b16 %v2430
        %v2501 = vunpack.c.l.b16 %v2431
        %v2502 = vunpack.c.l.b16 %v2432
        %v2503 = vunpack.c.l.b16 %v2433
        %v2504 = vunpack.c.l.b16 %v2434
        %v2505 = vunpack.c.l.b16 %v2435
        %v2506 = vunpack.c.l.b16 %v2436
        %v2507 = vunpack.c.l.b16 %v2437
        %v2508 = vunpack.c.l.b16 %v2438
        %v2509 = vunpack.c.l.b16 %v2439
        %v2510 = vunpack.c.l.b16 %v2440
        %v2511 = vunpack.c.l.b16 %v2441
        %v2512 = vunpack.c.l.b16 %v2442
        %v2513 = vunpack.c.l.b16 %v2443
        %v2514 = vunpack.c.l.b16 %v2444
        %v2515 = vunpack.c.l.b16 %v2445
        %v2516 = vunpack.c.l.b16 %v2446
        %v2517 = vunpack.c.l.b16 %v2447
        %v2518 = vunpack.c.l.b16 %v2448
        %v2519 = vunpack.c.l.b16 %v2449
        %v2520 = vunpack.c.l.b16 %v2450
        %v2521 = vunpack.c.l.b16 %v2451
        %v2522 = vunpack.c.l.b16 %v2452
        %v2523 = vunpack.c.l.b16 %v2453
        %v2524 = vunpack.c.l.b16 %v2454
        %v2525 = vunpack.c.l.b16 %v2455
        %v2526 = vunpack.c.l.b16 %v2456
        %v2527 = vunpack.c.l.b16 %v2457
        %v2528 = vunpack.c.l.b16 %v2458
        %v2529 = vunpack.c.l.b16 %v2459
        %v2530 = vunpack.c.l.b16 %v2460
        %v2531 = vunpack.c.l.b16 %v2461
        %v2532 = vunpack.c.l.b16 %v2462
        %v2533 = vunpack.c.l.b16 %v2463
        %v2534 = vunpack.c.l.b16 %v2464
        %v2535 = vpack.c.b16 %v2501, %v2500
        %v2536 = vpack.c.b16 %v2503, %v2502
        %v2537 = vpack.c.b16 %v2505, %v2504
        %v2538 = vpack.c.b16 %v2507, %v2506
        %v2539 = vpack.c.b16 %v2509, %v2508
        %v2540 = vpack.c.b16 %v2511, %v2510
        %v2541 = vpack.c.b16 %v2513, %v2512
        %v2542 = vpack.c.b16 %v2515, %v2514
        %v2543 = vpack.c.b16 %v2517, %v2516
        %v2544 = vpack.c.b16 %v2519, %v2518
        %v2545 = vpack.c.b16 %v2521, %v2520
        %v2546 = vpack.c.b16 %v2523, %v2522
        %v2547 = vpack.c.b16 %v2525, %v2524
        %v2548 = vpack.c.b16 %v2527, %v2526
        %v2549 = vpack.c.b16 %v2529, %v2528
        %v2550 = vpack.c.b16 %v2531, %v2530
        %v2551 = vpack.c.b16 %v2533, %v2532
        %v2552 = vpack.c.b16 %v2534, %v2534
        %vm2553 = vsmask.f32 7424
        %v2555 = vshrl.u32 %v2535, 16
        %v2557 = vshll.u32 %v2535, 16
        %v2559 = vrot.slane %v2557, 1
        %v2560 = vor.u32 %v2555, %v2559
        %v2562 = vshll.u32 %v2536, 16
        %v2564 = vrot.slane %v2562, 1
        %v2565 = vsel %vm2553, %v2560, %v2564
        %v2566 = vshrl.u32 %v2536, 16
        %v2568 = vor.u32 %v2566, %v2564
        %v2570 = vshll.u32 %v2537, 16
        %v2572 = vrot.slane %v2570, 1
        %v2573 = vsel %vm2553, %v2568, %v2572
        %v2574 = vshrl.u32 %v2537, 16
        %v2576 = vor.u32 %v2574, %v2572
        %v2578 = vshll.u32 %v2538, 16
        %v2580 = vrot.slane %v2578, 1
        %v2581 = vsel %vm2553, %v2576, %v2580
        %v2582 = vshrl.u32 %v2538, 16
        %v2584 = vor.u32 %v2582, %v2580
        %v2586 = vshll.u32 %v2539, 16
        %v2588 = vrot.slane %v2586, 1
        %v2589 = vsel %vm2553, %v2584, %v2588
        %v2590 = vshrl.u32 %v2539, 16
        %v2592 = vor.u32 %v2590, %v2588
        %v2594 = vshll.u32 %v2540, 16
        %v2596 = vrot.slane %v2594, 1
        %v2597 = vsel %vm2553, %v2592, %v2596
        %v2598 = vshrl.u32 %v2540, 16
        %v2600 = vor.u32 %v2598, %v2596
        %v2602 = vshll.u32 %v2541, 16
        %v2604 = vrot.slane %v2602, 1
        %v2605 = vsel %vm2553, %v2600, %v2604
        %v2606 = vshrl.u32 %v2541, 16
        %v2608 = vor.u32 %v2606, %v2604
        %v2610 = vshll.u32 %v2542, 16
        %v2612 = vrot.slane %v2610, 1
        %v2613 = vsel %vm2553, %v2608, %v2612
        %v2614 = vshrl.u32 %v2542, 16
        %v2616 = vor.u32 %v2614, %v2612
        %v2618 = vshll.u32 %v2543, 16
        %v2620 = vrot.slane %v2618, 1
        %v2621 = vsel %vm2553, %v2616, %v2620
        %v2622 = vshrl.u32 %v2543, 16
        %v2624 = vor.u32 %v2622, %v2620
        %v2626 = vshll.u32 %v2544, 16
        %v2628 = vrot.slane %v2626, 1
        %v2629 = vsel %vm2553, %v2624, %v2628
        %v2630 = vshrl.u32 %v2544, 16
        %v2632 = vor.u32 %v2630, %v2628
        %v2634 = vshll.u32 %v2545, 16
        %v2636 = vrot.slane %v2634, 1
        %v2637 = vsel %vm2553, %v2632, %v2636
        %v2638 = vshrl.u32 %v2545, 16
        %v2640 = vor.u32 %v2638, %v2636
        %v2642 = vshll.u32 %v2546, 16
        %v2644 = vrot.slane %v2642, 1
        %v2645 = vsel %vm2553, %v2640, %v2644
        %v2646 = vshrl.u32 %v2546, 16
        %v2648 = vor.u32 %v2646, %v2644
        %v2650 = vshll.u32 %v2547, 16
        %v2652 = vrot.slane %v2650, 1
        %v2653 = vsel %vm2553, %v2648, %v2652
        %v2654 = vshrl.u32 %v2547, 16
        %v2656 = vor.u32 %v2654, %v2652
        %v2658 = vshll.u32 %v2548, 16
        %v2660 = vrot.slane %v2658, 1
        %v2661 = vsel %vm2553, %v2656, %v2660
        %v2662 = vshrl.u32 %v2548, 16
        %v2664 = vor.u32 %v2662, %v2660
        %v2666 = vshll.u32 %v2549, 16
        %v2668 = vrot.slane %v2666, 1
        %v2669 = vsel %vm2553, %v2664, %v2668
        %v2670 = vshrl.u32 %v2549, 16
        %v2672 = vor.u32 %v2670, %v2668
        %v2674 = vshll.u32 %v2550, 16
        %v2676 = vrot.slane %v2674, 1
        %v2677 = vsel %vm2553, %v2672, %v2676
        %v2678 = vshrl.u32 %v2550, 16
        %v2680 = vor.u32 %v2678, %v2676
        %v2682 = vshll.u32 %v2551, 16
        %v2684 = vrot.slane %v2682, 1
        %v2685 = vsel %vm2553, %v2680, %v2684
        %v2686 = vshrl.u32 %v2551, 16
        %v2688 = vor.u32 %v2686, %v2684
        %v2690 = vshll.u32 %v2552, 16
        %v2692 = vrot.slane %v2690, 1
        %v2693 = vsel %vm2553, %v2688, %v2692
        %v2727 = vunpack.c.l.b16 %v2398
        %v2728 = vunpack.c.h.b16 %v2398
        %v2729 = vunpack.c.l.b16 %v2399
        %v2730 = vunpack.c.h.b16 %v2399
        %v2731 = vunpack.c.l.b16 %v2400
        %v2732 = vunpack.c.h.b16 %v2400
        %v2733 = vunpack.c.l.b16 %v2401
        %v2734 = vunpack.c.h.b16 %v2401
        %v2735 = vunpack.c.l.b16 %v2402
        %v2736 = vunpack.c.h.b16 %v2402
        %v2737 = vunpack.c.l.b16 %v2403
        %v2738 = vunpack.c.h.b16 %v2403
        %v2739 = vunpack.c.l.b16 %v2404
        %v2740 = vunpack.c.h.b16 %v2404
        %v2741 = vunpack.c.l.b16 %v2405
        %v2742 = vunpack.c.h.b16 %v2405
        %v2743 = vunpack.c.l.b16 %v2406
        %v2744 = vunpack.c.h.b16 %v2406
        %v2745 = vunpack.c.l.b16 %v2407
        %v2746 = vunpack.c.h.b16 %v2407
        %v2747 = vunpack.c.l.b16 %v2408
        %v2748 = vunpack.c.h.b16 %v2408
        %v2749 = vunpack.c.l.b16 %v2409
        %v2750 = vunpack.c.h.b16 %v2409
        %v2751 = vunpack.c.l.b16 %v2410
        %v2752 = vunpack.c.h.b16 %v2410
        %v2753 = vunpack.c.l.b16 %v2411
        %v2754 = vunpack.c.h.b16 %v2411
        %v2755 = vunpack.c.l.b16 %v2412
        %v2756 = vunpack.c.h.b16 %v2412
        %v2757 = vunpack.c.l.b16 %v2413
        %v2758 = vunpack.c.h.b16 %v2413
        %v2759 = vpack.c.b16 %v2729, %v2727
        %v2760 = vpack.c.b16 %v2730, %v2728
        %v2761 = vpack.c.b16 %v2733, %v2731
        %v2762 = vpack.c.b16 %v2734, %v2732
        %v2763 = vpack.c.b16 %v2737, %v2735
        %v2764 = vpack.c.b16 %v2738, %v2736
        %v2765 = vpack.c.b16 %v2741, %v2739
        %v2766 = vpack.c.b16 %v2742, %v2740
        %v2767 = vpack.c.b16 %v2745, %v2743
        %v2768 = vpack.c.b16 %v2746, %v2744
        %v2769 = vpack.c.b16 %v2749, %v2747
        %v2770 = vpack.c.b16 %v2750, %v2748
        %v2771 = vpack.c.b16 %v2753, %v2751
        %v2772 = vpack.c.b16 %v2754, %v2752
        %v2773 = vpack.c.b16 %v2757, %v2755
        %v2774 = vpack.c.b16 %v2758, %v2756
        %2791 = vmatprep.subr.bf16.mxu0 %v2774
        %2792 = vmatpush1.bf16.msra.mxu0 %v2773
        %2793 = vmatprep.subr.bf16.mxu0 %v2772
        %2794 = vmatpush1.bf16.msra.mxu0 %v2771
        %2795 = vmatprep.subr.bf16.mxu0 %v2770
        %2796 = vmatpush1.bf16.msra.mxu0 %v2769
        %2797 = vmatprep.subr.bf16.mxu0 %v2768
        %2798 = vmatpush1.bf16.msra.mxu0 %v2767
        %2799 = vmatprep.subr.bf16.mxu0 %v2766
        %2800 = vmatpush1.bf16.msra.mxu0 %v2765
        %2801 = vmatprep.subr.bf16.mxu0 %v2764
        %2802 = vmatpush1.bf16.msra.mxu0 %v2763
        %2803 = vmatprep.subr.bf16.mxu0 %v2762
        %2804 = vmatpush1.bf16.msra.mxu0 %v2761
        %2805 = vmatprep.subr.bf16.mxu0 %v2760
        %2806 = vmatpush1.bf16.msra.mxu0 %v2759
        %2807 = vmatprep.subr.bf16.mxu0 0
        %2808 = vmatpush2.bf16.msra.mxu0 0
        %2809 = vmatprep.subr.bf16.mxu0 0
        %2810 = vmatpush2.bf16.msra.mxu0 0
        %2811 = vmatprep.subr.bf16.mxu0 0
        %2812 = vmatpush2.bf16.msra.mxu0 0
        %2813 = vmatprep.subr.bf16.mxu0 0
        %2814 = vmatpush2.bf16.msra.mxu0 0
        %2815 = vmatprep.subr.bf16.mxu0 0
        %2816 = vmatpush2.bf16.msra.mxu0 0
        %2817 = vmatprep.subr.bf16.mxu0 0
        %2818 = vmatpush2.bf16.msra.mxu0 0
        %2819 = vmatprep.subr.bf16.mxu0 0
        %2820 = vmatpush2.bf16.msra.mxu0 0
        %2821 = vmatprep.subr.bf16.mxu0 0
        %2822 = vmatpush2.bf16.msra.mxu0 0
        %2823 = vmatprep.mubr.bf16.mxu0 0
        %2824 = vmatmul.mubr.bf16.gmra.mxu0 %v2565
        %v2825 = vpop.f32.mrf.mxu0
        %v2826 = vadd.f32 0.0, %v2825
        %v2827 = vpop.f32.mrf.mxu0
        %v2828 = vadd.f32 0.0, %v2827
        %v2829 = vpop.f32.mrf.mxu0
        %v2830 = vadd.f32 0.0, %v2829
        %v2831 = vpop.f32.mrf.mxu0
        %v2832 = vadd.f32 0.0, %v2831
        %2833 = vmatprep.mubr.bf16.mxu0 0
        %2834 = vmatmul.mubr.bf16.gmra.mxu0 %v2573
        %v2835 = vpop.f32.mrf.mxu0
        %v2836 = vadd.f32 0.0, %v2835
        %v2837 = vpop.f32.mrf.mxu0
        %v2838 = vadd.f32 0.0, %v2837
        %v2839 = vpop.f32.mrf.mxu0
        %v2840 = vadd.f32 0.0, %v2839
        %v2841 = vpop.f32.mrf.mxu0
        %v2842 = vadd.f32 0.0, %v2841
        %2843 = vmatprep.mubr.bf16.mxu0 0
        %2844 = vmatmul.mubr.bf16.gmra.mxu0 %v2581
        %v2845 = vpop.f32.mrf.mxu0
        %v2846 = vadd.f32 0.0, %v2845
        %v2847 = vpop.f32.mrf.mxu0
        %v2848 = vadd.f32 0.0, %v2847
        %v2849 = vpop.f32.mrf.mxu0
        %v2850 = vadd.f32 0.0, %v2849
        %v2851 = vpop.f32.mrf.mxu0
        %v2852 = vadd.f32 0.0, %v2851
        %2853 = vmatprep.mubr.bf16.mxu0 0
        %2854 = vmatmul.mubr.bf16.gmra.mxu0 %v2589
        %v2855 = vpop.f32.mrf.mxu0
        %v2856 = vadd.f32 0.0, %v2855
        %v2857 = vpop.f32.mrf.mxu0
        %v2858 = vadd.f32 0.0, %v2857
        %v2859 = vpop.f32.mrf.mxu0
        %v2860 = vadd.f32 0.0, %v2859
        %v2861 = vpop.f32.mrf.mxu0
        %v2862 = vadd.f32 0.0, %v2861
        %2863 = vmatprep.mubr.bf16.mxu0 0
        %2864 = vmatmul.mubr.bf16.gmra.mxu0 %v2597
        %v2865 = vpop.f32.mrf.mxu0
        %v2866 = vadd.f32 0.0, %v2865
        %v2867 = vpop.f32.mrf.mxu0
        %v2868 = vadd.f32 0.0, %v2867
        %v2869 = vpop.f32.mrf.mxu0
        %v2870 = vadd.f32 0.0, %v2869
        %v2871 = vpop.f32.mrf.mxu0
        %v2872 = vadd.f32 0.0, %v2871
        %2873 = vmatprep.mubr.bf16.mxu0 0
        %2874 = vmatmul.mubr.bf16.gmra.mxu0 %v2605
        %v2875 = vpop.f32.mrf.mxu0
        %v2876 = vadd.f32 0.0, %v2875
        %v2877 = vpop.f32.mrf.mxu0
        %v2878 = vadd.f32 0.0, %v2877
        %v2879 = vpop.f32.mrf.mxu0
        %v2880 = vadd.f32 0.0, %v2879
        %v2881 = vpop.f32.mrf.mxu0
        %v2882 = vadd.f32 0.0, %v2881
        %2883 = vmatprep.mubr.bf16.mxu0 0
        %2884 = vmatmul.mubr.bf16.gmra.mxu0 %v2613
        %v2885 = vpop.f32.mrf.mxu0
        %v2886 = vadd.f32 0.0, %v2885
        %v2887 = vpop.f32.mrf.mxu0
        %v2888 = vadd.f32 0.0, %v2887
        %v2889 = vpop.f32.mrf.mxu0
        %v2890 = vadd.f32 0.0, %v2889
        %v2891 = vpop.f32.mrf.mxu0
        %v2892 = vadd.f32 0.0, %v2891
        %2893 = vmatprep.mubr.bf16.mxu0 0
        %2894 = vmatmul.mubr.bf16.gmra.mxu0 %v2621
        %v2895 = vpop.f32.mrf.mxu0
        %v2896 = vadd.f32 0.0, %v2895
        %v2897 = vpop.f32.mrf.mxu0
        %v2898 = vadd.f32 0.0, %v2897
        %v2899 = vpop.f32.mrf.mxu0
        %v2900 = vadd.f32 0.0, %v2899
        %v2901 = vpop.f32.mrf.mxu0
        %v2902 = vadd.f32 0.0, %v2901
        %2903 = vmatprep.mubr.bf16.mxu0 0
        %2904 = vmatmul.mubr.bf16.gmra.mxu0 %v2629
        %v2905 = vpop.f32.mrf.mxu0
        %v2906 = vadd.f32 0.0, %v2905
        %v2907 = vpop.f32.mrf.mxu0
        %v2908 = vadd.f32 0.0, %v2907
        %v2909 = vpop.f32.mrf.mxu0
        %v2910 = vadd.f32 0.0, %v2909
        %v2911 = vpop.f32.mrf.mxu0
        %v2912 = vadd.f32 0.0, %v2911
        %2913 = vmatprep.mubr.bf16.mxu0 0
        %2914 = vmatmul.mubr.bf16.gmra.mxu0 %v2637
        %v2915 = vpop.f32.mrf.mxu0
        %v2916 = vadd.f32 0.0, %v2915
        %v2917 = vpop.f32.mrf.mxu0
        %v2918 = vadd.f32 0.0, %v2917
        %v2919 = vpop.f32.mrf.mxu0
        %v2920 = vadd.f32 0.0, %v2919
        %v2921 = vpop.f32.mrf.mxu0
        %v2922 = vadd.f32 0.0, %v2921
        %2923 = vmatprep.mubr.bf16.mxu0 0
        %2924 = vmatmul.mubr.bf16.gmra.mxu0 %v2645
        %v2925 = vpop.f32.mrf.mxu0
        %v2926 = vadd.f32 0.0, %v2925
        %v2927 = vpop.f32.mrf.mxu0
        %v2928 = vadd.f32 0.0, %v2927
        %v2929 = vpop.f32.mrf.mxu0
        %v2930 = vadd.f32 0.0, %v2929
        %v2931 = vpop.f32.mrf.mxu0
        %v2932 = vadd.f32 0.0, %v2931
        %2933 = vmatprep.mubr.bf16.mxu0 0
        %2934 = vmatmul.mubr.bf16.gmra.mxu0 %v2653
        %v2935 = vpop.f32.mrf.mxu0
        %v2936 = vadd.f32 0.0, %v2935
        %v2937 = vpop.f32.mrf.mxu0
        %v2938 = vadd.f32 0.0, %v2937
        %v2939 = vpop.f32.mrf.mxu0
        %v2940 = vadd.f32 0.0, %v2939
        %v2941 = vpop.f32.mrf.mxu0
        %v2942 = vadd.f32 0.0, %v2941
        %2943 = vmatprep.mubr.bf16.mxu0 0
        %2944 = vmatmul.mubr.bf16.gmra.mxu0 %v2661
        %v2945 = vpop.f32.mrf.mxu0
        %v2946 = vadd.f32 0.0, %v2945
        %v2947 = vpop.f32.mrf.mxu0
        %v2948 = vadd.f32 0.0, %v2947
        %v2949 = vpop.f32.mrf.mxu0
        %v2950 = vadd.f32 0.0, %v2949
        %v2951 = vpop.f32.mrf.mxu0
        %v2952 = vadd.f32 0.0, %v2951
        %2953 = vmatprep.mubr.bf16.mxu0 0
        %2954 = vmatmul.mubr.bf16.gmra.mxu0 %v2669
        %v2955 = vpop.f32.mrf.mxu0
        %v2956 = vadd.f32 0.0, %v2955
        %v2957 = vpop.f32.mrf.mxu0
        %v2958 = vadd.f32 0.0, %v2957
        %v2959 = vpop.f32.mrf.mxu0
        %v2960 = vadd.f32 0.0, %v2959
        %v2961 = vpop.f32.mrf.mxu0
        %v2962 = vadd.f32 0.0, %v2961
        %2963 = vmatprep.mubr.bf16.mxu0 0
        %2964 = vmatmul.mubr.bf16.gmra.mxu0 %v2677
        %v2965 = vpop.f32.mrf.mxu0
        %v2966 = vadd.f32 0.0, %v2965
        %v2967 = vpop.f32.mrf.mxu0
        %v2968 = vadd.f32 0.0, %v2967
        %v2969 = vpop.f32.mrf.mxu0
        %v2970 = vadd.f32 0.0, %v2969
        %v2971 = vpop.f32.mrf.mxu0
        %v2972 = vadd.f32 0.0, %v2971
        %2973 = vmatprep.mubr.bf16.mxu0 0
        %2974 = vmatmul.mubr.bf16.gmra.mxu0 %v2685
        %v2975 = vpop.f32.mrf.mxu0
        %v2976 = vadd.f32 0.0, %v2975
        %v2977 = vpop.f32.mrf.mxu0
        %v2978 = vadd.f32 0.0, %v2977
        %v2979 = vpop.f32.mrf.mxu0
        %v2980 = vadd.f32 0.0, %v2979
        %v2981 = vpop.f32.mrf.mxu0
        %v2982 = vadd.f32 0.0, %v2981
        %2983 = vmatprep.mubr.bf16.mxu0 0
        %2984 = vmatmul.mubr.bf16.gmra.mxu0 %v2693
        %v2985 = vpop.f32.mrf.mxu0
        %v2986 = vadd.f32 0.0, %v2985
        %v2987 = vpop.f32.mrf.mxu0
        %v2988 = vadd.f32 0.0, %v2987
        %v2989 = vpop.f32.mrf.mxu0
        %v2990 = vadd.f32 0.0, %v2989
        %v2991 = vpop.f32.mrf.mxu0
        %v2992 = vadd.f32 0.0, %v2991
        %2993 = vdwg.mxu0
        %v2994 = vadd.f32 %v2397, %v2826
        %v2995 = vadd.f32 %v2397, %v2830
        %v2996 = vadd.f32 %v2397, %v2836
        %v2997 = vadd.f32 %v2397, %v2840
        %v2998 = vadd.f32 %v2397, %v2846
        %v2999 = vadd.f32 %v2397, %v2850
        %v3000 = vadd.f32 %v2397, %v2856
        %v3001 = vadd.f32 %v2397, %v2860
        %v3002 = vadd.f32 %v2397, %v2866
        %v3003 = vadd.f32 %v2397, %v2870
        %v3004 = vadd.f32 %v2397, %v2876
        %v3005 = vadd.f32 %v2397, %v2880
        %v3006 = vadd.f32 %v2397, %v2886
        %v3007 = vadd.f32 %v2397, %v2890
        %v3008 = vadd.f32 %v2397, %v2896
        %v3009 = vadd.f32 %v2397, %v2900
        %v3010 = vadd.f32 %v2397, %v2906
        %v3011 = vadd.f32 %v2397, %v2910
        %v3012 = vadd.f32 %v2397, %v2916
        %v3013 = vadd.f32 %v2397, %v2920
        %v3014 = vadd.f32 %v2397, %v2926
        %v3015 = vadd.f32 %v2397, %v2930
        %v3016 = vadd.f32 %v2397, %v2936
        %v3017 = vadd.f32 %v2397, %v2940
        %v3018 = vadd.f32 %v2397, %v2946
        %v3019 = vadd.f32 %v2397, %v2950
        %v3020 = vadd.f32 %v2397, %v2956
        %v3021 = vadd.f32 %v2397, %v2960
        %v3022 = vadd.f32 %v2397, %v2966
        %v3023 = vadd.f32 %v2397, %v2970
        %v3024 = vadd.f32 %v2397, %v2976
        %v3025 = vadd.f32 %v2397, %v2980
        %v3026 = vadd.f32 %v2397, %v2986
        %v3027 = vadd.f32 %v2397, %v2990
        %v3028 = vadd.f32 %v2397, %v2828
        %v3029 = vadd.f32 %v2397, %v2832
        %v3030 = vadd.f32 %v2397, %v2838
        %v3031 = vadd.f32 %v2397, %v2842
        %v3032 = vadd.f32 %v2397, %v2848
        %v3033 = vadd.f32 %v2397, %v2852
        %v3034 = vadd.f32 %v2397, %v2858
        %v3035 = vadd.f32 %v2397, %v2862
        %v3036 = vadd.f32 %v2397, %v2868
        %v3037 = vadd.f32 %v2397, %v2872
        %v3038 = vadd.f32 %v2397, %v2878
        %v3039 = vadd.f32 %v2397, %v2882
        %v3040 = vadd.f32 %v2397, %v2888
        %v3041 = vadd.f32 %v2397, %v2892
        %v3042 = vadd.f32 %v2397, %v2898
        %v3043 = vadd.f32 %v2397, %v2902
        %v3044 = vadd.f32 %v2397, %v2908
        %v3045 = vadd.f32 %v2397, %v2912
        %v3046 = vadd.f32 %v2397, %v2918
        %v3047 = vadd.f32 %v2397, %v2922
        %v3048 = vadd.f32 %v2397, %v2928
        %v3049 = vadd.f32 %v2397, %v2932
        %v3050 = vadd.f32 %v2397, %v2938
        %v3051 = vadd.f32 %v2397, %v2942
        %v3052 = vadd.f32 %v2397, %v2948
        %v3053 = vadd.f32 %v2397, %v2952
        %v3054 = vadd.f32 %v2397, %v2958
        %v3055 = vadd.f32 %v2397, %v2962
        %v3056 = vadd.f32 %v2397, %v2968
        %v3057 = vadd.f32 %v2397, %v2972
        %v3058 = vadd.f32 %v2397, %v2978
        %v3059 = vadd.f32 %v2397, %v2982
        %v3060 = vadd.f32 %v2397, %v2988
        %v3061 = vadd.f32 %v2397, %v2992
        %v3062 = vld [vmem:[#allocation3] sm:$0xf]
        %v3063 = vld [vmem:[#allocation3 + $0x4] sm:$0xf]
        %v3064 = vld [vmem:[#allocation3 + $0x8] sm:$0xf]
        %v3065 = vld [vmem:[#allocation3 + $0xc] sm:$0xf]
        %v3066 = vld [vmem:[#allocation3 + $0x10] sm:$0xf]
        %v3067 = vld [vmem:[#allocation3 + $0x14] sm:$0xf]
        %v3068 = vld [vmem:[#allocation3 + $0x18] sm:$0xf]
        %v3069 = vld [vmem:[#allocation3 + $0x1c] sm:$0xf]
        %v3070 = vld [vmem:[#allocation3 + $0x20] sm:$0xf]
        %v3071 = vld [vmem:[#allocation3 + $0x24] sm:$0xf]
        %v3072 = vld [vmem:[#allocation3 + $0x28] sm:$0xf]
        %v3073 = vld [vmem:[#allocation3 + $0x2c] sm:$0xf]
        %v3074 = vld [vmem:[#allocation3 + $0x30] sm:$0xf]
        %v3075 = vld [vmem:[#allocation3 + $0x34] sm:$0xf]
        %v3076 = vld [vmem:[#allocation3 + $0x38] sm:$0xf]
        %v3077 = vld [vmem:[#allocation3 + $0x3c] sm:$0xf]
        %v3078 = vld [vmem:[#allocation3 + $0x40] sm:$0xf]
        %v3079 = vld [vmem:[#allocation3 + $0x44] sm:$0xf]
        %v3080 = vld [vmem:[#allocation3 + $0x48] sm:$0xf]
        %v3081 = vld [vmem:[#allocation3 + $0x4c] sm:$0xf]
        %v3082 = vld [vmem:[#allocation3 + $0x50] sm:$0xf]
        %v3083 = vld [vmem:[#allocation3 + $0x54] sm:$0xf]
        %v3084 = vld [vmem:[#allocation3 + $0x58] sm:$0xf]
        %v3085 = vld [vmem:[#allocation3 + $0x5c] sm:$0xf]
        %v3086 = vld [vmem:[#allocation3 + $0x60] sm:$0xf]
        %v3087 = vld [vmem:[#allocation3 + $0x64] sm:$0xf]
        %v3088 = vld [vmem:[#allocation3 + $0x68] sm:$0xf]
        %v3089 = vld [vmem:[#allocation3 + $0x6c] sm:$0xf]
        %v3090 = vld [vmem:[#allocation3 + $0x70] sm:$0xf]
        %v3091 = vld [vmem:[#allocation3 + $0x74] sm:$0xf]
        %v3092 = vld [vmem:[#allocation3 + $0x78] sm:$0xf]
        %v3093 = vld [vmem:[#allocation3 + $0x7c] sm:$0xf]
        %v3094 = vld [vmem:[#allocation3 + $0x80] sm:$0xf]
        %v3095 = vld [vmem:[#allocation3 + $0x84] sm:$0xf]
        %v3096 = vld [vmem:[#allocation3 + $0x88] sm:$0x1]
        %v3132 = vunpack.c.l.b16 %v3062
        %v3133 = vunpack.c.l.b16 %v3063
        %v3134 = vunpack.c.l.b16 %v3064
        %v3135 = vunpack.c.l.b16 %v3065
        %v3136 = vunpack.c.l.b16 %v3066
        %v3137 = vunpack.c.l.b16 %v3067
        %v3138 = vunpack.c.l.b16 %v3068
        %v3139 = vunpack.c.l.b16 %v3069
        %v3140 = vunpack.c.l.b16 %v3070
        %v3141 = vunpack.c.l.b16 %v3071
        %v3142 = vunpack.c.l.b16 %v3072
        %v3143 = vunpack.c.l.b16 %v3073
        %v3144 = vunpack.c.l.b16 %v3074
        %v3145 = vunpack.c.l.b16 %v3075
        %v3146 = vunpack.c.l.b16 %v3076
        %v3147 = vunpack.c.l.b16 %v3077
        %v3148 = vunpack.c.l.b16 %v3078
        %v3149 = vunpack.c.l.b16 %v3079
        %v3150 = vunpack.c.l.b16 %v3080
        %v3151 = vunpack.c.l.b16 %v3081
        %v3152 = vunpack.c.l.b16 %v3082
        %v3153 = vunpack.c.l.b16 %v3083
        %v3154 = vunpack.c.l.b16 %v3084
        %v3155 = vunpack.c.l.b16 %v3085
        %v3156 = vunpack.c.l.b16 %v3086
        %v3157 = vunpack.c.l.b16 %v3087
        %v3158 = vunpack.c.l.b16 %v3088
        %v3159 = vunpack.c.l.b16 %v3089
        %v3160 = vunpack.c.l.b16 %v3090
        %v3161 = vunpack.c.l.b16 %v3091
        %v3162 = vunpack.c.l.b16 %v3092
        %v3163 = vunpack.c.l.b16 %v3093
        %v3164 = vunpack.c.l.b16 %v3094
        %v3165 = vunpack.c.l.b16 %v3095
        %v3166 = vunpack.c.l.b16 %v3096
        %v3167 = vpack.c.b16 %v3133, %v3132
        %v3168 = vpack.c.b16 %v3135, %v3134
        %v3169 = vpack.c.b16 %v3137, %v3136
        %v3170 = vpack.c.b16 %v3139, %v3138
        %v3171 = vpack.c.b16 %v3141, %v3140
        %v3172 = vpack.c.b16 %v3143, %v3142
        %v3173 = vpack.c.b16 %v3145, %v3144
        %v3174 = vpack.c.b16 %v3147, %v3146
        %v3175 = vpack.c.b16 %v3149, %v3148
        %v3176 = vpack.c.b16 %v3151, %v3150
        %v3177 = vpack.c.b16 %v3153, %v3152
        %v3178 = vpack.c.b16 %v3155, %v3154
        %v3179 = vpack.c.b16 %v3157, %v3156
        %v3180 = vpack.c.b16 %v3159, %v3158
        %v3181 = vpack.c.b16 %v3161, %v3160
        %v3182 = vpack.c.b16 %v3163, %v3162
        %v3183 = vpack.c.b16 %v3165, %v3164
        %v3184 = vpack.c.b16 %v3166, %v3166
        %v3186 = vshrl.u32 %v3167, 16
        %v3188 = vshll.u32 %v3167, 16
        %v3190 = vrot.slane %v3188, 1
        %v3191 = vor.u32 %v3186, %v3190
        %v3193 = vshll.u32 %v3168, 16
        %v3195 = vrot.slane %v3193, 1
        %v3196 = vsel %vm2553, %v3191, %v3195
        %v3197 = vshrl.u32 %v3168, 16
        %v3199 = vor.u32 %v3197, %v3195
        %v3201 = vshll.u32 %v3169, 16
        %v3203 = vrot.slane %v3201, 1
        %v3204 = vsel %vm2553, %v3199, %v3203
        %v3205 = vshrl.u32 %v3169, 16
        %v3207 = vor.u32 %v3205, %v3203
        %v3209 = vshll.u32 %v3170, 16
        %v3211 = vrot.slane %v3209, 1
        %v3212 = vsel %vm2553, %v3207, %v3211
        %v3213 = vshrl.u32 %v3170, 16
        %v3215 = vor.u32 %v3213, %v3211
        %v3217 = vshll.u32 %v3171, 16
        %v3219 = vrot.slane %v3217, 1
        %v3220 = vsel %vm2553, %v3215, %v3219
        %v3221 = vshrl.u32 %v3171, 16
        %v3223 = vor.u32 %v3221, %v3219
        %v3225 = vshll.u32 %v3172, 16
        %v3227 = vrot.slane %v3225, 1
        %v3228 = vsel %vm2553, %v3223, %v3227
        %v3229 = vshrl.u32 %v3172, 16
        %v3231 = vor.u32 %v3229, %v3227
        %v3233 = vshll.u32 %v3173, 16
        %v3235 = vrot.slane %v3233, 1
        %v3236 = vsel %vm2553, %v3231, %v3235
        %v3237 = vshrl.u32 %v3173, 16
        %v3239 = vor.u32 %v3237, %v3235
        %v3241 = vshll.u32 %v3174, 16
        %v3243 = vrot.slane %v3241, 1
        %v3244 = vsel %vm2553, %v3239, %v3243
        %v3245 = vshrl.u32 %v3174, 16
        %v3247 = vor.u32 %v3245, %v3243
        %v3249 = vshll.u32 %v3175, 16
        %v3251 = vrot.slane %v3249, 1
        %v3252 = vsel %vm2553, %v3247, %v3251
        %v3253 = vshrl.u32 %v3175, 16
        %v3255 = vor.u32 %v3253, %v3251
        %v3257 = vshll.u32 %v3176, 16
        %v3259 = vrot.slane %v3257, 1
        %v3260 = vsel %vm2553, %v3255, %v3259
        %v3261 = vshrl.u32 %v3176, 16
        %v3263 = vor.u32 %v3261, %v3259
        %v3265 = vshll.u32 %v3177, 16
        %v3267 = vrot.slane %v3265, 1
        %v3268 = vsel %vm2553, %v3263, %v3267
        %v3269 = vshrl.u32 %v3177, 16
        %v3271 = vor.u32 %v3269, %v3267
        %v3273 = vshll.u32 %v3178, 16
        %v3275 = vrot.slane %v3273, 1
        %v3276 = vsel %vm2553, %v3271, %v3275
        %v3277 = vshrl.u32 %v3178, 16
        %v3279 = vor.u32 %v3277, %v3275
        %v3281 = vshll.u32 %v3179, 16
        %v3283 = vrot.slane %v3281, 1
        %v3284 = vsel %vm2553, %v3279, %v3283
        %v3285 = vshrl.u32 %v3179, 16
        %v3287 = vor.u32 %v3285, %v3283
        %v3289 = vshll.u32 %v3180, 16
        %v3291 = vrot.slane %v3289, 1
        %v3292 = vsel %vm2553, %v3287, %v3291
        %v3293 = vshrl.u32 %v3180, 16
        %v3295 = vor.u32 %v3293, %v3291
        %v3297 = vshll.u32 %v3181, 16
        %v3299 = vrot.slane %v3297, 1
        %v3300 = vsel %vm2553, %v3295, %v3299
        %v3301 = vshrl.u32 %v3181, 16
        %v3303 = vor.u32 %v3301, %v3299
        %v3305 = vshll.u32 %v3182, 16
        %v3307 = vrot.slane %v3305, 1
        %v3308 = vsel %vm2553, %v3303, %v3307
        %v3309 = vshrl.u32 %v3182, 16
        %v3311 = vor.u32 %v3309, %v3307
        %v3313 = vshll.u32 %v3183, 16
        %v3315 = vrot.slane %v3313, 1
        %v3316 = vsel %vm2553, %v3311, %v3315
        %v3317 = vshrl.u32 %v3183, 16
        %v3319 = vor.u32 %v3317, %v3315
        %v3321 = vshll.u32 %v3184, 16
        %v3323 = vrot.slane %v3321, 1
        %v3324 = vsel %vm2553, %v3319, %v3323
        %v3358 = vunpack.c.l.b16 %v2414
        %v3359 = vunpack.c.h.b16 %v2414
        %v3360 = vunpack.c.l.b16 %v2415
        %v3361 = vunpack.c.h.b16 %v2415
        %v3362 = vunpack.c.l.b16 %v2416
        %v3363 = vunpack.c.h.b16 %v2416
        %v3364 = vunpack.c.l.b16 %v2417
        %v3365 = vunpack.c.h.b16 %v2417
        %v3366 = vunpack.c.l.b16 %v2418
        %v3367 = vunpack.c.h.b16 %v2418
        %v3368 = vunpack.c.l.b16 %v2419
        %v3369 = vunpack.c.h.b16 %v2419
        %v3370 = vunpack.c.l.b16 %v2420
        %v3371 = vunpack.c.h.b16 %v2420
        %v3372 = vunpack.c.l.b16 %v2421
        %v3373 = vunpack.c.h.b16 %v2421
        %v3374 = vunpack.c.l.b16 %v2422
        %v3375 = vunpack.c.h.b16 %v2422
        %v3376 = vunpack.c.l.b16 %v2423
        %v3377 = vunpack.c.h.b16 %v2423
        %v3378 = vunpack.c.l.b16 %v2424
        %v3379 = vunpack.c.h.b16 %v2424
        %v3380 = vunpack.c.l.b16 %v2425
        %v3381 = vunpack.c.h.b16 %v2425
        %v3382 = vunpack.c.l.b16 %v2426
        %v3383 = vunpack.c.h.b16 %v2426
        %v3384 = vunpack.c.l.b16 %v2427
        %v3385 = vunpack.c.h.b16 %v2427
        %v3386 = vunpack.c.l.b16 %v2428
        %v3387 = vunpack.c.h.b16 %v2428
        %v3388 = vunpack.c.l.b16 %v2429
        %v3389 = vunpack.c.h.b16 %v2429
        %v3390 = vpack.c.b16 %v3360, %v3358
        %v3391 = vpack.c.b16 %v3361, %v3359
        %v3392 = vpack.c.b16 %v3364, %v3362
        %v3393 = vpack.c.b16 %v3365, %v3363
        %v3394 = vpack.c.b16 %v3368, %v3366
        %v3395 = vpack.c.b16 %v3369, %v3367
        %v3396 = vpack.c.b16 %v3372, %v3370
        %v3397 = vpack.c.b16 %v3373, %v3371
        %v3398 = vpack.c.b16 %v3376, %v3374
        %v3399 = vpack.c.b16 %v3377, %v3375
        %v3400 = vpack.c.b16 %v3380, %v3378
        %v3401 = vpack.c.b16 %v3381, %v3379
        %v3402 = vpack.c.b16 %v3384, %v3382
        %v3403 = vpack.c.b16 %v3385, %v3383
        %v3404 = vpack.c.b16 %v3388, %v3386
        %v3405 = vpack.c.b16 %v3389, %v3387
        %3422 = vmatprep.subr.bf16.mxu0 %v3405
        %3423 = vmatpush1.bf16.msra.mxu0 %v3404
        %3424 = vmatprep.subr.bf16.mxu0 %v3403
        %3425 = vmatpush1.bf16.msra.mxu0 %v3402
        %3426 = vmatprep.subr.bf16.mxu0 %v3401
        %3427 = vmatpush1.bf16.msra.mxu0 %v3400
        %3428 = vmatprep.subr.bf16.mxu0 %v3399
        %3429 = vmatpush1.bf16.msra.mxu0 %v3398
        %3430 = vmatprep.subr.bf16.mxu0 %v3397
        %3431 = vmatpush1.bf16.msra.mxu0 %v3396
        %3432 = vmatprep.subr.bf16.mxu0 %v3395
        %3433 = vmatpush1.bf16.msra.mxu0 %v3394
        %3434 = vmatprep.subr.bf16.mxu0 %v3393
        %3435 = vmatpush1.bf16.msra.mxu0 %v3392
        %3436 = vmatprep.subr.bf16.mxu0 %v3391
        %3437 = vmatpush1.bf16.msra.mxu0 %v3390
        %3438 = vmatprep.subr.bf16.mxu0 0
        %3439 = vmatpush2.bf16.msra.mxu0 0
        %3440 = vmatprep.subr.bf16.mxu0 0
        %3441 = vmatpush2.bf16.msra.mxu0 0
        %3442 = vmatprep.subr.bf16.mxu0 0
        %3443 = vmatpush2.bf16.msra.mxu0 0
        %3444 = vmatprep.subr.bf16.mxu0 0
        %3445 = vmatpush2.bf16.msra.mxu0 0
        %3446 = vmatprep.subr.bf16.mxu0 0
        %3447 = vmatpush2.bf16.msra.mxu0 0
        %3448 = vmatprep.subr.bf16.mxu0 0
        %3449 = vmatpush2.bf16.msra.mxu0 0
        %3450 = vmatprep.subr.bf16.mxu0 0
        %3451 = vmatpush2.bf16.msra.mxu0 0
        %3452 = vmatprep.subr.bf16.mxu0 0
        %3453 = vmatpush2.bf16.msra.mxu0 0
        %3454 = vmatprep.mubr.bf16.mxu0 0
        %3455 = vmatmul.mubr.bf16.gmra.mxu0 %v3196
        %v3456 = vpop.f32.mrf.mxu0
        %v3457 = vadd.f32 0.0, %v3456
        %v3458 = vpop.f32.mrf.mxu0
        %v3459 = vadd.f32 0.0, %v3458
        %v3460 = vpop.f32.mrf.mxu0
        %v3461 = vadd.f32 0.0, %v3460
        %v3462 = vpop.f32.mrf.mxu0
        %v3463 = vadd.f32 0.0, %v3462
        %3464 = vmatprep.mubr.bf16.mxu0 0
        %3465 = vmatmul.mubr.bf16.gmra.mxu0 %v3204
        %v3466 = vpop.f32.mrf.mxu0
        %v3467 = vadd.f32 0.0, %v3466
        %v3468 = vpop.f32.mrf.mxu0
        %v3469 = vadd.f32 0.0, %v3468
        %v3470 = vpop.f32.mrf.mxu0
        %v3471 = vadd.f32 0.0, %v3470
        %v3472 = vpop.f32.mrf.mxu0
        %v3473 = vadd.f32 0.0, %v3472
        %3474 = vmatprep.mubr.bf16.mxu0 0
        %3475 = vmatmul.mubr.bf16.gmra.mxu0 %v3212
        %v3476 = vpop.f32.mrf.mxu0
        %v3477 = vadd.f32 0.0, %v3476
        %v3478 = vpop.f32.mrf.mxu0
        %v3479 = vadd.f32 0.0, %v3478
        %v3480 = vpop.f32.mrf.mxu0
        %v3481 = vadd.f32 0.0, %v3480
        %v3482 = vpop.f32.mrf.mxu0
        %v3483 = vadd.f32 0.0, %v3482
        %3484 = vmatprep.mubr.bf16.mxu0 0
        %3485 = vmatmul.mubr.bf16.gmra.mxu0 %v3220
        %v3486 = vpop.f32.mrf.mxu0
        %v3487 = vadd.f32 0.0, %v3486
        %v3488 = vpop.f32.mrf.mxu0
        %v3489 = vadd.f32 0.0, %v3488
        %v3490 = vpop.f32.mrf.mxu0
        %v3491 = vadd.f32 0.0, %v3490
        %v3492 = vpop.f32.mrf.mxu0
        %v3493 = vadd.f32 0.0, %v3492
        %3494 = vmatprep.mubr.bf16.mxu0 0
        %3495 = vmatmul.mubr.bf16.gmra.mxu0 %v3228
        %v3496 = vpop.f32.mrf.mxu0
        %v3497 = vadd.f32 0.0, %v3496
        %v3498 = vpop.f32.mrf.mxu0
        %v3499 = vadd.f32 0.0, %v3498
        %v3500 = vpop.f32.mrf.mxu0
        %v3501 = vadd.f32 0.0, %v3500
        %v3502 = vpop.f32.mrf.mxu0
        %v3503 = vadd.f32 0.0, %v3502
        %3504 = vmatprep.mubr.bf16.mxu0 0
        %3505 = vmatmul.mubr.bf16.gmra.mxu0 %v3236
        %v3506 = vpop.f32.mrf.mxu0
        %v3507 = vadd.f32 0.0, %v3506
        %v3508 = vpop.f32.mrf.mxu0
        %v3509 = vadd.f32 0.0, %v3508
        %v3510 = vpop.f32.mrf.mxu0
        %v3511 = vadd.f32 0.0, %v3510
        %v3512 = vpop.f32.mrf.mxu0
        %v3513 = vadd.f32 0.0, %v3512
        %3514 = vmatprep.mubr.bf16.mxu0 0
        %3515 = vmatmul.mubr.bf16.gmra.mxu0 %v3244
        %v3516 = vpop.f32.mrf.mxu0
        %v3517 = vadd.f32 0.0, %v3516
        %v3518 = vpop.f32.mrf.mxu0
        %v3519 = vadd.f32 0.0, %v3518
        %v3520 = vpop.f32.mrf.mxu0
        %v3521 = vadd.f32 0.0, %v3520
        %v3522 = vpop.f32.mrf.mxu0
        %v3523 = vadd.f32 0.0, %v3522
        %3524 = vmatprep.mubr.bf16.mxu0 0
        %3525 = vmatmul.mubr.bf16.gmra.mxu0 %v3252
        %v3526 = vpop.f32.mrf.mxu0
        %v3527 = vadd.f32 0.0, %v3526
        %v3528 = vpop.f32.mrf.mxu0
        %v3529 = vadd.f32 0.0, %v3528
        %v3530 = vpop.f32.mrf.mxu0
        %v3531 = vadd.f32 0.0, %v3530
        %v3532 = vpop.f32.mrf.mxu0
        %v3533 = vadd.f32 0.0, %v3532
        %3534 = vmatprep.mubr.bf16.mxu0 0
        %3535 = vmatmul.mubr.bf16.gmra.mxu0 %v3260
        %v3536 = vpop.f32.mrf.mxu0
        %v3537 = vadd.f32 0.0, %v3536
        %v3538 = vpop.f32.mrf.mxu0
        %v3539 = vadd.f32 0.0, %v3538
        %v3540 = vpop.f32.mrf.mxu0
        %v3541 = vadd.f32 0.0, %v3540
        %v3542 = vpop.f32.mrf.mxu0
        %v3543 = vadd.f32 0.0, %v3542
        %3544 = vmatprep.mubr.bf16.mxu0 0
        %3545 = vmatmul.mubr.bf16.gmra.mxu0 %v3268
        %v3546 = vpop.f32.mrf.mxu0
        %v3547 = vadd.f32 0.0, %v3546
        %v3548 = vpop.f32.mrf.mxu0
        %v3549 = vadd.f32 0.0, %v3548
        %v3550 = vpop.f32.mrf.mxu0
        %v3551 = vadd.f32 0.0, %v3550
        %v3552 = vpop.f32.mrf.mxu0
        %v3553 = vadd.f32 0.0, %v3552
        %3554 = vmatprep.mubr.bf16.mxu0 0
        %3555 = vmatmul.mubr.bf16.gmra.mxu0 %v3276
        %v3556 = vpop.f32.mrf.mxu0
        %v3557 = vadd.f32 0.0, %v3556
        %v3558 = vpop.f32.mrf.mxu0
        %v3559 = vadd.f32 0.0, %v3558
        %v3560 = vpop.f32.mrf.mxu0
        %v3561 = vadd.f32 0.0, %v3560
        %v3562 = vpop.f32.mrf.mxu0
        %v3563 = vadd.f32 0.0, %v3562
        %3564 = vmatprep.mubr.bf16.mxu0 0
        %3565 = vmatmul.mubr.bf16.gmra.mxu0 %v3284
        %v3566 = vpop.f32.mrf.mxu0
        %v3567 = vadd.f32 0.0, %v3566
        %v3568 = vpop.f32.mrf.mxu0
        %v3569 = vadd.f32 0.0, %v3568
        %v3570 = vpop.f32.mrf.mxu0
        %v3571 = vadd.f32 0.0, %v3570
        %v3572 = vpop.f32.mrf.mxu0
        %v3573 = vadd.f32 0.0, %v3572
        %3574 = vmatprep.mubr.bf16.mxu0 0
        %3575 = vmatmul.mubr.bf16.gmra.mxu0 %v3292
        %v3576 = vpop.f32.mrf.mxu0
        %v3577 = vadd.f32 0.0, %v3576
        %v3578 = vpop.f32.mrf.mxu0
        %v3579 = vadd.f32 0.0, %v3578
        %v3580 = vpop.f32.mrf.mxu0
        %v3581 = vadd.f32 0.0, %v3580
        %v3582 = vpop.f32.mrf.mxu0
        %v3583 = vadd.f32 0.0, %v3582
        %3584 = vmatprep.mubr.bf16.mxu0 0
        %3585 = vmatmul.mubr.bf16.gmra.mxu0 %v3300
        %v3586 = vpop.f32.mrf.mxu0
        %v3587 = vadd.f32 0.0, %v3586
        %v3588 = vpop.f32.mrf.mxu0
        %v3589 = vadd.f32 0.0, %v3588
        %v3590 = vpop.f32.mrf.mxu0
        %v3591 = vadd.f32 0.0, %v3590
        %v3592 = vpop.f32.mrf.mxu0
        %v3593 = vadd.f32 0.0, %v3592
        %3594 = vmatprep.mubr.bf16.mxu0 0
        %3595 = vmatmul.mubr.bf16.gmra.mxu0 %v3308
        %v3596 = vpop.f32.mrf.mxu0
        %v3597 = vadd.f32 0.0, %v3596
        %v3598 = vpop.f32.mrf.mxu0
        %v3599 = vadd.f32 0.0, %v3598
        %v3600 = vpop.f32.mrf.mxu0
        %v3601 = vadd.f32 0.0, %v3600
        %v3602 = vpop.f32.mrf.mxu0
        %v3603 = vadd.f32 0.0, %v3602
        %3604 = vmatprep.mubr.bf16.mxu0 0
        %3605 = vmatmul.mubr.bf16.gmra.mxu0 %v3316
        %v3606 = vpop.f32.mrf.mxu0
        %v3607 = vadd.f32 0.0, %v3606
        %v3608 = vpop.f32.mrf.mxu0
        %v3609 = vadd.f32 0.0, %v3608
        %v3610 = vpop.f32.mrf.mxu0
        %v3611 = vadd.f32 0.0, %v3610
        %v3612 = vpop.f32.mrf.mxu0
        %v3613 = vadd.f32 0.0, %v3612
        %3614 = vmatprep.mubr.bf16.mxu0 0
        %3615 = vmatmul.mubr.bf16.gmra.mxu0 %v3324
        %v3616 = vpop.f32.mrf.mxu0
        %v3617 = vadd.f32 0.0, %v3616
        %v3618 = vpop.f32.mrf.mxu0
        %v3619 = vadd.f32 0.0, %v3618
        %v3620 = vpop.f32.mrf.mxu0
        %v3621 = vadd.f32 0.0, %v3620
        %v3622 = vpop.f32.mrf.mxu0
        %v3623 = vadd.f32 0.0, %v3622
        %3624 = vdwg.mxu0
        %v3625 = vadd.f32 %v2994, %v3457
        %v3626 = vadd.f32 %v2995, %v3461
        %v3627 = vadd.f32 %v2996, %v3467
        %v3628 = vadd.f32 %v2997, %v3471
        %v3629 = vadd.f32 %v2998, %v3477
        %v3630 = vadd.f32 %v2999, %v3481
        %v3631 = vadd.f32 %v3000, %v3487
        %v3632 = vadd.f32 %v3001, %v3491
        %v3633 = vadd.f32 %v3002, %v3497
        %v3634 = vadd.f32 %v3003, %v3501
        %v3635 = vadd.f32 %v3004, %v3507
        %v3636 = vadd.f32 %v3005, %v3511
        %v3637 = vadd.f32 %v3006, %v3517
        %v3638 = vadd.f32 %v3007, %v3521
        %v3639 = vadd.f32 %v3008, %v3527
        %v3640 = vadd.f32 %v3009, %v3531
        %v3641 = vadd.f32 %v3010, %v3537
        %v3642 = vadd.f32 %v3011, %v3541
        %v3643 = vadd.f32 %v3012, %v3547
        %v3644 = vadd.f32 %v3013, %v3551
        %v3645 = vadd.f32 %v3014, %v3557
        %v3646 = vadd.f32 %v3015, %v3561
        %v3647 = vadd.f32 %v3016, %v3567
        %v3648 = vadd.f32 %v3017, %v3571
        %v3649 = vadd.f32 %v3018, %v3577
        %v3650 = vadd.f32 %v3019, %v3581
        %v3651 = vadd.f32 %v3020, %v3587
        %v3652 = vadd.f32 %v3021, %v3591
        %v3653 = vadd.f32 %v3022, %v3597
        %v3654 = vadd.f32 %v3023, %v3601
        %v3655 = vadd.f32 %v3024, %v3607
        %v3656 = vadd.f32 %v3025, %v3611
        %v3657 = vadd.f32 %v3026, %v3617
        %v3658 = vadd.f32 %v3027, %v3621
        %v3659 = vadd.f32 %v3028, %v3459
        %v3660 = vadd.f32 %v3029, %v3463
        %v3661 = vadd.f32 %v3030, %v3469
        %v3662 = vadd.f32 %v3031, %v3473
        %v3663 = vadd.f32 %v3032, %v3479
        %v3664 = vadd.f32 %v3033, %v3483
        %v3665 = vadd.f32 %v3034, %v3489
        %v3666 = vadd.f32 %v3035, %v3493
        %v3667 = vadd.f32 %v3036, %v3499
        %v3668 = vadd.f32 %v3037, %v3503
        %v3669 = vadd.f32 %v3038, %v3509
        %v3670 = vadd.f32 %v3039, %v3513
        %v3671 = vadd.f32 %v3040, %v3519
        %v3672 = vadd.f32 %v3041, %v3523
        %v3673 = vadd.f32 %v3042, %v3529
        %v3674 = vadd.f32 %v3043, %v3533
        %v3675 = vadd.f32 %v3044, %v3539
        %v3676 = vadd.f32 %v3045, %v3543
        %v3677 = vadd.f32 %v3046, %v3549
        %v3678 = vadd.f32 %v3047, %v3553
        %v3679 = vadd.f32 %v3048, %v3559
        %v3680 = vadd.f32 %v3049, %v3563
        %v3681 = vadd.f32 %v3050, %v3569
        %v3682 = vadd.f32 %v3051, %v3573
        %v3683 = vadd.f32 %v3052, %v3579
        %v3684 = vadd.f32 %v3053, %v3583
        %v3685 = vadd.f32 %v3054, %v3589
        %v3686 = vadd.f32 %v3055, %v3593
        %v3687 = vadd.f32 %v3056, %v3599
        %v3688 = vadd.f32 %v3057, %v3603
        %v3689 = vadd.f32 %v3058, %v3609
        %v3690 = vadd.f32 %v3059, %v3613
        %v3691 = vadd.f32 %v3060, %v3619
        %v3692 = vadd.f32 %v3061, %v3623
        %v3693 = vld [vmem:[#allocation3] sm:$0xf]
        %v3694 = vld [vmem:[#allocation3 + $0x4] sm:$0xf]
        %v3695 = vld [vmem:[#allocation3 + $0x8] sm:$0xf]
        %v3696 = vld [vmem:[#allocation3 + $0xc] sm:$0xf]
        %v3697 = vld [vmem:[#allocation3 + $0x10] sm:$0xf]
        %v3698 = vld [vmem:[#allocation3 + $0x14] sm:$0xf]
        %v3699 = vld [vmem:[#allocation3 + $0x18] sm:$0xf]
        %v3700 = vld [vmem:[#allocation3 + $0x1c] sm:$0xf]
        %v3701 = vld [vmem:[#allocation3 + $0x20] sm:$0xf]
        %v3702 = vld [vmem:[#allocation3 + $0x24] sm:$0xf]
        %v3703 = vld [vmem:[#allocation3 + $0x28] sm:$0xf]
        %v3704 = vld [vmem:[#allocation3 + $0x2c] sm:$0xf]
        %v3705 = vld [vmem:[#allocation3 + $0x30] sm:$0xf]
        %v3706 = vld [vmem:[#allocation3 + $0x34] sm:$0xf]
        %v3707 = vld [vmem:[#allocation3 + $0x38] sm:$0xf]
        %v3708 = vld [vmem:[#allocation3 + $0x3c] sm:$0xf]
        %v3709 = vld [vmem:[#allocation3 + $0x40] sm:$0xf]
        %v3710 = vld [vmem:[#allocation3 + $0x44] sm:$0xf]
        %v3711 = vld [vmem:[#allocation3 + $0x48] sm:$0xf]
        %v3712 = vld [vmem:[#allocation3 + $0x4c] sm:$0xf]
        %v3713 = vld [vmem:[#allocation3 + $0x50] sm:$0xf]
        %v3714 = vld [vmem:[#allocation3 + $0x54] sm:$0xf]
        %v3715 = vld [vmem:[#allocation3 + $0x58] sm:$0xf]
        %v3716 = vld [vmem:[#allocation3 + $0x5c] sm:$0xf]
        %v3717 = vld [vmem:[#allocation3 + $0x60] sm:$0xf]
        %v3718 = vld [vmem:[#allocation3 + $0x64] sm:$0xf]
        %v3719 = vld [vmem:[#allocation3 + $0x68] sm:$0xf]
        %v3720 = vld [vmem:[#allocation3 + $0x6c] sm:$0xf]
        %v3721 = vld [vmem:[#allocation3 + $0x70] sm:$0xf]
        %v3722 = vld [vmem:[#allocation3 + $0x74] sm:$0xf]
        %v3723 = vld [vmem:[#allocation3 + $0x78] sm:$0xf]
        %v3724 = vld [vmem:[#allocation3 + $0x7c] sm:$0xf]
        %v3725 = vld [vmem:[#allocation3 + $0x80] sm:$0xf]
        %v3726 = vld [vmem:[#allocation3 + $0x84] sm:$0xf]
        %v3761 = vunpack.c.l.b16 %v3693
        %v3762 = vunpack.c.l.b16 %v3694
        %v3763 = vunpack.c.l.b16 %v3695
        %v3764 = vunpack.c.l.b16 %v3696
        %v3765 = vunpack.c.l.b16 %v3697
        %v3766 = vunpack.c.l.b16 %v3698
        %v3767 = vunpack.c.l.b16 %v3699
        %v3768 = vunpack.c.l.b16 %v3700
        %v3769 = vunpack.c.l.b16 %v3701
        %v3770 = vunpack.c.l.b16 %v3702
        %v3771 = vunpack.c.l.b16 %v3703
        %v3772 = vunpack.c.l.b16 %v3704
        %v3773 = vunpack.c.l.b16 %v3705
        %v3774 = vunpack.c.l.b16 %v3706
        %v3775 = vunpack.c.l.b16 %v3707
        %v3776 = vunpack.c.l.b16 %v3708
        %v3777 = vunpack.c.l.b16 %v3709
        %v3778 = vunpack.c.l.b16 %v3710
        %v3779 = vunpack.c.l.b16 %v3711
        %v3780 = vunpack.c.l.b16 %v3712
        %v3781 = vunpack.c.l.b16 %v3713
        %v3782 = vunpack.c.l.b16 %v3714
        %v3783 = vunpack.c.l.b16 %v3715
        %v3784 = vunpack.c.l.b16 %v3716
        %v3785 = vunpack.c.l.b16 %v3717
        %v3786 = vunpack.c.l.b16 %v3718
        %v3787 = vunpack.c.l.b16 %v3719
        %v3788 = vunpack.c.l.b16 %v3720
        %v3789 = vunpack.c.l.b16 %v3721
        %v3790 = vunpack.c.l.b16 %v3722
        %v3791 = vunpack.c.l.b16 %v3723
        %v3792 = vunpack.c.l.b16 %v3724
        %v3793 = vunpack.c.l.b16 %v3725
        %v3794 = vunpack.c.l.b16 %v3726
        %v3795 = vpack.c.b16 %v3762, %v3761
        %v3796 = vpack.c.b16 %v3764, %v3763
        %v3797 = vpack.c.b16 %v3766, %v3765
        %v3798 = vpack.c.b16 %v3768, %v3767
        %v3799 = vpack.c.b16 %v3770, %v3769
        %v3800 = vpack.c.b16 %v3772, %v3771
        %v3801 = vpack.c.b16 %v3774, %v3773
        %v3802 = vpack.c.b16 %v3776, %v3775
        %v3803 = vpack.c.b16 %v3778, %v3777
        %v3804 = vpack.c.b16 %v3780, %v3779
        %v3805 = vpack.c.b16 %v3782, %v3781
        %v3806 = vpack.c.b16 %v3784, %v3783
        %v3807 = vpack.c.b16 %v3786, %v3785
        %v3808 = vpack.c.b16 %v3788, %v3787
        %v3809 = vpack.c.b16 %v3790, %v3789
        %v3810 = vpack.c.b16 %v3792, %v3791
        %v3811 = vpack.c.b16 %v3794, %v3793
        %3829 = vmatprep.subr.bf16.mxu0 0
        %3830 = vmatpush1.bf16.msra.mxu0 %v2774
        %3831 = vmatprep.subr.bf16.mxu0 0
        %3832 = vmatpush1.bf16.msra.mxu0 %v2772
        %3833 = vmatprep.subr.bf16.mxu0 0
        %3834 = vmatpush1.bf16.msra.mxu0 %v2770
        %3835 = vmatprep.subr.bf16.mxu0 0
        %3836 = vmatpush1.bf16.msra.mxu0 %v2768
        %3837 = vmatprep.subr.bf16.mxu0 0
        %3838 = vmatpush1.bf16.msra.mxu0 %v2766
        %3839 = vmatprep.subr.bf16.mxu0 0
        %3840 = vmatpush1.bf16.msra.mxu0 %v2764
        %3841 = vmatprep.subr.bf16.mxu0 0
        %3842 = vmatpush1.bf16.msra.mxu0 %v2762
        %3843 = vmatprep.subr.bf16.mxu0 0
        %3844 = vmatpush1.bf16.msra.mxu0 %v2760
        %3845 = vmatprep.subr.bf16.mxu0 0
        %3846 = vmatpush2.bf16.msra.mxu0 0
        %3847 = vmatprep.subr.bf16.mxu0 0
        %3848 = vmatpush2.bf16.msra.mxu0 0
        %3849 = vmatprep.subr.bf16.mxu0 0
        %3850 = vmatpush2.bf16.msra.mxu0 0
        %3851 = vmatprep.subr.bf16.mxu0 0
        %3852 = vmatpush2.bf16.msra.mxu0 0
        %3853 = vmatprep.subr.bf16.mxu0 0
        %3854 = vmatpush2.bf16.msra.mxu0 0
        %3855 = vmatprep.subr.bf16.mxu0 0
        %3856 = vmatpush2.bf16.msra.mxu0 0
        %3857 = vmatprep.subr.bf16.mxu0 0
        %3858 = vmatpush2.bf16.msra.mxu0 0
        %3859 = vmatprep.subr.bf16.mxu0 0
        %3860 = vmatpush2.bf16.msra.mxu0 0
        %3861 = vmatprep.mubr.bf16.mxu0 0
        %3862 = vmatmul.mubr.bf16.gmra.mxu0 %v3795
        %v3863 = vpop.f32.mrf.mxu0
        %v3864 = vadd.f32 0.0, %v3863
        %v3865 = vpop.f32.mrf.mxu0
        %v3866 = vpop.f32.mrf.mxu0
        %v3867 = vadd.f32 0.0, %v3866
        %v3868 = vpop.f32.mrf.mxu0
        %3869 = vmatprep.mubr.bf16.mxu0 0
        %3870 = vmatmul.mubr.bf16.gmra.mxu0 %v3796
        %v3871 = vpop.f32.mrf.mxu0
        %v3872 = vadd.f32 0.0, %v3871
        %v3873 = vpop.f32.mrf.mxu0
        %v3874 = vpop.f32.mrf.mxu0
        %v3875 = vadd.f32 0.0, %v3874
        %v3876 = vpop.f32.mrf.mxu0
        %3877 = vmatprep.mubr.bf16.mxu0 0
        %3878 = vmatmul.mubr.bf16.gmra.mxu0 %v3797
        %v3879 = vpop.f32.mrf.mxu0
        %v3880 = vadd.f32 0.0, %v3879
        %v3881 = vpop.f32.mrf.mxu0
        %v3882 = vpop.f32.mrf.mxu0
        %v3883 = vadd.f32 0.0, %v3882
        %v3884 = vpop.f32.mrf.mxu0
        %3885 = vmatprep.mubr.bf16.mxu0 0
        %3886 = vmatmul.mubr.bf16.gmra.mxu0 %v3798
        %v3887 = vpop.f32.mrf.mxu0
        %v3888 = vadd.f32 0.0, %v3887
        %v3889 = vpop.f32.mrf.mxu0
        %v3890 = vpop.f32.mrf.mxu0
        %v3891 = vadd.f32 0.0, %v3890
        %v3892 = vpop.f32.mrf.mxu0
        %3893 = vmatprep.mubr.bf16.mxu0 0
        %3894 = vmatmul.mubr.bf16.gmra.mxu0 %v3799
        %v3895 = vpop.f32.mrf.mxu0
        %v3896 = vadd.f32 0.0, %v3895
        %v3897 = vpop.f32.mrf.mxu0
        %v3898 = vpop.f32.mrf.mxu0
        %v3899 = vadd.f32 0.0, %v3898
        %v3900 = vpop.f32.mrf.mxu0
        %3901 = vmatprep.mubr.bf16.mxu0 0
        %3902 = vmatmul.mubr.bf16.gmra.mxu0 %v3800
        %v3903 = vpop.f32.mrf.mxu0
        %v3904 = vadd.f32 0.0, %v3903
        %v3905 = vpop.f32.mrf.mxu0
        %v3906 = vpop.f32.mrf.mxu0
        %v3907 = vadd.f32 0.0, %v3906
        %v3908 = vpop.f32.mrf.mxu0
        %3909 = vmatprep.mubr.bf16.mxu0 0
        %3910 = vmatmul.mubr.bf16.gmra.mxu0 %v3801
        %v3911 = vpop.f32.mrf.mxu0
        %v3912 = vadd.f32 0.0, %v3911
        %v3913 = vpop.f32.mrf.mxu0
        %v3914 = vpop.f32.mrf.mxu0
        %v3915 = vadd.f32 0.0, %v3914
        %v3916 = vpop.f32.mrf.mxu0
        %3917 = vmatprep.mubr.bf16.mxu0 0
        %3918 = vmatmul.mubr.bf16.gmra.mxu0 %v3802
        %v3919 = vpop.f32.mrf.mxu0
        %v3920 = vadd.f32 0.0, %v3919
        %v3921 = vpop.f32.mrf.mxu0
        %v3922 = vpop.f32.mrf.mxu0
        %v3923 = vadd.f32 0.0, %v3922
        %v3924 = vpop.f32.mrf.mxu0
        %3925 = vmatprep.mubr.bf16.mxu0 0
        %3926 = vmatmul.mubr.bf16.gmra.mxu0 %v3803
        %v3927 = vpop.f32.mrf.mxu0
        %v3928 = vadd.f32 0.0, %v3927
        %v3929 = vpop.f32.mrf.mxu0
        %v3930 = vpop.f32.mrf.mxu0
        %v3931 = vadd.f32 0.0, %v3930
        %v3932 = vpop.f32.mrf.mxu0
        %3933 = vmatprep.mubr.bf16.mxu0 0
        %3934 = vmatmul.mubr.bf16.gmra.mxu0 %v3804
        %v3935 = vpop.f32.mrf.mxu0
        %v3936 = vadd.f32 0.0, %v3935
        %v3937 = vpop.f32.mrf.mxu0
        %v3938 = vpop.f32.mrf.mxu0
        %v3939 = vadd.f32 0.0, %v3938
        %v3940 = vpop.f32.mrf.mxu0
        %3941 = vmatprep.mubr.bf16.mxu0 0
        %3942 = vmatmul.mubr.bf16.gmra.mxu0 %v3805
        %v3943 = vpop.f32.mrf.mxu0
        %v3944 = vadd.f32 0.0, %v3943
        %v3945 = vpop.f32.mrf.mxu0
        %v3946 = vpop.f32.mrf.mxu0
        %v3947 = vadd.f32 0.0, %v3946
        %v3948 = vpop.f32.mrf.mxu0
        %3949 = vmatprep.mubr.bf16.mxu0 0
        %3950 = vmatmul.mubr.bf16.gmra.mxu0 %v3806
        %v3951 = vpop.f32.mrf.mxu0
        %v3952 = vadd.f32 0.0, %v3951
        %v3953 = vpop.f32.mrf.mxu0
        %v3954 = vpop.f32.mrf.mxu0
        %v3955 = vadd.f32 0.0, %v3954
        %v3956 = vpop.f32.mrf.mxu0
        %3957 = vmatprep.mubr.bf16.mxu0 0
        %3958 = vmatmul.mubr.bf16.gmra.mxu0 %v3807
        %v3959 = vpop.f32.mrf.mxu0
        %v3960 = vadd.f32 0.0, %v3959
        %v3961 = vpop.f32.mrf.mxu0
        %v3962 = vpop.f32.mrf.mxu0
        %v3963 = vadd.f32 0.0, %v3962
        %v3964 = vpop.f32.mrf.mxu0
        %3965 = vmatprep.mubr.bf16.mxu0 0
        %3966 = vmatmul.mubr.bf16.gmra.mxu0 %v3808
        %v3967 = vpop.f32.mrf.mxu0
        %v3968 = vadd.f32 0.0, %v3967
        %v3969 = vpop.f32.mrf.mxu0
        %v3970 = vpop.f32.mrf.mxu0
        %v3971 = vadd.f32 0.0, %v3970
        %v3972 = vpop.f32.mrf.mxu0
        %3973 = vmatprep.mubr.bf16.mxu0 0
        %3974 = vmatmul.mubr.bf16.gmra.mxu0 %v3809
        %v3975 = vpop.f32.mrf.mxu0
        %v3976 = vadd.f32 0.0, %v3975
        %v3977 = vpop.f32.mrf.mxu0
        %v3978 = vpop.f32.mrf.mxu0
        %v3979 = vadd.f32 0.0, %v3978
        %v3980 = vpop.f32.mrf.mxu0
        %3981 = vmatprep.mubr.bf16.mxu0 0
        %3982 = vmatmul.mubr.bf16.gmra.mxu0 %v3810
        %v3983 = vpop.f32.mrf.mxu0
        %v3984 = vadd.f32 0.0, %v3983
        %v3985 = vpop.f32.mrf.mxu0
        %v3986 = vpop.f32.mrf.mxu0
        %v3987 = vadd.f32 0.0, %v3986
        %v3988 = vpop.f32.mrf.mxu0
        %3989 = vmatprep.mubr.bf16.mxu0 0
        %3990 = vmatmul.mubr.bf16.gmra.mxu0 %v3811
        %v3991 = vpop.f32.mrf.mxu0
        %v3992 = vadd.f32 0.0, %v3991
        %v3993 = vpop.f32.mrf.mxu0
        %v3994 = vpop.f32.mrf.mxu0
        %v3995 = vadd.f32 0.0, %v3994
        %v3996 = vpop.f32.mrf.mxu0
        %3997 = vdwg.mxu0
        %v3998 = vadd.f32 %v3625, %v3864
        %v3999 = vadd.f32 %v3626, %v3867
        %v4000 = vadd.f32 %v3627, %v3872
        %v4001 = vadd.f32 %v3628, %v3875
        %v4002 = vadd.f32 %v3629, %v3880
        %v4003 = vadd.f32 %v3630, %v3883
        %v4004 = vadd.f32 %v3631, %v3888
        %v4005 = vadd.f32 %v3632, %v3891
        %v4006 = vadd.f32 %v3633, %v3896
        %v4007 = vadd.f32 %v3634, %v3899
        %v4008 = vadd.f32 %v3635, %v3904
        %v4009 = vadd.f32 %v3636, %v3907
        %v4010 = vadd.f32 %v3637, %v3912
        %v4011 = vadd.f32 %v3638, %v3915
        %v4012 = vadd.f32 %v3639, %v3920
        %v4013 = vadd.f32 %v3640, %v3923
        %v4014 = vadd.f32 %v3641, %v3928
        %v4015 = vadd.f32 %v3642, %v3931
        %v4016 = vadd.f32 %v3643, %v3936
        %v4017 = vadd.f32 %v3644, %v3939
        %v4018 = vadd.f32 %v3645, %v3944
        %v4019 = vadd.f32 %v3646, %v3947
        %v4020 = vadd.f32 %v3647, %v3952
        %v4021 = vadd.f32 %v3648, %v3955
        %v4022 = vadd.f32 %v3649, %v3960
        %v4023 = vadd.f32 %v3650, %v3963
        %v4024 = vadd.f32 %v3651, %v3968
        %v4025 = vadd.f32 %v3652, %v3971
        %v4026 = vadd.f32 %v3653, %v3976
        %v4027 = vadd.f32 %v3654, %v3979
        %v4028 = vadd.f32 %v3655, %v3984
        %v4029 = vadd.f32 %v3656, %v3987
        %v4030 = vadd.f32 %v3657, %v3992
        %v4031 = vadd.f32 %v3658, %v3995
        %v4032 = vld [vmem:[#allocation2] sm:$0xe]
        %v4034 = vunpack.c.l.b16 %v4032
        %v4035 = vpack.c.b16 %v2501, %v4034
        %vm4036 = vcmask 1046528
        %v4037 = vrot.slane %v4035, 1
        %v4038 = vrot.slane %v2536, 1
        %v4039 = vsel %vm4036, %v4037, %v4038
        %v4040 = vrot.slane %v2537, 1
        %v4041 = vsel %vm4036, %v4038, %v4040
        %v4042 = vrot.slane %v2538, 1
        %v4043 = vsel %vm4036, %v4040, %v4042
        %v4044 = vrot.slane %v2539, 1
        %v4045 = vsel %vm4036, %v4042, %v4044
        %v4046 = vrot.slane %v2540, 1
        %v4047 = vsel %vm4036, %v4044, %v4046
        %v4048 = vrot.slane %v2541, 1
        %v4049 = vsel %vm4036, %v4046, %v4048
        %v4050 = vrot.slane %v2542, 1
        %v4051 = vsel %vm4036, %v4048, %v4050
        %v4052 = vrot.slane %v2543, 1
        %v4053 = vsel %vm4036, %v4050, %v4052
        %v4054 = vrot.slane %v2544, 1
        %v4055 = vsel %vm4036, %v4052, %v4054
        %v4056 = vrot.slane %v2545, 1
        %v4057 = vsel %vm4036, %v4054, %v4056
        %v4058 = vrot.slane %v2546, 1
        %v4059 = vsel %vm4036, %v4056, %v4058
        %v4060 = vrot.slane %v2547, 1
        %v4061 = vsel %vm4036, %v4058, %v4060
        %v4062 = vrot.slane %v2548, 1
        %v4063 = vsel %vm4036, %v4060, %v4062
        %v4064 = vrot.slane %v2549, 1
        %v4065 = vsel %vm4036, %v4062, %v4064
        %v4066 = vrot.slane %v2550, 1
        %v4067 = vsel %vm4036, %v4064, %v4066
        %v4068 = vrot.slane %v2551, 1
        %v4069 = vsel %vm4036, %v4066, %v4068
        %v4070 = vrot.slane %v2552, 1
        %v4071 = vsel %vm4036, %v4068, %v4070
        %4089 = vmatprep.subr.bf16.mxu0 0
        %4090 = vmatpush1.bf16.msra.mxu0 %v3404
        %4091 = vmatprep.subr.bf16.mxu0 0
        %4092 = vmatpush1.bf16.msra.mxu0 %v3402
        %4093 = vmatprep.subr.bf16.mxu0 0
        %4094 = vmatpush1.bf16.msra.mxu0 %v3400
        %4095 = vmatprep.subr.bf16.mxu0 0
        %4096 = vmatpush1.bf16.msra.mxu0 %v3398
        %4097 = vmatprep.subr.bf16.mxu0 0
        %4098 = vmatpush1.bf16.msra.mxu0 %v3396
        %4099 = vmatprep.subr.bf16.mxu0 0
        %4100 = vmatpush1.bf16.msra.mxu0 %v3394
        %4101 = vmatprep.subr.bf16.mxu0 0
        %4102 = vmatpush1.bf16.msra.mxu0 %v3392
        %4103 = vmatprep.subr.bf16.mxu0 0
        %4104 = vmatpush1.bf16.msra.mxu0 %v3390
        %4105 = vmatprep.subr.bf16.mxu0 0
        %4106 = vmatpush2.bf16.msra.mxu0 0
        %4107 = vmatprep.subr.bf16.mxu0 0
        %4108 = vmatpush2.bf16.msra.mxu0 0
        %4109 = vmatprep.subr.bf16.mxu0 0
        %4110 = vmatpush2.bf16.msra.mxu0 0
        %4111 = vmatprep.subr.bf16.mxu0 0
        %4112 = vmatpush2.bf16.msra.mxu0 0
        %4113 = vmatprep.subr.bf16.mxu0 0
        %4114 = vmatpush2.bf16.msra.mxu0 0
        %4115 = vmatprep.subr.bf16.mxu0 0
        %4116 = vmatpush2.bf16.msra.mxu0 0
        %4117 = vmatprep.subr.bf16.mxu0 0
        %4118 = vmatpush2.bf16.msra.mxu0 0
        %4119 = vmatprep.subr.bf16.mxu0 0
        %4120 = vmatpush2.bf16.msra.mxu0 0
        %4121 = vmatprep.mubr.bf16.mxu0 0
        %4122 = vmatmul.mubr.bf16.gmra.mxu0 %v4039
        %v4123 = vpop.f32.mrf.mxu0
        %v4124 = vadd.f32 0.0, %v4123
        %v4125 = vpop.f32.mrf.mxu0
        %v4126 = vpop.f32.mrf.mxu0
        %v4127 = vadd.f32 0.0, %v4126
        %v4128 = vpop.f32.mrf.mxu0
        %4129 = vmatprep.mubr.bf16.mxu0 0
        %4130 = vmatmul.mubr.bf16.gmra.mxu0 %v4041
        %v4131 = vpop.f32.mrf.mxu0
        %v4132 = vadd.f32 0.0, %v4131
        %v4133 = vpop.f32.mrf.mxu0
        %v4134 = vpop.f32.mrf.mxu0
        %v4135 = vadd.f32 0.0, %v4134
        %v4136 = vpop.f32.mrf.mxu0
        %4137 = vmatprep.mubr.bf16.mxu0 0
        %4138 = vmatmul.mubr.bf16.gmra.mxu0 %v4043
        %v4139 = vpop.f32.mrf.mxu0
        %v4140 = vadd.f32 0.0, %v4139
        %v4141 = vpop.f32.mrf.mxu0
        %v4142 = vpop.f32.mrf.mxu0
        %v4143 = vadd.f32 0.0, %v4142
        %v4144 = vpop.f32.mrf.mxu0
        %4145 = vmatprep.mubr.bf16.mxu0 0
        %4146 = vmatmul.mubr.bf16.gmra.mxu0 %v4045
        %v4147 = vpop.f32.mrf.mxu0
        %v4148 = vadd.f32 0.0, %v4147
        %v4149 = vpop.f32.mrf.mxu0
        %v4150 = vpop.f32.mrf.mxu0
        %v4151 = vadd.f32 0.0, %v4150
        %v4152 = vpop.f32.mrf.mxu0
        %4153 = vmatprep.mubr.bf16.mxu0 0
        %4154 = vmatmul.mubr.bf16.gmra.mxu0 %v4047
        %v4155 = vpop.f32.mrf.mxu0
        %v4156 = vadd.f32 0.0, %v4155
        %v4157 = vpop.f32.mrf.mxu0
        %v4158 = vpop.f32.mrf.mxu0
        %v4159 = vadd.f32 0.0, %v4158
        %v4160 = vpop.f32.mrf.mxu0
        %4161 = vmatprep.mubr.bf16.mxu0 0
        %4162 = vmatmul.mubr.bf16.gmra.mxu0 %v4049
        %v4163 = vpop.f32.mrf.mxu0
        %v4164 = vadd.f32 0.0, %v4163
        %v4165 = vpop.f32.mrf.mxu0
        %v4166 = vpop.f32.mrf.mxu0
        %v4167 = vadd.f32 0.0, %v4166
        %v4168 = vpop.f32.mrf.mxu0
        %4169 = vmatprep.mubr.bf16.mxu0 0
        %4170 = vmatmul.mubr.bf16.gmra.mxu0 %v4051
        %v4171 = vpop.f32.mrf.mxu0
        %v4172 = vadd.f32 0.0, %v4171
        %v4173 = vpop.f32.mrf.mxu0
        %v4174 = vpop.f32.mrf.mxu0
        %v4175 = vadd.f32 0.0, %v4174
        %v4176 = vpop.f32.mrf.mxu0
        %4177 = vmatprep.mubr.bf16.mxu0 0
        %4178 = vmatmul.mubr.bf16.gmra.mxu0 %v4053
        %v4179 = vpop.f32.mrf.mxu0
        %v4180 = vadd.f32 0.0, %v4179
        %v4181 = vpop.f32.mrf.mxu0
        %v4182 = vpop.f32.mrf.mxu0
        %v4183 = vadd.f32 0.0, %v4182
        %v4184 = vpop.f32.mrf.mxu0
        %4185 = vmatprep.mubr.bf16.mxu0 0
        %4186 = vmatmul.mubr.bf16.gmra.mxu0 %v4055
        %v4187 = vpop.f32.mrf.mxu0
        %v4188 = vadd.f32 0.0, %v4187
        %v4189 = vpop.f32.mrf.mxu0
        %v4190 = vpop.f32.mrf.mxu0
        %v4191 = vadd.f32 0.0, %v4190
        %v4192 = vpop.f32.mrf.mxu0
        %4193 = vmatprep.mubr.bf16.mxu0 0
        %4194 = vmatmul.mubr.bf16.gmra.mxu0 %v4057
        %v4195 = vpop.f32.mrf.mxu0
        %v4196 = vadd.f32 0.0, %v4195
        %v4197 = vpop.f32.mrf.mxu0
        %v4198 = vpop.f32.mrf.mxu0
        %v4199 = vadd.f32 0.0, %v4198
        %v4200 = vpop.f32.mrf.mxu0
        %4201 = vmatprep.mubr.bf16.mxu0 0
        %4202 = vmatmul.mubr.bf16.gmra.mxu0 %v4059
        %v4203 = vpop.f32.mrf.mxu0
        %v4204 = vadd.f32 0.0, %v4203
        %v4205 = vpop.f32.mrf.mxu0
        %v4206 = vpop.f32.mrf.mxu0
        %v4207 = vadd.f32 0.0, %v4206
        %v4208 = vpop.f32.mrf.mxu0
        %4209 = vmatprep.mubr.bf16.mxu0 0
        %4210 = vmatmul.mubr.bf16.gmra.mxu0 %v4061
        %v4211 = vpop.f32.mrf.mxu0
        %v4212 = vadd.f32 0.0, %v4211
        %v4213 = vpop.f32.mrf.mxu0
        %v4214 = vpop.f32.mrf.mxu0
        %v4215 = vadd.f32 0.0, %v4214
        %v4216 = vpop.f32.mrf.mxu0
        %4217 = vmatprep.mubr.bf16.mxu0 0
        %4218 = vmatmul.mubr.bf16.gmra.mxu0 %v4063
        %v4219 = vpop.f32.mrf.mxu0
        %v4220 = vadd.f32 0.0, %v4219
        %v4221 = vpop.f32.mrf.mxu0
        %v4222 = vpop.f32.mrf.mxu0
        %v4223 = vadd.f32 0.0, %v4222
        %v4224 = vpop.f32.mrf.mxu0
        %4225 = vmatprep.mubr.bf16.mxu0 0
        %4226 = vmatmul.mubr.bf16.gmra.mxu0 %v4065
        %v4227 = vpop.f32.mrf.mxu0
        %v4228 = vadd.f32 0.0, %v4227
        %v4229 = vpop.f32.mrf.mxu0
        %v4230 = vpop.f32.mrf.mxu0
        %v4231 = vadd.f32 0.0, %v4230
        %v4232 = vpop.f32.mrf.mxu0
        %4233 = vmatprep.mubr.bf16.mxu0 0
        %4234 = vmatmul.mubr.bf16.gmra.mxu0 %v4067
        %v4235 = vpop.f32.mrf.mxu0
        %v4236 = vadd.f32 0.0, %v4235
        %v4237 = vpop.f32.mrf.mxu0
        %v4238 = vpop.f32.mrf.mxu0
        %v4239 = vadd.f32 0.0, %v4238
        %v4240 = vpop.f32.mrf.mxu0
        %4241 = vmatprep.mubr.bf16.mxu0 0
        %4242 = vmatmul.mubr.bf16.gmra.mxu0 %v4069
        %v4243 = vpop.f32.mrf.mxu0
        %v4244 = vadd.f32 0.0, %v4243
        %v4245 = vpop.f32.mrf.mxu0
        %v4246 = vpop.f32.mrf.mxu0
        %v4247 = vadd.f32 0.0, %v4246
        %v4248 = vpop.f32.mrf.mxu0
        %4249 = vmatprep.mubr.bf16.mxu0 0
        %4250 = vmatmul.mubr.bf16.gmra.mxu0 %v4071
        %v4251 = vpop.f32.mrf.mxu0
        %v4252 = vadd.f32 0.0, %v4251
        %v4253 = vpop.f32.mrf.mxu0
        %v4254 = vpop.f32.mrf.mxu0
        %v4255 = vadd.f32 0.0, %v4254
        %v4256 = vpop.f32.mrf.mxu0
        %4257 = vdwg.mxu0
        %v4258 = vadd.f32 %v3659, %v4124
        %v4259 = vadd.f32 %v3660, %v4127
        %v4260 = vadd.f32 %v3661, %v4132
        %v4261 = vadd.f32 %v3662, %v4135
        %v4262 = vadd.f32 %v3663, %v4140
        %v4263 = vadd.f32 %v3664, %v4143
        %v4264 = vadd.f32 %v3665, %v4148
        %v4265 = vadd.f32 %v3666, %v4151
        %v4266 = vadd.f32 %v3667, %v4156
        %v4267 = vadd.f32 %v3668, %v4159
        %v4268 = vadd.f32 %v3669, %v4164
        %v4269 = vadd.f32 %v3670, %v4167
        %v4270 = vadd.f32 %v3671, %v4172
        %v4271 = vadd.f32 %v3672, %v4175
        %v4272 = vadd.f32 %v3673, %v4180
        %v4273 = vadd.f32 %v3674, %v4183
        %v4274 = vadd.f32 %v3675, %v4188
        %v4275 = vadd.f32 %v3676, %v4191
        %v4276 = vadd.f32 %v3677, %v4196
        %v4277 = vadd.f32 %v3678, %v4199
        %v4278 = vadd.f32 %v3679, %v4204
        %v4279 = vadd.f32 %v3680, %v4207
        %v4280 = vadd.f32 %v3681, %v4212
        %v4281 = vadd.f32 %v3682, %v4215
        %v4282 = vadd.f32 %v3683, %v4220
        %v4283 = vadd.f32 %v3684, %v4223
        %v4284 = vadd.f32 %v3685, %v4228
        %v4285 = vadd.f32 %v3686, %v4231
        %v4286 = vadd.f32 %v3687, %v4236
        %v4287 = vadd.f32 %v3688, %v4239
        %v4288 = vadd.f32 %v3689, %v4244
        %v4289 = vadd.f32 %v3690, %v4247
        %v4290 = vadd.f32 %v3691, %v4252
        %v4291 = vadd.f32 %v3692, %v4255
        %s4292 = scalar_lea.vmem [#allocation13], 128
        %v4293 = vld [vmem:[%s4292] sm:$0xff]
        %v4294 = vld [vmem:[%s4292 + $0x8] sm:$0xff]
        %v4295 = vld [vmem:[%s4292 + $0x10] sm:$0xff]
        %v4296 = vld [vmem:[%s4292 + $0x18] sm:$0xff]
        %v4297 = vld [vmem:[%s4292 + $0x20] sm:$0xff]
        %v4298 = vld [vmem:[%s4292 + $0x28] sm:$0xff]
        %v4299 = vld [vmem:[%s4292 + $0x30] sm:$0xff]
        %v4300 = vld [vmem:[%s4292 + $0x38] sm:$0xff]
        %v4301 = vld [vmem:[%s4292 + $0x40] sm:$0xff]
        %v4302 = vld [vmem:[%s4292 + $0x48] sm:$0xff]
        %v4303 = vld [vmem:[%s4292 + $0x50] sm:$0xff]
        %v4304 = vld [vmem:[%s4292 + $0x58] sm:$0xff]
        %v4305 = vld [vmem:[%s4292 + $0x60] sm:$0xff]
        %v4306 = vld [vmem:[%s4292 + $0x68] sm:$0xff]
        %v4307 = vld [vmem:[%s4292 + $0x70] sm:$0xff]
        %v4308 = vld [vmem:[%s4292 + $0x78] sm:$0xff]
        %s4309 = scalar_lea.vmem [#allocation14], 128
        %v4310 = vld [vmem:[%s4309] sm:$0xff]
        %v4311 = vld [vmem:[%s4309 + $0x8] sm:$0xff]
        %v4312 = vld [vmem:[%s4309 + $0x10] sm:$0xff]
        %v4313 = vld [vmem:[%s4309 + $0x18] sm:$0xff]
        %v4314 = vld [vmem:[%s4309 + $0x20] sm:$0xff]
        %v4315 = vld [vmem:[%s4309 + $0x28] sm:$0xff]
        %v4316 = vld [vmem:[%s4309 + $0x30] sm:$0xff]
        %v4317 = vld [vmem:[%s4309 + $0x38] sm:$0xff]
        %v4318 = vld [vmem:[%s4309 + $0x40] sm:$0xff]
        %v4319 = vld [vmem:[%s4309 + $0x48] sm:$0xff]
        %v4320 = vld [vmem:[%s4309 + $0x50] sm:$0xff]
        %v4321 = vld [vmem:[%s4309 + $0x58] sm:$0xff]
        %v4322 = vld [vmem:[%s4309 + $0x60] sm:$0xff]
        %v4323 = vld [vmem:[%s4309 + $0x68] sm:$0xff]
        %v4324 = vld [vmem:[%s4309 + $0x70] sm:$0xff]
        %v4325 = vld [vmem:[%s4309 + $0x78] sm:$0xff]
        %v4326 = vld [vmem:[#allocation2 + $0x8] sm:$0xe]
        %v4327 = vld [vmem:[#allocation2 + $0xc] sm:$0xf]
        %v4328 = vld [vmem:[#allocation2 + $0x10] sm:$0xf]
        %v4329 = vld [vmem:[#allocation2 + $0x14] sm:$0xf]
        %v4330 = vld [vmem:[#allocation2 + $0x18] sm:$0xf]
        %v4331 = vld [vmem:[#allocation2 + $0x1c] sm:$0xf]
        %v4332 = vld [vmem:[#allocation2 + $0x20] sm:$0xf]
        %v4333 = vld [vmem:[#allocation2 + $0x24] sm:$0xf]
        %v4334 = vld [vmem:[#allocation2 + $0x28] sm:$0xf]
        %v4335 = vld [vmem:[#allocation2 + $0x2c] sm:$0xf]
        %v4336 = vld [vmem:[#allocation2 + $0x30] sm:$0xf]
        %v4337 = vld [vmem:[#allocation2 + $0x34] sm:$0xf]
        %v4338 = vld [vmem:[#allocation2 + $0x38] sm:$0xf]
        %v4339 = vld [vmem:[#allocation2 + $0x3c] sm:$0xf]
        %v4340 = vld [vmem:[#allocation2 + $0x40] sm:$0xf]
        %v4341 = vld [vmem:[#allocation2 + $0x44] sm:$0xf]
        %v4342 = vld [vmem:[#allocation2 + $0x48] sm:$0xf]
        %v4343 = vld [vmem:[#allocation2 + $0x4c] sm:$0xf]
        %v4344 = vld [vmem:[#allocation2 + $0x50] sm:$0xf]
        %v4345 = vld [vmem:[#allocation2 + $0x54] sm:$0xf]
        %v4346 = vld [vmem:[#allocation2 + $0x58] sm:$0xf]
        %v4347 = vld [vmem:[#allocation2 + $0x5c] sm:$0xf]
        %v4348 = vld [vmem:[#allocation2 + $0x60] sm:$0xf]
        %v4349 = vld [vmem:[#allocation2 + $0x64] sm:$0xf]
        %v4350 = vld [vmem:[#allocation2 + $0x68] sm:$0xf]
        %v4351 = vld [vmem:[#allocation2 + $0x6c] sm:$0xf]
        %v4352 = vld [vmem:[#allocation2 + $0x70] sm:$0xf]
        %v4353 = vld [vmem:[#allocation2 + $0x74] sm:$0xf]
        %v4354 = vld [vmem:[#allocation2 + $0x78] sm:$0xf]
        %v4355 = vld [vmem:[#allocation2 + $0x7c] sm:$0xf]
        %v4356 = vld [vmem:[#allocation2 + $0x80] sm:$0xf]
        %v4357 = vld [vmem:[#allocation2 + $0x84] sm:$0xf]
        %v4358 = vld [vmem:[#allocation2 + $0x88] sm:$0xf]
        %v4359 = vld [vmem:[#allocation2 + $0x8c] sm:$0xf]
        %v4360 = vld [vmem:[#allocation2 + $0x90] sm:$0x1]
        %v4396 = vunpack.c.l.b16 %v4326
        %v4397 = vunpack.c.l.b16 %v4327
        %v4398 = vunpack.c.l.b16 %v4328
        %v4399 = vunpack.c.l.b16 %v4329
        %v4400 = vunpack.c.l.b16 %v4330
        %v4401 = vunpack.c.l.b16 %v4331
        %v4402 = vunpack.c.l.b16 %v4332
        %v4403 = vunpack.c.l.b16 %v4333
        %v4404 = vunpack.c.l.b16 %v4334
        %v4405 = vunpack.c.l.b16 %v4335
        %v4406 = vunpack.c.l.b16 %v4336
        %v4407 = vunpack.c.l.b16 %v4337
        %v4408 = vunpack.c.l.b16 %v4338
        %v4409 = vunpack.c.l.b16 %v4339
        %v4410 = vunpack.c.l.b16 %v4340
        %v4411 = vunpack.c.l.b16 %v4341
        %v4412 = vunpack.c.l.b16 %v4342
        %v4413 = vunpack.c.l.b16 %v4343
        %v4414 = vunpack.c.l.b16 %v4344
        %v4415 = vunpack.c.l.b16 %v4345
        %v4416 = vunpack.c.l.b16 %v4346
        %v4417 = vunpack.c.l.b16 %v4347
        %v4418 = vunpack.c.l.b16 %v4348
        %v4419 = vunpack.c.l.b16 %v4349
        %v4420 = vunpack.c.l.b16 %v4350
        %v4421 = vunpack.c.l.b16 %v4351
        %v4422 = vunpack.c.l.b16 %v4352
        %v4423 = vunpack.c.l.b16 %v4353
        %v4424 = vunpack.c.l.b16 %v4354
        %v4425 = vunpack.c.l.b16 %v4355
        %v4426 = vunpack.c.l.b16 %v4356
        %v4427 = vunpack.c.l.b16 %v4357
        %v4428 = vunpack.c.l.b16 %v4358
        %v4429 = vunpack.c.l.b16 %v4359
        %v4430 = vunpack.c.l.b16 %v4360
        %v4431 = vpack.c.b16 %v4397, %v4396
        %v4432 = vpack.c.b16 %v4399, %v4398
        %v4433 = vpack.c.b16 %v4401, %v4400
        %v4434 = vpack.c.b16 %v4403, %v4402
        %v4435 = vpack.c.b16 %v4405, %v4404
        %v4436 = vpack.c.b16 %v4407, %v4406
        %v4437 = vpack.c.b16 %v4409, %v4408
        %v4438 = vpack.c.b16 %v4411, %v4410
        %v4439 = vpack.c.b16 %v4413, %v4412
        %v4440 = vpack.c.b16 %v4415, %v4414
        %v4441 = vpack.c.b16 %v4417, %v4416
        %v4442 = vpack.c.b16 %v4419, %v4418
        %v4443 = vpack.c.b16 %v4421, %v4420
        %v4444 = vpack.c.b16 %v4423, %v4422
        %v4445 = vpack.c.b16 %v4425, %v4424
        %v4446 = vpack.c.b16 %v4427, %v4426
        %v4447 = vpack.c.b16 %v4429, %v4428
        %v4448 = vpack.c.b16 %v4430, %v4430
        %v4449 = vrot.slane %v4431, 1
        %v4450 = vrot.slane %v4432, 1
        %v4451 = vsel %vm4036, %v4449, %v4450
        %v4452 = vrot.slane %v4433, 1
        %v4453 = vsel %vm4036, %v4450, %v4452
        %v4454 = vrot.slane %v4434, 1
        %v4455 = vsel %vm4036, %v4452, %v4454
        %v4456 = vrot.slane %v4435, 1
        %v4457 = vsel %vm4036, %v4454, %v4456
        %v4458 = vrot.slane %v4436, 1
        %v4459 = vsel %vm4036, %v4456, %v4458
        %v4460 = vrot.slane %v4437, 1
        %v4461 = vsel %vm4036, %v4458, %v4460
        %v4462 = vrot.slane %v4438, 1
        %v4463 = vsel %vm4036, %v4460, %v4462
        %v4464 = vrot.slane %v4439, 1
        %v4465 = vsel %vm4036, %v4462, %v4464
        %v4466 = vrot.slane %v4440, 1
        %v4467 = vsel %vm4036, %v4464, %v4466
        %v4468 = vrot.slane %v4441, 1
        %v4469 = vsel %vm4036, %v4466, %v4468
        %v4470 = vrot.slane %v4442, 1
        %v4471 = vsel %vm4036, %v4468, %v4470
        %v4472 = vrot.slane %v4443, 1
        %v4473 = vsel %vm4036, %v4470, %v4472
        %v4474 = vrot.slane %v4444, 1
        %v4475 = vsel %vm4036, %v4472, %v4474
        %v4476 = vrot.slane %v4445, 1
        %v4477 = vsel %vm4036, %v4474, %v4476
        %v4478 = vrot.slane %v4446, 1
        %v4479 = vsel %vm4036, %v4476, %v4478
        %v4480 = vrot.slane %v4447, 1
        %v4481 = vsel %vm4036, %v4478, %v4480
        %v4482 = vrot.slane %v4448, 1
        %v4483 = vsel %vm4036, %v4480, %v4482
        %v4517 = vunpack.c.l.b16 %v4293
        %v4518 = vunpack.c.h.b16 %v4293
        %v4519 = vunpack.c.l.b16 %v4294
        %v4520 = vunpack.c.h.b16 %v4294
        %v4521 = vunpack.c.l.b16 %v4295
        %v4522 = vunpack.c.h.b16 %v4295
        %v4523 = vunpack.c.l.b16 %v4296
        %v4524 = vunpack.c.h.b16 %v4296
        %v4525 = vunpack.c.l.b16 %v4297
        %v4526 = vunpack.c.h.b16 %v4297
        %v4527 = vunpack.c.l.b16 %v4298
        %v4528 = vunpack.c.h.b16 %v4298
        %v4529 = vunpack.c.l.b16 %v4299
        %v4530 = vunpack.c.h.b16 %v4299
        %v4531 = vunpack.c.l.b16 %v4300
        %v4532 = vunpack.c.h.b16 %v4300
        %v4533 = vunpack.c.l.b16 %v4301
        %v4534 = vunpack.c.h.b16 %v4301
        %v4535 = vunpack.c.l.b16 %v4302
        %v4536 = vunpack.c.h.b16 %v4302
        %v4537 = vunpack.c.l.b16 %v4303
        %v4538 = vunpack.c.h.b16 %v4303
        %v4539 = vunpack.c.l.b16 %v4304
        %v4540 = vunpack.c.h.b16 %v4304
        %v4541 = vunpack.c.l.b16 %v4305
        %v4542 = vunpack.c.h.b16 %v4305
        %v4543 = vunpack.c.l.b16 %v4306
        %v4544 = vunpack.c.h.b16 %v4306
        %v4545 = vunpack.c.l.b16 %v4307
        %v4546 = vunpack.c.h.b16 %v4307
        %v4547 = vunpack.c.l.b16 %v4308
        %v4548 = vunpack.c.h.b16 %v4308
        %v4549 = vpack.c.b16 %v4519, %v4517
        %v4550 = vpack.c.b16 %v4520, %v4518
        %v4551 = vpack.c.b16 %v4523, %v4521
        %v4552 = vpack.c.b16 %v4524, %v4522
        %v4553 = vpack.c.b16 %v4527, %v4525
        %v4554 = vpack.c.b16 %v4528, %v4526
        %v4555 = vpack.c.b16 %v4531, %v4529
        %v4556 = vpack.c.b16 %v4532, %v4530
        %v4557 = vpack.c.b16 %v4535, %v4533
        %v4558 = vpack.c.b16 %v4536, %v4534
        %v4559 = vpack.c.b16 %v4539, %v4537
        %v4560 = vpack.c.b16 %v4540, %v4538
        %v4561 = vpack.c.b16 %v4543, %v4541
        %v4562 = vpack.c.b16 %v4544, %v4542
        %v4563 = vpack.c.b16 %v4547, %v4545
        %v4564 = vpack.c.b16 %v4548, %v4546
        %4581 = vmatprep.subr.bf16.mxu0 %v4564
        %4582 = vmatpush1.bf16.msra.mxu0 %v4563
        %4583 = vmatprep.subr.bf16.mxu0 %v4562
        %4584 = vmatpush1.bf16.msra.mxu0 %v4561
        %4585 = vmatprep.subr.bf16.mxu0 %v4560
        %4586 = vmatpush1.bf16.msra.mxu0 %v4559
        %4587 = vmatprep.subr.bf16.mxu0 %v4558
        %4588 = vmatpush1.bf16.msra.mxu0 %v4557
        %4589 = vmatprep.subr.bf16.mxu0 %v4556
        %4590 = vmatpush1.bf16.msra.mxu0 %v4555
        %4591 = vmatprep.subr.bf16.mxu0 %v4554
        %4592 = vmatpush1.bf16.msra.mxu0 %v4553
        %4593 = vmatprep.subr.bf16.mxu0 %v4552
        %4594 = vmatpush1.bf16.msra.mxu0 %v4551
        %4595 = vmatprep.subr.bf16.mxu0 %v4550
        %4596 = vmatpush1.bf16.msra.mxu0 %v4549
        %4597 = vmatprep.subr.bf16.mxu0 0
        %4598 = vmatpush2.bf16.msra.mxu0 0
        %4599 = vmatprep.subr.bf16.mxu0 0
        %4600 = vmatpush2.bf16.msra.mxu0 0
        %4601 = vmatprep.subr.bf16.mxu0 0
        %4602 = vmatpush2.bf16.msra.mxu0 0
        %4603 = vmatprep.subr.bf16.mxu0 0
        %4604 = vmatpush2.bf16.msra.mxu0 0
        %4605 = vmatprep.subr.bf16.mxu0 0
        %4606 = vmatpush2.bf16.msra.mxu0 0
        %4607 = vmatprep.subr.bf16.mxu0 0
        %4608 = vmatpush2.bf16.msra.mxu0 0
        %4609 = vmatprep.subr.bf16.mxu0 0
        %4610 = vmatpush2.bf16.msra.mxu0 0
        %4611 = vmatprep.subr.bf16.mxu0 0
        %4612 = vmatpush2.bf16.msra.mxu0 0
        %4613 = vmatprep.mubr.bf16.mxu0 0
        %4614 = vmatmul.mubr.bf16.gmra.mxu0 %v4451
        %v4615 = vpop.f32.mrf.mxu0
        %v4616 = vadd.f32 0.0, %v4615
        %v4617 = vpop.f32.mrf.mxu0
        %v4618 = vadd.f32 0.0, %v4617
        %v4619 = vpop.f32.mrf.mxu0
        %v4620 = vadd.f32 0.0, %v4619
        %v4621 = vpop.f32.mrf.mxu0
        %v4622 = vadd.f32 0.0, %v4621
        %4623 = vmatprep.mubr.bf16.mxu0 0
        %4624 = vmatmul.mubr.bf16.gmra.mxu0 %v4453
        %v4625 = vpop.f32.mrf.mxu0
        %v4626 = vadd.f32 0.0, %v4625
        %v4627 = vpop.f32.mrf.mxu0
        %v4628 = vadd.f32 0.0, %v4627
        %v4629 = vpop.f32.mrf.mxu0
        %v4630 = vadd.f32 0.0, %v4629
        %v4631 = vpop.f32.mrf.mxu0
        %v4632 = vadd.f32 0.0, %v4631
        %4633 = vmatprep.mubr.bf16.mxu0 0
        %4634 = vmatmul.mubr.bf16.gmra.mxu0 %v4455
        %v4635 = vpop.f32.mrf.mxu0
        %v4636 = vadd.f32 0.0, %v4635
        %v4637 = vpop.f32.mrf.mxu0
        %v4638 = vadd.f32 0.0, %v4637
        %v4639 = vpop.f32.mrf.mxu0
        %v4640 = vadd.f32 0.0, %v4639
        %v4641 = vpop.f32.mrf.mxu0
        %v4642 = vadd.f32 0.0, %v4641
        %4643 = vmatprep.mubr.bf16.mxu0 0
        %4644 = vmatmul.mubr.bf16.gmra.mxu0 %v4457
        %v4645 = vpop.f32.mrf.mxu0
        %v4646 = vadd.f32 0.0, %v4645
        %v4647 = vpop.f32.mrf.mxu0
        %v4648 = vadd.f32 0.0, %v4647
        %v4649 = vpop.f32.mrf.mxu0
        %v4650 = vadd.f32 0.0, %v4649
        %v4651 = vpop.f32.mrf.mxu0
        %v4652 = vadd.f32 0.0, %v4651
        %4653 = vmatprep.mubr.bf16.mxu0 0
        %4654 = vmatmul.mubr.bf16.gmra.mxu0 %v4459
        %v4655 = vpop.f32.mrf.mxu0
        %v4656 = vadd.f32 0.0, %v4655
        %v4657 = vpop.f32.mrf.mxu0
        %v4658 = vadd.f32 0.0, %v4657
        %v4659 = vpop.f32.mrf.mxu0
        %v4660 = vadd.f32 0.0, %v4659
        %v4661 = vpop.f32.mrf.mxu0
        %v4662 = vadd.f32 0.0, %v4661
        %4663 = vmatprep.mubr.bf16.mxu0 0
        %4664 = vmatmul.mubr.bf16.gmra.mxu0 %v4461
        %v4665 = vpop.f32.mrf.mxu0
        %v4666 = vadd.f32 0.0, %v4665
        %v4667 = vpop.f32.mrf.mxu0
        %v4668 = vadd.f32 0.0, %v4667
        %v4669 = vpop.f32.mrf.mxu0
        %v4670 = vadd.f32 0.0, %v4669
        %v4671 = vpop.f32.mrf.mxu0
        %v4672 = vadd.f32 0.0, %v4671
        %4673 = vmatprep.mubr.bf16.mxu0 0
        %4674 = vmatmul.mubr.bf16.gmra.mxu0 %v4463
        %v4675 = vpop.f32.mrf.mxu0
        %v4676 = vadd.f32 0.0, %v4675
        %v4677 = vpop.f32.mrf.mxu0
        %v4678 = vadd.f32 0.0, %v4677
        %v4679 = vpop.f32.mrf.mxu0
        %v4680 = vadd.f32 0.0, %v4679
        %v4681 = vpop.f32.mrf.mxu0
        %v4682 = vadd.f32 0.0, %v4681
        %4683 = vmatprep.mubr.bf16.mxu0 0
        %4684 = vmatmul.mubr.bf16.gmra.mxu0 %v4465
        %v4685 = vpop.f32.mrf.mxu0
        %v4686 = vadd.f32 0.0, %v4685
        %v4687 = vpop.f32.mrf.mxu0
        %v4688 = vadd.f32 0.0, %v4687
        %v4689 = vpop.f32.mrf.mxu0
        %v4690 = vadd.f32 0.0, %v4689
        %v4691 = vpop.f32.mrf.mxu0
        %v4692 = vadd.f32 0.0, %v4691
        %4693 = vmatprep.mubr.bf16.mxu0 0
        %4694 = vmatmul.mubr.bf16.gmra.mxu0 %v4467
        %v4695 = vpop.f32.mrf.mxu0
        %v4696 = vadd.f32 0.0, %v4695
        %v4697 = vpop.f32.mrf.mxu0
        %v4698 = vadd.f32 0.0, %v4697
        %v4699 = vpop.f32.mrf.mxu0
        %v4700 = vadd.f32 0.0, %v4699
        %v4701 = vpop.f32.mrf.mxu0
        %v4702 = vadd.f32 0.0, %v4701
        %4703 = vmatprep.mubr.bf16.mxu0 0
        %4704 = vmatmul.mubr.bf16.gmra.mxu0 %v4469
        %v4705 = vpop.f32.mrf.mxu0
        %v4706 = vadd.f32 0.0, %v4705
        %v4707 = vpop.f32.mrf.mxu0
        %v4708 = vadd.f32 0.0, %v4707
        %v4709 = vpop.f32.mrf.mxu0
        %v4710 = vadd.f32 0.0, %v4709
        %v4711 = vpop.f32.mrf.mxu0
        %v4712 = vadd.f32 0.0, %v4711
        %4713 = vmatprep.mubr.bf16.mxu0 0
        %4714 = vmatmul.mubr.bf16.gmra.mxu0 %v4471
        %v4715 = vpop.f32.mrf.mxu0
        %v4716 = vadd.f32 0.0, %v4715
        %v4717 = vpop.f32.mrf.mxu0
        %v4718 = vadd.f32 0.0, %v4717
        %v4719 = vpop.f32.mrf.mxu0
        %v4720 = vadd.f32 0.0, %v4719
        %v4721 = vpop.f32.mrf.mxu0
        %v4722 = vadd.f32 0.0, %v4721
        %4723 = vmatprep.mubr.bf16.mxu0 0
        %4724 = vmatmul.mubr.bf16.gmra.mxu0 %v4473
        %v4725 = vpop.f32.mrf.mxu0
        %v4726 = vadd.f32 0.0, %v4725
        %v4727 = vpop.f32.mrf.mxu0
        %v4728 = vadd.f32 0.0, %v4727
        %v4729 = vpop.f32.mrf.mxu0
        %v4730 = vadd.f32 0.0, %v4729
        %v4731 = vpop.f32.mrf.mxu0
        %v4732 = vadd.f32 0.0, %v4731
        %4733 = vmatprep.mubr.bf16.mxu0 0
        %4734 = vmatmul.mubr.bf16.gmra.mxu0 %v4475
        %v4735 = vpop.f32.mrf.mxu0
        %v4736 = vadd.f32 0.0, %v4735
        %v4737 = vpop.f32.mrf.mxu0
        %v4738 = vadd.f32 0.0, %v4737
        %v4739 = vpop.f32.mrf.mxu0
        %v4740 = vadd.f32 0.0, %v4739
        %v4741 = vpop.f32.mrf.mxu0
        %v4742 = vadd.f32 0.0, %v4741
        %4743 = vmatprep.mubr.bf16.mxu0 0
        %4744 = vmatmul.mubr.bf16.gmra.mxu0 %v4477
        %v4745 = vpop.f32.mrf.mxu0
        %v4746 = vadd.f32 0.0, %v4745
        %v4747 = vpop.f32.mrf.mxu0
        %v4748 = vadd.f32 0.0, %v4747
        %v4749 = vpop.f32.mrf.mxu0
        %v4750 = vadd.f32 0.0, %v4749
        %v4751 = vpop.f32.mrf.mxu0
        %v4752 = vadd.f32 0.0, %v4751
        %4753 = vmatprep.mubr.bf16.mxu0 0
        %4754 = vmatmul.mubr.bf16.gmra.mxu0 %v4479
        %v4755 = vpop.f32.mrf.mxu0
        %v4756 = vadd.f32 0.0, %v4755
        %v4757 = vpop.f32.mrf.mxu0
        %v4758 = vadd.f32 0.0, %v4757
        %v4759 = vpop.f32.mrf.mxu0
        %v4760 = vadd.f32 0.0, %v4759
        %v4761 = vpop.f32.mrf.mxu0
        %v4762 = vadd.f32 0.0, %v4761
        %4763 = vmatprep.mubr.bf16.mxu0 0
        %4764 = vmatmul.mubr.bf16.gmra.mxu0 %v4481
        %v4765 = vpop.f32.mrf.mxu0
        %v4766 = vadd.f32 0.0, %v4765
        %v4767 = vpop.f32.mrf.mxu0
        %v4768 = vadd.f32 0.0, %v4767
        %v4769 = vpop.f32.mrf.mxu0
        %v4770 = vadd.f32 0.0, %v4769
        %v4771 = vpop.f32.mrf.mxu0
        %v4772 = vadd.f32 0.0, %v4771
        %4773 = vmatprep.mubr.bf16.mxu0 0
        %4774 = vmatmul.mubr.bf16.gmra.mxu0 %v4483
        %v4775 = vpop.f32.mrf.mxu0
        %v4776 = vadd.f32 0.0, %v4775
        %v4777 = vpop.f32.mrf.mxu0
        %v4778 = vadd.f32 0.0, %v4777
        %v4779 = vpop.f32.mrf.mxu0
        %v4780 = vadd.f32 0.0, %v4779
        %v4781 = vpop.f32.mrf.mxu0
        %v4782 = vadd.f32 0.0, %v4781
        %4783 = vdwg.mxu0
        %v4784 = vadd.f32 %v3998, %v4616
        %v4785 = vadd.f32 %v3999, %v4620
        %v4786 = vadd.f32 %v4000, %v4626
        %v4787 = vadd.f32 %v4001, %v4630
        %v4788 = vadd.f32 %v4002, %v4636
        %v4789 = vadd.f32 %v4003, %v4640
        %v4790 = vadd.f32 %v4004, %v4646
        %v4791 = vadd.f32 %v4005, %v4650
        %v4792 = vadd.f32 %v4006, %v4656
        %v4793 = vadd.f32 %v4007, %v4660
        %v4794 = vadd.f32 %v4008, %v4666
        %v4795 = vadd.f32 %v4009, %v4670
        %v4796 = vadd.f32 %v4010, %v4676
        %v4797 = vadd.f32 %v4011, %v4680
        %v4798 = vadd.f32 %v4012, %v4686
        %v4799 = vadd.f32 %v4013, %v4690
        %v4800 = vadd.f32 %v4014, %v4696
        %v4801 = vadd.f32 %v4015, %v4700
        %v4802 = vadd.f32 %v4016, %v4706
        %v4803 = vadd.f32 %v4017, %v4710
        %v4804 = vadd.f32 %v4018, %v4716
        %v4805 = vadd.f32 %v4019, %v4720
        %v4806 = vadd.f32 %v4020, %v4726
        %v4807 = vadd.f32 %v4021, %v4730
        %v4808 = vadd.f32 %v4022, %v4736
        %v4809 = vadd.f32 %v4023, %v4740
        %v4810 = vadd.f32 %v4024, %v4746
        %v4811 = vadd.f32 %v4025, %v4750
        %v4812 = vadd.f32 %v4026, %v4756
        %v4813 = vadd.f32 %v4027, %v4760
        %v4814 = vadd.f32 %v4028, %v4766
        %v4815 = vadd.f32 %v4029, %v4770
        %v4816 = vadd.f32 %v4030, %v4776
        %v4817 = vadd.f32 %v4031, %v4780
        %v4818 = vadd.f32 %v4258, %v4618
        %v4819 = vadd.f32 %v4259, %v4622
        %v4820 = vadd.f32 %v4260, %v4628
        %v4821 = vadd.f32 %v4261, %v4632
        %v4822 = vadd.f32 %v4262, %v4638
        %v4823 = vadd.f32 %v4263, %v4642
        %v4824 = vadd.f32 %v4264, %v4648
        %v4825 = vadd.f32 %v4265, %v4652
        %v4826 = vadd.f32 %v4266, %v4658
        %v4827 = vadd.f32 %v4267, %v4662
        %v4828 = vadd.f32 %v4268, %v4668
        %v4829 = vadd.f32 %v4269, %v4672
        %v4830 = vadd.f32 %v4270, %v4678
        %v4831 = vadd.f32 %v4271, %v4682
        %v4832 = vadd.f32 %v4272, %v4688
        %v4833 = vadd.f32 %v4273, %v4692
        %v4834 = vadd.f32 %v4274, %v4698
        %v4835 = vadd.f32 %v4275, %v4702
        %v4836 = vadd.f32 %v4276, %v4708
        %v4837 = vadd.f32 %v4277, %v4712
        %v4838 = vadd.f32 %v4278, %v4718
        %v4839 = vadd.f32 %v4279, %v4722
        %v4840 = vadd.f32 %v4280, %v4728
        %v4841 = vadd.f32 %v4281, %v4732
        %v4842 = vadd.f32 %v4282, %v4738
        %v4843 = vadd.f32 %v4283, %v4742
        %v4844 = vadd.f32 %v4284, %v4748
        %v4845 = vadd.f32 %v4285, %v4752
        %v4846 = vadd.f32 %v4286, %v4758
        %v4847 = vadd.f32 %v4287, %v4762
        %v4848 = vadd.f32 %v4288, %v4768
        %v4849 = vadd.f32 %v4289, %v4772
        %v4850 = vadd.f32 %v4290, %v4778
        %v4851 = vadd.f32 %v4291, %v4782
        %v4852 = vld [vmem:[#allocation3 + $0x8] sm:$0xe]
        %v4853 = vld [vmem:[#allocation3 + $0xc] sm:$0xf]
        %v4854 = vld [vmem:[#allocation3 + $0x10] sm:$0xf]
        %v4855 = vld [vmem:[#allocation3 + $0x14] sm:$0xf]
        %v4856 = vld [vmem:[#allocation3 + $0x18] sm:$0xf]
        %v4857 = vld [vmem:[#allocation3 + $0x1c] sm:$0xf]
        %v4858 = vld [vmem:[#allocation3 + $0x20] sm:$0xf]
        %v4859 = vld [vmem:[#allocation3 + $0x24] sm:$0xf]
        %v4860 = vld [vmem:[#allocation3 + $0x28] sm:$0xf]
        %v4861 = vld [vmem:[#allocation3 + $0x2c] sm:$0xf]
        %v4862 = vld [vmem:[#allocation3 + $0x30] sm:$0xf]
        %v4863 = vld [vmem:[#allocation3 + $0x34] sm:$0xf]
        %v4864 = vld [vmem:[#allocation3 + $0x38] sm:$0xf]
        %v4865 = vld [vmem:[#allocation3 + $0x3c] sm:$0xf]
        %v4866 = vld [vmem:[#allocation3 + $0x40] sm:$0xf]
        %v4867 = vld [vmem:[#allocation3 + $0x44] sm:$0xf]
        %v4868 = vld [vmem:[#allocation3 + $0x48] sm:$0xf]
        %v4869 = vld [vmem:[#allocation3 + $0x4c] sm:$0xf]
        %v4870 = vld [vmem:[#allocation3 + $0x50] sm:$0xf]
        %v4871 = vld [vmem:[#allocation3 + $0x54] sm:$0xf]
        %v4872 = vld [vmem:[#allocation3 + $0x58] sm:$0xf]
        %v4873 = vld [vmem:[#allocation3 + $0x5c] sm:$0xf]
        %v4874 = vld [vmem:[#allocation3 + $0x60] sm:$0xf]
        %v4875 = vld [vmem:[#allocation3 + $0x64] sm:$0xf]
        %v4876 = vld [vmem:[#allocation3 + $0x68] sm:$0xf]
        %v4877 = vld [vmem:[#allocation3 + $0x6c] sm:$0xf]
        %v4878 = vld [vmem:[#allocation3 + $0x70] sm:$0xf]
        %v4879 = vld [vmem:[#allocation3 + $0x74] sm:$0xf]
        %v4880 = vld [vmem:[#allocation3 + $0x78] sm:$0xf]
        %v4881 = vld [vmem:[#allocation3 + $0x7c] sm:$0xf]
        %v4882 = vld [vmem:[#allocation3 + $0x80] sm:$0xf]
        %v4883 = vld [vmem:[#allocation3 + $0x84] sm:$0xf]
        %v4884 = vld [vmem:[#allocation3 + $0x88] sm:$0xf]
        %v4885 = vld [vmem:[#allocation3 + $0x8c] sm:$0xf]
        %v4886 = vld [vmem:[#allocation3 + $0x90] sm:$0x1]
        %v4922 = vunpack.c.l.b16 %v4852
        %v4923 = vunpack.c.l.b16 %v4853
        %v4924 = vunpack.c.l.b16 %v4854
        %v4925 = vunpack.c.l.b16 %v4855
        %v4926 = vunpack.c.l.b16 %v4856
        %v4927 = vunpack.c.l.b16 %v4857
        %v4928 = vunpack.c.l.b16 %v4858
        %v4929 = vunpack.c.l.b16 %v4859
        %v4930 = vunpack.c.l.b16 %v4860
        %v4931 = vunpack.c.l.b16 %v4861
        %v4932 = vunpack.c.l.b16 %v4862
        %v4933 = vunpack.c.l.b16 %v4863
        %v4934 = vunpack.c.l.b16 %v4864
        %v4935 = vunpack.c.l.b16 %v4865
        %v4936 = vunpack.c.l.b16 %v4866
        %v4937 = vunpack.c.l.b16 %v4867
        %v4938 = vunpack.c.l.b16 %v4868
        %v4939 = vunpack.c.l.b16 %v4869
        %v4940 = vunpack.c.l.b16 %v4870
        %v4941 = vunpack.c.l.b16 %v4871
        %v4942 = vunpack.c.l.b16 %v4872
        %v4943 = vunpack.c.l.b16 %v4873
        %v4944 = vunpack.c.l.b16 %v4874
        %v4945 = vunpack.c.l.b16 %v4875
        %v4946 = vunpack.c.l.b16 %v4876
        %v4947 = vunpack.c.l.b16 %v4877
        %v4948 = vunpack.c.l.b16 %v4878
        %v4949 = vunpack.c.l.b16 %v4879
        %v4950 = vunpack.c.l.b16 %v4880
        %v4951 = vunpack.c.l.b16 %v4881
        %v4952 = vunpack.c.l.b16 %v4882
        %v4953 = vunpack.c.l.b16 %v4883
        %v4954 = vunpack.c.l.b16 %v4884
        %v4955 = vunpack.c.l.b16 %v4885
        %v4956 = vunpack.c.l.b16 %v4886
        %v4957 = vpack.c.b16 %v4923, %v4922
        %v4958 = vpack.c.b16 %v4925, %v4924
        %v4959 = vpack.c.b16 %v4927, %v4926
        %v4960 = vpack.c.b16 %v4929, %v4928
        %v4961 = vpack.c.b16 %v4931, %v4930
        %v4962 = vpack.c.b16 %v4933, %v4932
        %v4963 = vpack.c.b16 %v4935, %v4934
        %v4964 = vpack.c.b16 %v4937, %v4936
        %v4965 = vpack.c.b16 %v4939, %v4938
        %v4966 = vpack.c.b16 %v4941, %v4940
        %v4967 = vpack.c.b16 %v4943, %v4942
        %v4968 = vpack.c.b16 %v4945, %v4944
        %v4969 = vpack.c.b16 %v4947, %v4946
        %v4970 = vpack.c.b16 %v4949, %v4948
        %v4971 = vpack.c.b16 %v4951, %v4950
        %v4972 = vpack.c.b16 %v4953, %v4952
        %v4973 = vpack.c.b16 %v4955, %v4954
        %v4974 = vpack.c.b16 %v4956, %v4956
        %v4975 = vrot.slane %v4957, 1
        %v4976 = vrot.slane %v4958, 1
        %v4977 = vsel %vm4036, %v4975, %v4976
        %v4978 = vrot.slane %v4959, 1
        %v4979 = vsel %vm4036, %v4976, %v4978
        %v4980 = vrot.slane %v4960, 1
        %v4981 = vsel %vm4036, %v4978, %v4980
        %v4982 = vrot.slane %v4961, 1
        %v4983 = vsel %vm4036, %v4980, %v4982
        %v4984 = vrot.slane %v4962, 1
        %v4985 = vsel %vm4036, %v4982, %v4984
        %v4986 = vrot.slane %v4963, 1
        %v4987 = vsel %vm4036, %v4984, %v4986
        %v4988 = vrot.slane %v4964, 1
        %v4989 = vsel %vm4036, %v4986, %v4988
        %v4990 = vrot.slane %v4965, 1
        %v4991 = vsel %vm4036, %v4988, %v4990
        %v4992 = vrot.slane %v4966, 1
        %v4993 = vsel %vm4036, %v4990, %v4992
        %v4994 = vrot.slane %v4967, 1
        %v4995 = vsel %vm4036, %v4992, %v4994
        %v4996 = vrot.slane %v4968, 1
        %v4997 = vsel %vm4036, %v4994, %v4996
        %v4998 = vrot.slane %v4969, 1
        %v4999 = vsel %vm4036, %v4996, %v4998
        %v5000 = vrot.slane %v4970, 1
        %v5001 = vsel %vm4036, %v4998, %v5000
        %v5002 = vrot.slane %v4971, 1
        %v5003 = vsel %vm4036, %v5000, %v5002
        %v5004 = vrot.slane %v4972, 1
        %v5005 = vsel %vm4036, %v5002, %v5004
        %v5006 = vrot.slane %v4973, 1
        %v5007 = vsel %vm4036, %v5004, %v5006
        %v5008 = vrot.slane %v4974, 1
        %v5009 = vsel %vm4036, %v5006, %v5008
        %v5043 = vunpack.c.l.b16 %v4310
        %v5044 = vunpack.c.h.b16 %v4310
        %v5045 = vunpack.c.l.b16 %v4311
        %v5046 = vunpack.c.h.b16 %v4311
        %v5047 = vunpack.c.l.b16 %v4312
        %v5048 = vunpack.c.h.b16 %v4312
        %v5049 = vunpack.c.l.b16 %v4313
        %v5050 = vunpack.c.h.b16 %v4313
        %v5051 = vunpack.c.l.b16 %v4314
        %v5052 = vunpack.c.h.b16 %v4314
        %v5053 = vunpack.c.l.b16 %v4315
        %v5054 = vunpack.c.h.b16 %v4315
        %v5055 = vunpack.c.l.b16 %v4316
        %v5056 = vunpack.c.h.b16 %v4316
        %v5057 = vunpack.c.l.b16 %v4317
        %v5058 = vunpack.c.h.b16 %v4317
        %v5059 = vunpack.c.l.b16 %v4318
        %v5060 = vunpack.c.h.b16 %v4318
        %v5061 = vunpack.c.l.b16 %v4319
        %v5062 = vunpack.c.h.b16 %v4319
        %v5063 = vunpack.c.l.b16 %v4320
        %v5064 = vunpack.c.h.b16 %v4320
        %v5065 = vunpack.c.l.b16 %v4321
        %v5066 = vunpack.c.h.b16 %v4321
        %v5067 = vunpack.c.l.b16 %v4322
        %v5068 = vunpack.c.h.b16 %v4322
        %v5069 = vunpack.c.l.b16 %v4323
        %v5070 = vunpack.c.h.b16 %v4323
        %v5071 = vunpack.c.l.b16 %v4324
        %v5072 = vunpack.c.h.b16 %v4324
        %v5073 = vunpack.c.l.b16 %v4325
        %v5074 = vunpack.c.h.b16 %v4325
        %v5075 = vpack.c.b16 %v5045, %v5043
        %v5076 = vpack.c.b16 %v5046, %v5044
        %v5077 = vpack.c.b16 %v5049, %v5047
        %v5078 = vpack.c.b16 %v5050, %v5048
        %v5079 = vpack.c.b16 %v5053, %v5051
        %v5080 = vpack.c.b16 %v5054, %v5052
        %v5081 = vpack.c.b16 %v5057, %v5055
        %v5082 = vpack.c.b16 %v5058, %v5056
        %v5083 = vpack.c.b16 %v5061, %v5059
        %v5084 = vpack.c.b16 %v5062, %v5060
        %v5085 = vpack.c.b16 %v5065, %v5063
        %v5086 = vpack.c.b16 %v5066, %v5064
        %v5087 = vpack.c.b16 %v5069, %v5067
        %v5088 = vpack.c.b16 %v5070, %v5068
        %v5089 = vpack.c.b16 %v5073, %v5071
        %v5090 = vpack.c.b16 %v5074, %v5072
        %5107 = vmatprep.subr.bf16.mxu0 %v5090
        %5108 = vmatpush1.bf16.msra.mxu0 %v5089
        %5109 = vmatprep.subr.bf16.mxu0 %v5088
        %5110 = vmatpush1.bf16.msra.mxu0 %v5087
        %5111 = vmatprep.subr.bf16.mxu0 %v5086
        %5112 = vmatpush1.bf16.msra.mxu0 %v5085
        %5113 = vmatprep.subr.bf16.mxu0 %v5084
        %5114 = vmatpush1.bf16.msra.mxu0 %v5083
        %5115 = vmatprep.subr.bf16.mxu0 %v5082
        %5116 = vmatpush1.bf16.msra.mxu0 %v5081
        %5117 = vmatprep.subr.bf16.mxu0 %v5080
        %5118 = vmatpush1.bf16.msra.mxu0 %v5079
        %5119 = vmatprep.subr.bf16.mxu0 %v5078
        %5120 = vmatpush1.bf16.msra.mxu0 %v5077
        %5121 = vmatprep.subr.bf16.mxu0 %v5076
        %5122 = vmatpush1.bf16.msra.mxu0 %v5075
        %5123 = vmatprep.subr.bf16.mxu0 0
        %5124 = vmatpush2.bf16.msra.mxu0 0
        %5125 = vmatprep.subr.bf16.mxu0 0
        %5126 = vmatpush2.bf16.msra.mxu0 0
        %5127 = vmatprep.subr.bf16.mxu0 0
        %5128 = vmatpush2.bf16.msra.mxu0 0
        %5129 = vmatprep.subr.bf16.mxu0 0
        %5130 = vmatpush2.bf16.msra.mxu0 0
        %5131 = vmatprep.subr.bf16.mxu0 0
        %5132 = vmatpush2.bf16.msra.mxu0 0
        %5133 = vmatprep.subr.bf16.mxu0 0
        %5134 = vmatpush2.bf16.msra.mxu0 0
        %5135 = vmatprep.subr.bf16.mxu0 0
        %5136 = vmatpush2.bf16.msra.mxu0 0
        %5137 = vmatprep.subr.bf16.mxu0 0
        %5138 = vmatpush2.bf16.msra.mxu0 0
        %5139 = vmatprep.mubr.bf16.mxu0 0
        %5140 = vmatmul.mubr.bf16.gmra.mxu0 %v4977
        %v5141 = vpop.f32.mrf.mxu0
        %v5142 = vadd.f32 0.0, %v5141
        %v5143 = vpop.f32.mrf.mxu0
        %v5144 = vadd.f32 0.0, %v5143
        %v5145 = vpop.f32.mrf.mxu0
        %v5146 = vadd.f32 0.0, %v5145
        %v5147 = vpop.f32.mrf.mxu0
        %v5148 = vadd.f32 0.0, %v5147
        %5149 = vmatprep.mubr.bf16.mxu0 0
        %5150 = vmatmul.mubr.bf16.gmra.mxu0 %v4979
        %v5151 = vpop.f32.mrf.mxu0
        %v5152 = vadd.f32 0.0, %v5151
        %v5153 = vpop.f32.mrf.mxu0
        %v5154 = vadd.f32 0.0, %v5153
        %v5155 = vpop.f32.mrf.mxu0
        %v5156 = vadd.f32 0.0, %v5155
        %v5157 = vpop.f32.mrf.mxu0
        %v5158 = vadd.f32 0.0, %v5157
        %5159 = vmatprep.mubr.bf16.mxu0 0
        %5160 = vmatmul.mubr.bf16.gmra.mxu0 %v4981
        %v5161 = vpop.f32.mrf.mxu0
        %v5162 = vadd.f32 0.0, %v5161
        %v5163 = vpop.f32.mrf.mxu0
        %v5164 = vadd.f32 0.0, %v5163
        %v5165 = vpop.f32.mrf.mxu0
        %v5166 = vadd.f32 0.0, %v5165
        %v5167 = vpop.f32.mrf.mxu0
        %v5168 = vadd.f32 0.0, %v5167
        %5169 = vmatprep.mubr.bf16.mxu0 0
        %5170 = vmatmul.mubr.bf16.gmra.mxu0 %v4983
        %v5171 = vpop.f32.mrf.mxu0
        %v5172 = vadd.f32 0.0, %v5171
        %v5173 = vpop.f32.mrf.mxu0
        %v5174 = vadd.f32 0.0, %v5173
        %v5175 = vpop.f32.mrf.mxu0
        %v5176 = vadd.f32 0.0, %v5175
        %v5177 = vpop.f32.mrf.mxu0
        %v5178 = vadd.f32 0.0, %v5177
        %5179 = vmatprep.mubr.bf16.mxu0 0
        %5180 = vmatmul.mubr.bf16.gmra.mxu0 %v4985
        %v5181 = vpop.f32.mrf.mxu0
        %v5182 = vadd.f32 0.0, %v5181
        %v5183 = vpop.f32.mrf.mxu0
        %v5184 = vadd.f32 0.0, %v5183
        %v5185 = vpop.f32.mrf.mxu0
        %v5186 = vadd.f32 0.0, %v5185
        %v5187 = vpop.f32.mrf.mxu0
        %v5188 = vadd.f32 0.0, %v5187
        %5189 = vmatprep.mubr.bf16.mxu0 0
        %5190 = vmatmul.mubr.bf16.gmra.mxu0 %v4987
        %v5191 = vpop.f32.mrf.mxu0
        %v5192 = vadd.f32 0.0, %v5191
        %v5193 = vpop.f32.mrf.mxu0
        %v5194 = vadd.f32 0.0, %v5193
        %v5195 = vpop.f32.mrf.mxu0
        %v5196 = vadd.f32 0.0, %v5195
        %v5197 = vpop.f32.mrf.mxu0
        %v5198 = vadd.f32 0.0, %v5197
        %5199 = vmatprep.mubr.bf16.mxu0 0
        %5200 = vmatmul.mubr.bf16.gmra.mxu0 %v4989
        %v5201 = vpop.f32.mrf.mxu0
        %v5202 = vadd.f32 0.0, %v5201
        %v5203 = vpop.f32.mrf.mxu0
        %v5204 = vadd.f32 0.0, %v5203
        %v5205 = vpop.f32.mrf.mxu0
        %v5206 = vadd.f32 0.0, %v5205
        %v5207 = vpop.f32.mrf.mxu0
        %v5208 = vadd.f32 0.0, %v5207
        %5209 = vmatprep.mubr.bf16.mxu0 0
        %5210 = vmatmul.mubr.bf16.gmra.mxu0 %v4991
        %v5211 = vpop.f32.mrf.mxu0
        %v5212 = vadd.f32 0.0, %v5211
        %v5213 = vpop.f32.mrf.mxu0
        %v5214 = vadd.f32 0.0, %v5213
        %v5215 = vpop.f32.mrf.mxu0
        %v5216 = vadd.f32 0.0, %v5215
        %v5217 = vpop.f32.mrf.mxu0
        %v5218 = vadd.f32 0.0, %v5217
        %5219 = vmatprep.mubr.bf16.mxu0 0
        %5220 = vmatmul.mubr.bf16.gmra.mxu0 %v4993
        %v5221 = vpop.f32.mrf.mxu0
        %v5222 = vadd.f32 0.0, %v5221
        %v5223 = vpop.f32.mrf.mxu0
        %v5224 = vadd.f32 0.0, %v5223
        %v5225 = vpop.f32.mrf.mxu0
        %v5226 = vadd.f32 0.0, %v5225
        %v5227 = vpop.f32.mrf.mxu0
        %v5228 = vadd.f32 0.0, %v5227
        %5229 = vmatprep.mubr.bf16.mxu0 0
        %5230 = vmatmul.mubr.bf16.gmra.mxu0 %v4995
        %v5231 = vpop.f32.mrf.mxu0
        %v5232 = vadd.f32 0.0, %v5231
        %v5233 = vpop.f32.mrf.mxu0
        %v5234 = vadd.f32 0.0, %v5233
        %v5235 = vpop.f32.mrf.mxu0
        %v5236 = vadd.f32 0.0, %v5235
        %v5237 = vpop.f32.mrf.mxu0
        %v5238 = vadd.f32 0.0, %v5237
        %5239 = vmatprep.mubr.bf16.mxu0 0
        %5240 = vmatmul.mubr.bf16.gmra.mxu0 %v4997
        %v5241 = vpop.f32.mrf.mxu0
        %v5242 = vadd.f32 0.0, %v5241
        %v5243 = vpop.f32.mrf.mxu0
        %v5244 = vadd.f32 0.0, %v5243
        %v5245 = vpop.f32.mrf.mxu0
        %v5246 = vadd.f32 0.0, %v5245
        %v5247 = vpop.f32.mrf.mxu0
        %v5248 = vadd.f32 0.0, %v5247
        %5249 = vmatprep.mubr.bf16.mxu0 0
        %5250 = vmatmul.mubr.bf16.gmra.mxu0 %v4999
        %v5251 = vpop.f32.mrf.mxu0
        %v5252 = vadd.f32 0.0, %v5251
        %v5253 = vpop.f32.mrf.mxu0
        %v5254 = vadd.f32 0.0, %v5253
        %v5255 = vpop.f32.mrf.mxu0
        %v5256 = vadd.f32 0.0, %v5255
        %v5257 = vpop.f32.mrf.mxu0
        %v5258 = vadd.f32 0.0, %v5257
        %5259 = vmatprep.mubr.bf16.mxu0 0
        %5260 = vmatmul.mubr.bf16.gmra.mxu0 %v5001
        %v5261 = vpop.f32.mrf.mxu0
        %v5262 = vadd.f32 0.0, %v5261
        %v5263 = vpop.f32.mrf.mxu0
        %v5264 = vadd.f32 0.0, %v5263
        %v5265 = vpop.f32.mrf.mxu0
        %v5266 = vadd.f32 0.0, %v5265
        %v5267 = vpop.f32.mrf.mxu0
        %v5268 = vadd.f32 0.0, %v5267
        %5269 = vmatprep.mubr.bf16.mxu0 0
        %5270 = vmatmul.mubr.bf16.gmra.mxu0 %v5003
        %v5271 = vpop.f32.mrf.mxu0
        %v5272 = vadd.f32 0.0, %v5271
        %v5273 = vpop.f32.mrf.mxu0
        %v5274 = vadd.f32 0.0, %v5273
        %v5275 = vpop.f32.mrf.mxu0
        %v5276 = vadd.f32 0.0, %v5275
        %v5277 = vpop.f32.mrf.mxu0
        %v5278 = vadd.f32 0.0, %v5277
        %5279 = vmatprep.mubr.bf16.mxu0 0
        %5280 = vmatmul.mubr.bf16.gmra.mxu0 %v5005
        %v5281 = vpop.f32.mrf.mxu0
        %v5282 = vadd.f32 0.0, %v5281
        %v5283 = vpop.f32.mrf.mxu0
        %v5284 = vadd.f32 0.0, %v5283
        %v5285 = vpop.f32.mrf.mxu0
        %v5286 = vadd.f32 0.0, %v5285
        %v5287 = vpop.f32.mrf.mxu0
        %v5288 = vadd.f32 0.0, %v5287
        %5289 = vmatprep.mubr.bf16.mxu0 0
        %5290 = vmatmul.mubr.bf16.gmra.mxu0 %v5007
        %v5291 = vpop.f32.mrf.mxu0
        %v5292 = vadd.f32 0.0, %v5291
        %v5293 = vpop.f32.mrf.mxu0
        %v5294 = vadd.f32 0.0, %v5293
        %v5295 = vpop.f32.mrf.mxu0
        %v5296 = vadd.f32 0.0, %v5295
        %v5297 = vpop.f32.mrf.mxu0
        %v5298 = vadd.f32 0.0, %v5297
        %5299 = vmatprep.mubr.bf16.mxu0 0
        %5300 = vmatmul.mubr.bf16.gmra.mxu0 %v5009
        %v5301 = vpop.f32.mrf.mxu0
        %v5302 = vadd.f32 0.0, %v5301
        %v5303 = vpop.f32.mrf.mxu0
        %v5304 = vadd.f32 0.0, %v5303
        %v5305 = vpop.f32.mrf.mxu0
        %v5306 = vadd.f32 0.0, %v5305
        %v5307 = vpop.f32.mrf.mxu0
        %v5308 = vadd.f32 0.0, %v5307
        %5309 = vdwg.mxu0
        %v5310 = vadd.f32 %v4784, %v5142
        %v5311 = vadd.f32 %v4785, %v5146
        %v5312 = vadd.f32 %v4786, %v5152
        %v5313 = vadd.f32 %v4787, %v5156
        %v5314 = vadd.f32 %v4788, %v5162
        %v5315 = vadd.f32 %v4789, %v5166
        %v5316 = vadd.f32 %v4790, %v5172
        %v5317 = vadd.f32 %v4791, %v5176
        %v5318 = vadd.f32 %v4792, %v5182
        %v5319 = vadd.f32 %v4793, %v5186
        %v5320 = vadd.f32 %v4794, %v5192
        %v5321 = vadd.f32 %v4795, %v5196
        %v5322 = vadd.f32 %v4796, %v5202
        %v5323 = vadd.f32 %v4797, %v5206
        %v5324 = vadd.f32 %v4798, %v5212
        %v5325 = vadd.f32 %v4799, %v5216
        %v5326 = vadd.f32 %v4800, %v5222
        %v5327 = vadd.f32 %v4801, %v5226
        %v5328 = vadd.f32 %v4802, %v5232
        %v5329 = vadd.f32 %v4803, %v5236
        %v5330 = vadd.f32 %v4804, %v5242
        %v5331 = vadd.f32 %v4805, %v5246
        %v5332 = vadd.f32 %v4806, %v5252
        %v5333 = vadd.f32 %v4807, %v5256
        %v5334 = vadd.f32 %v4808, %v5262
        %v5335 = vadd.f32 %v4809, %v5266
        %v5336 = vadd.f32 %v4810, %v5272
        %v5337 = vadd.f32 %v4811, %v5276
        %v5338 = vadd.f32 %v4812, %v5282
        %v5339 = vadd.f32 %v4813, %v5286
        %v5340 = vadd.f32 %v4814, %v5292
        %v5341 = vadd.f32 %v4815, %v5296
        %v5342 = vadd.f32 %v4816, %v5302
        %v5343 = vadd.f32 %v4817, %v5306
        %v5344 = vadd.f32 %v4818, %v5144
        %v5345 = vadd.f32 %v4819, %v5148
        %v5346 = vadd.f32 %v4820, %v5154
        %v5347 = vadd.f32 %v4821, %v5158
        %v5348 = vadd.f32 %v4822, %v5164
        %v5349 = vadd.f32 %v4823, %v5168
        %v5350 = vadd.f32 %v4824, %v5174
        %v5351 = vadd.f32 %v4825, %v5178
        %v5352 = vadd.f32 %v4826, %v5184
        %v5353 = vadd.f32 %v4827, %v5188
        %v5354 = vadd.f32 %v4828, %v5194
        %v5355 = vadd.f32 %v4829, %v5198
        %v5356 = vadd.f32 %v4830, %v5204
        %v5357 = vadd.f32 %v4831, %v5208
        %v5358 = vadd.f32 %v4832, %v5214
        %v5359 = vadd.f32 %v4833, %v5218
        %v5360 = vadd.f32 %v4834, %v5224
        %v5361 = vadd.f32 %v4835, %v5228
        %v5362 = vadd.f32 %v4836, %v5234
        %v5363 = vadd.f32 %v4837, %v5238
        %v5364 = vadd.f32 %v4838, %v5244
        %v5365 = vadd.f32 %v4839, %v5248
        %v5366 = vadd.f32 %v4840, %v5254
        %v5367 = vadd.f32 %v4841, %v5258
        %v5368 = vadd.f32 %v4842, %v5264
        %v5369 = vadd.f32 %v4843, %v5268
        %v5370 = vadd.f32 %v4844, %v5274
        %v5371 = vadd.f32 %v4845, %v5278
        %v5372 = vadd.f32 %v4846, %v5284
        %v5373 = vadd.f32 %v4847, %v5288
        %v5374 = vadd.f32 %v4848, %v5294
        %v5375 = vadd.f32 %v4849, %v5298
        %v5376 = vadd.f32 %v4850, %v5304
        %v5377 = vadd.f32 %v4851, %v5308
        %v5378 = vld [vmem:[#allocation3 + $0x8] sm:$0xf]
        %v5380 = vunpack.c.l.b16 %v5378
        %v5381 = vpack.c.b16 %v4923, %v5380
        %v5383 = vshrl.u32 %v5381, 16
        %v5385 = vshll.u32 %v5381, 16
        %v5387 = vrot.slane %v5385, 1
        %v5388 = vor.u32 %v5383, %v5387
        %v5390 = vshll.u32 %v4958, 16
        %v5392 = vrot.slane %v5390, 1
        %v5393 = vsel %vm2553, %v5388, %v5392
        %v5394 = vshrl.u32 %v4958, 16
        %v5396 = vor.u32 %v5394, %v5392
        %v5398 = vshll.u32 %v4959, 16
        %v5400 = vrot.slane %v5398, 1
        %v5401 = vsel %vm2553, %v5396, %v5400
        %v5402 = vshrl.u32 %v4959, 16
        %v5404 = vor.u32 %v5402, %v5400
        %v5406 = vshll.u32 %v4960, 16
        %v5408 = vrot.slane %v5406, 1
        %v5409 = vsel %vm2553, %v5404, %v5408
        %v5410 = vshrl.u32 %v4960, 16
        %v5412 = vor.u32 %v5410, %v5408
        %v5414 = vshll.u32 %v4961, 16
        %v5416 = vrot.slane %v5414, 1
        %v5417 = vsel %vm2553, %v5412, %v5416
        %v5418 = vshrl.u32 %v4961, 16
        %v5420 = vor.u32 %v5418, %v5416
        %v5422 = vshll.u32 %v4962, 16
        %v5424 = vrot.slane %v5422, 1
        %v5425 = vsel %vm2553, %v5420, %v5424
        %v5426 = vshrl.u32 %v4962, 16
        %v5428 = vor.u32 %v5426, %v5424
        %v5430 = vshll.u32 %v4963, 16
        %v5432 = vrot.slane %v5430, 1
        %v5433 = vsel %vm2553, %v5428, %v5432
        %v5434 = vshrl.u32 %v4963, 16
        %v5436 = vor.u32 %v5434, %v5432
        %v5438 = vshll.u32 %v4964, 16
        %v5440 = vrot.slane %v5438, 1
        %v5441 = vsel %vm2553, %v5436, %v5440
        %v5442 = vshrl.u32 %v4964, 16
        %v5444 = vor.u32 %v5442, %v5440
        %v5446 = vshll.u32 %v4965, 16
        %v5448 = vrot.slane %v5446, 1
        %v5449 = vsel %vm2553, %v5444, %v5448
        %v5450 = vshrl.u32 %v4965, 16
        %v5452 = vor.u32 %v5450, %v5448
        %v5454 = vshll.u32 %v4966, 16
        %v5456 = vrot.slane %v5454, 1
        %v5457 = vsel %vm2553, %v5452, %v5456
        %v5458 = vshrl.u32 %v4966, 16
        %v5460 = vor.u32 %v5458, %v5456
        %v5462 = vshll.u32 %v4967, 16
        %v5464 = vrot.slane %v5462, 1
        %v5465 = vsel %vm2553, %v5460, %v5464
        %v5466 = vshrl.u32 %v4967, 16
        %v5468 = vor.u32 %v5466, %v5464
        %v5470 = vshll.u32 %v4968, 16
        %v5472 = vrot.slane %v5470, 1
        %v5473 = vsel %vm2553, %v5468, %v5472
        %v5474 = vshrl.u32 %v4968, 16
        %v5476 = vor.u32 %v5474, %v5472
        %v5478 = vshll.u32 %v4969, 16
        %v5480 = vrot.slane %v5478, 1
        %v5481 = vsel %vm2553, %v5476, %v5480
        %v5482 = vshrl.u32 %v4969, 16
        %v5484 = vor.u32 %v5482, %v5480
        %v5486 = vshll.u32 %v4970, 16
        %v5488 = vrot.slane %v5486, 1
        %v5489 = vsel %vm2553, %v5484, %v5488
        %v5490 = vshrl.u32 %v4970, 16
        %v5492 = vor.u32 %v5490, %v5488
        %v5494 = vshll.u32 %v4971, 16
        %v5496 = vrot.slane %v5494, 1
        %v5497 = vsel %vm2553, %v5492, %v5496
        %v5498 = vshrl.u32 %v4971, 16
        %v5500 = vor.u32 %v5498, %v5496
        %v5502 = vshll.u32 %v4972, 16
        %v5504 = vrot.slane %v5502, 1
        %v5505 = vsel %vm2553, %v5500, %v5504
        %v5506 = vshrl.u32 %v4972, 16
        %v5508 = vor.u32 %v5506, %v5504
        %v5510 = vshll.u32 %v4973, 16
        %v5512 = vrot.slane %v5510, 1
        %v5513 = vsel %vm2553, %v5508, %v5512
        %v5514 = vshrl.u32 %v4973, 16
        %v5516 = vor.u32 %v5514, %v5512
        %v5518 = vshll.u32 %v4974, 16
        %v5520 = vrot.slane %v5518, 1
        %v5521 = vsel %vm2553, %v5516, %v5520
        %5539 = vmatprep.subr.bf16.mxu0 0
        %5540 = vmatpush1.bf16.msra.mxu0 %v4564
        %5541 = vmatprep.subr.bf16.mxu0 0
        %5542 = vmatpush1.bf16.msra.mxu0 %v4562
        %5543 = vmatprep.subr.bf16.mxu0 0
        %5544 = vmatpush1.bf16.msra.mxu0 %v4560
        %5545 = vmatprep.subr.bf16.mxu0 0
        %5546 = vmatpush1.bf16.msra.mxu0 %v4558
        %5547 = vmatprep.subr.bf16.mxu0 0
        %5548 = vmatpush1.bf16.msra.mxu0 %v4556
        %5549 = vmatprep.subr.bf16.mxu0 0
        %5550 = vmatpush1.bf16.msra.mxu0 %v4554
        %5551 = vmatprep.subr.bf16.mxu0 0
        %5552 = vmatpush1.bf16.msra.mxu0 %v4552
        %5553 = vmatprep.subr.bf16.mxu0 0
        %5554 = vmatpush1.bf16.msra.mxu0 %v4550
        %5555 = vmatprep.subr.bf16.mxu0 0
        %5556 = vmatpush2.bf16.msra.mxu0 0
        %5557 = vmatprep.subr.bf16.mxu0 0
        %5558 = vmatpush2.bf16.msra.mxu0 0
        %5559 = vmatprep.subr.bf16.mxu0 0
        %5560 = vmatpush2.bf16.msra.mxu0 0
        %5561 = vmatprep.subr.bf16.mxu0 0
        %5562 = vmatpush2.bf16.msra.mxu0 0
        %5563 = vmatprep.subr.bf16.mxu0 0
        %5564 = vmatpush2.bf16.msra.mxu0 0
        %5565 = vmatprep.subr.bf16.mxu0 0
        %5566 = vmatpush2.bf16.msra.mxu0 0
        %5567 = vmatprep.subr.bf16.mxu0 0
        %5568 = vmatpush2.bf16.msra.mxu0 0
        %5569 = vmatprep.subr.bf16.mxu0 0
        %5570 = vmatpush2.bf16.msra.mxu0 0
        %5571 = vmatprep.mubr.bf16.mxu0 0
        %5572 = vmatmul.mubr.bf16.gmra.mxu0 %v5393
        %v5573 = vpop.f32.mrf.mxu0
        %v5574 = vadd.f32 0.0, %v5573
        %v5575 = vpop.f32.mrf.mxu0
        %v5576 = vpop.f32.mrf.mxu0
        %v5577 = vadd.f32 0.0, %v5576
        %v5578 = vpop.f32.mrf.mxu0
        %5579 = vmatprep.mubr.bf16.mxu0 0
        %5580 = vmatmul.mubr.bf16.gmra.mxu0 %v5401
        %v5581 = vpop.f32.mrf.mxu0
        %v5582 = vadd.f32 0.0, %v5581
        %v5583 = vpop.f32.mrf.mxu0
        %v5584 = vpop.f32.mrf.mxu0
        %v5585 = vadd.f32 0.0, %v5584
        %v5586 = vpop.f32.mrf.mxu0
        %5587 = vmatprep.mubr.bf16.mxu0 0
        %5588 = vmatmul.mubr.bf16.gmra.mxu0 %v5409
        %v5589 = vpop.f32.mrf.mxu0
        %v5590 = vadd.f32 0.0, %v5589
        %v5591 = vpop.f32.mrf.mxu0
        %v5592 = vpop.f32.mrf.mxu0
        %v5593 = vadd.f32 0.0, %v5592
        %v5594 = vpop.f32.mrf.mxu0
        %5595 = vmatprep.mubr.bf16.mxu0 0
        %5596 = vmatmul.mubr.bf16.gmra.mxu0 %v5417
        %v5597 = vpop.f32.mrf.mxu0
        %v5598 = vadd.f32 0.0, %v5597
        %v5599 = vpop.f32.mrf.mxu0
        %v5600 = vpop.f32.mrf.mxu0
        %v5601 = vadd.f32 0.0, %v5600
        %v5602 = vpop.f32.mrf.mxu0
        %5603 = vmatprep.mubr.bf16.mxu0 0
        %5604 = vmatmul.mubr.bf16.gmra.mxu0 %v5425
        %v5605 = vpop.f32.mrf.mxu0
        %v5606 = vadd.f32 0.0, %v5605
        %v5607 = vpop.f32.mrf.mxu0
        %v5608 = vpop.f32.mrf.mxu0
        %v5609 = vadd.f32 0.0, %v5608
        %v5610 = vpop.f32.mrf.mxu0
        %5611 = vmatprep.mubr.bf16.mxu0 0
        %5612 = vmatmul.mubr.bf16.gmra.mxu0 %v5433
        %v5613 = vpop.f32.mrf.mxu0
        %v5614 = vadd.f32 0.0, %v5613
        %v5615 = vpop.f32.mrf.mxu0
        %v5616 = vpop.f32.mrf.mxu0
        %v5617 = vadd.f32 0.0, %v5616
        %v5618 = vpop.f32.mrf.mxu0
        %5619 = vmatprep.mubr.bf16.mxu0 0
        %5620 = vmatmul.mubr.bf16.gmra.mxu0 %v5441
        %v5621 = vpop.f32.mrf.mxu0
        %v5622 = vadd.f32 0.0, %v5621
        %v5623 = vpop.f32.mrf.mxu0
        %v5624 = vpop.f32.mrf.mxu0
        %v5625 = vadd.f32 0.0, %v5624
        %v5626 = vpop.f32.mrf.mxu0
        %5627 = vmatprep.mubr.bf16.mxu0 0
        %5628 = vmatmul.mubr.bf16.gmra.mxu0 %v5449
        %v5629 = vpop.f32.mrf.mxu0
        %v5630 = vadd.f32 0.0, %v5629
        %v5631 = vpop.f32.mrf.mxu0
        %v5632 = vpop.f32.mrf.mxu0
        %v5633 = vadd.f32 0.0, %v5632
        %v5634 = vpop.f32.mrf.mxu0
        %5635 = vmatprep.mubr.bf16.mxu0 0
        %5636 = vmatmul.mubr.bf16.gmra.mxu0 %v5457
        %v5637 = vpop.f32.mrf.mxu0
        %v5638 = vadd.f32 0.0, %v5637
        %v5639 = vpop.f32.mrf.mxu0
        %v5640 = vpop.f32.mrf.mxu0
        %v5641 = vadd.f32 0.0, %v5640
        %v5642 = vpop.f32.mrf.mxu0
        %5643 = vmatprep.mubr.bf16.mxu0 0
        %5644 = vmatmul.mubr.bf16.gmra.mxu0 %v5465
        %v5645 = vpop.f32.mrf.mxu0
        %v5646 = vadd.f32 0.0, %v5645
        %v5647 = vpop.f32.mrf.mxu0
        %v5648 = vpop.f32.mrf.mxu0
        %v5649 = vadd.f32 0.0, %v5648
        %v5650 = vpop.f32.mrf.mxu0
        %5651 = vmatprep.mubr.bf16.mxu0 0
        %5652 = vmatmul.mubr.bf16.gmra.mxu0 %v5473
        %v5653 = vpop.f32.mrf.mxu0
        %v5654 = vadd.f32 0.0, %v5653
        %v5655 = vpop.f32.mrf.mxu0
        %v5656 = vpop.f32.mrf.mxu0
        %v5657 = vadd.f32 0.0, %v5656
        %v5658 = vpop.f32.mrf.mxu0
        %5659 = vmatprep.mubr.bf16.mxu0 0
        %5660 = vmatmul.mubr.bf16.gmra.mxu0 %v5481
        %v5661 = vpop.f32.mrf.mxu0
        %v5662 = vadd.f32 0.0, %v5661
        %v5663 = vpop.f32.mrf.mxu0
        %v5664 = vpop.f32.mrf.mxu0
        %v5665 = vadd.f32 0.0, %v5664
        %v5666 = vpop.f32.mrf.mxu0
        %5667 = vmatprep.mubr.bf16.mxu0 0
        %5668 = vmatmul.mubr.bf16.gmra.mxu0 %v5489
        %v5669 = vpop.f32.mrf.mxu0
        %v5670 = vadd.f32 0.0, %v5669
        %v5671 = vpop.f32.mrf.mxu0
        %v5672 = vpop.f32.mrf.mxu0
        %v5673 = vadd.f32 0.0, %v5672
        %v5674 = vpop.f32.mrf.mxu0
        %5675 = vmatprep.mubr.bf16.mxu0 0
        %5676 = vmatmul.mubr.bf16.gmra.mxu0 %v5497
        %v5677 = vpop.f32.mrf.mxu0
        %v5678 = vadd.f32 0.0, %v5677
        %v5679 = vpop.f32.mrf.mxu0
        %v5680 = vpop.f32.mrf.mxu0
        %v5681 = vadd.f32 0.0, %v5680
        %v5682 = vpop.f32.mrf.mxu0
        %5683 = vmatprep.mubr.bf16.mxu0 0
        %5684 = vmatmul.mubr.bf16.gmra.mxu0 %v5505
        %v5685 = vpop.f32.mrf.mxu0
        %v5686 = vadd.f32 0.0, %v5685
        %v5687 = vpop.f32.mrf.mxu0
        %v5688 = vpop.f32.mrf.mxu0
        %v5689 = vadd.f32 0.0, %v5688
        %v5690 = vpop.f32.mrf.mxu0
        %5691 = vmatprep.mubr.bf16.mxu0 0
        %5692 = vmatmul.mubr.bf16.gmra.mxu0 %v5513
        %v5693 = vpop.f32.mrf.mxu0
        %v5694 = vadd.f32 0.0, %v5693
        %v5695 = vpop.f32.mrf.mxu0
        %v5696 = vpop.f32.mrf.mxu0
        %v5697 = vadd.f32 0.0, %v5696
        %v5698 = vpop.f32.mrf.mxu0
        %5699 = vmatprep.mubr.bf16.mxu0 0
        %5700 = vmatmul.mubr.bf16.gmra.mxu0 %v5521
        %v5701 = vpop.f32.mrf.mxu0
        %v5702 = vadd.f32 0.0, %v5701
        %v5703 = vpop.f32.mrf.mxu0
        %v5704 = vpop.f32.mrf.mxu0
        %v5705 = vadd.f32 0.0, %v5704
        %v5706 = vpop.f32.mrf.mxu0
        %5707 = vdwg.mxu0
        %v5708 = vadd.f32 %v5310, %v5574
        %v5709 = vadd.f32 %v5311, %v5577
        %v5710 = vadd.f32 %v5312, %v5582
        %v5711 = vadd.f32 %v5313, %v5585
        %v5712 = vadd.f32 %v5314, %v5590
        %v5713 = vadd.f32 %v5315, %v5593
        %v5714 = vadd.f32 %v5316, %v5598
        %v5715 = vadd.f32 %v5317, %v5601
        %v5716 = vadd.f32 %v5318, %v5606
        %v5717 = vadd.f32 %v5319, %v5609
        %v5718 = vadd.f32 %v5320, %v5614
        %v5719 = vadd.f32 %v5321, %v5617
        %v5720 = vadd.f32 %v5322, %v5622
        %v5721 = vadd.f32 %v5323, %v5625
        %v5722 = vadd.f32 %v5324, %v5630
        %v5723 = vadd.f32 %v5325, %v5633
        %v5724 = vadd.f32 %v5326, %v5638
        %v5725 = vadd.f32 %v5327, %v5641
        %v5726 = vadd.f32 %v5328, %v5646
        %v5727 = vadd.f32 %v5329, %v5649
        %v5728 = vadd.f32 %v5330, %v5654
        %v5729 = vadd.f32 %v5331, %v5657
        %v5730 = vadd.f32 %v5332, %v5662
        %v5731 = vadd.f32 %v5333, %v5665
        %v5732 = vadd.f32 %v5334, %v5670
        %v5733 = vadd.f32 %v5335, %v5673
        %v5734 = vadd.f32 %v5336, %v5678
        %v5735 = vadd.f32 %v5337, %v5681
        %v5736 = vadd.f32 %v5338, %v5686
        %v5737 = vadd.f32 %v5339, %v5689
        %v5738 = vadd.f32 %v5340, %v5694
        %v5739 = vadd.f32 %v5341, %v5697
        %v5740 = vadd.f32 %v5342, %v5702
        %v5741 = vadd.f32 %v5343, %v5705
        %v5742 = vld [vmem:[#allocation2 + $0x90] sm:$0x3]
        %v5744 = vunpack.c.l.b16 %v5742
        %v5745 = vpack.c.b16 %v5744, %v5744
        %vm5746 = vsmask.f32 6400
        %v5748 = vshrl.u32 %v4431, 16
        %v5750 = vrot.slane %v5748, 1
        %v5751 = vshll.u32 %v4431, 16
        %v5753 = vrot.slane %v5751, 2
        %v5754 = vor.u32 %v5750, %v5753
        %v5756 = vshrl.u32 %v4432, 16
        %v5758 = vrot.slane %v5756, 1
        %v5759 = vshll.u32 %v4432, 16
        %v5761 = vrot.slane %v5759, 2
        %v5762 = vor.u32 %v5758, %v5761
        %v5763 = vsel %vm5746, %v5754, %v5762
        %v5765 = vshrl.u32 %v4433, 16
        %v5767 = vrot.slane %v5765, 1
        %v5768 = vshll.u32 %v4433, 16
        %v5770 = vrot.slane %v5768, 2
        %v5771 = vor.u32 %v5767, %v5770
        %v5772 = vsel %vm5746, %v5762, %v5771
        %v5774 = vshrl.u32 %v4434, 16
        %v5776 = vrot.slane %v5774, 1
        %v5777 = vshll.u32 %v4434, 16
        %v5779 = vrot.slane %v5777, 2
        %v5780 = vor.u32 %v5776, %v5779
        %v5781 = vsel %vm5746, %v5771, %v5780
        %v5783 = vshrl.u32 %v4435, 16
        %v5785 = vrot.slane %v5783, 1
        %v5786 = vshll.u32 %v4435, 16
        %v5788 = vrot.slane %v5786, 2
        %v5789 = vor.u32 %v5785, %v5788
        %v5790 = vsel %vm5746, %v5780, %v5789
        %v5792 = vshrl.u32 %v4436, 16
        %v5794 = vrot.slane %v5792, 1
        %v5795 = vshll.u32 %v4436, 16
        %v5797 = vrot.slane %v5795, 2
        %v5798 = vor.u32 %v5794, %v5797
        %v5799 = vsel %vm5746, %v5789, %v5798
        %v5801 = vshrl.u32 %v4437, 16
        %v5803 = vrot.slane %v5801, 1
        %v5804 = vshll.u32 %v4437, 16
        %v5806 = vrot.slane %v5804, 2
        %v5807 = vor.u32 %v5803, %v5806
        %v5808 = vsel %vm5746, %v5798, %v5807
        %v5810 = vshrl.u32 %v4438, 16
        %v5812 = vrot.slane %v5810, 1
        %v5813 = vshll.u32 %v4438, 16
        %v5815 = vrot.slane %v5813, 2
        %v5816 = vor.u32 %v5812, %v5815
        %v5817 = vsel %vm5746, %v5807, %v5816
        %v5819 = vshrl.u32 %v4439, 16
        %v5821 = vrot.slane %v5819, 1
        %v5822 = vshll.u32 %v4439, 16
        %v5824 = vrot.slane %v5822, 2
        %v5825 = vor.u32 %v5821, %v5824
        %v5826 = vsel %vm5746, %v5816, %v5825
        %v5828 = vshrl.u32 %v4440, 16
        %v5830 = vrot.slane %v5828, 1
        %v5831 = vshll.u32 %v4440, 16
        %v5833 = vrot.slane %v5831, 2
        %v5834 = vor.u32 %v5830, %v5833
        %v5835 = vsel %vm5746, %v5825, %v5834
        %v5837 = vshrl.u32 %v4441, 16
        %v5839 = vrot.slane %v5837, 1
        %v5840 = vshll.u32 %v4441, 16
        %v5842 = vrot.slane %v5840, 2
        %v5843 = vor.u32 %v5839, %v5842
        %v5844 = vsel %vm5746, %v5834, %v5843
        %v5846 = vshrl.u32 %v4442, 16
        %v5848 = vrot.slane %v5846, 1
        %v5849 = vshll.u32 %v4442, 16
        %v5851 = vrot.slane %v5849, 2
        %v5852 = vor.u32 %v5848, %v5851
        %v5853 = vsel %vm5746, %v5843, %v5852
        %v5855 = vshrl.u32 %v4443, 16
        %v5857 = vrot.slane %v5855, 1
        %v5858 = vshll.u32 %v4443, 16
        %v5860 = vrot.slane %v5858, 2
        %v5861 = vor.u32 %v5857, %v5860
        %v5862 = vsel %vm5746, %v5852, %v5861
        %v5864 = vshrl.u32 %v4444, 16
        %v5866 = vrot.slane %v5864, 1
        %v5867 = vshll.u32 %v4444, 16
        %v5869 = vrot.slane %v5867, 2
        %v5870 = vor.u32 %v5866, %v5869
        %v5871 = vsel %vm5746, %v5861, %v5870
        %v5873 = vshrl.u32 %v4445, 16
        %v5875 = vrot.slane %v5873, 1
        %v5876 = vshll.u32 %v4445, 16
        %v5878 = vrot.slane %v5876, 2
        %v5879 = vor.u32 %v5875, %v5878
        %v5880 = vsel %vm5746, %v5870, %v5879
        %v5882 = vshrl.u32 %v4446, 16
        %v5884 = vrot.slane %v5882, 1
        %v5885 = vshll.u32 %v4446, 16
        %v5887 = vrot.slane %v5885, 2
        %v5888 = vor.u32 %v5884, %v5887
        %v5889 = vsel %vm5746, %v5879, %v5888
        %v5891 = vshrl.u32 %v4447, 16
        %v5893 = vrot.slane %v5891, 1
        %v5894 = vshll.u32 %v4447, 16
        %v5896 = vrot.slane %v5894, 2
        %v5897 = vor.u32 %v5893, %v5896
        %v5898 = vsel %vm5746, %v5888, %v5897
        %v5900 = vshrl.u32 %v5745, 16
        %v5902 = vrot.slane %v5900, 1
        %v5903 = vshll.u32 %v5745, 16
        %v5905 = vrot.slane %v5903, 2
        %v5906 = vor.u32 %v5902, %v5905
        %v5907 = vsel %vm5746, %v5897, %v5906
        %5925 = vmatprep.subr.bf16.mxu0 0
        %5926 = vmatpush1.bf16.msra.mxu0 %v5089
        %5927 = vmatprep.subr.bf16.mxu0 0
        %5928 = vmatpush1.bf16.msra.mxu0 %v5087
        %5929 = vmatprep.subr.bf16.mxu0 0
        %5930 = vmatpush1.bf16.msra.mxu0 %v5085
        %5931 = vmatprep.subr.bf16.mxu0 0
        %5932 = vmatpush1.bf16.msra.mxu0 %v5083
        %5933 = vmatprep.subr.bf16.mxu0 0
        %5934 = vmatpush1.bf16.msra.mxu0 %v5081
        %5935 = vmatprep.subr.bf16.mxu0 0
        %5936 = vmatpush1.bf16.msra.mxu0 %v5079
        %5937 = vmatprep.subr.bf16.mxu0 0
        %5938 = vmatpush1.bf16.msra.mxu0 %v5077
        %5939 = vmatprep.subr.bf16.mxu0 0
        %5940 = vmatpush1.bf16.msra.mxu0 %v5075
        %5941 = vmatprep.subr.bf16.mxu0 0
        %5942 = vmatpush2.bf16.msra.mxu0 0
        %5943 = vmatprep.subr.bf16.mxu0 0
        %5944 = vmatpush2.bf16.msra.mxu0 0
        %5945 = vmatprep.subr.bf16.mxu0 0
        %5946 = vmatpush2.bf16.msra.mxu0 0
        %5947 = vmatprep.subr.bf16.mxu0 0
        %5948 = vmatpush2.bf16.msra.mxu0 0
        %5949 = vmatprep.subr.bf16.mxu0 0
        %5950 = vmatpush2.bf16.msra.mxu0 0
        %5951 = vmatprep.subr.bf16.mxu0 0
        %5952 = vmatpush2.bf16.msra.mxu0 0
        %5953 = vmatprep.subr.bf16.mxu0 0
        %5954 = vmatpush2.bf16.msra.mxu0 0
        %5955 = vmatprep.subr.bf16.mxu0 0
        %5956 = vmatpush2.bf16.msra.mxu0 0
        %5957 = vmatprep.mubr.bf16.mxu0 0
        %5958 = vmatmul.mubr.bf16.gmra.mxu0 %v5763
        %v5959 = vpop.f32.mrf.mxu0
        %v5960 = vadd.f32 0.0, %v5959
        %v5961 = vpop.f32.mrf.mxu0
        %v5962 = vpop.f32.mrf.mxu0
        %v5963 = vadd.f32 0.0, %v5962
        %v5964 = vpop.f32.mrf.mxu0
        %5965 = vmatprep.mubr.bf16.mxu0 0
        %5966 = vmatmul.mubr.bf16.gmra.mxu0 %v5772
        %v5967 = vpop.f32.mrf.mxu0
        %v5968 = vadd.f32 0.0, %v5967
        %v5969 = vpop.f32.mrf.mxu0
        %v5970 = vpop.f32.mrf.mxu0
        %v5971 = vadd.f32 0.0, %v5970
        %v5972 = vpop.f32.mrf.mxu0
        %5973 = vmatprep.mubr.bf16.mxu0 0
        %5974 = vmatmul.mubr.bf16.gmra.mxu0 %v5781
        %v5975 = vpop.f32.mrf.mxu0
        %v5976 = vadd.f32 0.0, %v5975
        %v5977 = vpop.f32.mrf.mxu0
        %v5978 = vpop.f32.mrf.mxu0
        %v5979 = vadd.f32 0.0, %v5978
        %v5980 = vpop.f32.mrf.mxu0
        %5981 = vmatprep.mubr.bf16.mxu0 0
        %5982 = vmatmul.mubr.bf16.gmra.mxu0 %v5790
        %v5983 = vpop.f32.mrf.mxu0
        %v5984 = vadd.f32 0.0, %v5983
        %v5985 = vpop.f32.mrf.mxu0
        %v5986 = vpop.f32.mrf.mxu0
        %v5987 = vadd.f32 0.0, %v5986
        %v5988 = vpop.f32.mrf.mxu0
        %5989 = vmatprep.mubr.bf16.mxu0 0
        %5990 = vmatmul.mubr.bf16.gmra.mxu0 %v5799
        %v5991 = vpop.f32.mrf.mxu0
        %v5992 = vadd.f32 0.0, %v5991
        %v5993 = vpop.f32.mrf.mxu0
        %v5994 = vpop.f32.mrf.mxu0
        %v5995 = vadd.f32 0.0, %v5994
        %v5996 = vpop.f32.mrf.mxu0
        %5997 = vmatprep.mubr.bf16.mxu0 0
        %5998 = vmatmul.mubr.bf16.gmra.mxu0 %v5808
        %v5999 = vpop.f32.mrf.mxu0
        %v6000 = vadd.f32 0.0, %v5999
        %v6001 = vpop.f32.mrf.mxu0
        %v6002 = vpop.f32.mrf.mxu0
        %v6003 = vadd.f32 0.0, %v6002
        %v6004 = vpop.f32.mrf.mxu0
        %6005 = vmatprep.mubr.bf16.mxu0 0
        %6006 = vmatmul.mubr.bf16.gmra.mxu0 %v5817
        %v6007 = vpop.f32.mrf.mxu0
        %v6008 = vadd.f32 0.0, %v6007
        %v6009 = vpop.f32.mrf.mxu0
        %v6010 = vpop.f32.mrf.mxu0
        %v6011 = vadd.f32 0.0, %v6010
        %v6012 = vpop.f32.mrf.mxu0
        %6013 = vmatprep.mubr.bf16.mxu0 0
        %6014 = vmatmul.mubr.bf16.gmra.mxu0 %v5826
        %v6015 = vpop.f32.mrf.mxu0
        %v6016 = vadd.f32 0.0, %v6015
        %v6017 = vpop.f32.mrf.mxu0
        %v6018 = vpop.f32.mrf.mxu0
        %v6019 = vadd.f32 0.0, %v6018
        %v6020 = vpop.f32.mrf.mxu0
        %6021 = vmatprep.mubr.bf16.mxu0 0
        %6022 = vmatmul.mubr.bf16.gmra.mxu0 %v5835
        %v6023 = vpop.f32.mrf.mxu0
        %v6024 = vadd.f32 0.0, %v6023
        %v6025 = vpop.f32.mrf.mxu0
        %v6026 = vpop.f32.mrf.mxu0
        %v6027 = vadd.f32 0.0, %v6026
        %v6028 = vpop.f32.mrf.mxu0
        %6029 = vmatprep.mubr.bf16.mxu0 0
        %6030 = vmatmul.mubr.bf16.gmra.mxu0 %v5844
        %v6031 = vpop.f32.mrf.mxu0
        %v6032 = vadd.f32 0.0, %v6031
        %v6033 = vpop.f32.mrf.mxu0
        %v6034 = vpop.f32.mrf.mxu0
        %v6035 = vadd.f32 0.0, %v6034
        %v6036 = vpop.f32.mrf.mxu0
        %6037 = vmatprep.mubr.bf16.mxu0 0
        %6038 = vmatmul.mubr.bf16.gmra.mxu0 %v5853
        %v6039 = vpop.f32.mrf.mxu0
        %v6040 = vadd.f32 0.0, %v6039
        %v6041 = vpop.f32.mrf.mxu0
        %v6042 = vpop.f32.mrf.mxu0
        %v6043 = vadd.f32 0.0, %v6042
        %v6044 = vpop.f32.mrf.mxu0
        %6045 = vmatprep.mubr.bf16.mxu0 0
        %6046 = vmatmul.mubr.bf16.gmra.mxu0 %v5862
        %v6047 = vpop.f32.mrf.mxu0
        %v6048 = vadd.f32 0.0, %v6047
        %v6049 = vpop.f32.mrf.mxu0
        %v6050 = vpop.f32.mrf.mxu0
        %v6051 = vadd.f32 0.0, %v6050
        %v6052 = vpop.f32.mrf.mxu0
        %6053 = vmatprep.mubr.bf16.mxu0 0
        %6054 = vmatmul.mubr.bf16.gmra.mxu0 %v5871
        %v6055 = vpop.f32.mrf.mxu0
        %v6056 = vadd.f32 0.0, %v6055
        %v6057 = vpop.f32.mrf.mxu0
        %v6058 = vpop.f32.mrf.mxu0
        %v6059 = vadd.f32 0.0, %v6058
        %v6060 = vpop.f32.mrf.mxu0
        %6061 = vmatprep.mubr.bf16.mxu0 0
        %6062 = vmatmul.mubr.bf16.gmra.mxu0 %v5880
        %v6063 = vpop.f32.mrf.mxu0
        %v6064 = vadd.f32 0.0, %v6063
        %v6065 = vpop.f32.mrf.mxu0
        %v6066 = vpop.f32.mrf.mxu0
        %v6067 = vadd.f32 0.0, %v6066
        %v6068 = vpop.f32.mrf.mxu0
        %6069 = vmatprep.mubr.bf16.mxu0 0
        %6070 = vmatmul.mubr.bf16.gmra.mxu0 %v5889
        %v6071 = vpop.f32.mrf.mxu0
        %v6072 = vadd.f32 0.0, %v6071
        %v6073 = vpop.f32.mrf.mxu0
        %v6074 = vpop.f32.mrf.mxu0
        %v6075 = vadd.f32 0.0, %v6074
        %v6076 = vpop.f32.mrf.mxu0
        %6077 = vmatprep.mubr.bf16.mxu0 0
        %6078 = vmatmul.mubr.bf16.gmra.mxu0 %v5898
        %v6079 = vpop.f32.mrf.mxu0
        %v6080 = vadd.f32 0.0, %v6079
        %v6081 = vpop.f32.mrf.mxu0
        %v6082 = vpop.f32.mrf.mxu0
        %v6083 = vadd.f32 0.0, %v6082
        %v6084 = vpop.f32.mrf.mxu0
        %6085 = vmatprep.mubr.bf16.mxu0 0
        %6086 = vmatmul.mubr.bf16.gmra.mxu0 %v5907
        %v6087 = vpop.f32.mrf.mxu0
        %v6088 = vadd.f32 0.0, %v6087
        %v6089 = vpop.f32.mrf.mxu0
        %v6090 = vpop.f32.mrf.mxu0
        %v6091 = vadd.f32 0.0, %v6090
        %v6092 = vpop.f32.mrf.mxu0
        %6093 = vdwg.mxu0
        %v6094 = vadd.f32 %v5344, %v5960
        %v6095 = vadd.f32 %v5345, %v5963
        %v6096 = vadd.f32 %v5346, %v5968
        %v6097 = vadd.f32 %v5347, %v5971
        %v6098 = vadd.f32 %v5348, %v5976
        %v6099 = vadd.f32 %v5349, %v5979
        %v6100 = vadd.f32 %v5350, %v5984
        %v6101 = vadd.f32 %v5351, %v5987
        %v6102 = vadd.f32 %v5352, %v5992
        %v6103 = vadd.f32 %v5353, %v5995
        %v6104 = vadd.f32 %v5354, %v6000
        %v6105 = vadd.f32 %v5355, %v6003
        %v6106 = vadd.f32 %v5356, %v6008
        %v6107 = vadd.f32 %v5357, %v6011
        %v6108 = vadd.f32 %v5358, %v6016
        %v6109 = vadd.f32 %v5359, %v6019
        %v6110 = vadd.f32 %v5360, %v6024
        %v6111 = vadd.f32 %v5361, %v6027
        %v6112 = vadd.f32 %v5362, %v6032
        %v6113 = vadd.f32 %v5363, %v6035
        %v6114 = vadd.f32 %v5364, %v6040
        %v6115 = vadd.f32 %v5365, %v6043
        %v6116 = vadd.f32 %v5366, %v6048
        %v6117 = vadd.f32 %v5367, %v6051
        %v6118 = vadd.f32 %v5368, %v6056
        %v6119 = vadd.f32 %v5369, %v6059
        %v6120 = vadd.f32 %v5370, %v6064
        %v6121 = vadd.f32 %v5371, %v6067
        %v6122 = vadd.f32 %v5372, %v6072
        %v6123 = vadd.f32 %v5373, %v6075
        %v6124 = vadd.f32 %v5374, %v6080
        %v6125 = vadd.f32 %v5375, %v6083
        %v6126 = vadd.f32 %v5376, %v6088
        %v6127 = vadd.f32 %v5377, %v6091
        %s6128 = scalar_lea.vmem [#allocation13], 256
        %v6129 = vld [vmem:[%s6128] sm:$0xff]
        %v6130 = vld [vmem:[%s6128 + $0x8] sm:$0xff]
        %v6131 = vld [vmem:[%s6128 + $0x10] sm:$0xff]
        %v6132 = vld [vmem:[%s6128 + $0x18] sm:$0xff]
        %v6133 = vld [vmem:[%s6128 + $0x20] sm:$0xff]
        %v6134 = vld [vmem:[%s6128 + $0x28] sm:$0xff]
        %v6135 = vld [vmem:[%s6128 + $0x30] sm:$0xff]
        %v6136 = vld [vmem:[%s6128 + $0x38] sm:$0xff]
        %v6137 = vld [vmem:[%s6128 + $0x40] sm:$0xff]
        %v6138 = vld [vmem:[%s6128 + $0x48] sm:$0xff]
        %v6139 = vld [vmem:[%s6128 + $0x50] sm:$0xff]
        %v6140 = vld [vmem:[%s6128 + $0x58] sm:$0xff]
        %v6141 = vld [vmem:[%s6128 + $0x60] sm:$0xff]
        %v6142 = vld [vmem:[%s6128 + $0x68] sm:$0xff]
        %v6143 = vld [vmem:[%s6128 + $0x70] sm:$0xff]
        %v6144 = vld [vmem:[%s6128 + $0x78] sm:$0xff]
        %s6145 = scalar_lea.vmem [#allocation14], 256
        %v6146 = vld [vmem:[%s6145] sm:$0xff]
        %v6147 = vld [vmem:[%s6145 + $0x8] sm:$0xff]
        %v6148 = vld [vmem:[%s6145 + $0x10] sm:$0xff]
        %v6149 = vld [vmem:[%s6145 + $0x18] sm:$0xff]
        %v6150 = vld [vmem:[%s6145 + $0x20] sm:$0xff]
        %v6151 = vld [vmem:[%s6145 + $0x28] sm:$0xff]
        %v6152 = vld [vmem:[%s6145 + $0x30] sm:$0xff]
        %v6153 = vld [vmem:[%s6145 + $0x38] sm:$0xff]
        %v6154 = vld [vmem:[%s6145 + $0x40] sm:$0xff]
        %v6155 = vld [vmem:[%s6145 + $0x48] sm:$0xff]
        %v6156 = vld [vmem:[%s6145 + $0x50] sm:$0xff]
        %v6157 = vld [vmem:[%s6145 + $0x58] sm:$0xff]
        %v6158 = vld [vmem:[%s6145 + $0x60] sm:$0xff]
        %v6159 = vld [vmem:[%s6145 + $0x68] sm:$0xff]
        %v6160 = vld [vmem:[%s6145 + $0x70] sm:$0xff]
        %v6161 = vld [vmem:[%s6145 + $0x78] sm:$0xff]
        %v6162 = vld [vmem:[#allocation2 + $0x10] sm:$0xe]
        %v6163 = vld [vmem:[#allocation2 + $0x14] sm:$0xf]
        %v6164 = vld [vmem:[#allocation2 + $0x18] sm:$0xf]
        %v6165 = vld [vmem:[#allocation2 + $0x1c] sm:$0xf]
        %v6166 = vld [vmem:[#allocation2 + $0x20] sm:$0xf]
        %v6167 = vld [vmem:[#allocation2 + $0x24] sm:$0xf]
        %v6168 = vld [vmem:[#allocation2 + $0x28] sm:$0xf]
        %v6169 = vld [vmem:[#allocation2 + $0x2c] sm:$0xf]
        %v6170 = vld [vmem:[#allocation2 + $0x30] sm:$0xf]
        %v6171 = vld [vmem:[#allocation2 + $0x34] sm:$0xf]
        %v6172 = vld [vmem:[#allocation2 + $0x38] sm:$0xf]
        %v6173 = vld [vmem:[#allocation2 + $0x3c] sm:$0xf]
        %v6174 = vld [vmem:[#allocation2 + $0x40] sm:$0xf]
        %v6175 = vld [vmem:[#allocation2 + $0x44] sm:$0xf]
        %v6176 = vld [vmem:[#allocation2 + $0x48] sm:$0xf]
        %v6177 = vld [vmem:[#allocation2 + $0x4c] sm:$0xf]
        %v6178 = vld [vmem:[#allocation2 + $0x50] sm:$0xf]
        %v6179 = vld [vmem:[#allocation2 + $0x54] sm:$0xf]
        %v6180 = vld [vmem:[#allocation2 + $0x58] sm:$0xf]
        %v6181 = vld [vmem:[#allocation2 + $0x5c] sm:$0xf]
        %v6182 = vld [vmem:[#allocation2 + $0x60] sm:$0xf]
        %v6183 = vld [vmem:[#allocation2 + $0x64] sm:$0xf]
        %v6184 = vld [vmem:[#allocation2 + $0x68] sm:$0xf]
        %v6185 = vld [vmem:[#allocation2 + $0x6c] sm:$0xf]
        %v6186 = vld [vmem:[#allocation2 + $0x70] sm:$0xf]
        %v6187 = vld [vmem:[#allocation2 + $0x74] sm:$0xf]
        %v6188 = vld [vmem:[#allocation2 + $0x78] sm:$0xf]
        %v6189 = vld [vmem:[#allocation2 + $0x7c] sm:$0xf]
        %v6190 = vld [vmem:[#allocation2 + $0x80] sm:$0xf]
        %v6191 = vld [vmem:[#allocation2 + $0x84] sm:$0xf]
        %v6192 = vld [vmem:[#allocation2 + $0x88] sm:$0xf]
        %v6193 = vld [vmem:[#allocation2 + $0x8c] sm:$0xf]
        %v6194 = vld [vmem:[#allocation2 + $0x90] sm:$0xf]
        %v6195 = vld [vmem:[#allocation2 + $0x94] sm:$0xf]
        %v6196 = vld [vmem:[#allocation2 + $0x98] sm:$0x3]
        %v6232 = vunpack.c.l.b16 %v6162
        %v6233 = vunpack.c.l.b16 %v6163
        %v6234 = vunpack.c.l.b16 %v6164
        %v6235 = vunpack.c.l.b16 %v6165
        %v6236 = vunpack.c.l.b16 %v6166
        %v6237 = vunpack.c.l.b16 %v6167
        %v6238 = vunpack.c.l.b16 %v6168
        %v6239 = vunpack.c.l.b16 %v6169
        %v6240 = vunpack.c.l.b16 %v6170
        %v6241 = vunpack.c.l.b16 %v6171
        %v6242 = vunpack.c.l.b16 %v6172
        %v6243 = vunpack.c.l.b16 %v6173
        %v6244 = vunpack.c.l.b16 %v6174
        %v6245 = vunpack.c.l.b16 %v6175
        %v6246 = vunpack.c.l.b16 %v6176
        %v6247 = vunpack.c.l.b16 %v6177
        %v6248 = vunpack.c.l.b16 %v6178
        %v6249 = vunpack.c.l.b16 %v6179
        %v6250 = vunpack.c.l.b16 %v6180
        %v6251 = vunpack.c.l.b16 %v6181
        %v6252 = vunpack.c.l.b16 %v6182
        %v6253 = vunpack.c.l.b16 %v6183
        %v6254 = vunpack.c.l.b16 %v6184
        %v6255 = vunpack.c.l.b16 %v6185
        %v6256 = vunpack.c.l.b16 %v6186
        %v6257 = vunpack.c.l.b16 %v6187
        %v6258 = vunpack.c.l.b16 %v6188
        %v6259 = vunpack.c.l.b16 %v6189
        %v6260 = vunpack.c.l.b16 %v6190
        %v6261 = vunpack.c.l.b16 %v6191
        %v6262 = vunpack.c.l.b16 %v6192
        %v6263 = vunpack.c.l.b16 %v6193
        %v6264 = vunpack.c.l.b16 %v6194
        %v6265 = vunpack.c.l.b16 %v6195
        %v6266 = vunpack.c.l.b16 %v6196
        %v6267 = vpack.c.b16 %v6233, %v6232
        %v6268 = vpack.c.b16 %v6235, %v6234
        %v6269 = vpack.c.b16 %v6237, %v6236
        %v6270 = vpack.c.b16 %v6239, %v6238
        %v6271 = vpack.c.b16 %v6241, %v6240
        %v6272 = vpack.c.b16 %v6243, %v6242
        %v6273 = vpack.c.b16 %v6245, %v6244
        %v6274 = vpack.c.b16 %v6247, %v6246
        %v6275 = vpack.c.b16 %v6249, %v6248
        %v6276 = vpack.c.b16 %v6251, %v6250
        %v6277 = vpack.c.b16 %v6253, %v6252
        %v6278 = vpack.c.b16 %v6255, %v6254
        %v6279 = vpack.c.b16 %v6257, %v6256
        %v6280 = vpack.c.b16 %v6259, %v6258
        %v6281 = vpack.c.b16 %v6261, %v6260
        %v6282 = vpack.c.b16 %v6263, %v6262
        %v6283 = vpack.c.b16 %v6265, %v6264
        %v6284 = vpack.c.b16 %v6266, %v6266
        %v6286 = vshrl.u32 %v6267, 16
        %v6288 = vrot.slane %v6286, 1
        %v6289 = vshll.u32 %v6267, 16
        %v6291 = vrot.slane %v6289, 2
        %v6292 = vor.u32 %v6288, %v6291
        %v6294 = vshrl.u32 %v6268, 16
        %v6296 = vrot.slane %v6294, 1
        %v6297 = vshll.u32 %v6268, 16
        %v6299 = vrot.slane %v6297, 2
        %v6300 = vor.u32 %v6296, %v6299
        %v6301 = vsel %vm5746, %v6292, %v6300
        %v6303 = vshrl.u32 %v6269, 16
        %v6305 = vrot.slane %v6303, 1
        %v6306 = vshll.u32 %v6269, 16
        %v6308 = vrot.slane %v6306, 2
        %v6309 = vor.u32 %v6305, %v6308
        %v6310 = vsel %vm5746, %v6300, %v6309
        %v6312 = vshrl.u32 %v6270, 16
        %v6314 = vrot.slane %v6312, 1
        %v6315 = vshll.u32 %v6270, 16
        %v6317 = vrot.slane %v6315, 2
        %v6318 = vor.u32 %v6314, %v6317
        %v6319 = vsel %vm5746, %v6309, %v6318
        %v6321 = vshrl.u32 %v6271, 16
        %v6323 = vrot.slane %v6321, 1
        %v6324 = vshll.u32 %v6271, 16
        %v6326 = vrot.slane %v6324, 2
        %v6327 = vor.u32 %v6323, %v6326
        %v6328 = vsel %vm5746, %v6318, %v6327
        %v6330 = vshrl.u32 %v6272, 16
        %v6332 = vrot.slane %v6330, 1
        %v6333 = vshll.u32 %v6272, 16
        %v6335 = vrot.slane %v6333, 2
        %v6336 = vor.u32 %v6332, %v6335
        %v6337 = vsel %vm5746, %v6327, %v6336
        %v6339 = vshrl.u32 %v6273, 16
        %v6341 = vrot.slane %v6339, 1
        %v6342 = vshll.u32 %v6273, 16
        %v6344 = vrot.slane %v6342, 2
        %v6345 = vor.u32 %v6341, %v6344
        %v6346 = vsel %vm5746, %v6336, %v6345
        %v6348 = vshrl.u32 %v6274, 16
        %v6350 = vrot.slane %v6348, 1
        %v6351 = vshll.u32 %v6274, 16
        %v6353 = vrot.slane %v6351, 2
        %v6354 = vor.u32 %v6350, %v6353
        %v6355 = vsel %vm5746, %v6345, %v6354
        %v6357 = vshrl.u32 %v6275, 16
        %v6359 = vrot.slane %v6357, 1
        %v6360 = vshll.u32 %v6275, 16
        %v6362 = vrot.slane %v6360, 2
        %v6363 = vor.u32 %v6359, %v6362
        %v6364 = vsel %vm5746, %v6354, %v6363
        %v6366 = vshrl.u32 %v6276, 16
        %v6368 = vrot.slane %v6366, 1
        %v6369 = vshll.u32 %v6276, 16
        %v6371 = vrot.slane %v6369, 2
        %v6372 = vor.u32 %v6368, %v6371
        %v6373 = vsel %vm5746, %v6363, %v6372
        %v6375 = vshrl.u32 %v6277, 16
        %v6377 = vrot.slane %v6375, 1
        %v6378 = vshll.u32 %v6277, 16
        %v6380 = vrot.slane %v6378, 2
        %v6381 = vor.u32 %v6377, %v6380
        %v6382 = vsel %vm5746, %v6372, %v6381
        %v6384 = vshrl.u32 %v6278, 16
        %v6386 = vrot.slane %v6384, 1
        %v6387 = vshll.u32 %v6278, 16
        %v6389 = vrot.slane %v6387, 2
        %v6390 = vor.u32 %v6386, %v6389
        %v6391 = vsel %vm5746, %v6381, %v6390
        %v6393 = vshrl.u32 %v6279, 16
        %v6395 = vrot.slane %v6393, 1
        %v6396 = vshll.u32 %v6279, 16
        %v6398 = vrot.slane %v6396, 2
        %v6399 = vor.u32 %v6395, %v6398
        %v6400 = vsel %vm5746, %v6390, %v6399
        %v6402 = vshrl.u32 %v6280, 16
        %v6404 = vrot.slane %v6402, 1
        %v6405 = vshll.u32 %v6280, 16
        %v6407 = vrot.slane %v6405, 2
        %v6408 = vor.u32 %v6404, %v6407
        %v6409 = vsel %vm5746, %v6399, %v6408
        %v6411 = vshrl.u32 %v6281, 16
        %v6413 = vrot.slane %v6411, 1
        %v6414 = vshll.u32 %v6281, 16
        %v6416 = vrot.slane %v6414, 2
        %v6417 = vor.u32 %v6413, %v6416
        %v6418 = vsel %vm5746, %v6408, %v6417
        %v6420 = vshrl.u32 %v6282, 16
        %v6422 = vrot.slane %v6420, 1
        %v6423 = vshll.u32 %v6282, 16
        %v6425 = vrot.slane %v6423, 2
        %v6426 = vor.u32 %v6422, %v6425
        %v6427 = vsel %vm5746, %v6417, %v6426
        %v6429 = vshrl.u32 %v6283, 16
        %v6431 = vrot.slane %v6429, 1
        %v6432 = vshll.u32 %v6283, 16
        %v6434 = vrot.slane %v6432, 2
        %v6435 = vor.u32 %v6431, %v6434
        %v6436 = vsel %vm5746, %v6426, %v6435
        %v6438 = vshrl.u32 %v6284, 16
        %v6440 = vrot.slane %v6438, 1
        %v6441 = vshll.u32 %v6284, 16
        %v6443 = vrot.slane %v6441, 2
        %v6444 = vor.u32 %v6440, %v6443
        %v6445 = vsel %vm5746, %v6435, %v6444
        %v6479 = vunpack.c.l.b16 %v6129
        %v6480 = vunpack.c.h.b16 %v6129
        %v6481 = vunpack.c.l.b16 %v6130
        %v6482 = vunpack.c.h.b16 %v6130
        %v6483 = vunpack.c.l.b16 %v6131
        %v6484 = vunpack.c.h.b16 %v6131
        %v6485 = vunpack.c.l.b16 %v6132
        %v6486 = vunpack.c.h.b16 %v6132
        %v6487 = vunpack.c.l.b16 %v6133
        %v6488 = vunpack.c.h.b16 %v6133
        %v6489 = vunpack.c.l.b16 %v6134
        %v6490 = vunpack.c.h.b16 %v6134
        %v6491 = vunpack.c.l.b16 %v6135
        %v6492 = vunpack.c.h.b16 %v6135
        %v6493 = vunpack.c.l.b16 %v6136
        %v6494 = vunpack.c.h.b16 %v6136
        %v6495 = vunpack.c.l.b16 %v6137
        %v6496 = vunpack.c.h.b16 %v6137
        %v6497 = vunpack.c.l.b16 %v6138
        %v6498 = vunpack.c.h.b16 %v6138
        %v6499 = vunpack.c.l.b16 %v6139
        %v6500 = vunpack.c.h.b16 %v6139
        %v6501 = vunpack.c.l.b16 %v6140
        %v6502 = vunpack.c.h.b16 %v6140
        %v6503 = vunpack.c.l.b16 %v6141
        %v6504 = vunpack.c.h.b16 %v6141
        %v6505 = vunpack.c.l.b16 %v6142
        %v6506 = vunpack.c.h.b16 %v6142
        %v6507 = vunpack.c.l.b16 %v6143
        %v6508 = vunpack.c.h.b16 %v6143
        %v6509 = vunpack.c.l.b16 %v6144
        %v6510 = vunpack.c.h.b16 %v6144
        %v6511 = vpack.c.b16 %v6481, %v6479
        %v6512 = vpack.c.b16 %v6482, %v6480
        %v6513 = vpack.c.b16 %v6485, %v6483
        %v6514 = vpack.c.b16 %v6486, %v6484
        %v6515 = vpack.c.b16 %v6489, %v6487
        %v6516 = vpack.c.b16 %v6490, %v6488
        %v6517 = vpack.c.b16 %v6493, %v6491
        %v6518 = vpack.c.b16 %v6494, %v6492
        %v6519 = vpack.c.b16 %v6497, %v6495
        %v6520 = vpack.c.b16 %v6498, %v6496
        %v6521 = vpack.c.b16 %v6501, %v6499
        %v6522 = vpack.c.b16 %v6502, %v6500
        %v6523 = vpack.c.b16 %v6505, %v6503
        %v6524 = vpack.c.b16 %v6506, %v6504
        %v6525 = vpack.c.b16 %v6509, %v6507
        %v6526 = vpack.c.b16 %v6510, %v6508
        %6543 = vmatprep.subr.bf16.mxu0 %v6526
        %6544 = vmatpush1.bf16.msra.mxu0 %v6525
        %6545 = vmatprep.subr.bf16.mxu0 %v6524
        %6546 = vmatpush1.bf16.msra.mxu0 %v6523
        %6547 = vmatprep.subr.bf16.mxu0 %v6522
        %6548 = vmatpush1.bf16.msra.mxu0 %v6521
        %6549 = vmatprep.subr.bf16.mxu0 %v6520
        %6550 = vmatpush1.bf16.msra.mxu0 %v6519
        %6551 = vmatprep.subr.bf16.mxu0 %v6518
        %6552 = vmatpush1.bf16.msra.mxu0 %v6517
        %6553 = vmatprep.subr.bf16.mxu0 %v6516
        %6554 = vmatpush1.bf16.msra.mxu0 %v6515
        %6555 = vmatprep.subr.bf16.mxu0 %v6514
        %6556 = vmatpush1.bf16.msra.mxu0 %v6513
        %6557 = vmatprep.subr.bf16.mxu0 %v6512
        %6558 = vmatpush1.bf16.msra.mxu0 %v6511
        %6559 = vmatprep.subr.bf16.mxu0 0
        %6560 = vmatpush2.bf16.msra.mxu0 0
        %6561 = vmatprep.subr.bf16.mxu0 0
        %6562 = vmatpush2.bf16.msra.mxu0 0
        %6563 = vmatprep.subr.bf16.mxu0 0
        %6564 = vmatpush2.bf16.msra.mxu0 0
        %6565 = vmatprep.subr.bf16.mxu0 0
        %6566 = vmatpush2.bf16.msra.mxu0 0
        %6567 = vmatprep.subr.bf16.mxu0 0
        %6568 = vmatpush2.bf16.msra.mxu0 0
        %6569 = vmatprep.subr.bf16.mxu0 0
        %6570 = vmatpush2.bf16.msra.mxu0 0
        %6571 = vmatprep.subr.bf16.mxu0 0
        %6572 = vmatpush2.bf16.msra.mxu0 0
        %6573 = vmatprep.subr.bf16.mxu0 0
        %6574 = vmatpush2.bf16.msra.mxu0 0
        %6575 = vmatprep.mubr.bf16.mxu0 0
        %6576 = vmatmul.mubr.bf16.gmra.mxu0 %v6301
        %v6577 = vpop.f32.mrf.mxu0
        %v6578 = vadd.f32 0.0, %v6577
        %v6579 = vpop.f32.mrf.mxu0
        %v6580 = vadd.f32 0.0, %v6579
        %v6581 = vpop.f32.mrf.mxu0
        %v6582 = vadd.f32 0.0, %v6581
        %v6583 = vpop.f32.mrf.mxu0
        %v6584 = vadd.f32 0.0, %v6583
        %6585 = vmatprep.mubr.bf16.mxu0 0
        %6586 = vmatmul.mubr.bf16.gmra.mxu0 %v6310
        %v6587 = vpop.f32.mrf.mxu0
        %v6588 = vadd.f32 0.0, %v6587
        %v6589 = vpop.f32.mrf.mxu0
        %v6590 = vadd.f32 0.0, %v6589
        %v6591 = vpop.f32.mrf.mxu0
        %v6592 = vadd.f32 0.0, %v6591
        %v6593 = vpop.f32.mrf.mxu0
        %v6594 = vadd.f32 0.0, %v6593
        %6595 = vmatprep.mubr.bf16.mxu0 0
        %6596 = vmatmul.mubr.bf16.gmra.mxu0 %v6319
        %v6597 = vpop.f32.mrf.mxu0
        %v6598 = vadd.f32 0.0, %v6597
        %v6599 = vpop.f32.mrf.mxu0
        %v6600 = vadd.f32 0.0, %v6599
        %v6601 = vpop.f32.mrf.mxu0
        %v6602 = vadd.f32 0.0, %v6601
        %v6603 = vpop.f32.mrf.mxu0
        %v6604 = vadd.f32 0.0, %v6603
        %6605 = vmatprep.mubr.bf16.mxu0 0
        %6606 = vmatmul.mubr.bf16.gmra.mxu0 %v6328
        %v6607 = vpop.f32.mrf.mxu0
        %v6608 = vadd.f32 0.0, %v6607
        %v6609 = vpop.f32.mrf.mxu0
        %v6610 = vadd.f32 0.0, %v6609
        %v6611 = vpop.f32.mrf.mxu0
        %v6612 = vadd.f32 0.0, %v6611
        %v6613 = vpop.f32.mrf.mxu0
        %v6614 = vadd.f32 0.0, %v6613
        %6615 = vmatprep.mubr.bf16.mxu0 0
        %6616 = vmatmul.mubr.bf16.gmra.mxu0 %v6337
        %v6617 = vpop.f32.mrf.mxu0
        %v6618 = vadd.f32 0.0, %v6617
        %v6619 = vpop.f32.mrf.mxu0
        %v6620 = vadd.f32 0.0, %v6619
        %v6621 = vpop.f32.mrf.mxu0
        %v6622 = vadd.f32 0.0, %v6621
        %v6623 = vpop.f32.mrf.mxu0
        %v6624 = vadd.f32 0.0, %v6623
        %6625 = vmatprep.mubr.bf16.mxu0 0
        %6626 = vmatmul.mubr.bf16.gmra.mxu0 %v6346
        %v6627 = vpop.f32.mrf.mxu0
        %v6628 = vadd.f32 0.0, %v6627
        %v6629 = vpop.f32.mrf.mxu0
        %v6630 = vadd.f32 0.0, %v6629
        %v6631 = vpop.f32.mrf.mxu0
        %v6632 = vadd.f32 0.0, %v6631
        %v6633 = vpop.f32.mrf.mxu0
        %v6634 = vadd.f32 0.0, %v6633
        %6635 = vmatprep.mubr.bf16.mxu0 0
        %6636 = vmatmul.mubr.bf16.gmra.mxu0 %v6355
        %v6637 = vpop.f32.mrf.mxu0
        %v6638 = vadd.f32 0.0, %v6637
        %v6639 = vpop.f32.mrf.mxu0
        %v6640 = vadd.f32 0.0, %v6639
        %v6641 = vpop.f32.mrf.mxu0
        %v6642 = vadd.f32 0.0, %v6641
        %v6643 = vpop.f32.mrf.mxu0
        %v6644 = vadd.f32 0.0, %v6643
        %6645 = vmatprep.mubr.bf16.mxu0 0
        %6646 = vmatmul.mubr.bf16.gmra.mxu0 %v6364
        %v6647 = vpop.f32.mrf.mxu0
        %v6648 = vadd.f32 0.0, %v6647
        %v6649 = vpop.f32.mrf.mxu0
        %v6650 = vadd.f32 0.0, %v6649
        %v6651 = vpop.f32.mrf.mxu0
        %v6652 = vadd.f32 0.0, %v6651
        %v6653 = vpop.f32.mrf.mxu0
        %v6654 = vadd.f32 0.0, %v6653
        %6655 = vmatprep.mubr.bf16.mxu0 0
        %6656 = vmatmul.mubr.bf16.gmra.mxu0 %v6373
        %v6657 = vpop.f32.mrf.mxu0
        %v6658 = vadd.f32 0.0, %v6657
        %v6659 = vpop.f32.mrf.mxu0
        %v6660 = vadd.f32 0.0, %v6659
        %v6661 = vpop.f32.mrf.mxu0
        %v6662 = vadd.f32 0.0, %v6661
        %v6663 = vpop.f32.mrf.mxu0
        %v6664 = vadd.f32 0.0, %v6663
        %6665 = vmatprep.mubr.bf16.mxu0 0
        %6666 = vmatmul.mubr.bf16.gmra.mxu0 %v6382
        %v6667 = vpop.f32.mrf.mxu0
        %v6668 = vadd.f32 0.0, %v6667
        %v6669 = vpop.f32.mrf.mxu0
        %v6670 = vadd.f32 0.0, %v6669
        %v6671 = vpop.f32.mrf.mxu0
        %v6672 = vadd.f32 0.0, %v6671
        %v6673 = vpop.f32.mrf.mxu0
        %v6674 = vadd.f32 0.0, %v6673
        %6675 = vmatprep.mubr.bf16.mxu0 0
        %6676 = vmatmul.mubr.bf16.gmra.mxu0 %v6391
        %v6677 = vpop.f32.mrf.mxu0
        %v6678 = vadd.f32 0.0, %v6677
        %v6679 = vpop.f32.mrf.mxu0
        %v6680 = vadd.f32 0.0, %v6679
        %v6681 = vpop.f32.mrf.mxu0
        %v6682 = vadd.f32 0.0, %v6681
        %v6683 = vpop.f32.mrf.mxu0
        %v6684 = vadd.f32 0.0, %v6683
        %6685 = vmatprep.mubr.bf16.mxu0 0
        %6686 = vmatmul.mubr.bf16.gmra.mxu0 %v6400
        %v6687 = vpop.f32.mrf.mxu0
        %v6688 = vadd.f32 0.0, %v6687
        %v6689 = vpop.f32.mrf.mxu0
        %v6690 = vadd.f32 0.0, %v6689
        %v6691 = vpop.f32.mrf.mxu0
        %v6692 = vadd.f32 0.0, %v6691
        %v6693 = vpop.f32.mrf.mxu0
        %v6694 = vadd.f32 0.0, %v6693
        %6695 = vmatprep.mubr.bf16.mxu0 0
        %6696 = vmatmul.mubr.bf16.gmra.mxu0 %v6409
        %v6697 = vpop.f32.mrf.mxu0
        %v6698 = vadd.f32 0.0, %v6697
        %v6699 = vpop.f32.mrf.mxu0
        %v6700 = vadd.f32 0.0, %v6699
        %v6701 = vpop.f32.mrf.mxu0
        %v6702 = vadd.f32 0.0, %v6701
        %v6703 = vpop.f32.mrf.mxu0
        %v6704 = vadd.f32 0.0, %v6703
        %6705 = vmatprep.mubr.bf16.mxu0 0
        %6706 = vmatmul.mubr.bf16.gmra.mxu0 %v6418
        %v6707 = vpop.f32.mrf.mxu0
        %v6708 = vadd.f32 0.0, %v6707
        %v6709 = vpop.f32.mrf.mxu0
        %v6710 = vadd.f32 0.0, %v6709
        %v6711 = vpop.f32.mrf.mxu0
        %v6712 = vadd.f32 0.0, %v6711
        %v6713 = vpop.f32.mrf.mxu0
        %v6714 = vadd.f32 0.0, %v6713
        %6715 = vmatprep.mubr.bf16.mxu0 0
        %6716 = vmatmul.mubr.bf16.gmra.mxu0 %v6427
        %v6717 = vpop.f32.mrf.mxu0
        %v6718 = vadd.f32 0.0, %v6717
        %v6719 = vpop.f32.mrf.mxu0
        %v6720 = vadd.f32 0.0, %v6719
        %v6721 = vpop.f32.mrf.mxu0
        %v6722 = vadd.f32 0.0, %v6721
        %v6723 = vpop.f32.mrf.mxu0
        %v6724 = vadd.f32 0.0, %v6723
        %6725 = vmatprep.mubr.bf16.mxu0 0
        %6726 = vmatmul.mubr.bf16.gmra.mxu0 %v6436
        %v6727 = vpop.f32.mrf.mxu0
        %v6728 = vadd.f32 0.0, %v6727
        %v6729 = vpop.f32.mrf.mxu0
        %v6730 = vadd.f32 0.0, %v6729
        %v6731 = vpop.f32.mrf.mxu0
        %v6732 = vadd.f32 0.0, %v6731
        %v6733 = vpop.f32.mrf.mxu0
        %v6734 = vadd.f32 0.0, %v6733
        %6735 = vmatprep.mubr.bf16.mxu0 0
        %6736 = vmatmul.mubr.bf16.gmra.mxu0 %v6445
        %v6737 = vpop.f32.mrf.mxu0
        %v6738 = vadd.f32 0.0, %v6737
        %v6739 = vpop.f32.mrf.mxu0
        %v6740 = vadd.f32 0.0, %v6739
        %v6741 = vpop.f32.mrf.mxu0
        %v6742 = vadd.f32 0.0, %v6741
        %v6743 = vpop.f32.mrf.mxu0
        %v6744 = vadd.f32 0.0, %v6743
        %6745 = vdwg.mxu0
        %v6746 = vadd.f32 %v5708, %v6578
        %v6747 = vadd.f32 %v5709, %v6582
        %v6748 = vadd.f32 %v5710, %v6588
        %v6749 = vadd.f32 %v5711, %v6592
        %v6750 = vadd.f32 %v5712, %v6598
        %v6751 = vadd.f32 %v5713, %v6602
        %v6752 = vadd.f32 %v5714, %v6608
        %v6753 = vadd.f32 %v5715, %v6612
        %v6754 = vadd.f32 %v5716, %v6618
        %v6755 = vadd.f32 %v5717, %v6622
        %v6756 = vadd.f32 %v5718, %v6628
        %v6757 = vadd.f32 %v5719, %v6632
        %v6758 = vadd.f32 %v5720, %v6638
        %v6759 = vadd.f32 %v5721, %v6642
        %v6760 = vadd.f32 %v5722, %v6648
        %v6761 = vadd.f32 %v5723, %v6652
        %v6762 = vadd.f32 %v5724, %v6658
        %v6763 = vadd.f32 %v5725, %v6662
        %v6764 = vadd.f32 %v5726, %v6668
        %v6765 = vadd.f32 %v5727, %v6672
        %v6766 = vadd.f32 %v5728, %v6678
        %v6767 = vadd.f32 %v5729, %v6682
        %v6768 = vadd.f32 %v5730, %v6688
        %v6769 = vadd.f32 %v5731, %v6692
        %v6770 = vadd.f32 %v5732, %v6698
        %v6771 = vadd.f32 %v5733, %v6702
        %v6772 = vadd.f32 %v5734, %v6708
        %v6773 = vadd.f32 %v5735, %v6712
        %v6774 = vadd.f32 %v5736, %v6718
        %v6775 = vadd.f32 %v5737, %v6722
        %v6776 = vadd.f32 %v5738, %v6728
        %v6777 = vadd.f32 %v5739, %v6732
        %v6778 = vadd.f32 %v5740, %v6738
        %v6779 = vadd.f32 %v5741, %v6742
        %v6780 = vadd.f32 %v6094, %v6580
        %v6781 = vadd.f32 %v6095, %v6584
        %v6782 = vadd.f32 %v6096, %v6590
        %v6783 = vadd.f32 %v6097, %v6594
        %v6784 = vadd.f32 %v6098, %v6600
        %v6785 = vadd.f32 %v6099, %v6604
        %v6786 = vadd.f32 %v6100, %v6610
        %v6787 = vadd.f32 %v6101, %v6614
        %v6788 = vadd.f32 %v6102, %v6620
        %v6789 = vadd.f32 %v6103, %v6624
        %v6790 = vadd.f32 %v6104, %v6630
        %v6791 = vadd.f32 %v6105, %v6634
        %v6792 = vadd.f32 %v6106, %v6640
        %v6793 = vadd.f32 %v6107, %v6644
        %v6794 = vadd.f32 %v6108, %v6650
        %v6795 = vadd.f32 %v6109, %v6654
        %v6796 = vadd.f32 %v6110, %v6660
        %v6797 = vadd.f32 %v6111, %v6664
        %v6798 = vadd.f32 %v6112, %v6670
        %v6799 = vadd.f32 %v6113, %v6674
        %v6800 = vadd.f32 %v6114, %v6680
        %v6801 = vadd.f32 %v6115, %v6684
        %v6802 = vadd.f32 %v6116, %v6690
        %v6803 = vadd.f32 %v6117, %v6694
        %v6804 = vadd.f32 %v6118, %v6700
        %v6805 = vadd.f32 %v6119, %v6704
        %v6806 = vadd.f32 %v6120, %v6710
        %v6807 = vadd.f32 %v6121, %v6714
        %v6808 = vadd.f32 %v6122, %v6720
        %v6809 = vadd.f32 %v6123, %v6724
        %v6810 = vadd.f32 %v6124, %v6730
        %v6811 = vadd.f32 %v6125, %v6734
        %v6812 = vadd.f32 %v6126, %v6740
        %v6813 = vadd.f32 %v6127, %v6744
        %v6814 = vld [vmem:[#allocation3 + $0x10] sm:$0xe]
        %v6815 = vld [vmem:[#allocation3 + $0x14] sm:$0xf]
        %v6816 = vld [vmem:[#allocation3 + $0x18] sm:$0xf]
        %v6817 = vld [vmem:[#allocation3 + $0x1c] sm:$0xf]
        %v6818 = vld [vmem:[#allocation3 + $0x20] sm:$0xf]
        %v6819 = vld [vmem:[#allocation3 + $0x24] sm:$0xf]
        %v6820 = vld [vmem:[#allocation3 + $0x28] sm:$0xf]
        %v6821 = vld [vmem:[#allocation3 + $0x2c] sm:$0xf]
        %v6822 = vld [vmem:[#allocation3 + $0x30] sm:$0xf]
        %v6823 = vld [vmem:[#allocation3 + $0x34] sm:$0xf]
        %v6824 = vld [vmem:[#allocation3 + $0x38] sm:$0xf]
        %v6825 = vld [vmem:[#allocation3 + $0x3c] sm:$0xf]
        %v6826 = vld [vmem:[#allocation3 + $0x40] sm:$0xf]
        %v6827 = vld [vmem:[#allocation3 + $0x44] sm:$0xf]
        %v6828 = vld [vmem:[#allocation3 + $0x48] sm:$0xf]
        %v6829 = vld [vmem:[#allocation3 + $0x4c] sm:$0xf]
        %v6830 = vld [vmem:[#allocation3 + $0x50] sm:$0xf]
        %v6831 = vld [vmem:[#allocation3 + $0x54] sm:$0xf]
        %v6832 = vld [vmem:[#allocation3 + $0x58] sm:$0xf]
        %v6833 = vld [vmem:[#allocation3 + $0x5c] sm:$0xf]
        %v6834 = vld [vmem:[#allocation3 + $0x60] sm:$0xf]
        %v6835 = vld [vmem:[#allocation3 + $0x64] sm:$0xf]
        %v6836 = vld [vmem:[#allocation3 + $0x68] sm:$0xf]
        %v6837 = vld [vmem:[#allocation3 + $0x6c] sm:$0xf]
        %v6838 = vld [vmem:[#allocation3 + $0x70] sm:$0xf]
        %v6839 = vld [vmem:[#allocation3 + $0x74] sm:$0xf]
        %v6840 = vld [vmem:[#allocation3 + $0x78] sm:$0xf]
        %v6841 = vld [vmem:[#allocation3 + $0x7c] sm:$0xf]
        %v6842 = vld [vmem:[#allocation3 + $0x80] sm:$0xf]
        %v6843 = vld [vmem:[#allocation3 + $0x84] sm:$0xf]
        %v6844 = vld [vmem:[#allocation3 + $0x88] sm:$0xf]
        %v6845 = vld [vmem:[#allocation3 + $0x8c] sm:$0xf]
        %v6846 = vld [vmem:[#allocation3 + $0x90] sm:$0xf]
        %v6847 = vld [vmem:[#allocation3 + $0x94] sm:$0xf]
        %v6848 = vld [vmem:[#allocation3 + $0x98] sm:$0x3]
        %v6884 = vunpack.c.l.b16 %v6814
        %v6885 = vunpack.c.l.b16 %v6815
        %v6886 = vunpack.c.l.b16 %v6816
        %v6887 = vunpack.c.l.b16 %v6817
        %v6888 = vunpack.c.l.b16 %v6818
        %v6889 = vunpack.c.l.b16 %v6819
        %v6890 = vunpack.c.l.b16 %v6820
        %v6891 = vunpack.c.l.b16 %v6821
        %v6892 = vunpack.c.l.b16 %v6822
        %v6893 = vunpack.c.l.b16 %v6823
        %v6894 = vunpack.c.l.b16 %v6824
        %v6895 = vunpack.c.l.b16 %v6825
        %v6896 = vunpack.c.l.b16 %v6826
        %v6897 = vunpack.c.l.b16 %v6827
        %v6898 = vunpack.c.l.b16 %v6828
        %v6899 = vunpack.c.l.b16 %v6829
        %v6900 = vunpack.c.l.b16 %v6830
        %v6901 = vunpack.c.l.b16 %v6831
        %v6902 = vunpack.c.l.b16 %v6832
        %v6903 = vunpack.c.l.b16 %v6833
        %v6904 = vunpack.c.l.b16 %v6834
        %v6905 = vunpack.c.l.b16 %v6835
        %v6906 = vunpack.c.l.b16 %v6836
        %v6907 = vunpack.c.l.b16 %v6837
        %v6908 = vunpack.c.l.b16 %v6838
        %v6909 = vunpack.c.l.b16 %v6839
        %v6910 = vunpack.c.l.b16 %v6840
        %v6911 = vunpack.c.l.b16 %v6841
        %v6912 = vunpack.c.l.b16 %v6842
        %v6913 = vunpack.c.l.b16 %v6843
        %v6914 = vunpack.c.l.b16 %v6844
        %v6915 = vunpack.c.l.b16 %v6845
        %v6916 = vunpack.c.l.b16 %v6846
        %v6917 = vunpack.c.l.b16 %v6847
        %v6918 = vunpack.c.l.b16 %v6848
        %v6919 = vpack.c.b16 %v6885, %v6884
        %v6920 = vpack.c.b16 %v6887, %v6886
        %v6921 = vpack.c.b16 %v6889, %v6888
        %v6922 = vpack.c.b16 %v6891, %v6890
        %v6923 = vpack.c.b16 %v6893, %v6892
        %v6924 = vpack.c.b16 %v6895, %v6894
        %v6925 = vpack.c.b16 %v6897, %v6896
        %v6926 = vpack.c.b16 %v6899, %v6898
        %v6927 = vpack.c.b16 %v6901, %v6900
        %v6928 = vpack.c.b16 %v6903, %v6902
        %v6929 = vpack.c.b16 %v6905, %v6904
        %v6930 = vpack.c.b16 %v6907, %v6906
        %v6931 = vpack.c.b16 %v6909, %v6908
        %v6932 = vpack.c.b16 %v6911, %v6910
        %v6933 = vpack.c.b16 %v6913, %v6912
        %v6934 = vpack.c.b16 %v6915, %v6914
        %v6935 = vpack.c.b16 %v6917, %v6916
        %v6936 = vpack.c.b16 %v6918, %v6918
        %v6938 = vshrl.u32 %v6919, 16
        %v6940 = vrot.slane %v6938, 1
        %v6941 = vshll.u32 %v6919, 16
        %v6943 = vrot.slane %v6941, 2
        %v6944 = vor.u32 %v6940, %v6943
        %v6946 = vshrl.u32 %v6920, 16
        %v6948 = vrot.slane %v6946, 1
        %v6949 = vshll.u32 %v6920, 16
        %v6951 = vrot.slane %v6949, 2
        %v6952 = vor.u32 %v6948, %v6951
        %v6953 = vsel %vm5746, %v6944, %v6952
        %v6955 = vshrl.u32 %v6921, 16
        %v6957 = vrot.slane %v6955, 1
        %v6958 = vshll.u32 %v6921, 16
        %v6960 = vrot.slane %v6958, 2
        %v6961 = vor.u32 %v6957, %v6960
        %v6962 = vsel %vm5746, %v6952, %v6961
        %v6964 = vshrl.u32 %v6922, 16
        %v6966 = vrot.slane %v6964, 1
        %v6967 = vshll.u32 %v6922, 16
        %v6969 = vrot.slane %v6967, 2
        %v6970 = vor.u32 %v6966, %v6969
        %v6971 = vsel %vm5746, %v6961, %v6970
        %v6973 = vshrl.u32 %v6923, 16
        %v6975 = vrot.slane %v6973, 1
        %v6976 = vshll.u32 %v6923, 16
        %v6978 = vrot.slane %v6976, 2
        %v6979 = vor.u32 %v6975, %v6978
        %v6980 = vsel %vm5746, %v6970, %v6979
        %v6982 = vshrl.u32 %v6924, 16
        %v6984 = vrot.slane %v6982, 1
        %v6985 = vshll.u32 %v6924, 16
        %v6987 = vrot.slane %v6985, 2
        %v6988 = vor.u32 %v6984, %v6987
        %v6989 = vsel %vm5746, %v6979, %v6988
        %v6991 = vshrl.u32 %v6925, 16
        %v6993 = vrot.slane %v6991, 1
        %v6994 = vshll.u32 %v6925, 16
        %v6996 = vrot.slane %v6994, 2
        %v6997 = vor.u32 %v6993, %v6996
        %v6998 = vsel %vm5746, %v6988, %v6997
        %v7000 = vshrl.u32 %v6926, 16
        %v7002 = vrot.slane %v7000, 1
        %v7003 = vshll.u32 %v6926, 16
        %v7005 = vrot.slane %v7003, 2
        %v7006 = vor.u32 %v7002, %v7005
        %v7007 = vsel %vm5746, %v6997, %v7006
        %v7009 = vshrl.u32 %v6927, 16
        %v7011 = vrot.slane %v7009, 1
        %v7012 = vshll.u32 %v6927, 16
        %v7014 = vrot.slane %v7012, 2
        %v7015 = vor.u32 %v7011, %v7014
        %v7016 = vsel %vm5746, %v7006, %v7015
        %v7018 = vshrl.u32 %v6928, 16
        %v7020 = vrot.slane %v7018, 1
        %v7021 = vshll.u32 %v6928, 16
        %v7023 = vrot.slane %v7021, 2
        %v7024 = vor.u32 %v7020, %v7023
        %v7025 = vsel %vm5746, %v7015, %v7024
        %v7027 = vshrl.u32 %v6929, 16
        %v7029 = vrot.slane %v7027, 1
        %v7030 = vshll.u32 %v6929, 16
        %v7032 = vrot.slane %v7030, 2
        %v7033 = vor.u32 %v7029, %v7032
        %v7034 = vsel %vm5746, %v7024, %v7033
        %v7036 = vshrl.u32 %v6930, 16
        %v7038 = vrot.slane %v7036, 1
        %v7039 = vshll.u32 %v6930, 16
        %v7041 = vrot.slane %v7039, 2
        %v7042 = vor.u32 %v7038, %v7041
        %v7043 = vsel %vm5746, %v7033, %v7042
        %v7045 = vshrl.u32 %v6931, 16
        %v7047 = vrot.slane %v7045, 1
        %v7048 = vshll.u32 %v6931, 16
        %v7050 = vrot.slane %v7048, 2
        %v7051 = vor.u32 %v7047, %v7050
        %v7052 = vsel %vm5746, %v7042, %v7051
        %v7054 = vshrl.u32 %v6932, 16
        %v7056 = vrot.slane %v7054, 1
        %v7057 = vshll.u32 %v6932, 16
        %v7059 = vrot.slane %v7057, 2
        %v7060 = vor.u32 %v7056, %v7059
        %v7061 = vsel %vm5746, %v7051, %v7060
        %v7063 = vshrl.u32 %v6933, 16
        %v7065 = vrot.slane %v7063, 1
        %v7066 = vshll.u32 %v6933, 16
        %v7068 = vrot.slane %v7066, 2
        %v7069 = vor.u32 %v7065, %v7068
        %v7070 = vsel %vm5746, %v7060, %v7069
        %v7072 = vshrl.u32 %v6934, 16
        %v7074 = vrot.slane %v7072, 1
        %v7075 = vshll.u32 %v6934, 16
        %v7077 = vrot.slane %v7075, 2
        %v7078 = vor.u32 %v7074, %v7077
        %v7079 = vsel %vm5746, %v7069, %v7078
        %v7081 = vshrl.u32 %v6935, 16
        %v7083 = vrot.slane %v7081, 1
        %v7084 = vshll.u32 %v6935, 16
        %v7086 = vrot.slane %v7084, 2
        %v7087 = vor.u32 %v7083, %v7086
        %v7088 = vsel %vm5746, %v7078, %v7087
        %v7090 = vshrl.u32 %v6936, 16
        %v7092 = vrot.slane %v7090, 1
        %v7093 = vshll.u32 %v6936, 16
        %v7095 = vrot.slane %v7093, 2
        %v7096 = vor.u32 %v7092, %v7095
        %v7097 = vsel %vm5746, %v7087, %v7096
        %v7131 = vunpack.c.l.b16 %v6146
        %v7132 = vunpack.c.h.b16 %v6146
        %v7133 = vunpack.c.l.b16 %v6147
        %v7134 = vunpack.c.h.b16 %v6147
        %v7135 = vunpack.c.l.b16 %v6148
        %v7136 = vunpack.c.h.b16 %v6148
        %v7137 = vunpack.c.l.b16 %v6149
        %v7138 = vunpack.c.h.b16 %v6149
        %v7139 = vunpack.c.l.b16 %v6150
        %v7140 = vunpack.c.h.b16 %v6150
        %v7141 = vunpack.c.l.b16 %v6151
        %v7142 = vunpack.c.h.b16 %v6151
        %v7143 = vunpack.c.l.b16 %v6152
        %v7144 = vunpack.c.h.b16 %v6152
        %v7145 = vunpack.c.l.b16 %v6153
        %v7146 = vunpack.c.h.b16 %v6153
        %v7147 = vunpack.c.l.b16 %v6154
        %v7148 = vunpack.c.h.b16 %v6154
        %v7149 = vunpack.c.l.b16 %v6155
        %v7150 = vunpack.c.h.b16 %v6155
        %v7151 = vunpack.c.l.b16 %v6156
        %v7152 = vunpack.c.h.b16 %v6156
        %v7153 = vunpack.c.l.b16 %v6157
        %v7154 = vunpack.c.h.b16 %v6157
        %v7155 = vunpack.c.l.b16 %v6158
        %v7156 = vunpack.c.h.b16 %v6158
        %v7157 = vunpack.c.l.b16 %v6159
        %v7158 = vunpack.c.h.b16 %v6159
        %v7159 = vunpack.c.l.b16 %v6160
        %v7160 = vunpack.c.h.b16 %v6160
        %v7161 = vunpack.c.l.b16 %v6161
        %v7162 = vunpack.c.h.b16 %v6161
        %v7163 = vpack.c.b16 %v7133, %v7131
        %v7164 = vpack.c.b16 %v7134, %v7132
        %v7165 = vpack.c.b16 %v7137, %v7135
        %v7166 = vpack.c.b16 %v7138, %v7136
        %v7167 = vpack.c.b16 %v7141, %v7139
        %v7168 = vpack.c.b16 %v7142, %v7140
        %v7169 = vpack.c.b16 %v7145, %v7143
        %v7170 = vpack.c.b16 %v7146, %v7144
        %v7171 = vpack.c.b16 %v7149, %v7147
        %v7172 = vpack.c.b16 %v7150, %v7148
        %v7173 = vpack.c.b16 %v7153, %v7151
        %v7174 = vpack.c.b16 %v7154, %v7152
        %v7175 = vpack.c.b16 %v7157, %v7155
        %v7176 = vpack.c.b16 %v7158, %v7156
        %v7177 = vpack.c.b16 %v7161, %v7159
        %v7178 = vpack.c.b16 %v7162, %v7160
        %7195 = vmatprep.subr.bf16.mxu0 %v7178
        %7196 = vmatpush1.bf16.msra.mxu0 %v7177
        %7197 = vmatprep.subr.bf16.mxu0 %v7176
        %7198 = vmatpush1.bf16.msra.mxu0 %v7175
        %7199 = vmatprep.subr.bf16.mxu0 %v7174
        %7200 = vmatpush1.bf16.msra.mxu0 %v7173
        %7201 = vmatprep.subr.bf16.mxu0 %v7172
        %7202 = vmatpush1.bf16.msra.mxu0 %v7171
        %7203 = vmatprep.subr.bf16.mxu0 %v7170
        %7204 = vmatpush1.bf16.msra.mxu0 %v7169
        %7205 = vmatprep.subr.bf16.mxu0 %v7168
        %7206 = vmatpush1.bf16.msra.mxu0 %v7167
        %7207 = vmatprep.subr.bf16.mxu0 %v7166
        %7208 = vmatpush1.bf16.msra.mxu0 %v7165
        %7209 = vmatprep.subr.bf16.mxu0 %v7164
        %7210 = vmatpush1.bf16.msra.mxu0 %v7163
        %7211 = vmatprep.subr.bf16.mxu0 0
        %7212 = vmatpush2.bf16.msra.mxu0 0
        %7213 = vmatprep.subr.bf16.mxu0 0
        %7214 = vmatpush2.bf16.msra.mxu0 0
        %7215 = vmatprep.subr.bf16.mxu0 0
        %7216 = vmatpush2.bf16.msra.mxu0 0
        %7217 = vmatprep.subr.bf16.mxu0 0
        %7218 = vmatpush2.bf16.msra.mxu0 0
        %7219 = vmatprep.subr.bf16.mxu0 0
        %7220 = vmatpush2.bf16.msra.mxu0 0
        %7221 = vmatprep.subr.bf16.mxu0 0
        %7222 = vmatpush2.bf16.msra.mxu0 0
        %7223 = vmatprep.subr.bf16.mxu0 0
        %7224 = vmatpush2.bf16.msra.mxu0 0
        %7225 = vmatprep.subr.bf16.mxu0 0
        %7226 = vmatpush2.bf16.msra.mxu0 0
        %7227 = vmatprep.mubr.bf16.mxu0 0
        %7228 = vmatmul.mubr.bf16.gmra.mxu0 %v6953
        %v7229 = vpop.f32.mrf.mxu0
        %v7230 = vadd.f32 0.0, %v7229
        %v7231 = vpop.f32.mrf.mxu0
        %v7232 = vadd.f32 0.0, %v7231
        %v7233 = vpop.f32.mrf.mxu0
        %v7234 = vadd.f32 0.0, %v7233
        %v7235 = vpop.f32.mrf.mxu0
        %v7236 = vadd.f32 0.0, %v7235
        %7237 = vmatprep.mubr.bf16.mxu0 0
        %7238 = vmatmul.mubr.bf16.gmra.mxu0 %v6962
        %v7239 = vpop.f32.mrf.mxu0
        %v7240 = vadd.f32 0.0, %v7239
        %v7241 = vpop.f32.mrf.mxu0
        %v7242 = vadd.f32 0.0, %v7241
        %v7243 = vpop.f32.mrf.mxu0
        %v7244 = vadd.f32 0.0, %v7243
        %v7245 = vpop.f32.mrf.mxu0
        %v7246 = vadd.f32 0.0, %v7245
        %7247 = vmatprep.mubr.bf16.mxu0 0
        %7248 = vmatmul.mubr.bf16.gmra.mxu0 %v6971
        %v7249 = vpop.f32.mrf.mxu0
        %v7250 = vadd.f32 0.0, %v7249
        %v7251 = vpop.f32.mrf.mxu0
        %v7252 = vadd.f32 0.0, %v7251
        %v7253 = vpop.f32.mrf.mxu0
        %v7254 = vadd.f32 0.0, %v7253
        %v7255 = vpop.f32.mrf.mxu0
        %v7256 = vadd.f32 0.0, %v7255
        %7257 = vmatprep.mubr.bf16.mxu0 0
        %7258 = vmatmul.mubr.bf16.gmra.mxu0 %v6980
        %v7259 = vpop.f32.mrf.mxu0
        %v7260 = vadd.f32 0.0, %v7259
        %v7261 = vpop.f32.mrf.mxu0
        %v7262 = vadd.f32 0.0, %v7261
        %v7263 = vpop.f32.mrf.mxu0
        %v7264 = vadd.f32 0.0, %v7263
        %v7265 = vpop.f32.mrf.mxu0
        %v7266 = vadd.f32 0.0, %v7265
        %7267 = vmatprep.mubr.bf16.mxu0 0
        %7268 = vmatmul.mubr.bf16.gmra.mxu0 %v6989
        %v7269 = vpop.f32.mrf.mxu0
        %v7270 = vadd.f32 0.0, %v7269
        %v7271 = vpop.f32.mrf.mxu0
        %v7272 = vadd.f32 0.0, %v7271
        %v7273 = vpop.f32.mrf.mxu0
        %v7274 = vadd.f32 0.0, %v7273
        %v7275 = vpop.f32.mrf.mxu0
        %v7276 = vadd.f32 0.0, %v7275
        %7277 = vmatprep.mubr.bf16.mxu0 0
        %7278 = vmatmul.mubr.bf16.gmra.mxu0 %v6998
        %v7279 = vpop.f32.mrf.mxu0
        %v7280 = vadd.f32 0.0, %v7279
        %v7281 = vpop.f32.mrf.mxu0
        %v7282 = vadd.f32 0.0, %v7281
        %v7283 = vpop.f32.mrf.mxu0
        %v7284 = vadd.f32 0.0, %v7283
        %v7285 = vpop.f32.mrf.mxu0
        %v7286 = vadd.f32 0.0, %v7285
        %7287 = vmatprep.mubr.bf16.mxu0 0
        %7288 = vmatmul.mubr.bf16.gmra.mxu0 %v7007
        %v7289 = vpop.f32.mrf.mxu0
        %v7290 = vadd.f32 0.0, %v7289
        %v7291 = vpop.f32.mrf.mxu0
        %v7292 = vadd.f32 0.0, %v7291
        %v7293 = vpop.f32.mrf.mxu0
        %v7294 = vadd.f32 0.0, %v7293
        %v7295 = vpop.f32.mrf.mxu0
        %v7296 = vadd.f32 0.0, %v7295
        %7297 = vmatprep.mubr.bf16.mxu0 0
        %7298 = vmatmul.mubr.bf16.gmra.mxu0 %v7016
        %v7299 = vpop.f32.mrf.mxu0
        %v7300 = vadd.f32 0.0, %v7299
        %v7301 = vpop.f32.mrf.mxu0
        %v7302 = vadd.f32 0.0, %v7301
        %v7303 = vpop.f32.mrf.mxu0
        %v7304 = vadd.f32 0.0, %v7303
        %v7305 = vpop.f32.mrf.mxu0
        %v7306 = vadd.f32 0.0, %v7305
        %7307 = vmatprep.mubr.bf16.mxu0 0
        %7308 = vmatmul.mubr.bf16.gmra.mxu0 %v7025
        %v7309 = vpop.f32.mrf.mxu0
        %v7310 = vadd.f32 0.0, %v7309
        %v7311 = vpop.f32.mrf.mxu0
        %v7312 = vadd.f32 0.0, %v7311
        %v7313 = vpop.f32.mrf.mxu0
        %v7314 = vadd.f32 0.0, %v7313
        %v7315 = vpop.f32.mrf.mxu0
        %v7316 = vadd.f32 0.0, %v7315
        %7317 = vmatprep.mubr.bf16.mxu0 0
        %7318 = vmatmul.mubr.bf16.gmra.mxu0 %v7034
        %v7319 = vpop.f32.mrf.mxu0
        %v7320 = vadd.f32 0.0, %v7319
        %v7321 = vpop.f32.mrf.mxu0
        %v7322 = vadd.f32 0.0, %v7321
        %v7323 = vpop.f32.mrf.mxu0
        %v7324 = vadd.f32 0.0, %v7323
        %v7325 = vpop.f32.mrf.mxu0
        %v7326 = vadd.f32 0.0, %v7325
        %7327 = vmatprep.mubr.bf16.mxu0 0
        %7328 = vmatmul.mubr.bf16.gmra.mxu0 %v7043
        %v7329 = vpop.f32.mrf.mxu0
        %v7330 = vadd.f32 0.0, %v7329
        %v7331 = vpop.f32.mrf.mxu0
        %v7332 = vadd.f32 0.0, %v7331
        %v7333 = vpop.f32.mrf.mxu0
        %v7334 = vadd.f32 0.0, %v7333
        %v7335 = vpop.f32.mrf.mxu0
        %v7336 = vadd.f32 0.0, %v7335
        %7337 = vmatprep.mubr.bf16.mxu0 0
        %7338 = vmatmul.mubr.bf16.gmra.mxu0 %v7052
        %v7339 = vpop.f32.mrf.mxu0
        %v7340 = vadd.f32 0.0, %v7339
        %v7341 = vpop.f32.mrf.mxu0
        %v7342 = vadd.f32 0.0, %v7341
        %v7343 = vpop.f32.mrf.mxu0
        %v7344 = vadd.f32 0.0, %v7343
        %v7345 = vpop.f32.mrf.mxu0
        %v7346 = vadd.f32 0.0, %v7345
        %7347 = vmatprep.mubr.bf16.mxu0 0
        %7348 = vmatmul.mubr.bf16.gmra.mxu0 %v7061
        %v7349 = vpop.f32.mrf.mxu0
        %v7350 = vadd.f32 0.0, %v7349
        %v7351 = vpop.f32.mrf.mxu0
        %v7352 = vadd.f32 0.0, %v7351
        %v7353 = vpop.f32.mrf.mxu0
        %v7354 = vadd.f32 0.0, %v7353
        %v7355 = vpop.f32.mrf.mxu0
        %v7356 = vadd.f32 0.0, %v7355
        %7357 = vmatprep.mubr.bf16.mxu0 0
        %7358 = vmatmul.mubr.bf16.gmra.mxu0 %v7070
        %v7359 = vpop.f32.mrf.mxu0
        %v7360 = vadd.f32 0.0, %v7359
        %v7361 = vpop.f32.mrf.mxu0
        %v7362 = vadd.f32 0.0, %v7361
        %v7363 = vpop.f32.mrf.mxu0
        %v7364 = vadd.f32 0.0, %v7363
        %v7365 = vpop.f32.mrf.mxu0
        %v7366 = vadd.f32 0.0, %v7365
        %7367 = vmatprep.mubr.bf16.mxu0 0
        %7368 = vmatmul.mubr.bf16.gmra.mxu0 %v7079
        %v7369 = vpop.f32.mrf.mxu0
        %v7370 = vadd.f32 0.0, %v7369
        %v7371 = vpop.f32.mrf.mxu0
        %v7372 = vadd.f32 0.0, %v7371
        %v7373 = vpop.f32.mrf.mxu0
        %v7374 = vadd.f32 0.0, %v7373
        %v7375 = vpop.f32.mrf.mxu0
        %v7376 = vadd.f32 0.0, %v7375
        %7377 = vmatprep.mubr.bf16.mxu0 0
        %7378 = vmatmul.mubr.bf16.gmra.mxu0 %v7088
        %v7379 = vpop.f32.mrf.mxu0
        %v7380 = vadd.f32 0.0, %v7379
        %v7381 = vpop.f32.mrf.mxu0
        %v7382 = vadd.f32 0.0, %v7381
        %v7383 = vpop.f32.mrf.mxu0
        %v7384 = vadd.f32 0.0, %v7383
        %v7385 = vpop.f32.mrf.mxu0
        %v7386 = vadd.f32 0.0, %v7385
        %7387 = vmatprep.mubr.bf16.mxu0 0
        %7388 = vmatmul.mubr.bf16.gmra.mxu0 %v7097
        %v7389 = vpop.f32.mrf.mxu0
        %v7390 = vadd.f32 0.0, %v7389
        %v7391 = vpop.f32.mrf.mxu0
        %v7392 = vadd.f32 0.0, %v7391
        %v7393 = vpop.f32.mrf.mxu0
        %v7394 = vadd.f32 0.0, %v7393
        %v7395 = vpop.f32.mrf.mxu0
        %v7396 = vadd.f32 0.0, %v7395
        %7397 = vdwg.mxu0
        %v7398 = vadd.f32 %v6746, %v7230
        %v7399 = vadd.f32 %v6747, %v7234
        %v7400 = vadd.f32 %v6748, %v7240
        %v7401 = vadd.f32 %v6749, %v7244
        %v7402 = vadd.f32 %v6750, %v7250
        %v7403 = vadd.f32 %v6751, %v7254
        %v7404 = vadd.f32 %v6752, %v7260
        %v7405 = vadd.f32 %v6753, %v7264
        %v7406 = vadd.f32 %v6754, %v7270
        %v7407 = vadd.f32 %v6755, %v7274
        %v7408 = vadd.f32 %v6756, %v7280
        %v7409 = vadd.f32 %v6757, %v7284
        %v7410 = vadd.f32 %v6758, %v7290
        %v7411 = vadd.f32 %v6759, %v7294
        %v7412 = vadd.f32 %v6760, %v7300
        %v7413 = vadd.f32 %v6761, %v7304
        %v7414 = vadd.f32 %v6762, %v7310
        %v7415 = vadd.f32 %v6763, %v7314
        %v7416 = vadd.f32 %v6764, %v7320
        %v7417 = vadd.f32 %v6765, %v7324
        %v7418 = vadd.f32 %v6766, %v7330
        %v7419 = vadd.f32 %v6767, %v7334
        %v7420 = vadd.f32 %v6768, %v7340
        %v7421 = vadd.f32 %v6769, %v7344
        %v7422 = vadd.f32 %v6770, %v7350
        %v7423 = vadd.f32 %v6771, %v7354
        %v7424 = vadd.f32 %v6772, %v7360
        %v7425 = vadd.f32 %v6773, %v7364
        %v7426 = vadd.f32 %v6774, %v7370
        %v7427 = vadd.f32 %v6775, %v7374
        %v7428 = vadd.f32 %v6776, %v7380
        %v7429 = vadd.f32 %v6777, %v7384
        %v7430 = vadd.f32 %v6778, %v7390
        %v7431 = vadd.f32 %v6779, %v7394
        %v7432 = vadd.f32 %v6780, %v7232
        %v7433 = vadd.f32 %v6781, %v7236
        %v7434 = vadd.f32 %v6782, %v7242
        %v7435 = vadd.f32 %v6783, %v7246
        %v7436 = vadd.f32 %v6784, %v7252
        %v7437 = vadd.f32 %v6785, %v7256
        %v7438 = vadd.f32 %v6786, %v7262
        %v7439 = vadd.f32 %v6787, %v7266
        %v7440 = vadd.f32 %v6788, %v7272
        %v7441 = vadd.f32 %v6789, %v7276
        %v7442 = vadd.f32 %v6790, %v7282
        %v7443 = vadd.f32 %v6791, %v7286
        %v7444 = vadd.f32 %v6792, %v7292
        %v7445 = vadd.f32 %v6793, %v7296
        %v7446 = vadd.f32 %v6794, %v7302
        %v7447 = vadd.f32 %v6795, %v7306
        %v7448 = vadd.f32 %v6796, %v7312
        %v7449 = vadd.f32 %v6797, %v7316
        %v7450 = vadd.f32 %v6798, %v7322
        %v7451 = vadd.f32 %v6799, %v7326
        %v7452 = vadd.f32 %v6800, %v7332
        %v7453 = vadd.f32 %v6801, %v7336
        %v7454 = vadd.f32 %v6802, %v7342
        %v7455 = vadd.f32 %v6803, %v7346
        %v7456 = vadd.f32 %v6804, %v7352
        %v7457 = vadd.f32 %v6805, %v7356
        %v7458 = vadd.f32 %v6806, %v7362
        %v7459 = vadd.f32 %v6807, %v7366
        %v7460 = vadd.f32 %v6808, %v7372
        %v7461 = vadd.f32 %v6809, %v7376
        %v7462 = vadd.f32 %v6810, %v7382
        %v7463 = vadd.f32 %v6811, %v7386
        %v7464 = vadd.f32 %v6812, %v7392
        %v7465 = vadd.f32 %v6813, %v7396
        %v7466 = vld [vmem:[#allocation3 + $0x98] sm:$0x1]
        %v7468 = vunpack.c.l.b16 %v7466
        %v7469 = vpack.c.b16 %v7468, %v7468
        %v7470 = vrot.slane %v6919, 1
        %v7471 = vrot.slane %v6920, 1
        %v7472 = vsel %vm4036, %v7470, %v7471
        %v7473 = vrot.slane %v6921, 1
        %v7474 = vsel %vm4036, %v7471, %v7473
        %v7475 = vrot.slane %v6922, 1
        %v7476 = vsel %vm4036, %v7473, %v7475
        %v7477 = vrot.slane %v6923, 1
        %v7478 = vsel %vm4036, %v7475, %v7477
        %v7479 = vrot.slane %v6924, 1
        %v7480 = vsel %vm4036, %v7477, %v7479
        %v7481 = vrot.slane %v6925, 1
        %v7482 = vsel %vm4036, %v7479, %v7481
        %v7483 = vrot.slane %v6926, 1
        %v7484 = vsel %vm4036, %v7481, %v7483
        %v7485 = vrot.slane %v6927, 1
        %v7486 = vsel %vm4036, %v7483, %v7485
        %v7487 = vrot.slane %v6928, 1
        %v7488 = vsel %vm4036, %v7485, %v7487
        %v7489 = vrot.slane %v6929, 1
        %v7490 = vsel %vm4036, %v7487, %v7489
        %v7491 = vrot.slane %v6930, 1
        %v7492 = vsel %vm4036, %v7489, %v7491
        %v7493 = vrot.slane %v6931, 1
        %v7494 = vsel %vm4036, %v7491, %v7493
        %v7495 = vrot.slane %v6932, 1
        %v7496 = vsel %vm4036, %v7493, %v7495
        %v7497 = vrot.slane %v6933, 1
        %v7498 = vsel %vm4036, %v7495, %v7497
        %v7499 = vrot.slane %v6934, 1
        %v7500 = vsel %vm4036, %v7497, %v7499
        %v7501 = vrot.slane %v6935, 1
        %v7502 = vsel %vm4036, %v7499, %v7501
        %v7503 = vrot.slane %v7469, 1
        %v7504 = vsel %vm4036, %v7501, %v7503
        %7522 = vmatprep.subr.bf16.mxu0 0
        %7523 = vmatpush1.bf16.msra.mxu0 %v6526
        %7524 = vmatprep.subr.bf16.mxu0 0
        %7525 = vmatpush1.bf16.msra.mxu0 %v6524
        %7526 = vmatprep.subr.bf16.mxu0 0
        %7527 = vmatpush1.bf16.msra.mxu0 %v6522
        %7528 = vmatprep.subr.bf16.mxu0 0
        %7529 = vmatpush1.bf16.msra.mxu0 %v6520
        %7530 = vmatprep.subr.bf16.mxu0 0
        %7531 = vmatpush1.bf16.msra.mxu0 %v6518
        %7532 = vmatprep.subr.bf16.mxu0 0
        %7533 = vmatpush1.bf16.msra.mxu0 %v6516
        %7534 = vmatprep.subr.bf16.mxu0 0
        %7535 = vmatpush1.bf16.msra.mxu0 %v6514
        %7536 = vmatprep.subr.bf16.mxu0 0
        %7537 = vmatpush1.bf16.msra.mxu0 %v6512
        %7538 = vmatprep.subr.bf16.mxu0 0
        %7539 = vmatpush2.bf16.msra.mxu0 0
        %7540 = vmatprep.subr.bf16.mxu0 0
        %7541 = vmatpush2.bf16.msra.mxu0 0
        %7542 = vmatprep.subr.bf16.mxu0 0
        %7543 = vmatpush2.bf16.msra.mxu0 0
        %7544 = vmatprep.subr.bf16.mxu0 0
        %7545 = vmatpush2.bf16.msra.mxu0 0
        %7546 = vmatprep.subr.bf16.mxu0 0
        %7547 = vmatpush2.bf16.msra.mxu0 0
        %7548 = vmatprep.subr.bf16.mxu0 0
        %7549 = vmatpush2.bf16.msra.mxu0 0
        %7550 = vmatprep.subr.bf16.mxu0 0
        %7551 = vmatpush2.bf16.msra.mxu0 0
        %7552 = vmatprep.subr.bf16.mxu0 0
        %7553 = vmatpush2.bf16.msra.mxu0 0
        %7554 = vmatprep.mubr.bf16.mxu0 0
        %7555 = vmatmul.mubr.bf16.gmra.mxu0 %v7472
        %v7556 = vpop.f32.mrf.mxu0
        %v7557 = vadd.f32 0.0, %v7556
        %v7558 = vpop.f32.mrf.mxu0
        %v7559 = vpop.f32.mrf.mxu0
        %v7560 = vadd.f32 0.0, %v7559
        %v7561 = vpop.f32.mrf.mxu0
        %7562 = vmatprep.mubr.bf16.mxu0 0
        %7563 = vmatmul.mubr.bf16.gmra.mxu0 %v7474
        %v7564 = vpop.f32.mrf.mxu0
        %v7565 = vadd.f32 0.0, %v7564
        %v7566 = vpop.f32.mrf.mxu0
        %v7567 = vpop.f32.mrf.mxu0
        %v7568 = vadd.f32 0.0, %v7567
        %v7569 = vpop.f32.mrf.mxu0
        %7570 = vmatprep.mubr.bf16.mxu0 0
        %7571 = vmatmul.mubr.bf16.gmra.mxu0 %v7476
        %v7572 = vpop.f32.mrf.mxu0
        %v7573 = vadd.f32 0.0, %v7572
        %v7574 = vpop.f32.mrf.mxu0
        %v7575 = vpop.f32.mrf.mxu0
        %v7576 = vadd.f32 0.0, %v7575
        %v7577 = vpop.f32.mrf.mxu0
        %7578 = vmatprep.mubr.bf16.mxu0 0
        %7579 = vmatmul.mubr.bf16.gmra.mxu0 %v7478
        %v7580 = vpop.f32.mrf.mxu0
        %v7581 = vadd.f32 0.0, %v7580
        %v7582 = vpop.f32.mrf.mxu0
        %v7583 = vpop.f32.mrf.mxu0
        %v7584 = vadd.f32 0.0, %v7583
        %v7585 = vpop.f32.mrf.mxu0
        %7586 = vmatprep.mubr.bf16.mxu0 0
        %7587 = vmatmul.mubr.bf16.gmra.mxu0 %v7480
        %v7588 = vpop.f32.mrf.mxu0
        %v7589 = vadd.f32 0.0, %v7588
        %v7590 = vpop.f32.mrf.mxu0
        %v7591 = vpop.f32.mrf.mxu0
        %v7592 = vadd.f32 0.0, %v7591
        %v7593 = vpop.f32.mrf.mxu0
        %7594 = vmatprep.mubr.bf16.mxu0 0
        %7595 = vmatmul.mubr.bf16.gmra.mxu0 %v7482
        %v7596 = vpop.f32.mrf.mxu0
        %v7597 = vadd.f32 0.0, %v7596
        %v7598 = vpop.f32.mrf.mxu0
        %v7599 = vpop.f32.mrf.mxu0
        %v7600 = vadd.f32 0.0, %v7599
        %v7601 = vpop.f32.mrf.mxu0
        %7602 = vmatprep.mubr.bf16.mxu0 0
        %7603 = vmatmul.mubr.bf16.gmra.mxu0 %v7484
        %v7604 = vpop.f32.mrf.mxu0
        %v7605 = vadd.f32 0.0, %v7604
        %v7606 = vpop.f32.mrf.mxu0
        %v7607 = vpop.f32.mrf.mxu0
        %v7608 = vadd.f32 0.0, %v7607
        %v7609 = vpop.f32.mrf.mxu0
        %7610 = vmatprep.mubr.bf16.mxu0 0
        %7611 = vmatmul.mubr.bf16.gmra.mxu0 %v7486
        %v7612 = vpop.f32.mrf.mxu0
        %v7613 = vadd.f32 0.0, %v7612
        %v7614 = vpop.f32.mrf.mxu0
        %v7615 = vpop.f32.mrf.mxu0
        %v7616 = vadd.f32 0.0, %v7615
        %v7617 = vpop.f32.mrf.mxu0
        %7618 = vmatprep.mubr.bf16.mxu0 0
        %7619 = vmatmul.mubr.bf16.gmra.mxu0 %v7488
        %v7620 = vpop.f32.mrf.mxu0
        %v7621 = vadd.f32 0.0, %v7620
        %v7622 = vpop.f32.mrf.mxu0
        %v7623 = vpop.f32.mrf.mxu0
        %v7624 = vadd.f32 0.0, %v7623
        %v7625 = vpop.f32.mrf.mxu0
        %7626 = vmatprep.mubr.bf16.mxu0 0
        %7627 = vmatmul.mubr.bf16.gmra.mxu0 %v7490
        %v7628 = vpop.f32.mrf.mxu0
        %v7629 = vadd.f32 0.0, %v7628
        %v7630 = vpop.f32.mrf.mxu0
        %v7631 = vpop.f32.mrf.mxu0
        %v7632 = vadd.f32 0.0, %v7631
        %v7633 = vpop.f32.mrf.mxu0
        %7634 = vmatprep.mubr.bf16.mxu0 0
        %7635 = vmatmul.mubr.bf16.gmra.mxu0 %v7492
        %v7636 = vpop.f32.mrf.mxu0
        %v7637 = vadd.f32 0.0, %v7636
        %v7638 = vpop.f32.mrf.mxu0
        %v7639 = vpop.f32.mrf.mxu0
        %v7640 = vadd.f32 0.0, %v7639
        %v7641 = vpop.f32.mrf.mxu0
        %7642 = vmatprep.mubr.bf16.mxu0 0
        %7643 = vmatmul.mubr.bf16.gmra.mxu0 %v7494
        %v7644 = vpop.f32.mrf.mxu0
        %v7645 = vadd.f32 0.0, %v7644
        %v7646 = vpop.f32.mrf.mxu0
        %v7647 = vpop.f32.mrf.mxu0
        %v7648 = vadd.f32 0.0, %v7647
        %v7649 = vpop.f32.mrf.mxu0
        %7650 = vmatprep.mubr.bf16.mxu0 0
        %7651 = vmatmul.mubr.bf16.gmra.mxu0 %v7496
        %v7652 = vpop.f32.mrf.mxu0
        %v7653 = vadd.f32 0.0, %v7652
        %v7654 = vpop.f32.mrf.mxu0
        %v7655 = vpop.f32.mrf.mxu0
        %v7656 = vadd.f32 0.0, %v7655
        %v7657 = vpop.f32.mrf.mxu0
        %7658 = vmatprep.mubr.bf16.mxu0 0
        %7659 = vmatmul.mubr.bf16.gmra.mxu0 %v7498
        %v7660 = vpop.f32.mrf.mxu0
        %v7661 = vadd.f32 0.0, %v7660
        %v7662 = vpop.f32.mrf.mxu0
        %v7663 = vpop.f32.mrf.mxu0
        %v7664 = vadd.f32 0.0, %v7663
        %v7665 = vpop.f32.mrf.mxu0
        %7666 = vmatprep.mubr.bf16.mxu0 0
        %7667 = vmatmul.mubr.bf16.gmra.mxu0 %v7500
        %v7668 = vpop.f32.mrf.mxu0
        %v7669 = vadd.f32 0.0, %v7668
        %v7670 = vpop.f32.mrf.mxu0
        %v7671 = vpop.f32.mrf.mxu0
        %v7672 = vadd.f32 0.0, %v7671
        %v7673 = vpop.f32.mrf.mxu0
        %7674 = vmatprep.mubr.bf16.mxu0 0
        %7675 = vmatmul.mubr.bf16.gmra.mxu0 %v7502
        %v7676 = vpop.f32.mrf.mxu0
        %v7677 = vadd.f32 0.0, %v7676
        %v7678 = vpop.f32.mrf.mxu0
        %v7679 = vpop.f32.mrf.mxu0
        %v7680 = vadd.f32 0.0, %v7679
        %v7681 = vpop.f32.mrf.mxu0
        %7682 = vmatprep.mubr.bf16.mxu0 0
        %7683 = vmatmul.mubr.bf16.gmra.mxu0 %v7504
        %v7684 = vpop.f32.mrf.mxu0
        %v7685 = vadd.f32 0.0, %v7684
        %v7686 = vpop.f32.mrf.mxu0
        %v7687 = vpop.f32.mrf.mxu0
        %v7688 = vadd.f32 0.0, %v7687
        %v7689 = vpop.f32.mrf.mxu0
        %7690 = vdwg.mxu0
        %v7691 = vadd.f32 %v7398, %v7557
        %v7692 = vadd.f32 %v7399, %v7560
        %v7693 = vadd.f32 %v7400, %v7565
        %v7694 = vadd.f32 %v7401, %v7568
        %v7695 = vadd.f32 %v7402, %v7573
        %v7696 = vadd.f32 %v7403, %v7576
        %v7697 = vadd.f32 %v7404, %v7581
        %v7698 = vadd.f32 %v7405, %v7584
        %v7699 = vadd.f32 %v7406, %v7589
        %v7700 = vadd.f32 %v7407, %v7592
        %v7701 = vadd.f32 %v7408, %v7597
        %v7702 = vadd.f32 %v7409, %v7600
        %v7703 = vadd.f32 %v7410, %v7605
        %v7704 = vadd.f32 %v7411, %v7608
        %v7705 = vadd.f32 %v7412, %v7613
        %v7706 = vadd.f32 %v7413, %v7616
        %v7707 = vadd.f32 %v7414, %v7621
        %v7708 = vadd.f32 %v7415, %v7624
        %v7709 = vadd.f32 %v7416, %v7629
        %v7710 = vadd.f32 %v7417, %v7632
        %v7711 = vadd.f32 %v7418, %v7637
        %v7712 = vadd.f32 %v7419, %v7640
        %v7713 = vadd.f32 %v7420, %v7645
        %v7714 = vadd.f32 %v7421, %v7648
        %v7715 = vadd.f32 %v7422, %v7653
        %v7716 = vadd.f32 %v7423, %v7656
        %v7717 = vadd.f32 %v7424, %v7661
        %v7718 = vadd.f32 %v7425, %v7664
        %v7719 = vadd.f32 %v7426, %v7669
        %v7720 = vadd.f32 %v7427, %v7672
        %v7721 = vadd.f32 %v7428, %v7677
        %v7722 = vadd.f32 %v7429, %v7680
        %v7723 = vadd.f32 %v7430, %v7685
        %v7724 = vadd.f32 %v7431, %v7688
        %v7725 = vld [vmem:[#allocation2 + $0x10] sm:$0xc]
        %v7727 = vunpack.c.l.b16 %v7725
        %v7728 = vpack.c.b16 %v6233, %v7727
        %vm7729 = vcmask 1045504
        %v7730 = vrot.slane %v7728, 2
        %v7731 = vrot.slane %v6268, 2
        %v7732 = vsel %vm7729, %v7730, %v7731
        %v7733 = vrot.slane %v6269, 2
        %v7734 = vsel %vm7729, %v7731, %v7733
        %v7735 = vrot.slane %v6270, 2
        %v7736 = vsel %vm7729, %v7733, %v7735
        %v7737 = vrot.slane %v6271, 2
        %v7738 = vsel %vm7729, %v7735, %v7737
        %v7739 = vrot.slane %v6272, 2
        %v7740 = vsel %vm7729, %v7737, %v7739
        %v7741 = vrot.slane %v6273, 2
        %v7742 = vsel %vm7729, %v7739, %v7741
        %v7743 = vrot.slane %v6274, 2
        %v7744 = vsel %vm7729, %v7741, %v7743
        %v7745 = vrot.slane %v6275, 2
        %v7746 = vsel %vm7729, %v7743, %v7745
        %v7747 = vrot.slane %v6276, 2
        %v7748 = vsel %vm7729, %v7745, %v7747
        %v7749 = vrot.slane %v6277, 2
        %v7750 = vsel %vm7729, %v7747, %v7749
        %v7751 = vrot.slane %v6278, 2
        %v7752 = vsel %vm7729, %v7749, %v7751
        %v7753 = vrot.slane %v6279, 2
        %v7754 = vsel %vm7729, %v7751, %v7753
        %v7755 = vrot.slane %v6280, 2
        %v7756 = vsel %vm7729, %v7753, %v7755
        %v7757 = vrot.slane %v6281, 2
        %v7758 = vsel %vm7729, %v7755, %v7757
        %v7759 = vrot.slane %v6282, 2
        %v7760 = vsel %vm7729, %v7757, %v7759
        %v7761 = vrot.slane %v6283, 2
        %v7762 = vsel %vm7729, %v7759, %v7761
        %v7763 = vrot.slane %v6284, 2
        %v7764 = vsel %vm7729, %v7761, %v7763
        %7782 = vmatprep.subr.bf16.mxu0 0
        %7783 = vmatpush1.bf16.msra.mxu0 %v7177
        %7784 = vmatprep.subr.bf16.mxu0 0
        %7785 = vmatpush1.bf16.msra.mxu0 %v7175
        %7786 = vmatprep.subr.bf16.mxu0 0
        %7787 = vmatpush1.bf16.msra.mxu0 %v7173
        %7788 = vmatprep.subr.bf16.mxu0 0
        %7789 = vmatpush1.bf16.msra.mxu0 %v7171
        %7790 = vmatprep.subr.bf16.mxu0 0
        %7791 = vmatpush1.bf16.msra.mxu0 %v7169
        %7792 = vmatprep.subr.bf16.mxu0 0
        %7793 = vmatpush1.bf16.msra.mxu0 %v7167
        %7794 = vmatprep.subr.bf16.mxu0 0
        %7795 = vmatpush1.bf16.msra.mxu0 %v7165
        %7796 = vmatprep.subr.bf16.mxu0 0
        %7797 = vmatpush1.bf16.msra.mxu0 %v7163
        %7798 = vmatprep.subr.bf16.mxu0 0
        %7799 = vmatpush2.bf16.msra.mxu0 0
        %7800 = vmatprep.subr.bf16.mxu0 0
        %7801 = vmatpush2.bf16.msra.mxu0 0
        %7802 = vmatprep.subr.bf16.mxu0 0
        %7803 = vmatpush2.bf16.msra.mxu0 0
        %7804 = vmatprep.subr.bf16.mxu0 0
        %7805 = vmatpush2.bf16.msra.mxu0 0
        %7806 = vmatprep.subr.bf16.mxu0 0
        %7807 = vmatpush2.bf16.msra.mxu0 0
        %7808 = vmatprep.subr.bf16.mxu0 0
        %7809 = vmatpush2.bf16.msra.mxu0 0
        %7810 = vmatprep.subr.bf16.mxu0 0
        %7811 = vmatpush2.bf16.msra.mxu0 0
        %7812 = vmatprep.subr.bf16.mxu0 0
        %7813 = vmatpush2.bf16.msra.mxu0 0
        %7814 = vmatprep.mubr.bf16.mxu0 0
        %7815 = vmatmul.mubr.bf16.gmra.mxu0 %v7732
        %v7816 = vpop.f32.mrf.mxu0
        %v7817 = vadd.f32 0.0, %v7816
        %v7818 = vpop.f32.mrf.mxu0
        %v7819 = vpop.f32.mrf.mxu0
        %v7820 = vadd.f32 0.0, %v7819
        %v7821 = vpop.f32.mrf.mxu0
        %7822 = vmatprep.mubr.bf16.mxu0 0
        %7823 = vmatmul.mubr.bf16.gmra.mxu0 %v7734
        %v7824 = vpop.f32.mrf.mxu0
        %v7825 = vadd.f32 0.0, %v7824
        %v7826 = vpop.f32.mrf.mxu0
        %v7827 = vpop.f32.mrf.mxu0
        %v7828 = vadd.f32 0.0, %v7827
        %v7829 = vpop.f32.mrf.mxu0
        %7830 = vmatprep.mubr.bf16.mxu0 0
        %7831 = vmatmul.mubr.bf16.gmra.mxu0 %v7736
        %v7832 = vpop.f32.mrf.mxu0
        %v7833 = vadd.f32 0.0, %v7832
        %v7834 = vpop.f32.mrf.mxu0
        %v7835 = vpop.f32.mrf.mxu0
        %v7836 = vadd.f32 0.0, %v7835
        %v7837 = vpop.f32.mrf.mxu0
        %7838 = vmatprep.mubr.bf16.mxu0 0
        %7839 = vmatmul.mubr.bf16.gmra.mxu0 %v7738
        %v7840 = vpop.f32.mrf.mxu0
        %v7841 = vadd.f32 0.0, %v7840
        %v7842 = vpop.f32.mrf.mxu0
        %v7843 = vpop.f32.mrf.mxu0
        %v7844 = vadd.f32 0.0, %v7843
        %v7845 = vpop.f32.mrf.mxu0
        %7846 = vmatprep.mubr.bf16.mxu0 0
        %7847 = vmatmul.mubr.bf16.gmra.mxu0 %v7740
        %v7848 = vpop.f32.mrf.mxu0
        %v7849 = vadd.f32 0.0, %v7848
        %v7850 = vpop.f32.mrf.mxu0
        %v7851 = vpop.f32.mrf.mxu0
        %v7852 = vadd.f32 0.0, %v7851
        %v7853 = vpop.f32.mrf.mxu0
        %7854 = vmatprep.mubr.bf16.mxu0 0
        %7855 = vmatmul.mubr.bf16.gmra.mxu0 %v7742
        %v7856 = vpop.f32.mrf.mxu0
        %v7857 = vadd.f32 0.0, %v7856
        %v7858 = vpop.f32.mrf.mxu0
        %v7859 = vpop.f32.mrf.mxu0
        %v7860 = vadd.f32 0.0, %v7859
        %v7861 = vpop.f32.mrf.mxu0
        %7862 = vmatprep.mubr.bf16.mxu0 0
        %7863 = vmatmul.mubr.bf16.gmra.mxu0 %v7744
        %v7864 = vpop.f32.mrf.mxu0
        %v7865 = vadd.f32 0.0, %v7864
        %v7866 = vpop.f32.mrf.mxu0
        %v7867 = vpop.f32.mrf.mxu0
        %v7868 = vadd.f32 0.0, %v7867
        %v7869 = vpop.f32.mrf.mxu0
        %7870 = vmatprep.mubr.bf16.mxu0 0
        %7871 = vmatmul.mubr.bf16.gmra.mxu0 %v7746
        %v7872 = vpop.f32.mrf.mxu0
        %v7873 = vadd.f32 0.0, %v7872
        %v7874 = vpop.f32.mrf.mxu0
        %v7875 = vpop.f32.mrf.mxu0
        %v7876 = vadd.f32 0.0, %v7875
        %v7877 = vpop.f32.mrf.mxu0
        %7878 = vmatprep.mubr.bf16.mxu0 0
        %7879 = vmatmul.mubr.bf16.gmra.mxu0 %v7748
        %v7880 = vpop.f32.mrf.mxu0
        %v7881 = vadd.f32 0.0, %v7880
        %v7882 = vpop.f32.mrf.mxu0
        %v7883 = vpop.f32.mrf.mxu0
        %v7884 = vadd.f32 0.0, %v7883
        %v7885 = vpop.f32.mrf.mxu0
        %7886 = vmatprep.mubr.bf16.mxu0 0
        %7887 = vmatmul.mubr.bf16.gmra.mxu0 %v7750
        %v7888 = vpop.f32.mrf.mxu0
        %v7889 = vadd.f32 0.0, %v7888
        %v7890 = vpop.f32.mrf.mxu0
        %v7891 = vpop.f32.mrf.mxu0
        %v7892 = vadd.f32 0.0, %v7891
        %v7893 = vpop.f32.mrf.mxu0
        %7894 = vmatprep.mubr.bf16.mxu0 0
        %7895 = vmatmul.mubr.bf16.gmra.mxu0 %v7752
        %v7896 = vpop.f32.mrf.mxu0
        %v7897 = vadd.f32 0.0, %v7896
        %v7898 = vpop.f32.mrf.mxu0
        %v7899 = vpop.f32.mrf.mxu0
        %v7900 = vadd.f32 0.0, %v7899
        %v7901 = vpop.f32.mrf.mxu0
        %7902 = vmatprep.mubr.bf16.mxu0 0
        %7903 = vmatmul.mubr.bf16.gmra.mxu0 %v7754
        %v7904 = vpop.f32.mrf.mxu0
        %v7905 = vadd.f32 0.0, %v7904
        %v7906 = vpop.f32.mrf.mxu0
        %v7907 = vpop.f32.mrf.mxu0
        %v7908 = vadd.f32 0.0, %v7907
        %v7909 = vpop.f32.mrf.mxu0
        %7910 = vmatprep.mubr.bf16.mxu0 0
        %7911 = vmatmul.mubr.bf16.gmra.mxu0 %v7756
        %v7912 = vpop.f32.mrf.mxu0
        %v7913 = vadd.f32 0.0, %v7912
        %v7914 = vpop.f32.mrf.mxu0
        %v7915 = vpop.f32.mrf.mxu0
        %v7916 = vadd.f32 0.0, %v7915
        %v7917 = vpop.f32.mrf.mxu0
        %7918 = vmatprep.mubr.bf16.mxu0 0
        %7919 = vmatmul.mubr.bf16.gmra.mxu0 %v7758
        %v7920 = vpop.f32.mrf.mxu0
        %v7921 = vadd.f32 0.0, %v7920
        %v7922 = vpop.f32.mrf.mxu0
        %v7923 = vpop.f32.mrf.mxu0
        %v7924 = vadd.f32 0.0, %v7923
        %v7925 = vpop.f32.mrf.mxu0
        %7926 = vmatprep.mubr.bf16.mxu0 0
        %7927 = vmatmul.mubr.bf16.gmra.mxu0 %v7760
        %v7928 = vpop.f32.mrf.mxu0
        %v7929 = vadd.f32 0.0, %v7928
        %v7930 = vpop.f32.mrf.mxu0
        %v7931 = vpop.f32.mrf.mxu0
        %v7932 = vadd.f32 0.0, %v7931
        %v7933 = vpop.f32.mrf.mxu0
        %7934 = vmatprep.mubr.bf16.mxu0 0
        %7935 = vmatmul.mubr.bf16.gmra.mxu0 %v7762
        %v7936 = vpop.f32.mrf.mxu0
        %v7937 = vadd.f32 0.0, %v7936
        %v7938 = vpop.f32.mrf.mxu0
        %v7939 = vpop.f32.mrf.mxu0
        %v7940 = vadd.f32 0.0, %v7939
        %v7941 = vpop.f32.mrf.mxu0
        %7942 = vmatprep.mubr.bf16.mxu0 0
        %7943 = vmatmul.mubr.bf16.gmra.mxu0 %v7764
        %v7944 = vpop.f32.mrf.mxu0
        %v7945 = vadd.f32 0.0, %v7944
        %v7946 = vpop.f32.mrf.mxu0
        %v7947 = vpop.f32.mrf.mxu0
        %v7948 = vadd.f32 0.0, %v7947
        %v7949 = vpop.f32.mrf.mxu0
        %7950 = vdwg.mxu0
        %v7951 = vadd.f32 %v7432, %v7817
        %v7952 = vadd.f32 %v7433, %v7820
        %v7953 = vadd.f32 %v7434, %v7825
        %v7954 = vadd.f32 %v7435, %v7828
        %v7955 = vadd.f32 %v7436, %v7833
        %v7956 = vadd.f32 %v7437, %v7836
        %v7957 = vadd.f32 %v7438, %v7841
        %v7958 = vadd.f32 %v7439, %v7844
        %v7959 = vadd.f32 %v7440, %v7849
        %v7960 = vadd.f32 %v7441, %v7852
        %v7961 = vadd.f32 %v7442, %v7857
        %v7962 = vadd.f32 %v7443, %v7860
        %v7963 = vadd.f32 %v7444, %v7865
        %v7964 = vadd.f32 %v7445, %v7868
        %v7965 = vadd.f32 %v7446, %v7873
        %v7966 = vadd.f32 %v7447, %v7876
        %v7967 = vadd.f32 %v7448, %v7881
        %v7968 = vadd.f32 %v7449, %v7884
        %v7969 = vadd.f32 %v7450, %v7889
        %v7970 = vadd.f32 %v7451, %v7892
        %v7971 = vadd.f32 %v7452, %v7897
        %v7972 = vadd.f32 %v7453, %v7900
        %v7973 = vadd.f32 %v7454, %v7905
        %v7974 = vadd.f32 %v7455, %v7908
        %v7975 = vadd.f32 %v7456, %v7913
        %v7976 = vadd.f32 %v7457, %v7916
        %v7977 = vadd.f32 %v7458, %v7921
        %v7978 = vadd.f32 %v7459, %v7924
        %v7979 = vadd.f32 %v7460, %v7929
        %v7980 = vadd.f32 %v7461, %v7932
        %v7981 = vadd.f32 %v7462, %v7937
        %v7982 = vadd.f32 %v7463, %v7940
        %v7983 = vadd.f32 %v7464, %v7945
        %v7984 = vadd.f32 %v7465, %v7948
        %v7985 = vmax.f32 %v7691, 0.0
        %v7986 = vmax.f32 %v7692, 0.0
        %v7987 = vmax.f32 %v7693, 0.0
        %v7988 = vmax.f32 %v7694, 0.0
        %v7989 = vmax.f32 %v7695, 0.0
        %v7990 = vmax.f32 %v7696, 0.0
        %v7991 = vmax.f32 %v7697, 0.0
        %v7992 = vmax.f32 %v7698, 0.0
        %v7993 = vmax.f32 %v7699, 0.0
        %v7994 = vmax.f32 %v7700, 0.0
        %v7995 = vmax.f32 %v7701, 0.0
        %v7996 = vmax.f32 %v7702, 0.0
        %v7997 = vmax.f32 %v7703, 0.0
        %v7998 = vmax.f32 %v7704, 0.0
        %v7999 = vmax.f32 %v7705, 0.0
        %v8000 = vmax.f32 %v7706, 0.0
        %v8001 = vmax.f32 %v7707, 0.0
        %v8002 = vmax.f32 %v7708, 0.0
        %v8003 = vmax.f32 %v7709, 0.0
        %v8004 = vmax.f32 %v7710, 0.0
        %v8005 = vmax.f32 %v7711, 0.0
        %v8006 = vmax.f32 %v7712, 0.0
        %v8007 = vmax.f32 %v7713, 0.0
        %v8008 = vmax.f32 %v7714, 0.0
        %v8009 = vmax.f32 %v7715, 0.0
        %v8010 = vmax.f32 %v7716, 0.0
        %v8011 = vmax.f32 %v7717, 0.0
        %v8012 = vmax.f32 %v7718, 0.0
        %v8013 = vmax.f32 %v7719, 0.0
        %v8014 = vmax.f32 %v7720, 0.0
        %v8015 = vmax.f32 %v7721, 0.0
        %v8016 = vmax.f32 %v7722, 0.0
        %v8017 = vmax.f32 %v7723, 0.0
        %v8018 = vmax.f32 %v7724, 0.0
        %8019 = vst [vmem:[%s437] sm:$0xff] %v7985
        %8020 = vst [vmem:[%s437 + $0x8] sm:$0xff] %v7986
        %8021 = vst [vmem:[%s437 + $0x10] sm:$0xff] %v7987
        %8022 = vst [vmem:[%s437 + $0x18] sm:$0xff] %v7988
        %8023 = vst [vmem:[%s437 + $0x20] sm:$0xff] %v7989
        %8024 = vst [vmem:[%s437 + $0x28] sm:$0xff] %v7990
        %8025 = vst [vmem:[%s437 + $0x30] sm:$0xff] %v7991
        %8026 = vst [vmem:[%s437 + $0x38] sm:$0xff] %v7992
        %8027 = vst [vmem:[%s437 + $0x40] sm:$0xff] %v7993
        %8028 = vst [vmem:[%s437 + $0x48] sm:$0xff] %v7994
        %8029 = vst [vmem:[%s437 + $0x50] sm:$0xff] %v7995
        %8030 = vst [vmem:[%s437 + $0x58] sm:$0xff] %v7996
        %8031 = vst [vmem:[%s437 + $0x60] sm:$0xff] %v7997
        %8032 = vst [vmem:[%s437 + $0x68] sm:$0xff] %v7998
        %8033 = vst [vmem:[%s437 + $0x70] sm:$0xff] %v7999
        %8034 = vst [vmem:[%s437 + $0x78] sm:$0xff] %v8000
        %8035 = vst [vmem:[%s437 + $0x80] sm:$0xff] %v8001
        %8036 = vst [vmem:[%s437 + $0x88] sm:$0xff] %v8002
        %8037 = vst [vmem:[%s437 + $0x90] sm:$0xff] %v8003
        %8038 = vst [vmem:[%s437 + $0x98] sm:$0xff] %v8004
        %8039 = vst [vmem:[%s437 + $0xa0] sm:$0xff] %v8005
        %8040 = vst [vmem:[%s437 + $0xa8] sm:$0xff] %v8006
        %8041 = vst [vmem:[%s437 + $0xb0] sm:$0xff] %v8007
        %8042 = vst [vmem:[%s437 + $0xb8] sm:$0xff] %v8008
        %8043 = vst [vmem:[%s437 + $0xc0] sm:$0xff] %v8009
        %8044 = vst [vmem:[%s437 + $0xc8] sm:$0xff] %v8010
        %8045 = vst [vmem:[%s437 + $0xd0] sm:$0xff] %v8011
        %8046 = vst [vmem:[%s437 + $0xd8] sm:$0xff] %v8012
        %8047 = vst [vmem:[%s437 + $0xe0] sm:$0xff] %v8013
        %8048 = vst [vmem:[%s437 + $0xe8] sm:$0xff] %v8014
        %8049 = vst [vmem:[%s437 + $0xf0] sm:$0xff] %v8015
        %8050 = vst [vmem:[%s437 + $0xf8] sm:$0xff] %v8016
        %8051 = vst [vmem:[%s437 + $0x100] sm:$0xff] %v8017
        %8052 = vst [vmem:[%s437 + $0x108] sm:$0xff] %v8018
        %v8053 = vmax.f32 %v7951, 0.0
        %v8054 = vmax.f32 %v7952, 0.0
        %v8055 = vmax.f32 %v7953, 0.0
        %v8056 = vmax.f32 %v7954, 0.0
        %v8057 = vmax.f32 %v7955, 0.0
        %v8058 = vmax.f32 %v7956, 0.0
        %v8059 = vmax.f32 %v7957, 0.0
        %v8060 = vmax.f32 %v7958, 0.0
        %v8061 = vmax.f32 %v7959, 0.0
        %v8062 = vmax.f32 %v7960, 0.0
        %v8063 = vmax.f32 %v7961, 0.0
        %v8064 = vmax.f32 %v7962, 0.0
        %v8065 = vmax.f32 %v7963, 0.0
        %v8066 = vmax.f32 %v7964, 0.0
        %v8067 = vmax.f32 %v7965, 0.0
        %v8068 = vmax.f32 %v7966, 0.0
        %v8069 = vmax.f32 %v7967, 0.0
        %v8070 = vmax.f32 %v7968, 0.0
        %v8071 = vmax.f32 %v7969, 0.0
        %v8072 = vmax.f32 %v7970, 0.0
        %v8073 = vmax.f32 %v7971, 0.0
        %v8074 = vmax.f32 %v7972, 0.0
        %v8075 = vmax.f32 %v7973, 0.0
        %v8076 = vmax.f32 %v7974, 0.0
        %v8077 = vmax.f32 %v7975, 0.0
        %v8078 = vmax.f32 %v7976, 0.0
        %v8079 = vmax.f32 %v7977, 0.0
        %v8080 = vmax.f32 %v7978, 0.0
        %v8081 = vmax.f32 %v7979, 0.0
        %v8082 = vmax.f32 %v7980, 0.0
        %v8083 = vmax.f32 %v7981, 0.0
        %v8084 = vmax.f32 %v7982, 0.0
        %v8085 = vmax.f32 %v7983, 0.0
        %v8086 = vmax.f32 %v7984, 0.0
        %s8087 = scalar_lea.vmem %s437, 272 [#allocation17]
        %8088 = vst [vmem:[%s8087] sm:$0xff] %v8053
        %8089 = vst [vmem:[%s8087 + $0x8] sm:$0xff] %v8054
        %8090 = vst [vmem:[%s8087 + $0x10] sm:$0xff] %v8055
        %8091 = vst [vmem:[%s8087 + $0x18] sm:$0xff] %v8056
        %8092 = vst [vmem:[%s8087 + $0x20] sm:$0xff] %v8057
        %8093 = vst [vmem:[%s8087 + $0x28] sm:$0xff] %v8058
        %8094 = vst [vmem:[%s8087 + $0x30] sm:$0xff] %v8059
        %8095 = vst [vmem:[%s8087 + $0x38] sm:$0xff] %v8060
        %8096 = vst [vmem:[%s8087 + $0x40] sm:$0xff] %v8061
        %8097 = vst [vmem:[%s8087 + $0x48] sm:$0xff] %v8062
        %8098 = vst [vmem:[%s8087 + $0x50] sm:$0xff] %v8063
        %8099 = vst [vmem:[%s8087 + $0x58] sm:$0xff] %v8064
        %8100 = vst [vmem:[%s8087 + $0x60] sm:$0xff] %v8065
        %8101 = vst [vmem:[%s8087 + $0x68] sm:$0xff] %v8066
        %8102 = vst [vmem:[%s8087 + $0x70] sm:$0xff] %v8067
        %8103 = vst [vmem:[%s8087 + $0x78] sm:$0xff] %v8068
        %8104 = vst [vmem:[%s8087 + $0x80] sm:$0xff] %v8069
        %8105 = vst [vmem:[%s8087 + $0x88] sm:$0xff] %v8070
        %8106 = vst [vmem:[%s8087 + $0x90] sm:$0xff] %v8071
        %8107 = vst [vmem:[%s8087 + $0x98] sm:$0xff] %v8072
        %8108 = vst [vmem:[%s8087 + $0xa0] sm:$0xff] %v8073
        %8109 = vst [vmem:[%s8087 + $0xa8] sm:$0xff] %v8074
        %8110 = vst [vmem:[%s8087 + $0xb0] sm:$0xff] %v8075
        %8111 = vst [vmem:[%s8087 + $0xb8] sm:$0xff] %v8076
        %8112 = vst [vmem:[%s8087 + $0xc0] sm:$0xff] %v8077
        %8113 = vst [vmem:[%s8087 + $0xc8] sm:$0xff] %v8078
        %8114 = vst [vmem:[%s8087 + $0xd0] sm:$0xff] %v8079
        %8115 = vst [vmem:[%s8087 + $0xd8] sm:$0xff] %v8080
        %8116 = vst [vmem:[%s8087 + $0xe0] sm:$0xff] %v8081
        %8117 = vst [vmem:[%s8087 + $0xe8] sm:$0xff] %v8082
        %8118 = vst [vmem:[%s8087 + $0xf0] sm:$0xff] %v8083
        %8119 = vst [vmem:[%s8087 + $0xf8] sm:$0xff] %v8084
        %8120 = vst [vmem:[%s8087 + $0x100] sm:$0xff] %v8085
        %8121 = vst [vmem:[%s8087 + $0x108] sm:$0xff] %v8086
        %s8122 = sand.u32 %s245, 1
        %s8123 = scalar_lea.sflag [#allocation7], %s8122
        %s8124 = sand.u32 %s245, 1
        %s8125 = smul.addr %s8124, 544
        %s8126 = scalar_lea.vmem [#allocation17], %s8125
        // Predicated region
        $region85: #{tpu_custom_call.1} parent=55 // pred_check
          %p8127 = pneg %p255
        $region86: #{tpu_custom_call.1} parent=55 // pred_check_branch
          %8129 = sbr.rel (%p8127) target = $region88
        $region87: #{tpu_custom_call.1} parent=55 // pred_region
          #allocation19 [shape = 'u32[6]{0}', space=smem, size = 0x18, scoped, tag = 'DMA stride descriptor']
          %s8130 = smul.u32 34, %s34
          %s8132 = ssub.s32 8704, 8704
          %8133 = vsyncadd %s8123, %s8132
          %s8134 = smul.addr %s33, 136
          %s8135 = sadd.s32 %s8130, %s8134
          %s8136 = smul.addr %s8135, 128
          %s8137 = scalar_lea.hbm %s9, %s8136
          %s8139 = sshll.u32 1, 14
          %s8140 = sxor.u32 4294967295, %s8139
          %s8143 = sshll.u32 7, 18
          %s8144 = sxor.u32 4294967295, %s8143
          %s8145 = sand.u32 0, %s8144
          %s8147 = sor.u32 %s8145, 0
          %s8148 = sshll.u32 %s8126, 4
          %s8149 = int_to_ptr.vmem [resolvable:$true] %s8148
          %8155 = sst [smem:[#allocation19]] 4352
          %s8156 = scalar_lea.smem [#allocation19], 1
          %8157 = sst [smem:[%s8156]] 8704
          %s8158 = scalar_lea.smem [#allocation19], 2
          %8159 = sst [smem:[%s8158]] 34
          %s8160 = scalar_lea.smem [#allocation19], 3
          %8161 = sst [smem:[%s8160]] 128
          %s8162 = scalar_lea.smem [#allocation19], 4
          %8163 = sst [smem:[%s8162]] 128
          %s8164 = scalar_lea.smem [#allocation19], 5
          %8165 = sst [smem:[%s8164]] 8
          %8167 = dma.general %s8149, 8704, %s8137, %s8123, 131072, [#allocation19], %s8147, 0
        $region88: #{tpu_custom_call.1} parent=55 // pred_fallthru
          _
      $region56: #{tpu_custom_call.1} parent=5 // pred_fallthru
        _
      %p8168 = scmp.le.s32.totalorder 2, %s24
      // Predicated region
      $region89: #{tpu_custom_call.1} parent=5 // pred_check
        %p8169 = pneg %p8168
      $region90: #{tpu_custom_call.1} parent=5 // pred_check_branch
        %8171 = sbr.rel (%p8169) target = $region92
      $region91: #{tpu_custom_call.1} parent=5 // pred_region
        %s8172 = ssub.s32 %s24, 2
        // Predicated region
        $region93: #{tpu_custom_call.1} parent=91 // pred_check
          %p8173 = pneg %p261
        $region94: #{tpu_custom_call.1} parent=91 // pred_check_branch
          %8175 = sbr.rel (%p8173) target = $region96
        $region95: #{tpu_custom_call.1} parent=91 // pred_region
          %s8176 = sand.u32 %s246, 1
          %s8177 = scalar_lea.sflag [#allocation7], %s8176
          %s8178 = sand.u32 %s246, 1
          %s8179 = smul.addr %s8178, 544
          %s8180 = scalar_lea.vmem [#allocation17], %s8179
          %8181 = dma.done %s8177, 8704
        $region96: #{tpu_custom_call.1} parent=91 // pred_fallthru
          _
      $region92: #{tpu_custom_call.1} parent=5 // pred_fallthru
        _
    $region6: #{tpu_custom_call.1} parent=1 // loop_footer
      %s28 = sadd.s32 1, %s24
    $region7: #{tpu_custom_call.1} parent=1 // loop_footer_branch
      %23 = sbr.rel target = $region3
    $region8: #{tpu_custom_call.1} parent=1 // loop_exit
      _
    %8182 = vsyncpa [#allocation6], 1
    %s8183 = scalar_lea.sflag [#allocation6], 1
    %8184 = vsyncpa %s8183, 1
    %8185 = vsyncpa [#allocation9], 1
    %8186 = vsyncpa [#allocation12], 1
    %8187 = vsyncpa [#allocation15], 1
    %8188 = vsyncpa [#allocation7], 1
    %s8189 = scalar_lea.sflag [#allocation7], 1
    %8190 = vsyncpa %s8189, 1

</llo_original>
